<compile_context>
chip_gen: v7x
topology: tpu7x:2x2x1
jax: 0.10.0
libtpu: 0.0.40
codegen_flags: <defaults>
</compile_context>

<pallas_src>
import functools

import numpy as np
import jax
import jax.numpy as jnp
from jax.experimental import pallas as pl
from jax.experimental.pallas import tpu as pltpu

NUM_CLASSES = 10

# ---- network geometry (fixed by the PyTorch module) -------------------------
K1, S1, C1_IN, C1_OUT = 5, 2, 1, 5          # conv1
K2, S2, C2_OUT = 5, 2, 50                   # conv2
H_IN = 28
H1 = (H_IN - K1) // S1 + 1                  # 12
H2 = (H1 - K2) // S2 + 1                    # 4
N_SP1 = H1 * H1                             # 144 conv1 output positions / image
N_SP2 = H2 * H2                             # 16  conv2 output positions / image
N_TAP = K1 * K1                             # 25 taps for both convs

# ---- padded / tiling sizes ---------------------------------------------------
LANES = 128                                 # lane-dense output width everywhere
K1_PAD = 32                                 # conv1 contraction 25 -> 32


def _pick_tb(batch):
    """Batch tile.  32 fills the 256-row MXU on v6e/v7x; smaller tiles for
    tiny batches keep padding low.  Any value is correct (prep is TB-free)."""
    if batch >= 32:
        return 32
    if batch >= 16:
        return 16
    return 8


# -----------------------------------------------------------------------------
# Fused kernel: conv1 -> ReLU -> conv2 -> ReLU -> classifier, all in VMEM.
#   p_ref  : (tb*144, 32)    bf16  conv1 im2col patches, rows = (b, Y, X)
#   w1_ref : (32, 128) bf16,  b1_ref : (1, 128) f32
#   w2_ref : (25*128, 128) bf16 (per-tap (Cin_pad, Cout_pad) slabs), b2: (1,128) f32
#   wc_ref : (16*128, 128) bf16 (per-spatial-pos slabs),             bc: (1,128) f32
#   out_ref: (tb, 128) f32  (first 10 lanes = logits)
# Scratch:
#   h1_ref : (tb, 144, 128)     f32   conv1 activations (channels on lanes)
#   g_ref  : (tb, 16, 25*128)   bf16  conv2 im2col LHS (pos rows, (tap,ci) cols)
#   h2_ref : (tb, 16, 128)      bf16  conv2 activations
# -----------------------------------------------------------------------------
def _fused_mnist_kernel(p_ref, w1_ref, b1_ref, w2_ref, b2_ref, wc_ref, bc_ref,
                        out_ref, h1_ref, g_ref, h2_ref, *, tb):
    f32, bf16 = jnp.float32, jnp.bfloat16

    # ---- conv1: one MXU matmul over all tb*144 output pixels, bias+ReLU in f32.
    h1 = jnp.dot(p_ref[...], w1_ref[...], preferred_element_type=f32)
    h1 = jnp.maximum(h1 + b1_ref[...], 0.0)                   # (tb*144, 128) f32
    h1_ref[...] = h1.reshape(tb, N_SP1, LANES)                # aligned split (144 % 8 == 0)

    # ---- conv2 im2col: 25 taps x 4 output rows of static strided slices.
    #      Pure ld/st into the staging scratch -- no MXU gather MACs and no
    #      batch-expanded selection matrix.
    for kh in range(K2):
        for kw in range(K2):
            col = (kh * K2 + kw) * LANES                      # tap column block
            for oy in range(H2):
                start = (S2 * oy + kh) * H1 + kw              # pixel (2oy+kh, kw)
                src = h1_ref[:, pl.ds(start, H2, stride=S2), :]   # (tb, 4, 128)
                g_ref[:, oy * H2:(oy + 1) * H2, col:col + LANES] = src.astype(bf16)

    # ---- conv2: ONE big-K matmul (K = 25*128 = 3200); MXU accumulates internally.
    lhs2 = g_ref[...].reshape(tb * N_SP2, N_TAP * LANES)      # aligned merge (16 % 16 == 0)
    h2 = jnp.dot(lhs2, w2_ref[...], preferred_element_type=f32)   # (tb*16, 128)
    h2 = jnp.maximum(h2 + b2_ref[...], 0.0).astype(bf16)      # single hoisted cast
    h2_ref[...] = h2.reshape(tb, N_SP2, LANES)

    # ---- classifier: lane-concat the 16 spatial slabs (each its own 128-lane
    #      tile) and run ONE (tb, 2048) @ (2048, 128) matmul.
    lhs_c = jnp.concatenate([h2_ref[:, r, :] for r in range(N_SP2)], axis=1)
    logits = jnp.dot(lhs_c, wc_ref[...], preferred_element_type=f32)   # (tb, 128)
    out_ref[...] = (logits + bc_ref[...]).astype(out_ref.dtype)


# -----------------------------------------------------------------------------
# One-time parameter preparation (hoisted out of the per-call path).
# No longer depends on the batch tile size.
# -----------------------------------------------------------------------------
def prepare_params(params):
    f32, bf16 = jnp.float32, jnp.bfloat16

    # conv1 weight (5,1,5,5) -> (K=32, Cout=128), K ordered (ci, kh, kw).
    w1 = jnp.zeros((K1_PAD, LANES), f32).at[:C1_IN * N_TAP, :C1_OUT].set(
        params["w1"].reshape(C1_OUT, C1_IN * N_TAP).T)
    b1 = jnp.zeros((1, LANES), f32).at[0, :C1_OUT].set(params["b1"])

    # conv2 weight (50,5,5,5) -> 25 stacked (Cin_pad=128, Cout_pad=128) slabs,
    # rows ordered (tap, ci) to match the g staging columns.
    w2_taps = jnp.transpose(params["w2"], (2, 3, 1, 0)).reshape(
        N_TAP, C1_OUT, C2_OUT)                                 # [tap, ci, co]
    w2 = jnp.zeros((N_TAP, LANES, LANES), f32)
    w2 = w2.at[:, :C1_OUT, :C2_OUT].set(w2_taps).reshape(N_TAP * LANES, LANES)
    b2 = jnp.zeros((1, LANES), f32).at[0, :C2_OUT].set(params["b2"])

    # classifier (10, 800); torch flatten index = c2*16 + (oy*4 + ox).
    # 16 per-position slabs, rows ordered (pos, c2) to match the lane-concat.
    wc_r = jnp.transpose(params["wc"].reshape(NUM_CLASSES, C2_OUT, N_SP2),
                         (2, 1, 0))                            # [r, c2, n]
    wc = jnp.zeros((N_SP2, LANES, LANES), f32)
    wc = wc.at[:, :C2_OUT, :NUM_CLASSES].set(wc_r).reshape(N_SP2 * LANES, LANES)
    bc = jnp.zeros((1, LANES), f32).at[0, :NUM_CLASSES].set(params["bc"])

    return {"w1": w1.astype(bf16), "b1": b1,
            "w2": w2.astype(bf16), "b2": b2,
            "wc": wc.astype(bf16), "bc": bc}


# -----------------------------------------------------------------------------
# Per-call input prep: conv1 im2col (input-side only; the fused kernel reads
# these patches once and never touches HBM again until the logits).
# -----------------------------------------------------------------------------
def _conv1_patches(x, b_pad):
    B = x.shape[0]
    span = S1 * (H1 - 1) + 1                                   # 23
    taps = []
    for kh in range(K1):
        for kw in range(K1):
            taps.append(x[:, 0, kh:kh + span:S1, kw:kw + span:S1])  # (B,12,12)
    p = jnp.stack(taps, axis=-1).reshape(B, N_SP1, N_TAP)
    p = jnp.pad(p, ((0, b_pad - B), (0, 0), (0, K1_PAD - N_TAP)))
    return p.reshape(b_pad * N_SP1, K1_PAD).astype(jnp.bfloat16)


def mnist_net_forward(prep, x):
    B = x.shape[0]
    tb = _pick_tb(B)
    b_pad = ((B + tb - 1) // tb) * tb
    patches = _conv1_patches(x, b_pad)

    kernel = functools.partial(_fused_mnist_kernel, tb=tb)
    out = pl.pallas_call(
        kernel,
        out_shape=jax.ShapeDtypeStruct((b_pad, LANES), jnp.float32),
        grid=(b_pad // tb,),
        in_specs=[
            pl.BlockSpec((tb * N_SP1, K1_PAD), lambda i: (i, 0)),       # patches
            pl.BlockSpec((K1_PAD, LANES), lambda i: (0, 0)),            # w1
            pl.BlockSpec((1, LANES), lambda i: (0, 0)),                 # b1
            pl.BlockSpec((N_TAP * LANES, LANES), lambda i: (0, 0)),     # w2
            pl.BlockSpec((1, LANES), lambda i: (0, 0)),                 # b2
            pl.BlockSpec((N_SP2 * LANES, LANES), lambda i: (0, 0)),     # wc
            pl.BlockSpec((1, LANES), lambda i: (0, 0)),                 # bc
        ],
        out_specs=pl.BlockSpec((tb, LANES), lambda i: (i, 0)),
        scratch_shapes=[
            pltpu.VMEM((tb, N_SP1, LANES), jnp.float32),                # h1
            pltpu.VMEM((tb, N_SP2, N_TAP * LANES), jnp.bfloat16),       # g (im2col)
            pltpu.VMEM((tb, N_SP2, LANES), jnp.bfloat16),               # h2
        ],
        compiler_params=pltpu.CompilerParams(
            dimension_semantics=("parallel",),
            vmem_limit_bytes=32 << 20),
    )(patches, prep["w1"], prep["b1"], prep["w2"], prep["b2"],
      prep["wc"], prep["bc"])
    return out[:B, :NUM_CLASSES]


# -----------------------------------------------------------------------------
# Init + pure-JAX reference (for a correctness sanity check)
# -----------------------------------------------------------------------------
def init_params(key):
    ks = jax.random.split(key, 6)

    def u(k, shape, fan_in):
        bound = 1.0 / np.sqrt(fan_in)
        return jax.random.uniform(k, shape, jnp.float32, -bound, bound)

    return {
        "w1": u(ks[0], (C1_OUT, C1_IN, K1, K1), C1_IN * K1 * K1),
        "b1": u(ks[1], (C1_OUT,), C1_IN * K1 * K1),
        "w2": u(ks[2], (C2_OUT, C1_OUT, K2, K2), C1_OUT * K2 * K2),
        "b2": u(ks[3], (C2_OUT,), C1_OUT * K2 * K2),
        "wc": u(ks[4], (NUM_CLASSES, C2_OUT * N_SP2), C2_OUT * N_SP2),
        "bc": u(ks[5], (NUM_CLASSES,), C2_OUT * N_SP2),
    }


def reference_forward(params, x):
    # f32 reference on bf16-rounded inputs (kernel matmuls run in bf16).
    rt = lambda a: a.astype(jnp.bfloat16).astype(jnp.float32)
    dn = ("NCHW", "OIHW", "NCHW")
    h = jax.lax.conv_general_dilated(rt(x), rt(params["w1"]), (S1, S1), "VALID",
                                     dimension_numbers=dn)
    h = jax.nn.relu(h + params["b1"][None, :, None, None])
    h = jax.lax.conv_general_dilated(h, rt(params["w2"]), (S2, S2), "VALID",
                                     dimension_numbers=dn)
    h = jax.nn.relu(h + params["b2"][None, :, None, None])
    h = h.reshape(h.shape[0], -1)
    return h @ rt(params["wc"]).T + params["bc"]


if __name__ == "__main__":
    key = jax.random.PRNGKey(0)
    pkey, xkey = jax.random.split(key)
    params = init_params(pkey)
    prep = prepare_params(params)        # one-time weight transform (not per call)

    # MNIST-shaped input (required by Linear(50*4*4, 10)): batch=2, 1x28x28.
    x = jax.random.normal(xkey, (2, C1_IN, H_IN, H_IN), jnp.float32)

    fwd = jax.jit(mnist_net_forward)
    out = jax.block_until_ready(fwd(prep, x))
    assert out.shape == (2, NUM_CLASSES)

    ref = reference_forward(params, x)
    rel_err = jnp.max(jnp.abs(out - ref)) / (jnp.max(jnp.abs(ref)) + 1e-6)
    assert rel_err < 3e-2, f"Pallas output mismatch vs reference (rel={rel_err})"

    print("KERNEL_OK")
</pallas_src>

<mosaic_0001>
module attributes {stable_mosaic.version = 11 : i64} {
  func.func @_fused_mnist_kernel(%arg0: i32, %arg1: memref<1152x32xbf16, #tpu.memory_space<vmem>>, %arg2: memref<32x128xbf16, #tpu.memory_space<vmem>>, %arg3: memref<1x128xf32, #tpu.memory_space<vmem>>, %arg4: memref<3200x128xbf16, #tpu.memory_space<vmem>>, %arg5: memref<1x128xf32, #tpu.memory_space<vmem>>, %arg6: memref<2048x128xbf16, #tpu.memory_space<vmem>>, %arg7: memref<1x128xf32, #tpu.memory_space<vmem>>, %arg8: memref<8x128xf32, #tpu.memory_space<vmem>>, %arg9: memref<8x144x128xf32, #tpu.memory_space<vmem>>, %arg10: memref<8x16x3200xbf16, #tpu.memory_space<vmem>>, %arg11: memref<8x16x128xbf16, #tpu.memory_space<vmem>>) attributes {dimension_semantics = [#tpu.dimension_semantics<parallel>], iteration_bounds = array<i64: 1>, scalar_prefetch = 0 : i64, scratch_operands = 3 : i64, tpu.core_type = #tpu.core_type<tc>, window_params = [{transform_indices = @transform_0, window_bounds = array<i64: 1152, 32>}, {pipeline_mode = #tpu.pipeline_mode<synchronous>, transform_indices = @transform_1, window_bounds = array<i64: 32, 128>}, {pipeline_mode = #tpu.pipeline_mode<synchronous>, transform_indices = @transform_2, window_bounds = array<i64: 1, 128>}, {pipeline_mode = #tpu.pipeline_mode<synchronous>, transform_indices = @transform_3, window_bounds = array<i64: 3200, 128>}, {pipeline_mode = #tpu.pipeline_mode<synchronous>, transform_indices = @transform_4, window_bounds = array<i64: 1, 128>}, {pipeline_mode = #tpu.pipeline_mode<synchronous>, transform_indices = @transform_5, window_bounds = array<i64: 2048, 128>}, {pipeline_mode = #tpu.pipeline_mode<synchronous>, transform_indices = @transform_6, window_bounds = array<i64: 1, 128>}, {transform_indices = @transform_7, window_bounds = array<i64: 8, 128>}]} {
    %c0 = arith.constant 0 : index
    %c0_0 = arith.constant 0 : index
    %0 = vector.load %arg1[%c0, %c0_0] : memref<1152x32xbf16, #tpu.memory_space<vmem>>, vector<1152x32xbf16>
    %c0_1 = arith.constant 0 : index
    %c0_2 = arith.constant 0 : index
    %1 = vector.load %arg2[%c0_1, %c0_2] : memref<32x128xbf16, #tpu.memory_space<vmem>>, vector<32x128xbf16>
    %cst = arith.constant dense<0.000000e+00> : vector<1152x128xf32>
    %2 = tpu.matmul %0, %1, %cst {dimension_numbers = #tpu.dot_dimension_numbers<[1], [0], [0], [1], [0, 0, 1, 1], [], []>} : vector<1152x32xbf16>, vector<32x128xbf16>, vector<1152x128xf32> -> vector<1152x128xf32>
    %c0_3 = arith.constant 0 : index
    %c0_4 = arith.constant 0 : index
    %3 = vector.load %arg3[%c0_3, %c0_4] : memref<1x128xf32, #tpu.memory_space<vmem>>, vector<1x128xf32>
    %4 = vector.broadcast %3 : vector<1x128xf32> to vector<1152x128xf32>
    %5 = arith.addf %2, %4 : vector<1152x128xf32>
    %cst_5 = arith.constant 0.000000e+00 : f32
    %6 = vector.broadcast %cst_5 : f32 to vector<1152x128xf32>
    %7 = arith.maximumf %5, %6 : vector<1152x128xf32>
    %8 = vector.shape_cast %7 : vector<1152x128xf32> to vector<8x144x128xf32>
    %c0_6 = arith.constant 0 : index
    %c0_7 = arith.constant 0 : index
    %c0_8 = arith.constant 0 : index
    %9 = vector.load %arg9[%c0_6, %c0_7, %c0_8] : memref<8x144x128xf32, #tpu.memory_space<vmem>>, vector<8x144x128xf32>
    tpu.vector_store %arg9[%c0_6, %c0_7, %c0_8], %8 {strides = array<i32>} : memref<8x144x128xf32, #tpu.memory_space<vmem>>, vector<8x144x128xf32>,
    %c0_9 = arith.constant 0 : index
    %c0_10 = arith.constant 0 : index
    %c0_11 = arith.constant 0 : index
    %10 = tpu.strided_load %arg9[%c0_9, %c0_10, %c0_11] {strides = array<i32: 1, 2, 1>} : memref<8x144x128xf32, #tpu.memory_space<vmem>>, vector<8x4x128xf32>
    %11 = arith.truncf %10 : vector<8x4x128xf32> to vector<8x4x128xbf16>
    %c0_12 = arith.constant 0 : index
    %c0_13 = arith.constant 0 : index
    %c0_14 = arith.constant 0 : index
    %12 = vector.load %arg10[%c0_12, %c0_13, %c0_14] : memref<8x16x3200xbf16, #tpu.memory_space<vmem>>, vector<8x4x128xbf16>
    tpu.vector_store %arg10[%c0_12, %c0_13, %c0_14], %11 {strides = array<i32>} : memref<8x16x3200xbf16, #tpu.memory_space<vmem>>, vector<8x4x128xbf16>,
    %c0_15 = arith.constant 0 : index
    %c24 = arith.constant 24 : index
    %c0_16 = arith.constant 0 : index
    %13 = tpu.strided_load %arg9[%c0_15, %c24, %c0_16] {strides = array<i32: 1, 2, 1>} : memref<8x144x128xf32, #tpu.memory_space<vmem>>, vector<8x4x128xf32>
    %14 = arith.truncf %13 : vector<8x4x128xf32> to vector<8x4x128xbf16>
    %c0_17 = arith.constant 0 : index
    %c4 = arith.constant 4 : index
    %c0_18 = arith.constant 0 : index
    %15 = vector.load %arg10[%c0_17, %c4, %c0_18] : memref<8x16x3200xbf16, #tpu.memory_space<vmem>>, vector<8x4x128xbf16>
    tpu.vector_store %arg10[%c0_17, %c4, %c0_18], %14 {strides = array<i32>} : memref<8x16x3200xbf16, #tpu.memory_space<vmem>>, vector<8x4x128xbf16>,
    %c0_19 = arith.constant 0 : index
    %c48 = arith.constant 48 : index
    %c0_20 = arith.constant 0 : index
    %16 = tpu.strided_load %arg9[%c0_19, %c48, %c0_20] {strides = array<i32: 1, 2, 1>} : memref<8x144x128xf32, #tpu.memory_space<vmem>>, vector<8x4x128xf32>
    %17 = arith.truncf %16 : vector<8x4x128xf32> to vector<8x4x128xbf16>
    %c0_21 = arith.constant 0 : index
    %c8 = arith.constant 8 : index
    %c0_22 = arith.constant 0 : index
    %18 = vector.load %arg10[%c0_21, %c8, %c0_22] : memref<8x16x3200xbf16, #tpu.memory_space<vmem>>, vector<8x4x128xbf16>
    tpu.vector_store %arg10[%c0_21, %c8, %c0_22], %17 {strides = array<i32>} : memref<8x16x3200xbf16, #tpu.memory_space<vmem>>, vector<8x4x128xbf16>,
    %c0_23 = arith.constant 0 : index
    %c72 = arith.constant 72 : index
    %c0_24 = arith.constant 0 : index
    %19 = tpu.strided_load %arg9[%c0_23, %c72, %c0_24] {strides = array<i32: 1, 2, 1>} : memref<8x144x128xf32, #tpu.memory_space<vmem>>, vector<8x4x128xf32>
    %20 = arith.truncf %19 : vector<8x4x128xf32> to vector<8x4x128xbf16>
    %c0_25 = arith.constant 0 : index
    %c12 = arith.constant 12 : index
    %c0_26 = arith.constant 0 : index
    %21 = vector.load %arg10[%c0_25, %c12, %c0_26] : memref<8x16x3200xbf16, #tpu.memory_space<vmem>>, vector<8x4x128xbf16>
    tpu.vector_store %arg10[%c0_25, %c12, %c0_26], %20 {strides = array<i32>} : memref<8x16x3200xbf16, #tpu.memory_space<vmem>>, vector<8x4x128xbf16>,
    %c0_27 = arith.constant 0 : index
    %c1 = arith.constant 1 : index
    %c0_28 = arith.constant 0 : index
    %22 = tpu.strided_load %arg9[%c0_27, %c1, %c0_28] {strides = array<i32: 1, 2, 1>} : memref<8x144x128xf32, #tpu.memory_space<vmem>>, vector<8x4x128xf32>
    %23 = arith.truncf %22 : vector<8x4x128xf32> to vector<8x4x128xbf16>
    %c0_29 = arith.constant 0 : index
    %c0_30 = arith.constant 0 : index
    %c128 = arith.constant 128 : index
    %24 = vector.load %arg10[%c0_29, %c0_30, %c128] : memref<8x16x3200xbf16, #tpu.memory_space<vmem>>, vector<8x4x128xbf16>
    tpu.vector_store %arg10[%c0_29, %c0_30, %c128], %23 {strides = array<i32>} : memref<8x16x3200xbf16, #tpu.memory_space<vmem>>, vector<8x4x128xbf16>,
    %c0_31 = arith.constant 0 : index
    %c25 = arith.constant 25 : index
    %c0_32 = arith.constant 0 : index
    %25 = tpu.strided_load %arg9[%c0_31, %c25, %c0_32] {strides = array<i32: 1, 2, 1>} : memref<8x144x128xf32, #tpu.memory_space<vmem>>, vector<8x4x128xf32>
    %26 = arith.truncf %25 : vector<8x4x128xf32> to vector<8x4x128xbf16>
    %c0_33 = arith.constant 0 : index
    %c4_34 = arith.constant 4 : index
    %c128_35 = arith.constant 128 : index
    %27 = vector.load %arg10[%c0_33, %c4_34, %c128_35] : memref<8x16x3200xbf16, #tpu.memory_space<vmem>>, vector<8x4x128xbf16>
    tpu.vector_store %arg10[%c0_33, %c4_34, %c128_35], %26 {strides = array<i32>} : memref<8x16x3200xbf16, #tpu.memory_space<vmem>>, vector<8x4x128xbf16>,
    %c0_36 = arith.constant 0 : index
    %c49 = arith.constant 49 : index
    %c0_37 = arith.constant 0 : index
    %28 = tpu.strided_load %arg9[%c0_36, %c49, %c0_37] {strides = array<i32: 1, 2, 1>} : memref<8x144x128xf32, #tpu.memory_space<vmem>>, vector<8x4x128xf32>
    %29 = arith.truncf %28 : vector<8x4x128xf32> to vector<8x4x128xbf16>
    %c0_38 = arith.constant 0 : index
    %c8_39 = arith.constant 8 : index
    %c128_40 = arith.constant 128 : index
    %30 = vector.load %arg10[%c0_38, %c8_39, %c128_40] : memref<8x16x3200xbf16, #tpu.memory_space<vmem>>, vector<8x4x128xbf16>
    tpu.vector_store %arg10[%c0_38, %c8_39, %c128_40], %29 {strides = array<i32>} : memref<8x16x3200xbf16, #tpu.memory_space<vmem>>, vector<8x4x128xbf16>,
    %c0_41 = arith.constant 0 : index
    %c73 = arith.constant 73 : index
    %c0_42 = arith.constant 0 : index
    %31 = tpu.strided_load %arg9[%c0_41, %c73, %c0_42] {strides = array<i32: 1, 2, 1>} : memref<8x144x128xf32, #tpu.memory_space<vmem>>, vector<8x4x128xf32>
    %32 = arith.truncf %31 : vector<8x4x128xf32> to vector<8x4x128xbf16>
    %c0_43 = arith.constant 0 : index
    %c12_44 = arith.constant 12 : index
    %c128_45 = arith.constant 128 : index
    %33 = vector.load %arg10[%c0_43, %c12_44, %c128_45] : memref<8x16x3200xbf16, #tpu.memory_space<vmem>>, vector<8x4x128xbf16>
    tpu.vector_store %arg10[%c0_43, %c12_44, %c128_45], %32 {strides = array<i32>} : memref<8x16x3200xbf16, #tpu.memory_space<vmem>>, vector<8x4x128xbf16>,
    %c0_46 = arith.constant 0 : index
    %c2 = arith.constant 2 : index
    %c0_47 = arith.constant 0 : index
    %34 = tpu.strided_load %arg9[%c0_46, %c2, %c0_47] {strides = array<i32: 1, 2, 1>} : memref<8x144x128xf32, #tpu.memory_space<vmem>>, vector<8x4x128xf32>
    %35 = arith.truncf %34 : vector<8x4x128xf32> to vector<8x4x128xbf16>
    %c0_48 = arith.constant 0 : index
    %c0_49 = arith.constant 0 : index
    %c256 = arith.constant 256 : index
    %36 = vector.load %arg10[%c0_48, %c0_49, %c256] : memref<8x16x3200xbf16, #tpu.memory_space<vmem>>, vector<8x4x128xbf16>
    tpu.vector_store %arg10[%c0_48, %c0_49, %c256], %35 {strides = array<i32>} : memref<8x16x3200xbf16, #tpu.memory_space<vmem>>, vector<8x4x128xbf16>,
    %c0_50 = arith.constant 0 : index
    %c26 = arith.constant 26 : index
    %c0_51 = arith.constant 0 : index
    %37 = tpu.strided_load %arg9[%c0_50, %c26, %c0_51] {strides = array<i32: 1, 2, 1>} : memref<8x144x128xf32, #tpu.memory_space<vmem>>, vector<8x4x128xf32>
    %38 = arith.truncf %37 : vector<8x4x128xf32> to vector<8x4x128xbf16>
    %c0_52 = arith.constant 0 : index
    %c4_53 = arith.constant 4 : index
    %c256_54 = arith.constant 256 : index
    %39 = vector.load %arg10[%c0_52, %c4_53, %c256_54] : memref<8x16x3200xbf16, #tpu.memory_space<vmem>>, vector<8x4x128xbf16>
    tpu.vector_store %arg10[%c0_52, %c4_53, %c256_54], %38 {strides = array<i32>} : memref<8x16x3200xbf16, #tpu.memory_space<vmem>>, vector<8x4x128xbf16>,
    %c0_55 = arith.constant 0 : index
    %c50 = arith.constant 50 : index
    %c0_56 = arith.constant 0 : index
    %40 = tpu.strided_load %arg9[%c0_55, %c50, %c0_56] {strides = array<i32: 1, 2, 1>} : memref<8x144x128xf32, #tpu.memory_space<vmem>>, vector<8x4x128xf32>
    %41 = arith.truncf %40 : vector<8x4x128xf32> to vector<8x4x128xbf16>
    %c0_57 = arith.constant 0 : index
    %c8_58 = arith.constant 8 : index
    %c256_59 = arith.constant 256 : index
    %42 = vector.load %arg10[%c0_57, %c8_58, %c256_59] : memref<8x16x3200xbf16, #tpu.memory_space<vmem>>, vector<8x4x128xbf16>
    tpu.vector_store %arg10[%c0_57, %c8_58, %c256_59], %41 {strides = array<i32>} : memref<8x16x3200xbf16, #tpu.memory_space<vmem>>, vector<8x4x128xbf16>,
    %c0_60 = arith.constant 0 : index
    %c74 = arith.constant 74 : index
    %c0_61 = arith.constant 0 : index
    %43 = tpu.strided_load %arg9[%c0_60, %c74, %c0_61] {strides = array<i32: 1, 2, 1>} : memref<8x144x128xf32, #tpu.memory_space<vmem>>, vector<8x4x128xf32>
    %44 = arith.truncf %43 : vector<8x4x128xf32> to vector<8x4x128xbf16>
    %c0_62 = arith.constant 0 : index
    %c12_63 = arith.constant 12 : index
    %c256_64 = arith.constant 256 : index
    %45 = vector.load %arg10[%c0_62, %c12_63, %c256_64] : memref<8x16x3200xbf16, #tpu.memory_space<vmem>>, vector<8x4x128xbf16>
    tpu.vector_store %arg10[%c0_62, %c12_63, %c256_64], %44 {strides = array<i32>} : memref<8x16x3200xbf16, #tpu.memory_space<vmem>>, vector<8x4x128xbf16>,
    %c0_65 = arith.constant 0 : index
    %c3 = arith.constant 3 : index
    %c0_66 = arith.constant 0 : index
    %46 = tpu.strided_load %arg9[%c0_65, %c3, %c0_66] {strides = array<i32: 1, 2, 1>} : memref<8x144x128xf32, #tpu.memory_space<vmem>>, vector<8x4x128xf32>
    %47 = arith.truncf %46 : vector<8x4x128xf32> to vector<8x4x128xbf16>
    %c0_67 = arith.constant 0 : index
    %c0_68 = arith.constant 0 : index
    %c384 = arith.constant 384 : index
    %48 = vector.load %arg10[%c0_67, %c0_68, %c384] : memref<8x16x3200xbf16, #tpu.memory_space<vmem>>, vector<8x4x128xbf16>
    tpu.vector_store %arg10[%c0_67, %c0_68, %c384], %47 {strides = array<i32>} : memref<8x16x3200xbf16, #tpu.memory_space<vmem>>, vector<8x4x128xbf16>,
    %c0_69 = arith.constant 0 : index
    %c27 = arith.constant 27 : index
    %c0_70 = arith.constant 0 : index
    %49 = tpu.strided_load %arg9[%c0_69, %c27, %c0_70] {strides = array<i32: 1, 2, 1>} : memref<8x144x128xf32, #tpu.memory_space<vmem>>, vector<8x4x128xf32>
    %50 = arith.truncf %49 : vector<8x4x128xf32> to vector<8x4x128xbf16>
    %c0_71 = arith.constant 0 : index
    %c4_72 = arith.constant 4 : index
    %c384_73 = arith.constant 384 : index
    %51 = vector.load %arg10[%c0_71, %c4_72, %c384_73] : memref<8x16x3200xbf16, #tpu.memory_space<vmem>>, vector<8x4x128xbf16>
    tpu.vector_store %arg10[%c0_71, %c4_72, %c384_73], %50 {strides = array<i32>} : memref<8x16x3200xbf16, #tpu.memory_space<vmem>>, vector<8x4x128xbf16>,
    %c0_74 = arith.constant 0 : index
    %c51 = arith.constant 51 : index
    %c0_75 = arith.constant 0 : index
    %52 = tpu.strided_load %arg9[%c0_74, %c51, %c0_75] {strides = array<i32: 1, 2, 1>} : memref<8x144x128xf32, #tpu.memory_space<vmem>>, vector<8x4x128xf32>
    %53 = arith.truncf %52 : vector<8x4x128xf32> to vector<8x4x128xbf16>
    %c0_76 = arith.constant 0 : index
    %c8_77 = arith.constant 8 : index
    %c384_78 = arith.constant 384 : index
    %54 = vector.load %arg10[%c0_76, %c8_77, %c384_78] : memref<8x16x3200xbf16, #tpu.memory_space<vmem>>, vector<8x4x128xbf16>
    tpu.vector_store %arg10[%c0_76, %c8_77, %c384_78], %53 {strides = array<i32>} : memref<8x16x3200xbf16, #tpu.memory_space<vmem>>, vector<8x4x128xbf16>,
    %c0_79 = arith.constant 0 : index
    %c75 = arith.constant 75 : index
    %c0_80 = arith.constant 0 : index
    %55 = tpu.strided_load %arg9[%c0_79, %c75, %c0_80] {strides = array<i32: 1, 2, 1>} : memref<8x144x128xf32, #tpu.memory_space<vmem>>, vector<8x4x128xf32>
    %56 = arith.truncf %55 : vector<8x4x128xf32> to vector<8x4x128xbf16>
    %c0_81 = arith.constant 0 : index
    %c12_82 = arith.constant 12 : index
    %c384_83 = arith.constant 384 : index
    %57 = vector.load %arg10[%c0_81, %c12_82, %c384_83] : memref<8x16x3200xbf16, #tpu.memory_space<vmem>>, vector<8x4x128xbf16>
    tpu.vector_store %arg10[%c0_81, %c12_82, %c384_83], %56 {strides = array<i32>} : memref<8x16x3200xbf16, #tpu.memory_space<vmem>>, vector<8x4x128xbf16>,
    %c0_84 = arith.constant 0 : index
    %c4_85 = arith.constant 4 : index
    %c0_86 = arith.constant 0 : index
    %58 = tpu.strided_load %arg9[%c0_84, %c4_85, %c0_86] {strides = array<i32: 1, 2, 1>} : memref<8x144x128xf32, #tpu.memory_space<vmem>>, vector<8x4x128xf32>
    %59 = arith.truncf %58 : vector<8x4x128xf32> to vector<8x4x128xbf16>
    %c0_87 = arith.constant 0 : index
    %c0_88 = arith.constant 0 : index
    %c512 = arith.constant 512 : index
    %60 = vector.load %arg10[%c0_87, %c0_88, %c512] : memref<8x16x3200xbf16, #tpu.memory_space<vmem>>, vector<8x4x128xbf16>
    tpu.vector_store %arg10[%c0_87, %c0_88, %c512], %59 {strides = array<i32>} : memref<8x16x3200xbf16, #tpu.memory_space<vmem>>, vector<8x4x128xbf16>,
    %c0_89 = arith.constant 0 : index
    %c28 = arith.constant 28 : index
    %c0_90 = arith.constant 0 : index
    %61 = tpu.strided_load %arg9[%c0_89, %c28, %c0_90] {strides = array<i32: 1, 2, 1>} : memref<8x144x128xf32, #tpu.memory_space<vmem>>, vector<8x4x128xf32>
    %62 = arith.truncf %61 : vector<8x4x128xf32> to vector<8x4x128xbf16>
    %c0_91 = arith.constant 0 : index
    %c4_92 = arith.constant 4 : index
    %c512_93 = arith.constant 512 : index
    %63 = vector.load %arg10[%c0_91, %c4_92, %c512_93] : memref<8x16x3200xbf16, #tpu.memory_space<vmem>>, vector<8x4x128xbf16>
    tpu.vector_store %arg10[%c0_91, %c4_92, %c512_93], %62 {strides = array<i32>} : memref<8x16x3200xbf16, #tpu.memory_space<vmem>>, vector<8x4x128xbf16>,
    %c0_94 = arith.constant 0 : index
    %c52 = arith.constant 52 : index
    %c0_95 = arith.constant 0 : index
    %64 = tpu.strided_load %arg9[%c0_94, %c52, %c0_95] {strides = array<i32: 1, 2, 1>} : memref<8x144x128xf32, #tpu.memory_space<vmem>>, vector<8x4x128xf32>
    %65 = arith.truncf %64 : vector<8x4x128xf32> to vector<8x4x128xbf16>
    %c0_96 = arith.constant 0 : index
    %c8_97 = arith.constant 8 : index
    %c512_98 = arith.constant 512 : index
    %66 = vector.load %arg10[%c0_96, %c8_97, %c512_98] : memref<8x16x3200xbf16, #tpu.memory_space<vmem>>, vector<8x4x128xbf16>
    tpu.vector_store %arg10[%c0_96, %c8_97, %c512_98], %65 {strides = array<i32>} : memref<8x16x3200xbf16, #tpu.memory_space<vmem>>, vector<8x4x128xbf16>,
    %c0_99 = arith.constant 0 : index
    %c76 = arith.constant 76 : index
    %c0_100 = arith.constant 0 : index
    %67 = tpu.strided_load %arg9[%c0_99, %c76, %c0_100] {strides = array<i32: 1, 2, 1>} : memref<8x144x128xf32, #tpu.memory_space<vmem>>, vector<8x4x128xf32>
    %68 = arith.truncf %67 : vector<8x4x128xf32> to vector<8x4x128xbf16>
    %c0_101 = arith.constant 0 : index
    %c12_102 = arith.constant 12 : index
    %c512_103 = arith.constant 512 : index
    %69 = vector.load %arg10[%c0_101, %c12_102, %c512_103] : memref<8x16x3200xbf16, #tpu.memory_space<vmem>>, vector<8x4x128xbf16>
    tpu.vector_store %arg10[%c0_101, %c12_102, %c512_103], %68 {strides = array<i32>} : memref<8x16x3200xbf16, #tpu.memory_space<vmem>>, vector<8x4x128xbf16>,
    %c0_104 = arith.constant 0 : index
    %c12_105 = arith.constant 12 : index
    %c0_106 = arith.constant 0 : index
    %70 = tpu.strided_load %arg9[%c0_104, %c12_105, %c0_106] {strides = array<i32: 1, 2, 1>} : memref<8x144x128xf32, #tpu.memory_space<vmem>>, vector<8x4x128xf32>
    %71 = arith.truncf %70 : vector<8x4x128xf32> to vector<8x4x128xbf16>
    %c0_107 = arith.constant 0 : index
    %c0_108 = arith.constant 0 : index
    %c640 = arith.constant 640 : index
    %72 = vector.load %arg10[%c0_107, %c0_108, %c640] : memref<8x16x3200xbf16, #tpu.memory_space<vmem>>, vector<8x4x128xbf16>
    tpu.vector_store %arg10[%c0_107, %c0_108, %c640], %71 {strides = array<i32>} : memref<8x16x3200xbf16, #tpu.memory_space<vmem>>, vector<8x4x128xbf16>,
    %c0_109 = arith.constant 0 : index
    %c36 = arith.constant 36 : index
    %c0_110 = arith.constant 0 : index
    %73 = tpu.strided_load %arg9[%c0_109, %c36, %c0_110] {strides = array<i32: 1, 2, 1>} : memref<8x144x128xf32, #tpu.memory_space<vmem>>, vector<8x4x128xf32>
    %74 = arith.truncf %73 : vector<8x4x128xf32> to vector<8x4x128xbf16>
    %c0_111 = arith.constant 0 : index
    %c4_112 = arith.constant 4 : index
    %c640_113 = arith.constant 640 : index
    %75 = vector.load %arg10[%c0_111, %c4_112, %c640_113] : memref<8x16x3200xbf16, #tpu.memory_space<vmem>>, vector<8x4x128xbf16>
    tpu.vector_store %arg10[%c0_111, %c4_112, %c640_113], %74 {strides = array<i32>} : memref<8x16x3200xbf16, #tpu.memory_space<vmem>>, vector<8x4x128xbf16>,
    %c0_114 = arith.constant 0 : index
    %c60 = arith.constant 60 : index
    %c0_115 = arith.constant 0 : index
    %76 = tpu.strided_load %arg9[%c0_114, %c60, %c0_115] {strides = array<i32: 1, 2, 1>} : memref<8x144x128xf32, #tpu.memory_space<vmem>>, vector<8x4x128xf32>
    %77 = arith.truncf %76 : vector<8x4x128xf32> to vector<8x4x128xbf16>
    %c0_116 = arith.constant 0 : index
    %c8_117 = arith.constant 8 : index
    %c640_118 = arith.constant 640 : index
    %78 = vector.load %arg10[%c0_116, %c8_117, %c640_118] : memref<8x16x3200xbf16, #tpu.memory_space<vmem>>, vector<8x4x128xbf16>
    tpu.vector_store %arg10[%c0_116, %c8_117, %c640_118], %77 {strides = array<i32>} : memref<8x16x3200xbf16, #tpu.memory_space<vmem>>, vector<8x4x128xbf16>,
    %c0_119 = arith.constant 0 : index
    %c84 = arith.constant 84 : index
    %c0_120 = arith.constant 0 : index
    %79 = tpu.strided_load %arg9[%c0_119, %c84, %c0_120] {strides = array<i32: 1, 2, 1>} : memref<8x144x128xf32, #tpu.memory_space<vmem>>, vector<8x4x128xf32>
    %80 = arith.truncf %79 : vector<8x4x128xf32> to vector<8x4x128xbf16>
    %c0_121 = arith.constant 0 : index
    %c12_122 = arith.constant 12 : index
    %c640_123 = arith.constant 640 : index
    %81 = vector.load %arg10[%c0_121, %c12_122, %c640_123] : memref<8x16x3200xbf16, #tpu.memory_space<vmem>>, vector<8x4x128xbf16>
    tpu.vector_store %arg10[%c0_121, %c12_122, %c640_123], %80 {strides = array<i32>} : memref<8x16x3200xbf16, #tpu.memory_space<vmem>>, vector<8x4x128xbf16>,
    %c0_124 = arith.constant 0 : index
    %c13 = arith.constant 13 : index
    %c0_125 = arith.constant 0 : index
    %82 = tpu.strided_load %arg9[%c0_124, %c13, %c0_125] {strides = array<i32: 1, 2, 1>} : memref<8x144x128xf32, #tpu.memory_space<vmem>>, vector<8x4x128xf32>
    %83 = arith.truncf %82 : vector<8x4x128xf32> to vector<8x4x128xbf16>
    %c0_126 = arith.constant 0 : index
    %c0_127 = arith.constant 0 : index
    %c768 = arith.constant 768 : index
    %84 = vector.load %arg10[%c0_126, %c0_127, %c768] : memref<8x16x3200xbf16, #tpu.memory_space<vmem>>, vector<8x4x128xbf16>
    tpu.vector_store %arg10[%c0_126, %c0_127, %c768], %83 {strides = array<i32>} : memref<8x16x3200xbf16, #tpu.memory_space<vmem>>, vector<8x4x128xbf16>,
    %c0_128 = arith.constant 0 : index
    %c37 = arith.constant 37 : index
    %c0_129 = arith.constant 0 : index
    %85 = tpu.strided_load %arg9[%c0_128, %c37, %c0_129] {strides = array<i32: 1, 2, 1>} : memref<8x144x128xf32, #tpu.memory_space<vmem>>, vector<8x4x128xf32>
    %86 = arith.truncf %85 : vector<8x4x128xf32> to vector<8x4x128xbf16>
    %c0_130 = arith.constant 0 : index
    %c4_131 = arith.constant 4 : index
    %c768_132 = arith.constant 768 : index
    %87 = vector.load %arg10[%c0_130, %c4_131, %c768_132] : memref<8x16x3200xbf16, #tpu.memory_space<vmem>>, vector<8x4x128xbf16>
    tpu.vector_store %arg10[%c0_130, %c4_131, %c768_132], %86 {strides = array<i32>} : memref<8x16x3200xbf16, #tpu.memory_space<vmem>>, vector<8x4x128xbf16>,
    %c0_133 = arith.constant 0 : index
    %c61 = arith.constant 61 : index
    %c0_134 = arith.constant 0 : index
    %88 = tpu.strided_load %arg9[%c0_133, %c61, %c0_134] {strides = array<i32: 1, 2, 1>} : memref<8x144x128xf32, #tpu.memory_space<vmem>>, vector<8x4x128xf32>
    %89 = arith.truncf %88 : vector<8x4x128xf32> to vector<8x4x128xbf16>
    %c0_135 = arith.constant 0 : index
    %c8_136 = arith.constant 8 : index
    %c768_137 = arith.constant 768 : index
    %90 = vector.load %arg10[%c0_135, %c8_136, %c768_137] : memref<8x16x3200xbf16, #tpu.memory_space<vmem>>, vector<8x4x128xbf16>
    tpu.vector_store %arg10[%c0_135, %c8_136, %c768_137], %89 {strides = array<i32>} : memref<8x16x3200xbf16, #tpu.memory_space<vmem>>, vector<8x4x128xbf16>,
    %c0_138 = arith.constant 0 : index
    %c85 = arith.constant 85 : index
    %c0_139 = arith.constant 0 : index
    %91 = tpu.strided_load %arg9[%c0_138, %c85, %c0_139] {strides = array<i32: 1, 2, 1>} : memref<8x144x128xf32, #tpu.memory_space<vmem>>, vector<8x4x128xf32>
    %92 = arith.truncf %91 : vector<8x4x128xf32> to vector<8x4x128xbf16>
    %c0_140 = arith.constant 0 : index
    %c12_141 = arith.constant 12 : index
    %c768_142 = arith.constant 768 : index
    %93 = vector.load %arg10[%c0_140, %c12_141, %c768_142] : memref<8x16x3200xbf16, #tpu.memory_space<vmem>>, vector<8x4x128xbf16>
    tpu.vector_store %arg10[%c0_140, %c12_141, %c768_142], %92 {strides = array<i32>} : memref<8x16x3200xbf16, #tpu.memory_space<vmem>>, vector<8x4x128xbf16>,
    %c0_143 = arith.constant 0 : index
    %c14 = arith.constant 14 : index
    %c0_144 = arith.constant 0 : index
    %94 = tpu.strided_load %arg9[%c0_143, %c14, %c0_144] {strides = array<i32: 1, 2, 1>} : memref<8x144x128xf32, #tpu.memory_space<vmem>>, vector<8x4x128xf32>
    %95 = arith.truncf %94 : vector<8x4x128xf32> to vector<8x4x128xbf16>
    %c0_145 = arith.constant 0 : index
    %c0_146 = arith.constant 0 : index
    %c896 = arith.constant 896 : index
    %96 = vector.load %arg10[%c0_145, %c0_146, %c896] : memref<8x16x3200xbf16, #tpu.memory_space<vmem>>, vector<8x4x128xbf16>
    tpu.vector_store %arg10[%c0_145, %c0_146, %c896], %95 {strides = array<i32>} : memref<8x16x3200xbf16, #tpu.memory_space<vmem>>, vector<8x4x128xbf16>,
    %c0_147 = arith.constant 0 : index
    %c38 = arith.constant 38 : index
    %c0_148 = arith.constant 0 : index
    %97 = tpu.strided_load %arg9[%c0_147, %c38, %c0_148] {strides = array<i32: 1, 2, 1>} : memref<8x144x128xf32, #tpu.memory_space<vmem>>, vector<8x4x128xf32>
    %98 = arith.truncf %97 : vector<8x4x128xf32> to vector<8x4x128xbf16>
    %c0_149 = arith.constant 0 : index
    %c4_150 = arith.constant 4 : index
    %c896_151 = arith.constant 896 : index
    %99 = vector.load %arg10[%c0_149, %c4_150, %c896_151] : memref<8x16x3200xbf16, #tpu.memory_space<vmem>>, vector<8x4x128xbf16>
    tpu.vector_store %arg10[%c0_149, %c4_150, %c896_151], %98 {strides = array<i32>} : memref<8x16x3200xbf16, #tpu.memory_space<vmem>>, vector<8x4x128xbf16>,
    %c0_152 = arith.constant 0 : index
    %c62 = arith.constant 62 : index
    %c0_153 = arith.constant 0 : index
    %100 = tpu.strided_load %arg9[%c0_152, %c62, %c0_153] {strides = array<i32: 1, 2, 1>} : memref<8x144x128xf32, #tpu.memory_space<vmem>>, vector<8x4x128xf32>
    %101 = arith.truncf %100 : vector<8x4x128xf32> to vector<8x4x128xbf16>
    %c0_154 = arith.constant 0 : index
    %c8_155 = arith.constant 8 : index
    %c896_156 = arith.constant 896 : index
    %102 = vector.load %arg10[%c0_154, %c8_155, %c896_156] : memref<8x16x3200xbf16, #tpu.memory_space<vmem>>, vector<8x4x128xbf16>
    tpu.vector_store %arg10[%c0_154, %c8_155, %c896_156], %101 {strides = array<i32>} : memref<8x16x3200xbf16, #tpu.memory_space<vmem>>, vector<8x4x128xbf16>,
    %c0_157 = arith.constant 0 : index
    %c86 = arith.constant 86 : index
    %c0_158 = arith.constant 0 : index
    %103 = tpu.strided_load %arg9[%c0_157, %c86, %c0_158] {strides = array<i32: 1, 2, 1>} : memref<8x144x128xf32, #tpu.memory_space<vmem>>, vector<8x4x128xf32>
    %104 = arith.truncf %103 : vector<8x4x128xf32> to vector<8x4x128xbf16>
    %c0_159 = arith.constant 0 : index
    %c12_160 = arith.constant 12 : index
    %c896_161 = arith.constant 896 : index
    %105 = vector.load %arg10[%c0_159, %c12_160, %c896_161] : memref<8x16x3200xbf16, #tpu.memory_space<vmem>>, vector<8x4x128xbf16>
    tpu.vector_store %arg10[%c0_159, %c12_160, %c896_161], %104 {strides = array<i32>} : memref<8x16x3200xbf16, #tpu.memory_space<vmem>>, vector<8x4x128xbf16>,
    %c0_162 = arith.constant 0 : index
    %c15 = arith.constant 15 : index
    %c0_163 = arith.constant 0 : index
    %106 = tpu.strided_load %arg9[%c0_162, %c15, %c0_163] {strides = array<i32: 1, 2, 1>} : memref<8x144x128xf32, #tpu.memory_space<vmem>>, vector<8x4x128xf32>
    %107 = arith.truncf %106 : vector<8x4x128xf32> to vector<8x4x128xbf16>
    %c0_164 = arith.constant 0 : index
    %c0_165 = arith.constant 0 : index
    %c1024 = arith.constant 1024 : index
    %108 = vector.load %arg10[%c0_164, %c0_165, %c1024] : memref<8x16x3200xbf16, #tpu.memory_space<vmem>>, vector<8x4x128xbf16>
    tpu.vector_store %arg10[%c0_164, %c0_165, %c1024], %107 {strides = array<i32>} : memref<8x16x3200xbf16, #tpu.memory_space<vmem>>, vector<8x4x128xbf16>,
    %c0_166 = arith.constant 0 : index
    %c39 = arith.constant 39 : index
    %c0_167 = arith.constant 0 : index
    %109 = tpu.strided_load %arg9[%c0_166, %c39, %c0_167] {strides = array<i32: 1, 2, 1>} : memref<8x144x128xf32, #tpu.memory_space<vmem>>, vector<8x4x128xf32>
    %110 = arith.truncf %109 : vector<8x4x128xf32> to vector<8x4x128xbf16>
    %c0_168 = arith.constant 0 : index
    %c4_169 = arith.constant 4 : index
    %c1024_170 = arith.constant 1024 : index
    %111 = vector.load %arg10[%c0_168, %c4_169, %c1024_170] : memref<8x16x3200xbf16, #tpu.memory_space<vmem>>, vector<8x4x128xbf16>
    tpu.vector_store %arg10[%c0_168, %c4_169, %c1024_170], %110 {strides = array<i32>} : memref<8x16x3200xbf16, #tpu.memory_space<vmem>>, vector<8x4x128xbf16>,
    %c0_171 = arith.constant 0 : index
    %c63 = arith.constant 63 : index
    %c0_172 = arith.constant 0 : index
    %112 = tpu.strided_load %arg9[%c0_171, %c63, %c0_172] {strides = array<i32: 1, 2, 1>} : memref<8x144x128xf32, #tpu.memory_space<vmem>>, vector<8x4x128xf32>
    %113 = arith.truncf %112 : vector<8x4x128xf32> to vector<8x4x128xbf16>
    %c0_173 = arith.constant 0 : index
    %c8_174 = arith.constant 8 : index
    %c1024_175 = arith.constant 1024 : index
    %114 = vector.load %arg10[%c0_173, %c8_174, %c1024_175] : memref<8x16x3200xbf16, #tpu.memory_space<vmem>>, vector<8x4x128xbf16>
    tpu.vector_store %arg10[%c0_173, %c8_174, %c1024_175], %113 {strides = array<i32>} : memref<8x16x3200xbf16, #tpu.memory_space<vmem>>, vector<8x4x128xbf16>,
    %c0_176 = arith.constant 0 : index
    %c87 = arith.constant 87 : index
    %c0_177 = arith.constant 0 : index
    %115 = tpu.strided_load %arg9[%c0_176, %c87, %c0_177] {strides = array<i32: 1, 2, 1>} : memref<8x144x128xf32, #tpu.memory_space<vmem>>, vector<8x4x128xf32>
    %116 = arith.truncf %115 : vector<8x4x128xf32> to vector<8x4x128xbf16>
    %c0_178 = arith.constant 0 : index
    %c12_179 = arith.constant 12 : index
    %c1024_180 = arith.constant 1024 : index
    %117 = vector.load %arg10[%c0_178, %c12_179, %c1024_180] : memref<8x16x3200xbf16, #tpu.memory_space<vmem>>, vector<8x4x128xbf16>
    tpu.vector_store %arg10[%c0_178, %c12_179, %c1024_180], %116 {strides = array<i32>} : memref<8x16x3200xbf16, #tpu.memory_space<vmem>>, vector<8x4x128xbf16>,
    %c0_181 = arith.constant 0 : index
    %c16 = arith.constant 16 : index
    %c0_182 = arith.constant 0 : index
    %118 = tpu.strided_load %arg9[%c0_181, %c16, %c0_182] {strides = array<i32: 1, 2, 1>} : memref<8x144x128xf32, #tpu.memory_space<vmem>>, vector<8x4x128xf32>
    %119 = arith.truncf %118 : vector<8x4x128xf32> to vector<8x4x128xbf16>
    %c0_183 = arith.constant 0 : index
    %c0_184 = arith.constant 0 : index
    %c1152 = arith.constant 1152 : index
    %120 = vector.load %arg10[%c0_183, %c0_184, %c1152] : memref<8x16x3200xbf16, #tpu.memory_space<vmem>>, vector<8x4x128xbf16>
    tpu.vector_store %arg10[%c0_183, %c0_184, %c1152], %119 {strides = array<i32>} : memref<8x16x3200xbf16, #tpu.memory_space<vmem>>, vector<8x4x128xbf16>,
    %c0_185 = arith.constant 0 : index
    %c40 = arith.constant 40 : index
    %c0_186 = arith.constant 0 : index
    %121 = tpu.strided_load %arg9[%c0_185, %c40, %c0_186] {strides = array<i32: 1, 2, 1>} : memref<8x144x128xf32, #tpu.memory_space<vmem>>, vector<8x4x128xf32>
    %122 = arith.truncf %121 : vector<8x4x128xf32> to vector<8x4x128xbf16>
    %c0_187 = arith.constant 0 : index
    %c4_188 = arith.constant 4 : index
    %c1152_189 = arith.constant 1152 : index
    %123 = vector.load %arg10[%c0_187, %c4_188, %c1152_189] : memref<8x16x3200xbf16, #tpu.memory_space<vmem>>, vector<8x4x128xbf16>
    tpu.vector_store %arg10[%c0_187, %c4_188, %c1152_189], %122 {strides = array<i32>} : memref<8x16x3200xbf16, #tpu.memory_space<vmem>>, vector<8x4x128xbf16>,
    %c0_190 = arith.constant 0 : index
    %c64 = arith.constant 64 : index
    %c0_191 = arith.constant 0 : index
    %124 = tpu.strided_load %arg9[%c0_190, %c64, %c0_191] {strides = array<i32: 1, 2, 1>} : memref<8x144x128xf32, #tpu.memory_space<vmem>>, vector<8x4x128xf32>
    %125 = arith.truncf %124 : vector<8x4x128xf32> to vector<8x4x128xbf16>
    %c0_192 = arith.constant 0 : index
    %c8_193 = arith.constant 8 : index
    %c1152_194 = arith.constant 1152 : index
    %126 = vector.load %arg10[%c0_192, %c8_193, %c1152_194] : memref<8x16x3200xbf16, #tpu.memory_space<vmem>>, vector<8x4x128xbf16>
    tpu.vector_store %arg10[%c0_192, %c8_193, %c1152_194], %125 {strides = array<i32>} : memref<8x16x3200xbf16, #tpu.memory_space<vmem>>, vector<8x4x128xbf16>,
    %c0_195 = arith.constant 0 : index
    %c88 = arith.constant 88 : index
    %c0_196 = arith.constant 0 : index
    %127 = tpu.strided_load %arg9[%c0_195, %c88, %c0_196] {strides = array<i32: 1, 2, 1>} : memref<8x144x128xf32, #tpu.memory_space<vmem>>, vector<8x4x128xf32>
    %128 = arith.truncf %127 : vector<8x4x128xf32> to vector<8x4x128xbf16>
    %c0_197 = arith.constant 0 : index
    %c12_198 = arith.constant 12 : index
    %c1152_199 = arith.constant 1152 : index
    %129 = vector.load %arg10[%c0_197, %c12_198, %c1152_199] : memref<8x16x3200xbf16, #tpu.memory_space<vmem>>, vector<8x4x128xbf16>
    tpu.vector_store %arg10[%c0_197, %c12_198, %c1152_199], %128 {strides = array<i32>} : memref<8x16x3200xbf16, #tpu.memory_space<vmem>>, vector<8x4x128xbf16>,
    %c0_200 = arith.constant 0 : index
    %c24_201 = arith.constant 24 : index
    %c0_202 = arith.constant 0 : index
    %130 = tpu.strided_load %arg9[%c0_200, %c24_201, %c0_202] {strides = array<i32: 1, 2, 1>} : memref<8x144x128xf32, #tpu.memory_space<vmem>>, vector<8x4x128xf32>
    %131 = arith.truncf %130 : vector<8x4x128xf32> to vector<8x4x128xbf16>
    %c0_203 = arith.constant 0 : index
    %c0_204 = arith.constant 0 : index
    %c1280 = arith.constant 1280 : index
    %132 = vector.load %arg10[%c0_203, %c0_204, %c1280] : memref<8x16x3200xbf16, #tpu.memory_space<vmem>>, vector<8x4x128xbf16>
    tpu.vector_store %arg10[%c0_203, %c0_204, %c1280], %131 {strides = array<i32>} : memref<8x16x3200xbf16, #tpu.memory_space<vmem>>, vector<8x4x128xbf16>,
    %c0_205 = arith.constant 0 : index
    %c48_206 = arith.constant 48 : index
    %c0_207 = arith.constant 0 : index
    %133 = tpu.strided_load %arg9[%c0_205, %c48_206, %c0_207] {strides = array<i32: 1, 2, 1>} : memref<8x144x128xf32, #tpu.memory_space<vmem>>, vector<8x4x128xf32>
    %134 = arith.truncf %133 : vector<8x4x128xf32> to vector<8x4x128xbf16>
    %c0_208 = arith.constant 0 : index
    %c4_209 = arith.constant 4 : index
    %c1280_210 = arith.constant 1280 : index
    %135 = vector.load %arg10[%c0_208, %c4_209, %c1280_210] : memref<8x16x3200xbf16, #tpu.memory_space<vmem>>, vector<8x4x128xbf16>
    tpu.vector_store %arg10[%c0_208, %c4_209, %c1280_210], %134 {strides = array<i32>} : memref<8x16x3200xbf16, #tpu.memory_space<vmem>>, vector<8x4x128xbf16>,
    %c0_211 = arith.constant 0 : index
    %c72_212 = arith.constant 72 : index
    %c0_213 = arith.constant 0 : index
    %136 = tpu.strided_load %arg9[%c0_211, %c72_212, %c0_213] {strides = array<i32: 1, 2, 1>} : memref<8x144x128xf32, #tpu.memory_space<vmem>>, vector<8x4x128xf32>
    %137 = arith.truncf %136 : vector<8x4x128xf32> to vector<8x4x128xbf16>
    %c0_214 = arith.constant 0 : index
    %c8_215 = arith.constant 8 : index
    %c1280_216 = arith.constant 1280 : index
    %138 = vector.load %arg10[%c0_214, %c8_215, %c1280_216] : memref<8x16x3200xbf16, #tpu.memory_space<vmem>>, vector<8x4x128xbf16>
    tpu.vector_store %arg10[%c0_214, %c8_215, %c1280_216], %137 {strides = array<i32>} : memref<8x16x3200xbf16, #tpu.memory_space<vmem>>, vector<8x4x128xbf16>,
    %c0_217 = arith.constant 0 : index
    %c96 = arith.constant 96 : index
    %c0_218 = arith.constant 0 : index
    %139 = tpu.strided_load %arg9[%c0_217, %c96, %c0_218] {strides = array<i32: 1, 2, 1>} : memref<8x144x128xf32, #tpu.memory_space<vmem>>, vector<8x4x128xf32>
    %140 = arith.truncf %139 : vector<8x4x128xf32> to vector<8x4x128xbf16>
    %c0_219 = arith.constant 0 : index
    %c12_220 = arith.constant 12 : index
    %c1280_221 = arith.constant 1280 : index
    %141 = vector.load %arg10[%c0_219, %c12_220, %c1280_221] : memref<8x16x3200xbf16, #tpu.memory_space<vmem>>, vector<8x4x128xbf16>
    tpu.vector_store %arg10[%c0_219, %c12_220, %c1280_221], %140 {strides = array<i32>} : memref<8x16x3200xbf16, #tpu.memory_space<vmem>>, vector<8x4x128xbf16>,
    %c0_222 = arith.constant 0 : index
    %c25_223 = arith.constant 25 : index
    %c0_224 = arith.constant 0 : index
    %142 = tpu.strided_load %arg9[%c0_222, %c25_223, %c0_224] {strides = array<i32: 1, 2, 1>} : memref<8x144x128xf32, #tpu.memory_space<vmem>>, vector<8x4x128xf32>
    %143 = arith.truncf %142 : vector<8x4x128xf32> to vector<8x4x128xbf16>
    %c0_225 = arith.constant 0 : index
    %c0_226 = arith.constant 0 : index
    %c1408 = arith.constant 1408 : index
    %144 = vector.load %arg10[%c0_225, %c0_226, %c1408] : memref<8x16x3200xbf16, #tpu.memory_space<vmem>>, vector<8x4x128xbf16>
    tpu.vector_store %arg10[%c0_225, %c0_226, %c1408], %143 {strides = array<i32>} : memref<8x16x3200xbf16, #tpu.memory_space<vmem>>, vector<8x4x128xbf16>,
    %c0_227 = arith.constant 0 : index
    %c49_228 = arith.constant 49 : index
    %c0_229 = arith.constant 0 : index
    %145 = tpu.strided_load %arg9[%c0_227, %c49_228, %c0_229] {strides = array<i32: 1, 2, 1>} : memref<8x144x128xf32, #tpu.memory_space<vmem>>, vector<8x4x128xf32>
    %146 = arith.truncf %145 : vector<8x4x128xf32> to vector<8x4x128xbf16>
    %c0_230 = arith.constant 0 : index
    %c4_231 = arith.constant 4 : index
    %c1408_232 = arith.constant 1408 : index
    %147 = vector.load %arg10[%c0_230, %c4_231, %c1408_232] : memref<8x16x3200xbf16, #tpu.memory_space<vmem>>, vector<8x4x128xbf16>
    tpu.vector_store %arg10[%c0_230, %c4_231, %c1408_232], %146 {strides = array<i32>} : memref<8x16x3200xbf16, #tpu.memory_space<vmem>>, vector<8x4x128xbf16>,
    %c0_233 = arith.constant 0 : index
    %c73_234 = arith.constant 73 : index
    %c0_235 = arith.constant 0 : index
    %148 = tpu.strided_load %arg9[%c0_233, %c73_234, %c0_235] {strides = array<i32: 1, 2, 1>} : memref<8x144x128xf32, #tpu.memory_space<vmem>>, vector<8x4x128xf32>
    %149 = arith.truncf %148 : vector<8x4x128xf32> to vector<8x4x128xbf16>
    %c0_236 = arith.constant 0 : index
    %c8_237 = arith.constant 8 : index
    %c1408_238 = arith.constant 1408 : index
    %150 = vector.load %arg10[%c0_236, %c8_237, %c1408_238] : memref<8x16x3200xbf16, #tpu.memory_space<vmem>>, vector<8x4x128xbf16>
    tpu.vector_store %arg10[%c0_236, %c8_237, %c1408_238], %149 {strides = array<i32>} : memref<8x16x3200xbf16, #tpu.memory_space<vmem>>, vector<8x4x128xbf16>,
    %c0_239 = arith.constant 0 : index
    %c97 = arith.constant 97 : index
    %c0_240 = arith.constant 0 : index
    %151 = tpu.strided_load %arg9[%c0_239, %c97, %c0_240] {strides = array<i32: 1, 2, 1>} : memref<8x144x128xf32, #tpu.memory_space<vmem>>, vector<8x4x128xf32>
    %152 = arith.truncf %151 : vector<8x4x128xf32> to vector<8x4x128xbf16>
    %c0_241 = arith.constant 0 : index
    %c12_242 = arith.constant 12 : index
    %c1408_243 = arith.constant 1408 : index
    %153 = vector.load %arg10[%c0_241, %c12_242, %c1408_243] : memref<8x16x3200xbf16, #tpu.memory_space<vmem>>, vector<8x4x128xbf16>
    tpu.vector_store %arg10[%c0_241, %c12_242, %c1408_243], %152 {strides = array<i32>} : memref<8x16x3200xbf16, #tpu.memory_space<vmem>>, vector<8x4x128xbf16>,
    %c0_244 = arith.constant 0 : index
    %c26_245 = arith.constant 26 : index
    %c0_246 = arith.constant 0 : index
    %154 = tpu.strided_load %arg9[%c0_244, %c26_245, %c0_246] {strides = array<i32: 1, 2, 1>} : memref<8x144x128xf32, #tpu.memory_space<vmem>>, vector<8x4x128xf32>
    %155 = arith.truncf %154 : vector<8x4x128xf32> to vector<8x4x128xbf16>
    %c0_247 = arith.constant 0 : index
    %c0_248 = arith.constant 0 : index
    %c1536 = arith.constant 1536 : index
    %156 = vector.load %arg10[%c0_247, %c0_248, %c1536] : memref<8x16x3200xbf16, #tpu.memory_space<vmem>>, vector<8x4x128xbf16>
    tpu.vector_store %arg10[%c0_247, %c0_248, %c1536], %155 {strides = array<i32>} : memref<8x16x3200xbf16, #tpu.memory_space<vmem>>, vector<8x4x128xbf16>,
    %c0_249 = arith.constant 0 : index
    %c50_250 = arith.constant 50 : index
    %c0_251 = arith.constant 0 : index
    %157 = tpu.strided_load %arg9[%c0_249, %c50_250, %c0_251] {strides = array<i32: 1, 2, 1>} : memref<8x144x128xf32, #tpu.memory_space<vmem>>, vector<8x4x128xf32>
    %158 = arith.truncf %157 : vector<8x4x128xf32> to vector<8x4x128xbf16>
    %c0_252 = arith.constant 0 : index
    %c4_253 = arith.constant 4 : index
    %c1536_254 = arith.constant 1536 : index
    %159 = vector.load %arg10[%c0_252, %c4_253, %c1536_254] : memref<8x16x3200xbf16, #tpu.memory_space<vmem>>, vector<8x4x128xbf16>
    tpu.vector_store %arg10[%c0_252, %c4_253, %c1536_254], %158 {strides = array<i32>} : memref<8x16x3200xbf16, #tpu.memory_space<vmem>>, vector<8x4x128xbf16>,
    %c0_255 = arith.constant 0 : index
    %c74_256 = arith.constant 74 : index
    %c0_257 = arith.constant 0 : index
    %160 = tpu.strided_load %arg9[%c0_255, %c74_256, %c0_257] {strides = array<i32: 1, 2, 1>} : memref<8x144x128xf32, #tpu.memory_space<vmem>>, vector<8x4x128xf32>
    %161 = arith.truncf %160 : vector<8x4x128xf32> to vector<8x4x128xbf16>
    %c0_258 = arith.constant 0 : index
    %c8_259 = arith.constant 8 : index
    %c1536_260 = arith.constant 1536 : index
    %162 = vector.load %arg10[%c0_258, %c8_259, %c1536_260] : memref<8x16x3200xbf16, #tpu.memory_space<vmem>>, vector<8x4x128xbf16>
    tpu.vector_store %arg10[%c0_258, %c8_259, %c1536_260], %161 {strides = array<i32>} : memref<8x16x3200xbf16, #tpu.memory_space<vmem>>, vector<8x4x128xbf16>,
    %c0_261 = arith.constant 0 : index
    %c98 = arith.constant 98 : index
    %c0_262 = arith.constant 0 : index
    %163 = tpu.strided_load %arg9[%c0_261, %c98, %c0_262] {strides = array<i32: 1, 2, 1>} : memref<8x144x128xf32, #tpu.memory_space<vmem>>, vector<8x4x128xf32>
    %164 = arith.truncf %163 : vector<8x4x128xf32> to vector<8x4x128xbf16>
    %c0_263 = arith.constant 0 : index
    %c12_264 = arith.constant 12 : index
    %c1536_265 = arith.constant 1536 : index
    %165 = vector.load %arg10[%c0_263, %c12_264, %c1536_265] : memref<8x16x3200xbf16, #tpu.memory_space<vmem>>, vector<8x4x128xbf16>
    tpu.vector_store %arg10[%c0_263, %c12_264, %c1536_265], %164 {strides = array<i32>} : memref<8x16x3200xbf16, #tpu.memory_space<vmem>>, vector<8x4x128xbf16>,
    %c0_266 = arith.constant 0 : index
    %c27_267 = arith.constant 27 : index
    %c0_268 = arith.constant 0 : index
    %166 = tpu.strided_load %arg9[%c0_266, %c27_267, %c0_268] {strides = array<i32: 1, 2, 1>} : memref<8x144x128xf32, #tpu.memory_space<vmem>>, vector<8x4x128xf32>
    %167 = arith.truncf %166 : vector<8x4x128xf32> to vector<8x4x128xbf16>
    %c0_269 = arith.constant 0 : index
    %c0_270 = arith.constant 0 : index
    %c1664 = arith.constant 1664 : index
    %168 = vector.load %arg10[%c0_269, %c0_270, %c1664] : memref<8x16x3200xbf16, #tpu.memory_space<vmem>>, vector<8x4x128xbf16>
    tpu.vector_store %arg10[%c0_269, %c0_270, %c1664], %167 {strides = array<i32>} : memref<8x16x3200xbf16, #tpu.memory_space<vmem>>, vector<8x4x128xbf16>,
    %c0_271 = arith.constant 0 : index
    %c51_272 = arith.constant 51 : index
    %c0_273 = arith.constant 0 : index
    %169 = tpu.strided_load %arg9[%c0_271, %c51_272, %c0_273] {strides = array<i32: 1, 2, 1>} : memref<8x144x128xf32, #tpu.memory_space<vmem>>, vector<8x4x128xf32>
    %170 = arith.truncf %169 : vector<8x4x128xf32> to vector<8x4x128xbf16>
    %c0_274 = arith.constant 0 : index
    %c4_275 = arith.constant 4 : index
    %c1664_276 = arith.constant 1664 : index
    %171 = vector.load %arg10[%c0_274, %c4_275, %c1664_276] : memref<8x16x3200xbf16, #tpu.memory_space<vmem>>, vector<8x4x128xbf16>
    tpu.vector_store %arg10[%c0_274, %c4_275, %c1664_276], %170 {strides = array<i32>} : memref<8x16x3200xbf16, #tpu.memory_space<vmem>>, vector<8x4x128xbf16>,
    %c0_277 = arith.constant 0 : index
    %c75_278 = arith.constant 75 : index
    %c0_279 = arith.constant 0 : index
    %172 = tpu.strided_load %arg9[%c0_277, %c75_278, %c0_279] {strides = array<i32: 1, 2, 1>} : memref<8x144x128xf32, #tpu.memory_space<vmem>>, vector<8x4x128xf32>
    %173 = arith.truncf %172 : vector<8x4x128xf32> to vector<8x4x128xbf16>
    %c0_280 = arith.constant 0 : index
    %c8_281 = arith.constant 8 : index
    %c1664_282 = arith.constant 1664 : index
    %174 = vector.load %arg10[%c0_280, %c8_281, %c1664_282] : memref<8x16x3200xbf16, #tpu.memory_space<vmem>>, vector<8x4x128xbf16>
    tpu.vector_store %arg10[%c0_280, %c8_281, %c1664_282], %173 {strides = array<i32>} : memref<8x16x3200xbf16, #tpu.memory_space<vmem>>, vector<8x4x128xbf16>,
    %c0_283 = arith.constant 0 : index
    %c99 = arith.constant 99 : index
    %c0_284 = arith.constant 0 : index
    %175 = tpu.strided_load %arg9[%c0_283, %c99, %c0_284] {strides = array<i32: 1, 2, 1>} : memref<8x144x128xf32, #tpu.memory_space<vmem>>, vector<8x4x128xf32>
    %176 = arith.truncf %175 : vector<8x4x128xf32> to vector<8x4x128xbf16>
    %c0_285 = arith.constant 0 : index
    %c12_286 = arith.constant 12 : index
    %c1664_287 = arith.constant 1664 : index
    %177 = vector.load %arg10[%c0_285, %c12_286, %c1664_287] : memref<8x16x3200xbf16, #tpu.memory_space<vmem>>, vector<8x4x128xbf16>
    tpu.vector_store %arg10[%c0_285, %c12_286, %c1664_287], %176 {strides = array<i32>} : memref<8x16x3200xbf16, #tpu.memory_space<vmem>>, vector<8x4x128xbf16>,
    %c0_288 = arith.constant 0 : index
    %c28_289 = arith.constant 28 : index
    %c0_290 = arith.constant 0 : index
    %178 = tpu.strided_load %arg9[%c0_288, %c28_289, %c0_290] {strides = array<i32: 1, 2, 1>} : memref<8x144x128xf32, #tpu.memory_space<vmem>>, vector<8x4x128xf32>
    %179 = arith.truncf %178 : vector<8x4x128xf32> to vector<8x4x128xbf16>
    %c0_291 = arith.constant 0 : index
    %c0_292 = arith.constant 0 : index
    %c1792 = arith.constant 1792 : index
    %180 = vector.load %arg10[%c0_291, %c0_292, %c1792] : memref<8x16x3200xbf16, #tpu.memory_space<vmem>>, vector<8x4x128xbf16>
    tpu.vector_store %arg10[%c0_291, %c0_292, %c1792], %179 {strides = array<i32>} : memref<8x16x3200xbf16, #tpu.memory_space<vmem>>, vector<8x4x128xbf16>,
    %c0_293 = arith.constant 0 : index
    %c52_294 = arith.constant 52 : index
    %c0_295 = arith.constant 0 : index
    %181 = tpu.strided_load %arg9[%c0_293, %c52_294, %c0_295] {strides = array<i32: 1, 2, 1>} : memref<8x144x128xf32, #tpu.memory_space<vmem>>, vector<8x4x128xf32>
    %182 = arith.truncf %181 : vector<8x4x128xf32> to vector<8x4x128xbf16>
    %c0_296 = arith.constant 0 : index
    %c4_297 = arith.constant 4 : index
    %c1792_298 = arith.constant 1792 : index
    %183 = vector.load %arg10[%c0_296, %c4_297, %c1792_298] : memref<8x16x3200xbf16, #tpu.memory_space<vmem>>, vector<8x4x128xbf16>
    tpu.vector_store %arg10[%c0_296, %c4_297, %c1792_298], %182 {strides = array<i32>} : memref<8x16x3200xbf16, #tpu.memory_space<vmem>>, vector<8x4x128xbf16>,
    %c0_299 = arith.constant 0 : index
    %c76_300 = arith.constant 76 : index
    %c0_301 = arith.constant 0 : index
    %184 = tpu.strided_load %arg9[%c0_299, %c76_300, %c0_301] {strides = array<i32: 1, 2, 1>} : memref<8x144x128xf32, #tpu.memory_space<vmem>>, vector<8x4x128xf32>
    %185 = arith.truncf %184 : vector<8x4x128xf32> to vector<8x4x128xbf16>
    %c0_302 = arith.constant 0 : index
    %c8_303 = arith.constant 8 : index
    %c1792_304 = arith.constant 1792 : index
    %186 = vector.load %arg10[%c0_302, %c8_303, %c1792_304] : memref<8x16x3200xbf16, #tpu.memory_space<vmem>>, vector<8x4x128xbf16>
    tpu.vector_store %arg10[%c0_302, %c8_303, %c1792_304], %185 {strides = array<i32>} : memref<8x16x3200xbf16, #tpu.memory_space<vmem>>, vector<8x4x128xbf16>,
    %c0_305 = arith.constant 0 : index
    %c100 = arith.constant 100 : index
    %c0_306 = arith.constant 0 : index
    %187 = tpu.strided_load %arg9[%c0_305, %c100, %c0_306] {strides = array<i32: 1, 2, 1>} : memref<8x144x128xf32, #tpu.memory_space<vmem>>, vector<8x4x128xf32>
    %188 = arith.truncf %187 : vector<8x4x128xf32> to vector<8x4x128xbf16>
    %c0_307 = arith.constant 0 : index
    %c12_308 = arith.constant 12 : index
    %c1792_309 = arith.constant 1792 : index
    %189 = vector.load %arg10[%c0_307, %c12_308, %c1792_309] : memref<8x16x3200xbf16, #tpu.memory_space<vmem>>, vector<8x4x128xbf16>
    tpu.vector_store %arg10[%c0_307, %c12_308, %c1792_309], %188 {strides = array<i32>} : memref<8x16x3200xbf16, #tpu.memory_space<vmem>>, vector<8x4x128xbf16>,
    %c0_310 = arith.constant 0 : index
    %c36_311 = arith.constant 36 : index
    %c0_312 = arith.constant 0 : index
    %190 = tpu.strided_load %arg9[%c0_310, %c36_311, %c0_312] {strides = array<i32: 1, 2, 1>} : memref<8x144x128xf32, #tpu.memory_space<vmem>>, vector<8x4x128xf32>
    %191 = arith.truncf %190 : vector<8x4x128xf32> to vector<8x4x128xbf16>
    %c0_313 = arith.constant 0 : index
    %c0_314 = arith.constant 0 : index
    %c1920 = arith.constant 1920 : index
    %192 = vector.load %arg10[%c0_313, %c0_314, %c1920] : memref<8x16x3200xbf16, #tpu.memory_space<vmem>>, vector<8x4x128xbf16>
    tpu.vector_store %arg10[%c0_313, %c0_314, %c1920], %191 {strides = array<i32>} : memref<8x16x3200xbf16, #tpu.memory_space<vmem>>, vector<8x4x128xbf16>,
    %c0_315 = arith.constant 0 : index
    %c60_316 = arith.constant 60 : index
    %c0_317 = arith.constant 0 : index
    %193 = tpu.strided_load %arg9[%c0_315, %c60_316, %c0_317] {strides = array<i32: 1, 2, 1>} : memref<8x144x128xf32, #tpu.memory_space<vmem>>, vector<8x4x128xf32>
    %194 = arith.truncf %193 : vector<8x4x128xf32> to vector<8x4x128xbf16>
    %c0_318 = arith.constant 0 : index
    %c4_319 = arith.constant 4 : index
    %c1920_320 = arith.constant 1920 : index
    %195 = vector.load %arg10[%c0_318, %c4_319, %c1920_320] : memref<8x16x3200xbf16, #tpu.memory_space<vmem>>, vector<8x4x128xbf16>
    tpu.vector_store %arg10[%c0_318, %c4_319, %c1920_320], %194 {strides = array<i32>} : memref<8x16x3200xbf16, #tpu.memory_space<vmem>>, vector<8x4x128xbf16>,
    %c0_321 = arith.constant 0 : index
    %c84_322 = arith.constant 84 : index
    %c0_323 = arith.constant 0 : index
    %196 = tpu.strided_load %arg9[%c0_321, %c84_322, %c0_323] {strides = array<i32: 1, 2, 1>} : memref<8x144x128xf32, #tpu.memory_space<vmem>>, vector<8x4x128xf32>
    %197 = arith.truncf %196 : vector<8x4x128xf32> to vector<8x4x128xbf16>
    %c0_324 = arith.constant 0 : index
    %c8_325 = arith.constant 8 : index
    %c1920_326 = arith.constant 1920 : index
    %198 = vector.load %arg10[%c0_324, %c8_325, %c1920_326] : memref<8x16x3200xbf16, #tpu.memory_space<vmem>>, vector<8x4x128xbf16>
    tpu.vector_store %arg10[%c0_324, %c8_325, %c1920_326], %197 {strides = array<i32>} : memref<8x16x3200xbf16, #tpu.memory_space<vmem>>, vector<8x4x128xbf16>,
    %c0_327 = arith.constant 0 : index
    %c108 = arith.constant 108 : index
    %c0_328 = arith.constant 0 : index
    %199 = tpu.strided_load %arg9[%c0_327, %c108, %c0_328] {strides = array<i32: 1, 2, 1>} : memref<8x144x128xf32, #tpu.memory_space<vmem>>, vector<8x4x128xf32>
    %200 = arith.truncf %199 : vector<8x4x128xf32> to vector<8x4x128xbf16>
    %c0_329 = arith.constant 0 : index
    %c12_330 = arith.constant 12 : index
    %c1920_331 = arith.constant 1920 : index
    %201 = vector.load %arg10[%c0_329, %c12_330, %c1920_331] : memref<8x16x3200xbf16, #tpu.memory_space<vmem>>, vector<8x4x128xbf16>
    tpu.vector_store %arg10[%c0_329, %c12_330, %c1920_331], %200 {strides = array<i32>} : memref<8x16x3200xbf16, #tpu.memory_space<vmem>>, vector<8x4x128xbf16>,
    %c0_332 = arith.constant 0 : index
    %c37_333 = arith.constant 37 : index
    %c0_334 = arith.constant 0 : index
    %202 = tpu.strided_load %arg9[%c0_332, %c37_333, %c0_334] {strides = array<i32: 1, 2, 1>} : memref<8x144x128xf32, #tpu.memory_space<vmem>>, vector<8x4x128xf32>
    %203 = arith.truncf %202 : vector<8x4x128xf32> to vector<8x4x128xbf16>
    %c0_335 = arith.constant 0 : index
    %c0_336 = arith.constant 0 : index
    %c2048 = arith.constant 2048 : index
    %204 = vector.load %arg10[%c0_335, %c0_336, %c2048] : memref<8x16x3200xbf16, #tpu.memory_space<vmem>>, vector<8x4x128xbf16>
    tpu.vector_store %arg10[%c0_335, %c0_336, %c2048], %203 {strides = array<i32>} : memref<8x16x3200xbf16, #tpu.memory_space<vmem>>, vector<8x4x128xbf16>,
    %c0_337 = arith.constant 0 : index
    %c61_338 = arith.constant 61 : index
    %c0_339 = arith.constant 0 : index
    %205 = tpu.strided_load %arg9[%c0_337, %c61_338, %c0_339] {strides = array<i32: 1, 2, 1>} : memref<8x144x128xf32, #tpu.memory_space<vmem>>, vector<8x4x128xf32>
    %206 = arith.truncf %205 : vector<8x4x128xf32> to vector<8x4x128xbf16>
    %c0_340 = arith.constant 0 : index
    %c4_341 = arith.constant 4 : index
    %c2048_342 = arith.constant 2048 : index
    %207 = vector.load %arg10[%c0_340, %c4_341, %c2048_342] : memref<8x16x3200xbf16, #tpu.memory_space<vmem>>, vector<8x4x128xbf16>
    tpu.vector_store %arg10[%c0_340, %c4_341, %c2048_342], %206 {strides = array<i32>} : memref<8x16x3200xbf16, #tpu.memory_space<vmem>>, vector<8x4x128xbf16>,
    %c0_343 = arith.constant 0 : index
    %c85_344 = arith.constant 85 : index
    %c0_345 = arith.constant 0 : index
    %208 = tpu.strided_load %arg9[%c0_343, %c85_344, %c0_345] {strides = array<i32: 1, 2, 1>} : memref<8x144x128xf32, #tpu.memory_space<vmem>>, vector<8x4x128xf32>
    %209 = arith.truncf %208 : vector<8x4x128xf32> to vector<8x4x128xbf16>
    %c0_346 = arith.constant 0 : index
    %c8_347 = arith.constant 8 : index
    %c2048_348 = arith.constant 2048 : index
    %210 = vector.load %arg10[%c0_346, %c8_347, %c2048_348] : memref<8x16x3200xbf16, #tpu.memory_space<vmem>>, vector<8x4x128xbf16>
    tpu.vector_store %arg10[%c0_346, %c8_347, %c2048_348], %209 {strides = array<i32>} : memref<8x16x3200xbf16, #tpu.memory_space<vmem>>, vector<8x4x128xbf16>,
    %c0_349 = arith.constant 0 : index
    %c109 = arith.constant 109 : index
    %c0_350 = arith.constant 0 : index
    %211 = tpu.strided_load %arg9[%c0_349, %c109, %c0_350] {strides = array<i32: 1, 2, 1>} : memref<8x144x128xf32, #tpu.memory_space<vmem>>, vector<8x4x128xf32>
    %212 = arith.truncf %211 : vector<8x4x128xf32> to vector<8x4x128xbf16>
    %c0_351 = arith.constant 0 : index
    %c12_352 = arith.constant 12 : index
    %c2048_353 = arith.constant 2048 : index
    %213 = vector.load %arg10[%c0_351, %c12_352, %c2048_353] : memref<8x16x3200xbf16, #tpu.memory_space<vmem>>, vector<8x4x128xbf16>
    tpu.vector_store %arg10[%c0_351, %c12_352, %c2048_353], %212 {strides = array<i32>} : memref<8x16x3200xbf16, #tpu.memory_space<vmem>>, vector<8x4x128xbf16>,
    %c0_354 = arith.constant 0 : index
    %c38_355 = arith.constant 38 : index
    %c0_356 = arith.constant 0 : index
    %214 = tpu.strided_load %arg9[%c0_354, %c38_355, %c0_356] {strides = array<i32: 1, 2, 1>} : memref<8x144x128xf32, #tpu.memory_space<vmem>>, vector<8x4x128xf32>
    %215 = arith.truncf %214 : vector<8x4x128xf32> to vector<8x4x128xbf16>
    %c0_357 = arith.constant 0 : index
    %c0_358 = arith.constant 0 : index
    %c2176 = arith.constant 2176 : index
    %216 = vector.load %arg10[%c0_357, %c0_358, %c2176] : memref<8x16x3200xbf16, #tpu.memory_space<vmem>>, vector<8x4x128xbf16>
    tpu.vector_store %arg10[%c0_357, %c0_358, %c2176], %215 {strides = array<i32>} : memref<8x16x3200xbf16, #tpu.memory_space<vmem>>, vector<8x4x128xbf16>,
    %c0_359 = arith.constant 0 : index
    %c62_360 = arith.constant 62 : index
    %c0_361 = arith.constant 0 : index
    %217 = tpu.strided_load %arg9[%c0_359, %c62_360, %c0_361] {strides = array<i32: 1, 2, 1>} : memref<8x144x128xf32, #tpu.memory_space<vmem>>, vector<8x4x128xf32>
    %218 = arith.truncf %217 : vector<8x4x128xf32> to vector<8x4x128xbf16>
    %c0_362 = arith.constant 0 : index
    %c4_363 = arith.constant 4 : index
    %c2176_364 = arith.constant 2176 : index
    %219 = vector.load %arg10[%c0_362, %c4_363, %c2176_364] : memref<8x16x3200xbf16, #tpu.memory_space<vmem>>, vector<8x4x128xbf16>
    tpu.vector_store %arg10[%c0_362, %c4_363, %c2176_364], %218 {strides = array<i32>} : memref<8x16x3200xbf16, #tpu.memory_space<vmem>>, vector<8x4x128xbf16>,
    %c0_365 = arith.constant 0 : index
    %c86_366 = arith.constant 86 : index
    %c0_367 = arith.constant 0 : index
    %220 = tpu.strided_load %arg9[%c0_365, %c86_366, %c0_367] {strides = array<i32: 1, 2, 1>} : memref<8x144x128xf32, #tpu.memory_space<vmem>>, vector<8x4x128xf32>
    %221 = arith.truncf %220 : vector<8x4x128xf32> to vector<8x4x128xbf16>
    %c0_368 = arith.constant 0 : index
    %c8_369 = arith.constant 8 : index
    %c2176_370 = arith.constant 2176 : index
    %222 = vector.load %arg10[%c0_368, %c8_369, %c2176_370] : memref<8x16x3200xbf16, #tpu.memory_space<vmem>>, vector<8x4x128xbf16>
    tpu.vector_store %arg10[%c0_368, %c8_369, %c2176_370], %221 {strides = array<i32>} : memref<8x16x3200xbf16, #tpu.memory_space<vmem>>, vector<8x4x128xbf16>,
    %c0_371 = arith.constant 0 : index
    %c110 = arith.constant 110 : index
    %c0_372 = arith.constant 0 : index
    %223 = tpu.strided_load %arg9[%c0_371, %c110, %c0_372] {strides = array<i32: 1, 2, 1>} : memref<8x144x128xf32, #tpu.memory_space<vmem>>, vector<8x4x128xf32>
    %224 = arith.truncf %223 : vector<8x4x128xf32> to vector<8x4x128xbf16>
    %c0_373 = arith.constant 0 : index
    %c12_374 = arith.constant 12 : index
    %c2176_375 = arith.constant 2176 : index
    %225 = vector.load %arg10[%c0_373, %c12_374, %c2176_375] : memref<8x16x3200xbf16, #tpu.memory_space<vmem>>, vector<8x4x128xbf16>
    tpu.vector_store %arg10[%c0_373, %c12_374, %c2176_375], %224 {strides = array<i32>} : memref<8x16x3200xbf16, #tpu.memory_space<vmem>>, vector<8x4x128xbf16>,
    %c0_376 = arith.constant 0 : index
    %c39_377 = arith.constant 39 : index
    %c0_378 = arith.constant 0 : index
    %226 = tpu.strided_load %arg9[%c0_376, %c39_377, %c0_378] {strides = array<i32: 1, 2, 1>} : memref<8x144x128xf32, #tpu.memory_space<vmem>>, vector<8x4x128xf32>
    %227 = arith.truncf %226 : vector<8x4x128xf32> to vector<8x4x128xbf16>
    %c0_379 = arith.constant 0 : index
    %c0_380 = arith.constant 0 : index
    %c2304 = arith.constant 2304 : index
    %228 = vector.load %arg10[%c0_379, %c0_380, %c2304] : memref<8x16x3200xbf16, #tpu.memory_space<vmem>>, vector<8x4x128xbf16>
    tpu.vector_store %arg10[%c0_379, %c0_380, %c2304], %227 {strides = array<i32>} : memref<8x16x3200xbf16, #tpu.memory_space<vmem>>, vector<8x4x128xbf16>,
    %c0_381 = arith.constant 0 : index
    %c63_382 = arith.constant 63 : index
    %c0_383 = arith.constant 0 : index
    %229 = tpu.strided_load %arg9[%c0_381, %c63_382, %c0_383] {strides = array<i32: 1, 2, 1>} : memref<8x144x128xf32, #tpu.memory_space<vmem>>, vector<8x4x128xf32>
    %230 = arith.truncf %229 : vector<8x4x128xf32> to vector<8x4x128xbf16>
    %c0_384 = arith.constant 0 : index
    %c4_385 = arith.constant 4 : index
    %c2304_386 = arith.constant 2304 : index
    %231 = vector.load %arg10[%c0_384, %c4_385, %c2304_386] : memref<8x16x3200xbf16, #tpu.memory_space<vmem>>, vector<8x4x128xbf16>
    tpu.vector_store %arg10[%c0_384, %c4_385, %c2304_386], %230 {strides = array<i32>} : memref<8x16x3200xbf16, #tpu.memory_space<vmem>>, vector<8x4x128xbf16>,
    %c0_387 = arith.constant 0 : index
    %c87_388 = arith.constant 87 : index
    %c0_389 = arith.constant 0 : index
    %232 = tpu.strided_load %arg9[%c0_387, %c87_388, %c0_389] {strides = array<i32: 1, 2, 1>} : memref<8x144x128xf32, #tpu.memory_space<vmem>>, vector<8x4x128xf32>
    %233 = arith.truncf %232 : vector<8x4x128xf32> to vector<8x4x128xbf16>
    %c0_390 = arith.constant 0 : index
    %c8_391 = arith.constant 8 : index
    %c2304_392 = arith.constant 2304 : index
    %234 = vector.load %arg10[%c0_390, %c8_391, %c2304_392] : memref<8x16x3200xbf16, #tpu.memory_space<vmem>>, vector<8x4x128xbf16>
    tpu.vector_store %arg10[%c0_390, %c8_391, %c2304_392], %233 {strides = array<i32>} : memref<8x16x3200xbf16, #tpu.memory_space<vmem>>, vector<8x4x128xbf16>,
    %c0_393 = arith.constant 0 : index
    %c111 = arith.constant 111 : index
    %c0_394 = arith.constant 0 : index
    %235 = tpu.strided_load %arg9[%c0_393, %c111, %c0_394] {strides = array<i32: 1, 2, 1>} : memref<8x144x128xf32, #tpu.memory_space<vmem>>, vector<8x4x128xf32>
    %236 = arith.truncf %235 : vector<8x4x128xf32> to vector<8x4x128xbf16>
    %c0_395 = arith.constant 0 : index
    %c12_396 = arith.constant 12 : index
    %c2304_397 = arith.constant 2304 : index
    %237 = vector.load %arg10[%c0_395, %c12_396, %c2304_397] : memref<8x16x3200xbf16, #tpu.memory_space<vmem>>, vector<8x4x128xbf16>
    tpu.vector_store %arg10[%c0_395, %c12_396, %c2304_397], %236 {strides = array<i32>} : memref<8x16x3200xbf16, #tpu.memory_space<vmem>>, vector<8x4x128xbf16>,
    %c0_398 = arith.constant 0 : index
    %c40_399 = arith.constant 40 : index
    %c0_400 = arith.constant 0 : index
    %238 = tpu.strided_load %arg9[%c0_398, %c40_399, %c0_400] {strides = array<i32: 1, 2, 1>} : memref<8x144x128xf32, #tpu.memory_space<vmem>>, vector<8x4x128xf32>
    %239 = arith.truncf %238 : vector<8x4x128xf32> to vector<8x4x128xbf16>
    %c0_401 = arith.constant 0 : index
    %c0_402 = arith.constant 0 : index
    %c2432 = arith.constant 2432 : index
    %240 = vector.load %arg10[%c0_401, %c0_402, %c2432] : memref<8x16x3200xbf16, #tpu.memory_space<vmem>>, vector<8x4x128xbf16>
    tpu.vector_store %arg10[%c0_401, %c0_402, %c2432], %239 {strides = array<i32>} : memref<8x16x3200xbf16, #tpu.memory_space<vmem>>, vector<8x4x128xbf16>,
    %c0_403 = arith.constant 0 : index
    %c64_404 = arith.constant 64 : index
    %c0_405 = arith.constant 0 : index
    %241 = tpu.strided_load %arg9[%c0_403, %c64_404, %c0_405] {strides = array<i32: 1, 2, 1>} : memref<8x144x128xf32, #tpu.memory_space<vmem>>, vector<8x4x128xf32>
    %242 = arith.truncf %241 : vector<8x4x128xf32> to vector<8x4x128xbf16>
    %c0_406 = arith.constant 0 : index
    %c4_407 = arith.constant 4 : index
    %c2432_408 = arith.constant 2432 : index
    %243 = vector.load %arg10[%c0_406, %c4_407, %c2432_408] : memref<8x16x3200xbf16, #tpu.memory_space<vmem>>, vector<8x4x128xbf16>
    tpu.vector_store %arg10[%c0_406, %c4_407, %c2432_408], %242 {strides = array<i32>} : memref<8x16x3200xbf16, #tpu.memory_space<vmem>>, vector<8x4x128xbf16>,
    %c0_409 = arith.constant 0 : index
    %c88_410 = arith.constant 88 : index
    %c0_411 = arith.constant 0 : index
    %244 = tpu.strided_load %arg9[%c0_409, %c88_410, %c0_411] {strides = array<i32: 1, 2, 1>} : memref<8x144x128xf32, #tpu.memory_space<vmem>>, vector<8x4x128xf32>
    %245 = arith.truncf %244 : vector<8x4x128xf32> to vector<8x4x128xbf16>
    %c0_412 = arith.constant 0 : index
    %c8_413 = arith.constant 8 : index
    %c2432_414 = arith.constant 2432 : index
    %246 = vector.load %arg10[%c0_412, %c8_413, %c2432_414] : memref<8x16x3200xbf16, #tpu.memory_space<vmem>>, vector<8x4x128xbf16>
    tpu.vector_store %arg10[%c0_412, %c8_413, %c2432_414], %245 {strides = array<i32>} : memref<8x16x3200xbf16, #tpu.memory_space<vmem>>, vector<8x4x128xbf16>,
    %c0_415 = arith.constant 0 : index
    %c112 = arith.constant 112 : index
    %c0_416 = arith.constant 0 : index
    %247 = tpu.strided_load %arg9[%c0_415, %c112, %c0_416] {strides = array<i32: 1, 2, 1>} : memref<8x144x128xf32, #tpu.memory_space<vmem>>, vector<8x4x128xf32>
    %248 = arith.truncf %247 : vector<8x4x128xf32> to vector<8x4x128xbf16>
    %c0_417 = arith.constant 0 : index
    %c12_418 = arith.constant 12 : index
    %c2432_419 = arith.constant 2432 : index
    %249 = vector.load %arg10[%c0_417, %c12_418, %c2432_419] : memref<8x16x3200xbf16, #tpu.memory_space<vmem>>, vector<8x4x128xbf16>
    tpu.vector_store %arg10[%c0_417, %c12_418, %c2432_419], %248 {strides = array<i32>} : memref<8x16x3200xbf16, #tpu.memory_space<vmem>>, vector<8x4x128xbf16>,
    %c0_420 = arith.constant 0 : index
    %c48_421 = arith.constant 48 : index
    %c0_422 = arith.constant 0 : index
    %250 = tpu.strided_load %arg9[%c0_420, %c48_421, %c0_422] {strides = array<i32: 1, 2, 1>} : memref<8x144x128xf32, #tpu.memory_space<vmem>>, vector<8x4x128xf32>
    %251 = arith.truncf %250 : vector<8x4x128xf32> to vector<8x4x128xbf16>
    %c0_423 = arith.constant 0 : index
    %c0_424 = arith.constant 0 : index
    %c2560 = arith.constant 2560 : index
    %252 = vector.load %arg10[%c0_423, %c0_424, %c2560] : memref<8x16x3200xbf16, #tpu.memory_space<vmem>>, vector<8x4x128xbf16>
    tpu.vector_store %arg10[%c0_423, %c0_424, %c2560], %251 {strides = array<i32>} : memref<8x16x3200xbf16, #tpu.memory_space<vmem>>, vector<8x4x128xbf16>,
    %c0_425 = arith.constant 0 : index
    %c72_426 = arith.constant 72 : index
    %c0_427 = arith.constant 0 : index
    %253 = tpu.strided_load %arg9[%c0_425, %c72_426, %c0_427] {strides = array<i32: 1, 2, 1>} : memref<8x144x128xf32, #tpu.memory_space<vmem>>, vector<8x4x128xf32>
    %254 = arith.truncf %253 : vector<8x4x128xf32> to vector<8x4x128xbf16>
    %c0_428 = arith.constant 0 : index
    %c4_429 = arith.constant 4 : index
    %c2560_430 = arith.constant 2560 : index
    %255 = vector.load %arg10[%c0_428, %c4_429, %c2560_430] : memref<8x16x3200xbf16, #tpu.memory_space<vmem>>, vector<8x4x128xbf16>
    tpu.vector_store %arg10[%c0_428, %c4_429, %c2560_430], %254 {strides = array<i32>} : memref<8x16x3200xbf16, #tpu.memory_space<vmem>>, vector<8x4x128xbf16>,
    %c0_431 = arith.constant 0 : index
    %c96_432 = arith.constant 96 : index
    %c0_433 = arith.constant 0 : index
    %256 = tpu.strided_load %arg9[%c0_431, %c96_432, %c0_433] {strides = array<i32: 1, 2, 1>} : memref<8x144x128xf32, #tpu.memory_space<vmem>>, vector<8x4x128xf32>
    %257 = arith.truncf %256 : vector<8x4x128xf32> to vector<8x4x128xbf16>
    %c0_434 = arith.constant 0 : index
    %c8_435 = arith.constant 8 : index
    %c2560_436 = arith.constant 2560 : index
    %258 = vector.load %arg10[%c0_434, %c8_435, %c2560_436] : memref<8x16x3200xbf16, #tpu.memory_space<vmem>>, vector<8x4x128xbf16>
    tpu.vector_store %arg10[%c0_434, %c8_435, %c2560_436], %257 {strides = array<i32>} : memref<8x16x3200xbf16, #tpu.memory_space<vmem>>, vector<8x4x128xbf16>,
    %c0_437 = arith.constant 0 : index
    %c120 = arith.constant 120 : index
    %c0_438 = arith.constant 0 : index
    %259 = tpu.strided_load %arg9[%c0_437, %c120, %c0_438] {strides = array<i32: 1, 2, 1>} : memref<8x144x128xf32, #tpu.memory_space<vmem>>, vector<8x4x128xf32>
    %260 = arith.truncf %259 : vector<8x4x128xf32> to vector<8x4x128xbf16>
    %c0_439 = arith.constant 0 : index
    %c12_440 = arith.constant 12 : index
    %c2560_441 = arith.constant 2560 : index
    %261 = vector.load %arg10[%c0_439, %c12_440, %c2560_441] : memref<8x16x3200xbf16, #tpu.memory_space<vmem>>, vector<8x4x128xbf16>
    tpu.vector_store %arg10[%c0_439, %c12_440, %c2560_441], %260 {strides = array<i32>} : memref<8x16x3200xbf16, #tpu.memory_space<vmem>>, vector<8x4x128xbf16>,
    %c0_442 = arith.constant 0 : index
    %c49_443 = arith.constant 49 : index
    %c0_444 = arith.constant 0 : index
    %262 = tpu.strided_load %arg9[%c0_442, %c49_443, %c0_444] {strides = array<i32: 1, 2, 1>} : memref<8x144x128xf32, #tpu.memory_space<vmem>>, vector<8x4x128xf32>
    %263 = arith.truncf %262 : vector<8x4x128xf32> to vector<8x4x128xbf16>
    %c0_445 = arith.constant 0 : index
    %c0_446 = arith.constant 0 : index
    %c2688 = arith.constant 2688 : index
    %264 = vector.load %arg10[%c0_445, %c0_446, %c2688] : memref<8x16x3200xbf16, #tpu.memory_space<vmem>>, vector<8x4x128xbf16>
    tpu.vector_store %arg10[%c0_445, %c0_446, %c2688], %263 {strides = array<i32>} : memref<8x16x3200xbf16, #tpu.memory_space<vmem>>, vector<8x4x128xbf16>,
    %c0_447 = arith.constant 0 : index
    %c73_448 = arith.constant 73 : index
    %c0_449 = arith.constant 0 : index
    %265 = tpu.strided_load %arg9[%c0_447, %c73_448, %c0_449] {strides = array<i32: 1, 2, 1>} : memref<8x144x128xf32, #tpu.memory_space<vmem>>, vector<8x4x128xf32>
    %266 = arith.truncf %265 : vector<8x4x128xf32> to vector<8x4x128xbf16>
    %c0_450 = arith.constant 0 : index
    %c4_451 = arith.constant 4 : index
    %c2688_452 = arith.constant 2688 : index
    %267 = vector.load %arg10[%c0_450, %c4_451, %c2688_452] : memref<8x16x3200xbf16, #tpu.memory_space<vmem>>, vector<8x4x128xbf16>
    tpu.vector_store %arg10[%c0_450, %c4_451, %c2688_452], %266 {strides = array<i32>} : memref<8x16x3200xbf16, #tpu.memory_space<vmem>>, vector<8x4x128xbf16>,
    %c0_453 = arith.constant 0 : index
    %c97_454 = arith.constant 97 : index
    %c0_455 = arith.constant 0 : index
    %268 = tpu.strided_load %arg9[%c0_453, %c97_454, %c0_455] {strides = array<i32: 1, 2, 1>} : memref<8x144x128xf32, #tpu.memory_space<vmem>>, vector<8x4x128xf32>
    %269 = arith.truncf %268 : vector<8x4x128xf32> to vector<8x4x128xbf16>
    %c0_456 = arith.constant 0 : index
    %c8_457 = arith.constant 8 : index
    %c2688_458 = arith.constant 2688 : index
    %270 = vector.load %arg10[%c0_456, %c8_457, %c2688_458] : memref<8x16x3200xbf16, #tpu.memory_space<vmem>>, vector<8x4x128xbf16>
    tpu.vector_store %arg10[%c0_456, %c8_457, %c2688_458], %269 {strides = array<i32>} : memref<8x16x3200xbf16, #tpu.memory_space<vmem>>, vector<8x4x128xbf16>,
    %c0_459 = arith.constant 0 : index
    %c121 = arith.constant 121 : index
    %c0_460 = arith.constant 0 : index
    %271 = tpu.strided_load %arg9[%c0_459, %c121, %c0_460] {strides = array<i32: 1, 2, 1>} : memref<8x144x128xf32, #tpu.memory_space<vmem>>, vector<8x4x128xf32>
    %272 = arith.truncf %271 : vector<8x4x128xf32> to vector<8x4x128xbf16>
    %c0_461 = arith.constant 0 : index
    %c12_462 = arith.constant 12 : index
    %c2688_463 = arith.constant 2688 : index
    %273 = vector.load %arg10[%c0_461, %c12_462, %c2688_463] : memref<8x16x3200xbf16, #tpu.memory_space<vmem>>, vector<8x4x128xbf16>
    tpu.vector_store %arg10[%c0_461, %c12_462, %c2688_463], %272 {strides = array<i32>} : memref<8x16x3200xbf16, #tpu.memory_space<vmem>>, vector<8x4x128xbf16>,
    %c0_464 = arith.constant 0 : index
    %c50_465 = arith.constant 50 : index
    %c0_466 = arith.constant 0 : index
    %274 = tpu.strided_load %arg9[%c0_464, %c50_465, %c0_466] {strides = array<i32: 1, 2, 1>} : memref<8x144x128xf32, #tpu.memory_space<vmem>>, vector<8x4x128xf32>
    %275 = arith.truncf %274 : vector<8x4x128xf32> to vector<8x4x128xbf16>
    %c0_467 = arith.constant 0 : index
    %c0_468 = arith.constant 0 : index
    %c2816 = arith.constant 2816 : index
    %276 = vector.load %arg10[%c0_467, %c0_468, %c2816] : memref<8x16x3200xbf16, #tpu.memory_space<vmem>>, vector<8x4x128xbf16>
    tpu.vector_store %arg10[%c0_467, %c0_468, %c2816], %275 {strides = array<i32>} : memref<8x16x3200xbf16, #tpu.memory_space<vmem>>, vector<8x4x128xbf16>,
    %c0_469 = arith.constant 0 : index
    %c74_470 = arith.constant 74 : index
    %c0_471 = arith.constant 0 : index
    %277 = tpu.strided_load %arg9[%c0_469, %c74_470, %c0_471] {strides = array<i32: 1, 2, 1>} : memref<8x144x128xf32, #tpu.memory_space<vmem>>, vector<8x4x128xf32>
    %278 = arith.truncf %277 : vector<8x4x128xf32> to vector<8x4x128xbf16>
    %c0_472 = arith.constant 0 : index
    %c4_473 = arith.constant 4 : index
    %c2816_474 = arith.constant 2816 : index
    %279 = vector.load %arg10[%c0_472, %c4_473, %c2816_474] : memref<8x16x3200xbf16, #tpu.memory_space<vmem>>, vector<8x4x128xbf16>
    tpu.vector_store %arg10[%c0_472, %c4_473, %c2816_474], %278 {strides = array<i32>} : memref<8x16x3200xbf16, #tpu.memory_space<vmem>>, vector<8x4x128xbf16>,
    %c0_475 = arith.constant 0 : index
    %c98_476 = arith.constant 98 : index
    %c0_477 = arith.constant 0 : index
    %280 = tpu.strided_load %arg9[%c0_475, %c98_476, %c0_477] {strides = array<i32: 1, 2, 1>} : memref<8x144x128xf32, #tpu.memory_space<vmem>>, vector<8x4x128xf32>
    %281 = arith.truncf %280 : vector<8x4x128xf32> to vector<8x4x128xbf16>
    %c0_478 = arith.constant 0 : index
    %c8_479 = arith.constant 8 : index
    %c2816_480 = arith.constant 2816 : index
    %282 = vector.load %arg10[%c0_478, %c8_479, %c2816_480] : memref<8x16x3200xbf16, #tpu.memory_space<vmem>>, vector<8x4x128xbf16>
    tpu.vector_store %arg10[%c0_478, %c8_479, %c2816_480], %281 {strides = array<i32>} : memref<8x16x3200xbf16, #tpu.memory_space<vmem>>, vector<8x4x128xbf16>,
    %c0_481 = arith.constant 0 : index
    %c122 = arith.constant 122 : index
    %c0_482 = arith.constant 0 : index
    %283 = tpu.strided_load %arg9[%c0_481, %c122, %c0_482] {strides = array<i32: 1, 2, 1>} : memref<8x144x128xf32, #tpu.memory_space<vmem>>, vector<8x4x128xf32>
    %284 = arith.truncf %283 : vector<8x4x128xf32> to vector<8x4x128xbf16>
    %c0_483 = arith.constant 0 : index
    %c12_484 = arith.constant 12 : index
    %c2816_485 = arith.constant 2816 : index
    %285 = vector.load %arg10[%c0_483, %c12_484, %c2816_485] : memref<8x16x3200xbf16, #tpu.memory_space<vmem>>, vector<8x4x128xbf16>
    tpu.vector_store %arg10[%c0_483, %c12_484, %c2816_485], %284 {strides = array<i32>} : memref<8x16x3200xbf16, #tpu.memory_space<vmem>>, vector<8x4x128xbf16>,
    %c0_486 = arith.constant 0 : index
    %c51_487 = arith.constant 51 : index
    %c0_488 = arith.constant 0 : index
    %286 = tpu.strided_load %arg9[%c0_486, %c51_487, %c0_488] {strides = array<i32: 1, 2, 1>} : memref<8x144x128xf32, #tpu.memory_space<vmem>>, vector<8x4x128xf32>
    %287 = arith.truncf %286 : vector<8x4x128xf32> to vector<8x4x128xbf16>
    %c0_489 = arith.constant 0 : index
    %c0_490 = arith.constant 0 : index
    %c2944 = arith.constant 2944 : index
    %288 = vector.load %arg10[%c0_489, %c0_490, %c2944] : memref<8x16x3200xbf16, #tpu.memory_space<vmem>>, vector<8x4x128xbf16>
    tpu.vector_store %arg10[%c0_489, %c0_490, %c2944], %287 {strides = array<i32>} : memref<8x16x3200xbf16, #tpu.memory_space<vmem>>, vector<8x4x128xbf16>,
    %c0_491 = arith.constant 0 : index
    %c75_492 = arith.constant 75 : index
    %c0_493 = arith.constant 0 : index
    %289 = tpu.strided_load %arg9[%c0_491, %c75_492, %c0_493] {strides = array<i32: 1, 2, 1>} : memref<8x144x128xf32, #tpu.memory_space<vmem>>, vector<8x4x128xf32>
    %290 = arith.truncf %289 : vector<8x4x128xf32> to vector<8x4x128xbf16>
    %c0_494 = arith.constant 0 : index
    %c4_495 = arith.constant 4 : index
    %c2944_496 = arith.constant 2944 : index
    %291 = vector.load %arg10[%c0_494, %c4_495, %c2944_496] : memref<8x16x3200xbf16, #tpu.memory_space<vmem>>, vector<8x4x128xbf16>
    tpu.vector_store %arg10[%c0_494, %c4_495, %c2944_496], %290 {strides = array<i32>} : memref<8x16x3200xbf16, #tpu.memory_space<vmem>>, vector<8x4x128xbf16>,
    %c0_497 = arith.constant 0 : index
    %c99_498 = arith.constant 99 : index
    %c0_499 = arith.constant 0 : index
    %292 = tpu.strided_load %arg9[%c0_497, %c99_498, %c0_499] {strides = array<i32: 1, 2, 1>} : memref<8x144x128xf32, #tpu.memory_space<vmem>>, vector<8x4x128xf32>
    %293 = arith.truncf %292 : vector<8x4x128xf32> to vector<8x4x128xbf16>
    %c0_500 = arith.constant 0 : index
    %c8_501 = arith.constant 8 : index
    %c2944_502 = arith.constant 2944 : index
    %294 = vector.load %arg10[%c0_500, %c8_501, %c2944_502] : memref<8x16x3200xbf16, #tpu.memory_space<vmem>>, vector<8x4x128xbf16>
    tpu.vector_store %arg10[%c0_500, %c8_501, %c2944_502], %293 {strides = array<i32>} : memref<8x16x3200xbf16, #tpu.memory_space<vmem>>, vector<8x4x128xbf16>,
    %c0_503 = arith.constant 0 : index
    %c123 = arith.constant 123 : index
    %c0_504 = arith.constant 0 : index
    %295 = tpu.strided_load %arg9[%c0_503, %c123, %c0_504] {strides = array<i32: 1, 2, 1>} : memref<8x144x128xf32, #tpu.memory_space<vmem>>, vector<8x4x128xf32>
    %296 = arith.truncf %295 : vector<8x4x128xf32> to vector<8x4x128xbf16>
    %c0_505 = arith.constant 0 : index
    %c12_506 = arith.constant 12 : index
    %c2944_507 = arith.constant 2944 : index
    %297 = vector.load %arg10[%c0_505, %c12_506, %c2944_507] : memref<8x16x3200xbf16, #tpu.memory_space<vmem>>, vector<8x4x128xbf16>
    tpu.vector_store %arg10[%c0_505, %c12_506, %c2944_507], %296 {strides = array<i32>} : memref<8x16x3200xbf16, #tpu.memory_space<vmem>>, vector<8x4x128xbf16>,
    %c0_508 = arith.constant 0 : index
    %c52_509 = arith.constant 52 : index
    %c0_510 = arith.constant 0 : index
    %298 = tpu.strided_load %arg9[%c0_508, %c52_509, %c0_510] {strides = array<i32: 1, 2, 1>} : memref<8x144x128xf32, #tpu.memory_space<vmem>>, vector<8x4x128xf32>
    %299 = arith.truncf %298 : vector<8x4x128xf32> to vector<8x4x128xbf16>
    %c0_511 = arith.constant 0 : index
    %c0_512 = arith.constant 0 : index
    %c3072 = arith.constant 3072 : index
    %300 = vector.load %arg10[%c0_511, %c0_512, %c3072] : memref<8x16x3200xbf16, #tpu.memory_space<vmem>>, vector<8x4x128xbf16>
    tpu.vector_store %arg10[%c0_511, %c0_512, %c3072], %299 {strides = array<i32>} : memref<8x16x3200xbf16, #tpu.memory_space<vmem>>, vector<8x4x128xbf16>,
    %c0_513 = arith.constant 0 : index
    %c76_514 = arith.constant 76 : index
    %c0_515 = arith.constant 0 : index
    %301 = tpu.strided_load %arg9[%c0_513, %c76_514, %c0_515] {strides = array<i32: 1, 2, 1>} : memref<8x144x128xf32, #tpu.memory_space<vmem>>, vector<8x4x128xf32>
    %302 = arith.truncf %301 : vector<8x4x128xf32> to vector<8x4x128xbf16>
    %c0_516 = arith.constant 0 : index
    %c4_517 = arith.constant 4 : index
    %c3072_518 = arith.constant 3072 : index
    %303 = vector.load %arg10[%c0_516, %c4_517, %c3072_518] : memref<8x16x3200xbf16, #tpu.memory_space<vmem>>, vector<8x4x128xbf16>
    tpu.vector_store %arg10[%c0_516, %c4_517, %c3072_518], %302 {strides = array<i32>} : memref<8x16x3200xbf16, #tpu.memory_space<vmem>>, vector<8x4x128xbf16>,
    %c0_519 = arith.constant 0 : index
    %c100_520 = arith.constant 100 : index
    %c0_521 = arith.constant 0 : index
    %304 = tpu.strided_load %arg9[%c0_519, %c100_520, %c0_521] {strides = array<i32: 1, 2, 1>} : memref<8x144x128xf32, #tpu.memory_space<vmem>>, vector<8x4x128xf32>
    %305 = arith.truncf %304 : vector<8x4x128xf32> to vector<8x4x128xbf16>
    %c0_522 = arith.constant 0 : index
    %c8_523 = arith.constant 8 : index
    %c3072_524 = arith.constant 3072 : index
    %306 = vector.load %arg10[%c0_522, %c8_523, %c3072_524] : memref<8x16x3200xbf16, #tpu.memory_space<vmem>>, vector<8x4x128xbf16>
    tpu.vector_store %arg10[%c0_522, %c8_523, %c3072_524], %305 {strides = array<i32>} : memref<8x16x3200xbf16, #tpu.memory_space<vmem>>, vector<8x4x128xbf16>,
    %c0_525 = arith.constant 0 : index
    %c124 = arith.constant 124 : index
    %c0_526 = arith.constant 0 : index
    %307 = tpu.strided_load %arg9[%c0_525, %c124, %c0_526] {strides = array<i32: 1, 2, 1>} : memref<8x144x128xf32, #tpu.memory_space<vmem>>, vector<8x4x128xf32>
    %308 = arith.truncf %307 : vector<8x4x128xf32> to vector<8x4x128xbf16>
    %c0_527 = arith.constant 0 : index
    %c12_528 = arith.constant 12 : index
    %c3072_529 = arith.constant 3072 : index
    %309 = vector.load %arg10[%c0_527, %c12_528, %c3072_529] : memref<8x16x3200xbf16, #tpu.memory_space<vmem>>, vector<8x4x128xbf16>
    tpu.vector_store %arg10[%c0_527, %c12_528, %c3072_529], %308 {strides = array<i32>} : memref<8x16x3200xbf16, #tpu.memory_space<vmem>>, vector<8x4x128xbf16>,
    %c0_530 = arith.constant 0 : index
    %c0_531 = arith.constant 0 : index
    %c0_532 = arith.constant 0 : index
    %310 = vector.load %arg10[%c0_530, %c0_531, %c0_532] : memref<8x16x3200xbf16, #tpu.memory_space<vmem>>, vector<8x16x3200xbf16>
    %311 = vector.shape_cast %310 : vector<8x16x3200xbf16> to vector<128x3200xbf16>
    %c0_533 = arith.constant 0 : index
    %c0_534 = arith.constant 0 : index
    %312 = vector.load %arg4[%c0_533, %c0_534] : memref<3200x128xbf16, #tpu.memory_space<vmem>>, vector<3200x128xbf16>
    %cst_535 = arith.constant dense<0.000000e+00> : vector<128x128xf32>
    %313 = tpu.matmul %311, %312, %cst_535 {dimension_numbers = #tpu.dot_dimension_numbers<[1], [0], [0], [1], [0, 0, 1, 1], [], []>} : vector<128x3200xbf16>, vector<3200x128xbf16>, vector<128x128xf32> -> vector<128x128xf32>
    %c0_536 = arith.constant 0 : index
    %c0_537 = arith.constant 0 : index
    %314 = vector.load %arg5[%c0_536, %c0_537] : memref<1x128xf32, #tpu.memory_space<vmem>>, vector<1x128xf32>
    %315 = vector.broadcast %314 : vector<1x128xf32> to vector<128x128xf32>
    %316 = arith.addf %313, %315 : vector<128x128xf32>
    %cst_538 = arith.constant 0.000000e+00 : f32
    %317 = vector.broadcast %cst_538 : f32 to vector<128x128xf32>
    %318 = arith.maximumf %316, %317 : vector<128x128xf32>
    %319 = arith.truncf %318 : vector<128x128xf32> to vector<128x128xbf16>
    %320 = vector.shape_cast %319 : vector<128x128xbf16> to vector<8x16x128xbf16>
    %c0_539 = arith.constant 0 : index
    %c0_540 = arith.constant 0 : index
    %c0_541 = arith.constant 0 : index
    %321 = vector.load %arg11[%c0_539, %c0_540, %c0_541] : memref<8x16x128xbf16, #tpu.memory_space<vmem>>, vector<8x16x128xbf16>
    tpu.vector_store %arg11[%c0_539, %c0_540, %c0_541], %320 {strides = array<i32>} : memref<8x16x128xbf16, #tpu.memory_space<vmem>>, vector<8x16x128xbf16>,
    %c0_542 = arith.constant 0 : index
    %c0_543 = arith.constant 0 : index
    %c0_544 = arith.constant 0 : index
    %322 = vector.load %arg11[%c0_542, %c0_543, %c0_544] : memref<8x16x128xbf16, #tpu.memory_space<vmem>>, vector<8x1x128xbf16>
    %323 = vector.shape_cast %322 : vector<8x1x128xbf16> to vector<8x128xbf16>
    %c0_545 = arith.constant 0 : index
    %c1_546 = arith.constant 1 : index
    %c0_547 = arith.constant 0 : index
    %324 = vector.load %arg11[%c0_545, %c1_546, %c0_547] : memref<8x16x128xbf16, #tpu.memory_space<vmem>>, vector<8x1x128xbf16>
    %325 = vector.shape_cast %324 : vector<8x1x128xbf16> to vector<8x128xbf16>
    %c0_548 = arith.constant 0 : index
    %c2_549 = arith.constant 2 : index
    %c0_550 = arith.constant 0 : index
    %326 = vector.load %arg11[%c0_548, %c2_549, %c0_550] : memref<8x16x128xbf16, #tpu.memory_space<vmem>>, vector<8x1x128xbf16>
    %327 = vector.shape_cast %326 : vector<8x1x128xbf16> to vector<8x128xbf16>
    %c0_551 = arith.constant 0 : index
    %c3_552 = arith.constant 3 : index
    %c0_553 = arith.constant 0 : index
    %328 = vector.load %arg11[%c0_551, %c3_552, %c0_553] : memref<8x16x128xbf16, #tpu.memory_space<vmem>>, vector<8x1x128xbf16>
    %329 = vector.shape_cast %328 : vector<8x1x128xbf16> to vector<8x128xbf16>
    %c0_554 = arith.constant 0 : index
    %c4_555 = arith.constant 4 : index
    %c0_556 = arith.constant 0 : index
    %330 = vector.load %arg11[%c0_554, %c4_555, %c0_556] : memref<8x16x128xbf16, #tpu.memory_space<vmem>>, vector<8x1x128xbf16>
    %331 = vector.shape_cast %330 : vector<8x1x128xbf16> to vector<8x128xbf16>
    %c0_557 = arith.constant 0 : index
    %c5 = arith.constant 5 : index
    %c0_558 = arith.constant 0 : index
    %332 = vector.load %arg11[%c0_557, %c5, %c0_558] : memref<8x16x128xbf16, #tpu.memory_space<vmem>>, vector<8x1x128xbf16>
    %333 = vector.shape_cast %332 : vector<8x1x128xbf16> to vector<8x128xbf16>
    %c0_559 = arith.constant 0 : index
    %c6 = arith.constant 6 : index
    %c0_560 = arith.constant 0 : index
    %334 = vector.load %arg11[%c0_559, %c6, %c0_560] : memref<8x16x128xbf16, #tpu.memory_space<vmem>>, vector<8x1x128xbf16>
    %335 = vector.shape_cast %334 : vector<8x1x128xbf16> to vector<8x128xbf16>
    %c0_561 = arith.constant 0 : index
    %c7 = arith.constant 7 : index
    %c0_562 = arith.constant 0 : index
    %336 = vector.load %arg11[%c0_561, %c7, %c0_562] : memref<8x16x128xbf16, #tpu.memory_space<vmem>>, vector<8x1x128xbf16>
    %337 = vector.shape_cast %336 : vector<8x1x128xbf16> to vector<8x128xbf16>
    %c0_563 = arith.constant 0 : index
    %c8_564 = arith.constant 8 : index
    %c0_565 = arith.constant 0 : index
    %338 = vector.load %arg11[%c0_563, %c8_564, %c0_565] : memref<8x16x128xbf16, #tpu.memory_space<vmem>>, vector<8x1x128xbf16>
    %339 = vector.shape_cast %338 : vector<8x1x128xbf16> to vector<8x128xbf16>
    %c0_566 = arith.constant 0 : index
    %c9 = arith.constant 9 : index
    %c0_567 = arith.constant 0 : index
    %340 = vector.load %arg11[%c0_566, %c9, %c0_567] : memref<8x16x128xbf16, #tpu.memory_space<vmem>>, vector<8x1x128xbf16>
    %341 = vector.shape_cast %340 : vector<8x1x128xbf16> to vector<8x128xbf16>
    %c0_568 = arith.constant 0 : index
    %c10 = arith.constant 10 : index
    %c0_569 = arith.constant 0 : index
    %342 = vector.load %arg11[%c0_568, %c10, %c0_569] : memref<8x16x128xbf16, #tpu.memory_space<vmem>>, vector<8x1x128xbf16>
    %343 = vector.shape_cast %342 : vector<8x1x128xbf16> to vector<8x128xbf16>
    %c0_570 = arith.constant 0 : index
    %c11 = arith.constant 11 : index
    %c0_571 = arith.constant 0 : index
    %344 = vector.load %arg11[%c0_570, %c11, %c0_571] : memref<8x16x128xbf16, #tpu.memory_space<vmem>>, vector<8x1x128xbf16>
    %345 = vector.shape_cast %344 : vector<8x1x128xbf16> to vector<8x128xbf16>
    %c0_572 = arith.constant 0 : index
    %c12_573 = arith.constant 12 : index
    %c0_574 = arith.constant 0 : index
    %346 = vector.load %arg11[%c0_572, %c12_573, %c0_574] : memref<8x16x128xbf16, #tpu.memory_space<vmem>>, vector<8x1x128xbf16>
    %347 = vector.shape_cast %346 : vector<8x1x128xbf16> to vector<8x128xbf16>
    %c0_575 = arith.constant 0 : index
    %c13_576 = arith.constant 13 : index
    %c0_577 = arith.constant 0 : index
    %348 = vector.load %arg11[%c0_575, %c13_576, %c0_577] : memref<8x16x128xbf16, #tpu.memory_space<vmem>>, vector<8x1x128xbf16>
    %349 = vector.shape_cast %348 : vector<8x1x128xbf16> to vector<8x128xbf16>
    %c0_578 = arith.constant 0 : index
    %c14_579 = arith.constant 14 : index
    %c0_580 = arith.constant 0 : index
    %350 = vector.load %arg11[%c0_578, %c14_579, %c0_580] : memref<8x16x128xbf16, #tpu.memory_space<vmem>>, vector<8x1x128xbf16>
    %351 = vector.shape_cast %350 : vector<8x1x128xbf16> to vector<8x128xbf16>
    %c0_581 = arith.constant 0 : index
    %c15_582 = arith.constant 15 : index
    %c0_583 = arith.constant 0 : index
    %352 = vector.load %arg11[%c0_581, %c15_582, %c0_583] : memref<8x16x128xbf16, #tpu.memory_space<vmem>>, vector<8x1x128xbf16>
    %353 = vector.shape_cast %352 : vector<8x1x128xbf16> to vector<8x128xbf16>
    %354 = tpu.concatenate %323, %325, %327, %329, %331, %333, %335, %337, %339, %341, %343, %345, %347, %349, %351, %353 in 1 : vector<8x128xbf16>, vector<8x128xbf16>, vector<8x128xbf16>, vector<8x128xbf16>, vector<8x128xbf16>, vector<8x128xbf16>, vector<8x128xbf16>, vector<8x128xbf16>, vector<8x128xbf16>, vector<8x128xbf16>, vector<8x128xbf16>, vector<8x128xbf16>, vector<8x128xbf16>, vector<8x128xbf16>, vector<8x128xbf16>, vector<8x128xbf16> -> vector<8x2048xbf16>
    %c0_584 = arith.constant 0 : index
    %c0_585 = arith.constant 0 : index
    %355 = vector.load %arg6[%c0_584, %c0_585] : memref<2048x128xbf16, #tpu.memory_space<vmem>>, vector<2048x128xbf16>
    %cst_586 = arith.constant dense<0.000000e+00> : vector<8x128xf32>
    %356 = tpu.matmul %354, %355, %cst_586 {dimension_numbers = #tpu.dot_dimension_numbers<[1], [0], [0], [1], [0, 0, 1, 1], [], []>} : vector<8x2048xbf16>, vector<2048x128xbf16>, vector<8x128xf32> -> vector<8x128xf32>
    %c0_587 = arith.constant 0 : index
    %c0_588 = arith.constant 0 : index
    %357 = vector.load %arg7[%c0_587, %c0_588] : memref<1x128xf32, #tpu.memory_space<vmem>>, vector<1x128xf32>
    %358 = vector.broadcast %357 : vector<1x128xf32> to vector<8x128xf32>
    %359 = arith.addf %356, %358 : vector<8x128xf32>
    %c0_589 = arith.constant 0 : index
    %c0_590 = arith.constant 0 : index
    %360 = vector.load %arg8[%c0_589, %c0_590] : memref<8x128xf32, #tpu.memory_space<vmem>>, vector<8x128xf32>
    tpu.vector_store %arg8[%c0_589, %c0_590], %359 {strides = array<i32>} : memref<8x128xf32, #tpu.memory_space<vmem>>, vector<8x128xf32>,
    return
  }
  func.func @transform_0(%arg0: i32) -> (i32, i32) {
    %c0_i32 = arith.constant 0 : i32
    %c0_i32_0 = arith.constant 0 : i32
    return %arg0, %c0_i32 : i32, i32
  }
  func.func @transform_1(%arg0: i32) -> (i32, i32) {
    %c0_i32 = arith.constant 0 : i32
    %c0_i32_0 = arith.constant 0 : i32
    %c0_i32_1 = arith.constant 0 : i32
    return %c0_i32, %c0_i32_0 : i32, i32
  }
  func.func @transform_2(%arg0: i32) -> (i32, i32) {
    %c0_i32 = arith.constant 0 : i32
    %c0_i32_0 = arith.constant 0 : i32
    %c0_i32_1 = arith.constant 0 : i32
    return %c0_i32, %c0_i32_0 : i32, i32
  }
  func.func @transform_3(%arg0: i32) -> (i32, i32) {
    %c0_i32 = arith.constant 0 : i32
    %c0_i32_0 = arith.constant 0 : i32
    %c0_i32_1 = arith.constant 0 : i32
    return %c0_i32, %c0_i32_0 : i32, i32
  }
  func.func @transform_4(%arg0: i32) -> (i32, i32) {
    %c0_i32 = arith.constant 0 : i32
    %c0_i32_0 = arith.constant 0 : i32
    %c0_i32_1 = arith.constant 0 : i32
    return %c0_i32, %c0_i32_0 : i32, i32
  }
  func.func @transform_5(%arg0: i32) -> (i32, i32) {
    %c0_i32 = arith.constant 0 : i32
    %c0_i32_0 = arith.constant 0 : i32
    %c0_i32_1 = arith.constant 0 : i32
    return %c0_i32, %c0_i32_0 : i32, i32
  }
  func.func @transform_6(%arg0: i32) -> (i32, i32) {
    %c0_i32 = arith.constant 0 : i32
    %c0_i32_0 = arith.constant 0 : i32
    %c0_i32_1 = arith.constant 0 : i32
    return %c0_i32, %c0_i32_0 : i32, i32
  }
  func.func @transform_7(%arg0: i32) -> (i32, i32) {
    %c0_i32 = arith.constant 0 : i32
    %c0_i32_0 = arith.constant 0 : i32
    return %arg0, %c0_i32 : i32, i32
  }
}

</mosaic_0001>

<llo_original>
// kernel: mnist_net_forward.1
$region0: #{mnist_net_forward.1}
  #allocation0 [shape = 'u32[]', space=smem, size = 0x4, offset = 0x4, fixed_abs, tag = 'smem constant byte address 0x4 - core index']
  #allocation1 [shape = 'u32[144,128]{1,0:T(1,128)}', space=vmem, size = 0x12000, scoped, tag = 'internal scratch']
  #allocation2 [shape = 'f32[8,144,128]{2,1,0:T(8,128)}', space=vmem, size = 0x90000, scoped, tag = 'scratch operand']
  #allocation3 [shape = 'bf16[8,16,3200]{2,1,0:T(16,128)(2,1)}', space=vmem, size = 0xc8000, scoped, tag = 'scratch operand']
  #allocation4 [shape = 'bf16[8,16,128]{2,1,0:T(16,128)(2,1)}', space=vmem, size = 0x8000, scoped, tag = 'scratch operand']
  %s0 = inlined_call_operand.vmem [shape: bf16[1152,32], index: 0, kind: input, shape index: {}]
  %s1 = inlined_call_operand.vmem [shape: bf16[32,128], index: 1, kind: input, shape index: {}]
  %s2 = inlined_call_operand.vmem [shape: f32[1,128], index: 2, kind: input, shape index: {}]
  %s3 = inlined_call_operand.vmem [shape: bf16[3200,128], index: 3, kind: input, shape index: {}]
  %s4 = inlined_call_operand.vmem [shape: f32[1,128], index: 4, kind: input, shape index: {}]
  %s5 = inlined_call_operand.vmem [shape: bf16[2048,128], index: 5, kind: input, shape index: {}]
  %s6 = inlined_call_operand.vmem [shape: f32[1,128], index: 6, kind: input, shape index: {}]
  %s7 = inlined_call_operand.vmem [shape: f32[8,128], index: 7, kind: output, shape index: {}]
  %s8 = sld [smem:[#allocation0]]
  $region38: #{mnist_net_forward.1} parent=0
    _
  %s10 = ssub.s32 1, %s8
  %s11 = scalar_select 0, %s10, %s8
  // Predicated region
  $region2: #{mnist_net_forward.1} parent=0 // pred_check
    _
  $region3: #{mnist_net_forward.1} parent=0 // pred_check_branch
    %13 = sbr.rel (0) target = $region5
  $region4: #{mnist_net_forward.1} parent=0 // pred_region
    _
  $region5: #{mnist_net_forward.1} parent=0 // pred_fallthru
    _
  // Predicated region
  $region6: #{mnist_net_forward.1} parent=0 // pred_check
    _
  $region7: #{mnist_net_forward.1} parent=0 // pred_check_branch
    %15 = sbr.rel (0) target = $region9
  $region8: #{mnist_net_forward.1} parent=0 // pred_region
    _
  $region9: #{mnist_net_forward.1} parent=0 // pred_fallthru
    _
  // Predicated region
  $region10: #{mnist_net_forward.1} parent=0 // pred_check
    _
  $region11: #{mnist_net_forward.1} parent=0 // pred_check_branch
    %17 = sbr.rel (0) target = $region13
  $region12: #{mnist_net_forward.1} parent=0 // pred_region
    _
  $region13: #{mnist_net_forward.1} parent=0 // pred_fallthru
    _
  // Predicated region
  $region14: #{mnist_net_forward.1} parent=0 // pred_check
    _
  $region15: #{mnist_net_forward.1} parent=0 // pred_check_branch
    %19 = sbr.rel (0) target = $region17
  $region16: #{mnist_net_forward.1} parent=0 // pred_region
    _
  $region17: #{mnist_net_forward.1} parent=0 // pred_fallthru
    _
  // Predicated region
  $region18: #{mnist_net_forward.1} parent=0 // pred_check
    _
  $region19: #{mnist_net_forward.1} parent=0 // pred_check_branch
    %21 = sbr.rel (0) target = $region21
  $region20: #{mnist_net_forward.1} parent=0 // pred_region
    _
  $region21: #{mnist_net_forward.1} parent=0 // pred_fallthru
    _
  // Predicated region
  $region22: #{mnist_net_forward.1} parent=0 // pred_check
    _
  $region23: #{mnist_net_forward.1} parent=0 // pred_check_branch
    %23 = sbr.rel (0) target = $region25
  $region24: #{mnist_net_forward.1} parent=0 // pred_region
    _
  $region25: #{mnist_net_forward.1} parent=0 // pred_fallthru
    _
  // Predicated region
  $region26: #{mnist_net_forward.1} parent=0 // pred_check
    _
  $region27: #{mnist_net_forward.1} parent=0 // pred_check_branch
    %25 = sbr.rel (0) target = $region29
  $region28: #{mnist_net_forward.1} parent=0 // pred_region
    _
  $region29: #{mnist_net_forward.1} parent=0 // pred_fallthru
    _
  %v27 = vld [vmem:[%s0] sm:$0xf]
  %v28 = vld [vmem:[%s0 + $0x4] sm:$0xf]
  %v29 = vld [vmem:[%s0 + $0x8] sm:$0xf]
  %v30 = vld [vmem:[%s0 + $0xc] sm:$0xf]
  %v31 = vld [vmem:[%s0 + $0x10] sm:$0xf]
  %v32 = vld [vmem:[%s0 + $0x14] sm:$0xf]
  %v33 = vld [vmem:[%s0 + $0x18] sm:$0xf]
  %v34 = vld [vmem:[%s0 + $0x1c] sm:$0xf]
  %v35 = vld [vmem:[%s0 + $0x20] sm:$0xf]
  %v36 = vld [vmem:[%s0 + $0x24] sm:$0xf]
  %v37 = vld [vmem:[%s0 + $0x28] sm:$0xf]
  %v38 = vld [vmem:[%s0 + $0x2c] sm:$0xf]
  %v39 = vld [vmem:[%s0 + $0x30] sm:$0xf]
  %v40 = vld [vmem:[%s0 + $0x34] sm:$0xf]
  %v41 = vld [vmem:[%s0 + $0x38] sm:$0xf]
  %v42 = vld [vmem:[%s0 + $0x3c] sm:$0xf]
  %v43 = vld [vmem:[%s0 + $0x40] sm:$0xf]
  %v44 = vld [vmem:[%s0 + $0x44] sm:$0xf]
  %v45 = vld [vmem:[%s0 + $0x48] sm:$0xf]
  %v46 = vld [vmem:[%s0 + $0x4c] sm:$0xf]
  %v47 = vld [vmem:[%s0 + $0x50] sm:$0xf]
  %v48 = vld [vmem:[%s0 + $0x54] sm:$0xf]
  %v49 = vld [vmem:[%s0 + $0x58] sm:$0xf]
  %v50 = vld [vmem:[%s0 + $0x5c] sm:$0xf]
  %v51 = vld [vmem:[%s0 + $0x60] sm:$0xf]
  %v52 = vld [vmem:[%s0 + $0x64] sm:$0xf]
  %v53 = vld [vmem:[%s0 + $0x68] sm:$0xf]
  %v54 = vld [vmem:[%s0 + $0x6c] sm:$0xf]
  %v55 = vld [vmem:[%s0 + $0x70] sm:$0xf]
  %v56 = vld [vmem:[%s0 + $0x74] sm:$0xf]
  %v57 = vld [vmem:[%s0 + $0x78] sm:$0xf]
  %v58 = vld [vmem:[%s0 + $0x7c] sm:$0xf]
  %v59 = vld [vmem:[%s0 + $0x80] sm:$0xf]
  %v60 = vld [vmem:[%s0 + $0x84] sm:$0xf]
  %v61 = vld [vmem:[%s0 + $0x88] sm:$0xf]
  %v62 = vld [vmem:[%s0 + $0x8c] sm:$0xf]
  %v63 = vld [vmem:[%s0 + $0x90] sm:$0xf]
  %v64 = vld [vmem:[%s0 + $0x94] sm:$0xf]
  %v65 = vld [vmem:[%s0 + $0x98] sm:$0xf]
  %v66 = vld [vmem:[%s0 + $0x9c] sm:$0xf]
  %v67 = vld [vmem:[%s0 + $0xa0] sm:$0xf]
  %v68 = vld [vmem:[%s0 + $0xa4] sm:$0xf]
  %v69 = vld [vmem:[%s0 + $0xa8] sm:$0xf]
  %v70 = vld [vmem:[%s0 + $0xac] sm:$0xf]
  %v71 = vld [vmem:[%s0 + $0xb0] sm:$0xf]
  %v72 = vld [vmem:[%s0 + $0xb4] sm:$0xf]
  %v73 = vld [vmem:[%s0 + $0xb8] sm:$0xf]
  %v74 = vld [vmem:[%s0 + $0xbc] sm:$0xf]
  %v75 = vld [vmem:[%s0 + $0xc0] sm:$0xf]
  %v76 = vld [vmem:[%s0 + $0xc4] sm:$0xf]
  %v77 = vld [vmem:[%s0 + $0xc8] sm:$0xf]
  %v78 = vld [vmem:[%s0 + $0xcc] sm:$0xf]
  %v79 = vld [vmem:[%s0 + $0xd0] sm:$0xf]
  %v80 = vld [vmem:[%s0 + $0xd4] sm:$0xf]
  %v81 = vld [vmem:[%s0 + $0xd8] sm:$0xf]
  %v82 = vld [vmem:[%s0 + $0xdc] sm:$0xf]
  %v83 = vld [vmem:[%s0 + $0xe0] sm:$0xf]
  %v84 = vld [vmem:[%s0 + $0xe4] sm:$0xf]
  %v85 = vld [vmem:[%s0 + $0xe8] sm:$0xf]
  %v86 = vld [vmem:[%s0 + $0xec] sm:$0xf]
  %v87 = vld [vmem:[%s0 + $0xf0] sm:$0xf]
  %v88 = vld [vmem:[%s0 + $0xf4] sm:$0xf]
  %v89 = vld [vmem:[%s0 + $0xf8] sm:$0xf]
  %v90 = vld [vmem:[%s0 + $0xfc] sm:$0xf]
  %v91 = vld [vmem:[%s0 + $0x100] sm:$0xf]
  %v92 = vld [vmem:[%s0 + $0x104] sm:$0xf]
  %v93 = vld [vmem:[%s0 + $0x108] sm:$0xf]
  %v94 = vld [vmem:[%s0 + $0x10c] sm:$0xf]
  %v95 = vld [vmem:[%s0 + $0x110] sm:$0xf]
  %v96 = vld [vmem:[%s0 + $0x114] sm:$0xf]
  %v97 = vld [vmem:[%s0 + $0x118] sm:$0xf]
  %v98 = vld [vmem:[%s0 + $0x11c] sm:$0xf]
  %v99 = vld [vmem:[%s0 + $0x120] sm:$0xf]
  %v100 = vld [vmem:[%s0 + $0x124] sm:$0xf]
  %v101 = vld [vmem:[%s0 + $0x128] sm:$0xf]
  %v102 = vld [vmem:[%s0 + $0x12c] sm:$0xf]
  %v103 = vld [vmem:[%s0 + $0x130] sm:$0xf]
  %v104 = vld [vmem:[%s0 + $0x134] sm:$0xf]
  %v105 = vld [vmem:[%s0 + $0x138] sm:$0xf]
  %v106 = vld [vmem:[%s0 + $0x13c] sm:$0xf]
  %v107 = vld [vmem:[%s0 + $0x140] sm:$0xf]
  %v108 = vld [vmem:[%s0 + $0x144] sm:$0xf]
  %v109 = vld [vmem:[%s0 + $0x148] sm:$0xf]
  %v110 = vld [vmem:[%s0 + $0x14c] sm:$0xf]
  %v111 = vld [vmem:[%s0 + $0x150] sm:$0xf]
  %v112 = vld [vmem:[%s0 + $0x154] sm:$0xf]
  %v113 = vld [vmem:[%s0 + $0x158] sm:$0xf]
  %v114 = vld [vmem:[%s0 + $0x15c] sm:$0xf]
  %v115 = vld [vmem:[%s0 + $0x160] sm:$0xf]
  %v116 = vld [vmem:[%s0 + $0x164] sm:$0xf]
  %v117 = vld [vmem:[%s0 + $0x168] sm:$0xf]
  %v118 = vld [vmem:[%s0 + $0x16c] sm:$0xf]
  %v119 = vld [vmem:[%s0 + $0x170] sm:$0xf]
  %v120 = vld [vmem:[%s0 + $0x174] sm:$0xf]
  %v121 = vld [vmem:[%s0 + $0x178] sm:$0xf]
  %v122 = vld [vmem:[%s0 + $0x17c] sm:$0xf]
  %v123 = vld [vmem:[%s0 + $0x180] sm:$0xf]
  %v124 = vld [vmem:[%s0 + $0x184] sm:$0xf]
  %v125 = vld [vmem:[%s0 + $0x188] sm:$0xf]
  %v126 = vld [vmem:[%s0 + $0x18c] sm:$0xf]
  %v127 = vld [vmem:[%s0 + $0x190] sm:$0xf]
  %v128 = vld [vmem:[%s0 + $0x194] sm:$0xf]
  %v129 = vld [vmem:[%s0 + $0x198] sm:$0xf]
  %v130 = vld [vmem:[%s0 + $0x19c] sm:$0xf]
  %v131 = vld [vmem:[%s0 + $0x1a0] sm:$0xf]
  %v132 = vld [vmem:[%s0 + $0x1a4] sm:$0xf]
  %v133 = vld [vmem:[%s0 + $0x1a8] sm:$0xf]
  %v134 = vld [vmem:[%s0 + $0x1ac] sm:$0xf]
  %v135 = vld [vmem:[%s0 + $0x1b0] sm:$0xf]
  %v136 = vld [vmem:[%s0 + $0x1b4] sm:$0xf]
  %v137 = vld [vmem:[%s0 + $0x1b8] sm:$0xf]
  %v138 = vld [vmem:[%s0 + $0x1bc] sm:$0xf]
  %v139 = vld [vmem:[%s0 + $0x1c0] sm:$0xf]
  %v140 = vld [vmem:[%s0 + $0x1c4] sm:$0xf]
  %v141 = vld [vmem:[%s0 + $0x1c8] sm:$0xf]
  %v142 = vld [vmem:[%s0 + $0x1cc] sm:$0xf]
  %v143 = vld [vmem:[%s0 + $0x1d0] sm:$0xf]
  %v144 = vld [vmem:[%s0 + $0x1d4] sm:$0xf]
  %v145 = vld [vmem:[%s0 + $0x1d8] sm:$0xf]
  %v146 = vld [vmem:[%s0 + $0x1dc] sm:$0xf]
  %v147 = vld [vmem:[%s0 + $0x1e0] sm:$0xf]
  %v148 = vld [vmem:[%s0 + $0x1e4] sm:$0xf]
  %v149 = vld [vmem:[%s0 + $0x1e8] sm:$0xf]
  %v150 = vld [vmem:[%s0 + $0x1ec] sm:$0xf]
  %v151 = vld [vmem:[%s0 + $0x1f0] sm:$0xf]
  %v152 = vld [vmem:[%s0 + $0x1f4] sm:$0xf]
  %v153 = vld [vmem:[%s0 + $0x1f8] sm:$0xf]
  %v154 = vld [vmem:[%s0 + $0x1fc] sm:$0xf]
  %v155 = vld [vmem:[%s0 + $0x200] sm:$0xf]
  %v156 = vld [vmem:[%s0 + $0x204] sm:$0xf]
  %v157 = vld [vmem:[%s0 + $0x208] sm:$0xf]
  %v158 = vld [vmem:[%s0 + $0x20c] sm:$0xf]
  %v159 = vld [vmem:[%s0 + $0x210] sm:$0xf]
  %v160 = vld [vmem:[%s0 + $0x214] sm:$0xf]
  %v161 = vld [vmem:[%s0 + $0x218] sm:$0xf]
  %v162 = vld [vmem:[%s0 + $0x21c] sm:$0xf]
  %v163 = vld [vmem:[%s0 + $0x220] sm:$0xf]
  %v164 = vld [vmem:[%s0 + $0x224] sm:$0xf]
  %v165 = vld [vmem:[%s0 + $0x228] sm:$0xf]
  %v166 = vld [vmem:[%s0 + $0x22c] sm:$0xf]
  %v167 = vld [vmem:[%s0 + $0x230] sm:$0xf]
  %v168 = vld [vmem:[%s0 + $0x234] sm:$0xf]
  %v169 = vld [vmem:[%s0 + $0x238] sm:$0xf]
  %v170 = vld [vmem:[%s0 + $0x23c] sm:$0xf]
  %v171 = vld [vmem:[%s1] sm:$0xf]
  %v172 = vld [vmem:[%s1 + $0x4] sm:$0xf]
  %v173 = vld [vmem:[%s1 + $0x8] sm:$0xf]
  %v174 = vld [vmem:[%s1 + $0xc] sm:$0xf]
  %v175 = vld [vmem:[%s2] sm:$0x1]
  %v177 = vlaneseq
  %v178 = vshrl.u32 %v177, 7
  %v179 = vsub.s32 0, %v178
  %v180 = vrot.slane %v175, %v179
  %v326 = vunpack.c.l.b16 %v27
  %v327 = vunpack.c.l.b16 %v28
  %v328 = vunpack.c.l.b16 %v29
  %v329 = vunpack.c.l.b16 %v30
  %v330 = vunpack.c.l.b16 %v31
  %v331 = vunpack.c.l.b16 %v32
  %v332 = vunpack.c.l.b16 %v33
  %v333 = vunpack.c.l.b16 %v34
  %v334 = vunpack.c.l.b16 %v35
  %v335 = vunpack.c.l.b16 %v36
  %v336 = vunpack.c.l.b16 %v37
  %v337 = vunpack.c.l.b16 %v38
  %v338 = vunpack.c.l.b16 %v39
  %v339 = vunpack.c.l.b16 %v40
  %v340 = vunpack.c.l.b16 %v41
  %v341 = vunpack.c.l.b16 %v42
  %v342 = vunpack.c.l.b16 %v43
  %v343 = vunpack.c.l.b16 %v44
  %v344 = vunpack.c.l.b16 %v45
  %v345 = vunpack.c.l.b16 %v46
  %v346 = vunpack.c.l.b16 %v47
  %v347 = vunpack.c.l.b16 %v48
  %v348 = vunpack.c.l.b16 %v49
  %v349 = vunpack.c.l.b16 %v50
  %v350 = vunpack.c.l.b16 %v51
  %v351 = vunpack.c.l.b16 %v52
  %v352 = vunpack.c.l.b16 %v53
  %v353 = vunpack.c.l.b16 %v54
  %v354 = vunpack.c.l.b16 %v55
  %v355 = vunpack.c.l.b16 %v56
  %v356 = vunpack.c.l.b16 %v57
  %v357 = vunpack.c.l.b16 %v58
  %v358 = vunpack.c.l.b16 %v59
  %v359 = vunpack.c.l.b16 %v60
  %v360 = vunpack.c.l.b16 %v61
  %v361 = vunpack.c.l.b16 %v62
  %v362 = vunpack.c.l.b16 %v63
  %v363 = vunpack.c.l.b16 %v64
  %v364 = vunpack.c.l.b16 %v65
  %v365 = vunpack.c.l.b16 %v66
  %v366 = vunpack.c.l.b16 %v67
  %v367 = vunpack.c.l.b16 %v68
  %v368 = vunpack.c.l.b16 %v69
  %v369 = vunpack.c.l.b16 %v70
  %v370 = vunpack.c.l.b16 %v71
  %v371 = vunpack.c.l.b16 %v72
  %v372 = vunpack.c.l.b16 %v73
  %v373 = vunpack.c.l.b16 %v74
  %v374 = vunpack.c.l.b16 %v75
  %v375 = vunpack.c.l.b16 %v76
  %v376 = vunpack.c.l.b16 %v77
  %v377 = vunpack.c.l.b16 %v78
  %v378 = vunpack.c.l.b16 %v79
  %v379 = vunpack.c.l.b16 %v80
  %v380 = vunpack.c.l.b16 %v81
  %v381 = vunpack.c.l.b16 %v82
  %v382 = vunpack.c.l.b16 %v83
  %v383 = vunpack.c.l.b16 %v84
  %v384 = vunpack.c.l.b16 %v85
  %v385 = vunpack.c.l.b16 %v86
  %v386 = vunpack.c.l.b16 %v87
  %v387 = vunpack.c.l.b16 %v88
  %v388 = vunpack.c.l.b16 %v89
  %v389 = vunpack.c.l.b16 %v90
  %v390 = vunpack.c.l.b16 %v91
  %v391 = vunpack.c.l.b16 %v92
  %v392 = vunpack.c.l.b16 %v93
  %v393 = vunpack.c.l.b16 %v94
  %v394 = vunpack.c.l.b16 %v95
  %v395 = vunpack.c.l.b16 %v96
  %v396 = vunpack.c.l.b16 %v97
  %v397 = vunpack.c.l.b16 %v98
  %v398 = vunpack.c.l.b16 %v99
  %v399 = vunpack.c.l.b16 %v100
  %v400 = vunpack.c.l.b16 %v101
  %v401 = vunpack.c.l.b16 %v102
  %v402 = vunpack.c.l.b16 %v103
  %v403 = vunpack.c.l.b16 %v104
  %v404 = vunpack.c.l.b16 %v105
  %v405 = vunpack.c.l.b16 %v106
  %v406 = vunpack.c.l.b16 %v107
  %v407 = vunpack.c.l.b16 %v108
  %v408 = vunpack.c.l.b16 %v109
  %v409 = vunpack.c.l.b16 %v110
  %v410 = vunpack.c.l.b16 %v111
  %v411 = vunpack.c.l.b16 %v112
  %v412 = vunpack.c.l.b16 %v113
  %v413 = vunpack.c.l.b16 %v114
  %v414 = vunpack.c.l.b16 %v115
  %v415 = vunpack.c.l.b16 %v116
  %v416 = vunpack.c.l.b16 %v117
  %v417 = vunpack.c.l.b16 %v118
  %v418 = vunpack.c.l.b16 %v119
  %v419 = vunpack.c.l.b16 %v120
  %v420 = vunpack.c.l.b16 %v121
  %v421 = vunpack.c.l.b16 %v122
  %v422 = vunpack.c.l.b16 %v123
  %v423 = vunpack.c.l.b16 %v124
  %v424 = vunpack.c.l.b16 %v125
  %v425 = vunpack.c.l.b16 %v126
  %v426 = vunpack.c.l.b16 %v127
  %v427 = vunpack.c.l.b16 %v128
  %v428 = vunpack.c.l.b16 %v129
  %v429 = vunpack.c.l.b16 %v130
  %v430 = vunpack.c.l.b16 %v131
  %v431 = vunpack.c.l.b16 %v132
  %v432 = vunpack.c.l.b16 %v133
  %v433 = vunpack.c.l.b16 %v134
  %v434 = vunpack.c.l.b16 %v135
  %v435 = vunpack.c.l.b16 %v136
  %v436 = vunpack.c.l.b16 %v137
  %v437 = vunpack.c.l.b16 %v138
  %v438 = vunpack.c.l.b16 %v139
  %v439 = vunpack.c.l.b16 %v140
  %v440 = vunpack.c.l.b16 %v141
  %v441 = vunpack.c.l.b16 %v142
  %v442 = vunpack.c.l.b16 %v143
  %v443 = vunpack.c.l.b16 %v144
  %v444 = vunpack.c.l.b16 %v145
  %v445 = vunpack.c.l.b16 %v146
  %v446 = vunpack.c.l.b16 %v147
  %v447 = vunpack.c.l.b16 %v148
  %v448 = vunpack.c.l.b16 %v149
  %v449 = vunpack.c.l.b16 %v150
  %v450 = vunpack.c.l.b16 %v151
  %v451 = vunpack.c.l.b16 %v152
  %v452 = vunpack.c.l.b16 %v153
  %v453 = vunpack.c.l.b16 %v154
  %v454 = vunpack.c.l.b16 %v155
  %v455 = vunpack.c.l.b16 %v156
  %v456 = vunpack.c.l.b16 %v157
  %v457 = vunpack.c.l.b16 %v158
  %v458 = vunpack.c.l.b16 %v159
  %v459 = vunpack.c.l.b16 %v160
  %v460 = vunpack.c.l.b16 %v161
  %v461 = vunpack.c.l.b16 %v162
  %v462 = vunpack.c.l.b16 %v163
  %v463 = vunpack.c.l.b16 %v164
  %v464 = vunpack.c.l.b16 %v165
  %v465 = vunpack.c.l.b16 %v166
  %v466 = vunpack.c.l.b16 %v167
  %v467 = vunpack.c.l.b16 %v168
  %v468 = vunpack.c.l.b16 %v169
  %v469 = vunpack.c.l.b16 %v170
  %v470 = vpack.c.b16 %v327, %v326
  %v471 = vpack.c.b16 %v329, %v328
  %v472 = vpack.c.b16 %v331, %v330
  %v473 = vpack.c.b16 %v333, %v332
  %v474 = vpack.c.b16 %v335, %v334
  %v475 = vpack.c.b16 %v337, %v336
  %v476 = vpack.c.b16 %v339, %v338
  %v477 = vpack.c.b16 %v341, %v340
  %v478 = vpack.c.b16 %v343, %v342
  %v479 = vpack.c.b16 %v345, %v344
  %v480 = vpack.c.b16 %v347, %v346
  %v481 = vpack.c.b16 %v349, %v348
  %v482 = vpack.c.b16 %v351, %v350
  %v483 = vpack.c.b16 %v353, %v352
  %v484 = vpack.c.b16 %v355, %v354
  %v485 = vpack.c.b16 %v357, %v356
  %v486 = vpack.c.b16 %v359, %v358
  %v487 = vpack.c.b16 %v361, %v360
  %v488 = vpack.c.b16 %v363, %v362
  %v489 = vpack.c.b16 %v365, %v364
  %v490 = vpack.c.b16 %v367, %v366
  %v491 = vpack.c.b16 %v369, %v368
  %v492 = vpack.c.b16 %v371, %v370
  %v493 = vpack.c.b16 %v373, %v372
  %v494 = vpack.c.b16 %v375, %v374
  %v495 = vpack.c.b16 %v377, %v376
  %v496 = vpack.c.b16 %v379, %v378
  %v497 = vpack.c.b16 %v381, %v380
  %v498 = vpack.c.b16 %v383, %v382
  %v499 = vpack.c.b16 %v385, %v384
  %v500 = vpack.c.b16 %v387, %v386
  %v501 = vpack.c.b16 %v389, %v388
  %v502 = vpack.c.b16 %v391, %v390
  %v503 = vpack.c.b16 %v393, %v392
  %v504 = vpack.c.b16 %v395, %v394
  %v505 = vpack.c.b16 %v397, %v396
  %v506 = vpack.c.b16 %v399, %v398
  %v507 = vpack.c.b16 %v401, %v400
  %v508 = vpack.c.b16 %v403, %v402
  %v509 = vpack.c.b16 %v405, %v404
  %v510 = vpack.c.b16 %v407, %v406
  %v511 = vpack.c.b16 %v409, %v408
  %v512 = vpack.c.b16 %v411, %v410
  %v513 = vpack.c.b16 %v413, %v412
  %v514 = vpack.c.b16 %v415, %v414
  %v515 = vpack.c.b16 %v417, %v416
  %v516 = vpack.c.b16 %v419, %v418
  %v517 = vpack.c.b16 %v421, %v420
  %v518 = vpack.c.b16 %v423, %v422
  %v519 = vpack.c.b16 %v425, %v424
  %v520 = vpack.c.b16 %v427, %v426
  %v521 = vpack.c.b16 %v429, %v428
  %v522 = vpack.c.b16 %v431, %v430
  %v523 = vpack.c.b16 %v433, %v432
  %v524 = vpack.c.b16 %v435, %v434
  %v525 = vpack.c.b16 %v437, %v436
  %v526 = vpack.c.b16 %v439, %v438
  %v527 = vpack.c.b16 %v441, %v440
  %v528 = vpack.c.b16 %v443, %v442
  %v529 = vpack.c.b16 %v445, %v444
  %v530 = vpack.c.b16 %v447, %v446
  %v531 = vpack.c.b16 %v449, %v448
  %v532 = vpack.c.b16 %v451, %v450
  %v533 = vpack.c.b16 %v453, %v452
  %v534 = vpack.c.b16 %v455, %v454
  %v535 = vpack.c.b16 %v457, %v456
  %v536 = vpack.c.b16 %v459, %v458
  %v537 = vpack.c.b16 %v461, %v460
  %v538 = vpack.c.b16 %v463, %v462
  %v539 = vpack.c.b16 %v465, %v464
  %v540 = vpack.c.b16 %v467, %v466
  %v541 = vpack.c.b16 %v469, %v468
  %v546 = vunpack.c.l.b16 %v171
  %v547 = vunpack.c.l.b16 %v172
  %v548 = vunpack.c.l.b16 %v173
  %v549 = vunpack.c.l.b16 %v174
  %v550 = vpack.c.b16 %v547, %v546
  %v551 = vpack.c.b16 %v549, %v548
  %vm554 = vcmask 261120
  %v556 = vsel %vm554, %v470, 0
  %v559 = vsel %vm554, %v471, 0
  %v562 = vsel %vm554, %v472, 0
  %v565 = vsel %vm554, %v473, 0
  %v568 = vsel %vm554, %v474, 0
  %v571 = vsel %vm554, %v475, 0
  %v574 = vsel %vm554, %v476, 0
  %v577 = vsel %vm554, %v477, 0
  %v580 = vsel %vm554, %v478, 0
  %v583 = vsel %vm554, %v479, 0
  %v586 = vsel %vm554, %v480, 0
  %v589 = vsel %vm554, %v481, 0
  %v592 = vsel %vm554, %v482, 0
  %v595 = vsel %vm554, %v483, 0
  %v598 = vsel %vm554, %v484, 0
  %v601 = vsel %vm554, %v485, 0
  %v604 = vsel %vm554, %v486, 0
  %v607 = vsel %vm554, %v487, 0
  %v610 = vsel %vm554, %v488, 0
  %v613 = vsel %vm554, %v489, 0
  %v616 = vsel %vm554, %v490, 0
  %v619 = vsel %vm554, %v491, 0
  %v622 = vsel %vm554, %v492, 0
  %v625 = vsel %vm554, %v493, 0
  %v628 = vsel %vm554, %v494, 0
  %v631 = vsel %vm554, %v495, 0
  %v634 = vsel %vm554, %v496, 0
  %v637 = vsel %vm554, %v497, 0
  %v640 = vsel %vm554, %v498, 0
  %v643 = vsel %vm554, %v499, 0
  %v646 = vsel %vm554, %v500, 0
  %v649 = vsel %vm554, %v501, 0
  %v652 = vsel %vm554, %v502, 0
  %v655 = vsel %vm554, %v503, 0
  %v658 = vsel %vm554, %v504, 0
  %v661 = vsel %vm554, %v505, 0
  %v664 = vsel %vm554, %v506, 0
  %v667 = vsel %vm554, %v507, 0
  %v670 = vsel %vm554, %v508, 0
  %v673 = vsel %vm554, %v509, 0
  %v676 = vsel %vm554, %v510, 0
  %v679 = vsel %vm554, %v511, 0
  %v682 = vsel %vm554, %v512, 0
  %v685 = vsel %vm554, %v513, 0
  %v688 = vsel %vm554, %v514, 0
  %v691 = vsel %vm554, %v515, 0
  %v694 = vsel %vm554, %v516, 0
  %v697 = vsel %vm554, %v517, 0
  %v700 = vsel %vm554, %v518, 0
  %v703 = vsel %vm554, %v519, 0
  %v706 = vsel %vm554, %v520, 0
  %v709 = vsel %vm554, %v521, 0
  %v712 = vsel %vm554, %v522, 0
  %v715 = vsel %vm554, %v523, 0
  %v718 = vsel %vm554, %v524, 0
  %v721 = vsel %vm554, %v525, 0
  %v724 = vsel %vm554, %v526, 0
  %v727 = vsel %vm554, %v527, 0
  %v730 = vsel %vm554, %v528, 0
  %v733 = vsel %vm554, %v529, 0
  %v736 = vsel %vm554, %v530, 0
  %v739 = vsel %vm554, %v531, 0
  %v742 = vsel %vm554, %v532, 0
  %v745 = vsel %vm554, %v533, 0
  %v748 = vsel %vm554, %v534, 0
  %v751 = vsel %vm554, %v535, 0
  %v754 = vsel %vm554, %v536, 0
  %v757 = vsel %vm554, %v537, 0
  %v760 = vsel %vm554, %v538, 0
  %v763 = vsel %vm554, %v539, 0
  %v766 = vsel %vm554, %v540, 0
  %v769 = vsel %vm554, %v541, 0
  %771 = vmatprep.subr.bf16.mxu0 0
  %772 = vmatpush1.bf16.msra.mxu0 %v550
  %773 = vmatprep.subr.bf16.mxu0 0
  %774 = vmatpush1.bf16.msra.mxu0 %v551
  %775 = vmatprep.subr.bf16.mxu0 0
  %776 = vmatpush1.bf16.msra.mxu0 0
  %777 = vmatprep.subr.bf16.mxu0 0
  %778 = vmatpush1.bf16.msra.mxu0 0
  %779 = vmatprep.subr.bf16.mxu0 0
  %780 = vmatpush1.bf16.msra.mxu0 0
  %781 = vmatprep.subr.bf16.mxu0 0
  %782 = vmatpush1.bf16.msra.mxu0 0
  %783 = vmatprep.subr.bf16.mxu0 0
  %784 = vmatpush1.bf16.msra.mxu0 0
  %785 = vmatprep.subr.bf16.mxu0 0
  %786 = vmatpush1.bf16.msra.mxu0 0
  %787 = vmatprep.subr.bf16.mxu0 0
  %788 = vmatpush1.bf16.msra.mxu0 0
  %789 = vmatprep.subr.bf16.mxu0 0
  %790 = vmatpush1.bf16.msra.mxu0 0
  %791 = vmatprep.subr.bf16.mxu0 0
  %792 = vmatpush1.bf16.msra.mxu0 0
  %793 = vmatprep.subr.bf16.mxu0 0
  %794 = vmatpush1.bf16.msra.mxu0 0
  %795 = vmatprep.subr.bf16.mxu0 0
  %796 = vmatpush1.bf16.msra.mxu0 0
  %797 = vmatprep.subr.bf16.mxu0 0
  %798 = vmatpush1.bf16.msra.mxu0 0
  %799 = vmatprep.subr.bf16.mxu0 0
  %800 = vmatpush1.bf16.msra.mxu0 0
  %801 = vmatprep.subr.bf16.mxu0 0
  %802 = vmatpush1.bf16.msra.mxu0 0
  %803 = vmatprep.mubr.bf16.mxu0 0
  %804 = vmatmul.mubr.bf16.gmra.mrb[0].mxu0 %v556
  %v805 = vpop.f32.mrb[0].mxu0
  %v806 = vadd.f32 %v180, %v805
  %v807 = vpop.f32.mrb[0].mxu0
  %v808 = vpop.f32.mrb[0].mxu0
  %v809 = vadd.f32 %v180, %v808
  %v810 = vpop.f32.mrb[0].mxu0
  %811 = vmatprep.mubr.bf16.mxu0 0
  %812 = vmatmul.mubr.bf16.gmra.mrb[0].mxu0 %v559
  %v813 = vpop.f32.mrb[0].mxu0
  %v814 = vadd.f32 %v180, %v813
  %v815 = vpop.f32.mrb[0].mxu0
  %v816 = vpop.f32.mrb[0].mxu0
  %v817 = vadd.f32 %v180, %v816
  %v818 = vpop.f32.mrb[0].mxu0
  %819 = vmatprep.mubr.bf16.mxu0 0
  %820 = vmatmul.mubr.bf16.gmra.mrb[0].mxu0 %v562
  %v821 = vpop.f32.mrb[0].mxu0
  %v822 = vadd.f32 %v180, %v821
  %v823 = vpop.f32.mrb[0].mxu0
  %v824 = vpop.f32.mrb[0].mxu0
  %v825 = vadd.f32 %v180, %v824
  %v826 = vpop.f32.mrb[0].mxu0
  %827 = vmatprep.mubr.bf16.mxu0 0
  %828 = vmatmul.mubr.bf16.gmra.mrb[0].mxu0 %v565
  %v829 = vpop.f32.mrb[0].mxu0
  %v830 = vadd.f32 %v180, %v829
  %v831 = vpop.f32.mrb[0].mxu0
  %v832 = vpop.f32.mrb[0].mxu0
  %v833 = vadd.f32 %v180, %v832
  %v834 = vpop.f32.mrb[0].mxu0
  %835 = vmatprep.mubr.bf16.mxu0 0
  %836 = vmatmul.mubr.bf16.gmra.mrb[0].mxu0 %v568
  %v837 = vpop.f32.mrb[0].mxu0
  %v838 = vadd.f32 %v180, %v837
  %v839 = vpop.f32.mrb[0].mxu0
  %v840 = vpop.f32.mrb[0].mxu0
  %v841 = vadd.f32 %v180, %v840
  %v842 = vpop.f32.mrb[0].mxu0
  %843 = vmatprep.mubr.bf16.mxu0 0
  %844 = vmatmul.mubr.bf16.gmra.mrb[0].mxu0 %v571
  %v845 = vpop.f32.mrb[0].mxu0
  %v846 = vadd.f32 %v180, %v845
  %v847 = vpop.f32.mrb[0].mxu0
  %v848 = vpop.f32.mrb[0].mxu0
  %v849 = vadd.f32 %v180, %v848
  %v850 = vpop.f32.mrb[0].mxu0
  %851 = vmatprep.mubr.bf16.mxu0 0
  %852 = vmatmul.mubr.bf16.gmra.mrb[0].mxu0 %v574
  %v853 = vpop.f32.mrb[0].mxu0
  %v854 = vadd.f32 %v180, %v853
  %v855 = vpop.f32.mrb[0].mxu0
  %v856 = vpop.f32.mrb[0].mxu0
  %v857 = vadd.f32 %v180, %v856
  %v858 = vpop.f32.mrb[0].mxu0
  %859 = vmatprep.mubr.bf16.mxu0 0
  %860 = vmatmul.mubr.bf16.gmra.mrb[0].mxu0 %v577
  %v861 = vpop.f32.mrb[0].mxu0
  %v862 = vadd.f32 %v180, %v861
  %v863 = vpop.f32.mrb[0].mxu0
  %v864 = vpop.f32.mrb[0].mxu0
  %v865 = vadd.f32 %v180, %v864
  %v866 = vpop.f32.mrb[0].mxu0
  %867 = vmatprep.mubr.bf16.mxu0 0
  %868 = vmatmul.mubr.bf16.gmra.mrb[0].mxu0 %v580
  %v869 = vpop.f32.mrb[0].mxu0
  %v870 = vadd.f32 %v180, %v869
  %v871 = vpop.f32.mrb[0].mxu0
  %v872 = vpop.f32.mrb[0].mxu0
  %v873 = vadd.f32 %v180, %v872
  %v874 = vpop.f32.mrb[0].mxu0
  %875 = vmatprep.mubr.bf16.mxu0 0
  %876 = vmatmul.mubr.bf16.gmra.mrb[0].mxu0 %v583
  %v877 = vpop.f32.mrb[0].mxu0
  %v878 = vadd.f32 %v180, %v877
  %v879 = vpop.f32.mrb[0].mxu0
  %v880 = vpop.f32.mrb[0].mxu0
  %v881 = vadd.f32 %v180, %v880
  %v882 = vpop.f32.mrb[0].mxu0
  %883 = vmatprep.mubr.bf16.mxu0 0
  %884 = vmatmul.mubr.bf16.gmra.mrb[0].mxu0 %v586
  %v885 = vpop.f32.mrb[0].mxu0
  %v886 = vadd.f32 %v180, %v885
  %v887 = vpop.f32.mrb[0].mxu0
  %v888 = vpop.f32.mrb[0].mxu0
  %v889 = vadd.f32 %v180, %v888
  %v890 = vpop.f32.mrb[0].mxu0
  %891 = vmatprep.mubr.bf16.mxu0 0
  %892 = vmatmul.mubr.bf16.gmra.mrb[0].mxu0 %v589
  %v893 = vpop.f32.mrb[0].mxu0
  %v894 = vadd.f32 %v180, %v893
  %v895 = vpop.f32.mrb[0].mxu0
  %v896 = vpop.f32.mrb[0].mxu0
  %v897 = vadd.f32 %v180, %v896
  %v898 = vpop.f32.mrb[0].mxu0
  %899 = vmatprep.mubr.bf16.mxu0 0
  %900 = vmatmul.mubr.bf16.gmra.mrb[0].mxu0 %v592
  %v901 = vpop.f32.mrb[0].mxu0
  %v902 = vadd.f32 %v180, %v901
  %v903 = vpop.f32.mrb[0].mxu0
  %v904 = vpop.f32.mrb[0].mxu0
  %v905 = vadd.f32 %v180, %v904
  %v906 = vpop.f32.mrb[0].mxu0
  %907 = vmatprep.mubr.bf16.mxu0 0
  %908 = vmatmul.mubr.bf16.gmra.mrb[0].mxu0 %v595
  %v909 = vpop.f32.mrb[0].mxu0
  %v910 = vadd.f32 %v180, %v909
  %v911 = vpop.f32.mrb[0].mxu0
  %v912 = vpop.f32.mrb[0].mxu0
  %v913 = vadd.f32 %v180, %v912
  %v914 = vpop.f32.mrb[0].mxu0
  %915 = vmatprep.mubr.bf16.mxu0 0
  %916 = vmatmul.mubr.bf16.gmra.mrb[0].mxu0 %v598
  %v917 = vpop.f32.mrb[0].mxu0
  %v918 = vadd.f32 %v180, %v917
  %v919 = vpop.f32.mrb[0].mxu0
  %v920 = vpop.f32.mrb[0].mxu0
  %v921 = vadd.f32 %v180, %v920
  %v922 = vpop.f32.mrb[0].mxu0
  %923 = vmatprep.mubr.bf16.mxu0 0
  %924 = vmatmul.mubr.bf16.gmra.mrb[0].mxu0 %v601
  %v925 = vpop.f32.mrb[0].mxu0
  %v926 = vadd.f32 %v180, %v925
  %v927 = vpop.f32.mrb[0].mxu0
  %v928 = vpop.f32.mrb[0].mxu0
  %v929 = vadd.f32 %v180, %v928
  %v930 = vpop.f32.mrb[0].mxu0
  %931 = vmatprep.mubr.bf16.mxu0 0
  %932 = vmatmul.mubr.bf16.gmra.mrb[0].mxu0 %v604
  %v933 = vpop.f32.mrb[0].mxu0
  %v934 = vadd.f32 %v180, %v933
  %v935 = vpop.f32.mrb[0].mxu0
  %v936 = vpop.f32.mrb[0].mxu0
  %v937 = vadd.f32 %v180, %v936
  %v938 = vpop.f32.mrb[0].mxu0
  %939 = vmatprep.mubr.bf16.mxu0 0
  %940 = vmatmul.mubr.bf16.gmra.mrb[0].mxu0 %v607
  %v941 = vpop.f32.mrb[0].mxu0
  %v942 = vadd.f32 %v180, %v941
  %v943 = vpop.f32.mrb[0].mxu0
  %v944 = vpop.f32.mrb[0].mxu0
  %v945 = vadd.f32 %v180, %v944
  %v946 = vpop.f32.mrb[0].mxu0
  %947 = vmatprep.mubr.bf16.mxu0 0
  %948 = vmatmul.mubr.bf16.gmra.mrb[0].mxu0 %v610
  %v949 = vpop.f32.mrb[0].mxu0
  %v950 = vadd.f32 %v180, %v949
  %v951 = vpop.f32.mrb[0].mxu0
  %v952 = vpop.f32.mrb[0].mxu0
  %v953 = vadd.f32 %v180, %v952
  %v954 = vpop.f32.mrb[0].mxu0
  %955 = vmatprep.mubr.bf16.mxu0 0
  %956 = vmatmul.mubr.bf16.gmra.mrb[0].mxu0 %v613
  %v957 = vpop.f32.mrb[0].mxu0
  %v958 = vadd.f32 %v180, %v957
  %v959 = vpop.f32.mrb[0].mxu0
  %v960 = vpop.f32.mrb[0].mxu0
  %v961 = vadd.f32 %v180, %v960
  %v962 = vpop.f32.mrb[0].mxu0
  %963 = vmatprep.mubr.bf16.mxu0 0
  %964 = vmatmul.mubr.bf16.gmra.mrb[0].mxu0 %v616
  %v965 = vpop.f32.mrb[0].mxu0
  %v966 = vadd.f32 %v180, %v965
  %v967 = vpop.f32.mrb[0].mxu0
  %v968 = vpop.f32.mrb[0].mxu0
  %v969 = vadd.f32 %v180, %v968
  %v970 = vpop.f32.mrb[0].mxu0
  %971 = vmatprep.mubr.bf16.mxu0 0
  %972 = vmatmul.mubr.bf16.gmra.mrb[0].mxu0 %v619
  %v973 = vpop.f32.mrb[0].mxu0
  %v974 = vadd.f32 %v180, %v973
  %v975 = vpop.f32.mrb[0].mxu0
  %v976 = vpop.f32.mrb[0].mxu0
  %v977 = vadd.f32 %v180, %v976
  %v978 = vpop.f32.mrb[0].mxu0
  %979 = vmatprep.mubr.bf16.mxu0 0
  %980 = vmatmul.mubr.bf16.gmra.mrb[0].mxu0 %v622
  %v981 = vpop.f32.mrb[0].mxu0
  %v982 = vadd.f32 %v180, %v981
  %v983 = vpop.f32.mrb[0].mxu0
  %v984 = vpop.f32.mrb[0].mxu0
  %v985 = vadd.f32 %v180, %v984
  %v986 = vpop.f32.mrb[0].mxu0
  %987 = vmatprep.mubr.bf16.mxu0 0
  %988 = vmatmul.mubr.bf16.gmra.mrb[0].mxu0 %v625
  %v989 = vpop.f32.mrb[0].mxu0
  %v990 = vadd.f32 %v180, %v989
  %v991 = vpop.f32.mrb[0].mxu0
  %v992 = vpop.f32.mrb[0].mxu0
  %v993 = vadd.f32 %v180, %v992
  %v994 = vpop.f32.mrb[0].mxu0
  %995 = vmatprep.mubr.bf16.mxu0 0
  %996 = vmatmul.mubr.bf16.gmra.mrb[0].mxu0 %v628
  %v997 = vpop.f32.mrb[0].mxu0
  %v998 = vadd.f32 %v180, %v997
  %v999 = vpop.f32.mrb[0].mxu0
  %v1000 = vpop.f32.mrb[0].mxu0
  %v1001 = vadd.f32 %v180, %v1000
  %v1002 = vpop.f32.mrb[0].mxu0
  %1003 = vmatprep.mubr.bf16.mxu0 0
  %1004 = vmatmul.mubr.bf16.gmra.mrb[0].mxu0 %v631
  %v1005 = vpop.f32.mrb[0].mxu0
  %v1006 = vadd.f32 %v180, %v1005
  %v1007 = vpop.f32.mrb[0].mxu0
  %v1008 = vpop.f32.mrb[0].mxu0
  %v1009 = vadd.f32 %v180, %v1008
  %v1010 = vpop.f32.mrb[0].mxu0
  %1011 = vmatprep.mubr.bf16.mxu0 0
  %1012 = vmatmul.mubr.bf16.gmra.mrb[0].mxu0 %v634
  %v1013 = vpop.f32.mrb[0].mxu0
  %v1014 = vadd.f32 %v180, %v1013
  %v1015 = vpop.f32.mrb[0].mxu0
  %v1016 = vpop.f32.mrb[0].mxu0
  %v1017 = vadd.f32 %v180, %v1016
  %v1018 = vpop.f32.mrb[0].mxu0
  %1019 = vmatprep.mubr.bf16.mxu0 0
  %1020 = vmatmul.mubr.bf16.gmra.mrb[0].mxu0 %v637
  %v1021 = vpop.f32.mrb[0].mxu0
  %v1022 = vadd.f32 %v180, %v1021
  %v1023 = vpop.f32.mrb[0].mxu0
  %v1024 = vpop.f32.mrb[0].mxu0
  %v1025 = vadd.f32 %v180, %v1024
  %v1026 = vpop.f32.mrb[0].mxu0
  %1027 = vmatprep.mubr.bf16.mxu0 0
  %1028 = vmatmul.mubr.bf16.gmra.mrb[0].mxu0 %v640
  %v1029 = vpop.f32.mrb[0].mxu0
  %v1030 = vadd.f32 %v180, %v1029
  %v1031 = vpop.f32.mrb[0].mxu0
  %v1032 = vpop.f32.mrb[0].mxu0
  %v1033 = vadd.f32 %v180, %v1032
  %v1034 = vpop.f32.mrb[0].mxu0
  %1035 = vmatprep.mubr.bf16.mxu0 0
  %1036 = vmatmul.mubr.bf16.gmra.mrb[0].mxu0 %v643
  %v1037 = vpop.f32.mrb[0].mxu0
  %v1038 = vadd.f32 %v180, %v1037
  %v1039 = vpop.f32.mrb[0].mxu0
  %v1040 = vpop.f32.mrb[0].mxu0
  %v1041 = vadd.f32 %v180, %v1040
  %v1042 = vpop.f32.mrb[0].mxu0
  %1043 = vmatprep.mubr.bf16.mxu0 0
  %1044 = vmatmul.mubr.bf16.gmra.mrb[0].mxu0 %v646
  %v1045 = vpop.f32.mrb[0].mxu0
  %v1046 = vadd.f32 %v180, %v1045
  %v1047 = vpop.f32.mrb[0].mxu0
  %v1048 = vpop.f32.mrb[0].mxu0
  %v1049 = vadd.f32 %v180, %v1048
  %v1050 = vpop.f32.mrb[0].mxu0
  %1051 = vmatprep.mubr.bf16.mxu0 0
  %1052 = vmatmul.mubr.bf16.gmra.mrb[0].mxu0 %v649
  %v1053 = vpop.f32.mrb[0].mxu0
  %v1054 = vadd.f32 %v180, %v1053
  %v1055 = vpop.f32.mrb[0].mxu0
  %v1056 = vpop.f32.mrb[0].mxu0
  %v1057 = vadd.f32 %v180, %v1056
  %v1058 = vpop.f32.mrb[0].mxu0
  %1059 = vmatprep.mubr.bf16.mxu0 0
  %1060 = vmatmul.mubr.bf16.gmra.mrb[0].mxu0 %v652
  %v1061 = vpop.f32.mrb[0].mxu0
  %v1062 = vadd.f32 %v180, %v1061
  %v1063 = vpop.f32.mrb[0].mxu0
  %v1064 = vpop.f32.mrb[0].mxu0
  %v1065 = vadd.f32 %v180, %v1064
  %v1066 = vpop.f32.mrb[0].mxu0
  %1067 = vmatprep.mubr.bf16.mxu0 0
  %1068 = vmatmul.mubr.bf16.gmra.mrb[0].mxu0 %v655
  %v1069 = vpop.f32.mrb[0].mxu0
  %v1070 = vadd.f32 %v180, %v1069
  %v1071 = vpop.f32.mrb[0].mxu0
  %v1072 = vpop.f32.mrb[0].mxu0
  %v1073 = vadd.f32 %v180, %v1072
  %v1074 = vpop.f32.mrb[0].mxu0
  %1075 = vmatprep.mubr.bf16.mxu0 0
  %1076 = vmatmul.mubr.bf16.gmra.mrb[0].mxu0 %v658
  %v1077 = vpop.f32.mrb[0].mxu0
  %v1078 = vadd.f32 %v180, %v1077
  %v1079 = vpop.f32.mrb[0].mxu0
  %v1080 = vpop.f32.mrb[0].mxu0
  %v1081 = vadd.f32 %v180, %v1080
  %v1082 = vpop.f32.mrb[0].mxu0
  %1083 = vmatprep.mubr.bf16.mxu0 0
  %1084 = vmatmul.mubr.bf16.gmra.mrb[0].mxu0 %v661
  %v1085 = vpop.f32.mrb[0].mxu0
  %v1086 = vadd.f32 %v180, %v1085
  %v1087 = vpop.f32.mrb[0].mxu0
  %v1088 = vpop.f32.mrb[0].mxu0
  %v1089 = vadd.f32 %v180, %v1088
  %v1090 = vpop.f32.mrb[0].mxu0
  %1091 = vmatprep.mubr.bf16.mxu0 0
  %1092 = vmatmul.mubr.bf16.gmra.mrb[0].mxu0 %v664
  %v1093 = vpop.f32.mrb[0].mxu0
  %v1094 = vadd.f32 %v180, %v1093
  %v1095 = vpop.f32.mrb[0].mxu0
  %v1096 = vpop.f32.mrb[0].mxu0
  %v1097 = vadd.f32 %v180, %v1096
  %v1098 = vpop.f32.mrb[0].mxu0
  %1099 = vmatprep.mubr.bf16.mxu0 0
  %1100 = vmatmul.mubr.bf16.gmra.mrb[0].mxu0 %v667
  %v1101 = vpop.f32.mrb[0].mxu0
  %v1102 = vadd.f32 %v180, %v1101
  %v1103 = vpop.f32.mrb[0].mxu0
  %v1104 = vpop.f32.mrb[0].mxu0
  %v1105 = vadd.f32 %v180, %v1104
  %v1106 = vpop.f32.mrb[0].mxu0
  %1107 = vmatprep.mubr.bf16.mxu0 0
  %1108 = vmatmul.mubr.bf16.gmra.mrb[0].mxu0 %v670
  %v1109 = vpop.f32.mrb[0].mxu0
  %v1110 = vadd.f32 %v180, %v1109
  %v1111 = vpop.f32.mrb[0].mxu0
  %v1112 = vpop.f32.mrb[0].mxu0
  %v1113 = vadd.f32 %v180, %v1112
  %v1114 = vpop.f32.mrb[0].mxu0
  %1115 = vmatprep.mubr.bf16.mxu0 0
  %1116 = vmatmul.mubr.bf16.gmra.mrb[0].mxu0 %v673
  %v1117 = vpop.f32.mrb[0].mxu0
  %v1118 = vadd.f32 %v180, %v1117
  %v1119 = vpop.f32.mrb[0].mxu0
  %v1120 = vpop.f32.mrb[0].mxu0
  %v1121 = vadd.f32 %v180, %v1120
  %v1122 = vpop.f32.mrb[0].mxu0
  %1123 = vmatprep.mubr.bf16.mxu0 0
  %1124 = vmatmul.mubr.bf16.gmra.mrb[0].mxu0 %v676
  %v1125 = vpop.f32.mrb[0].mxu0
  %v1126 = vadd.f32 %v180, %v1125
  %v1127 = vpop.f32.mrb[0].mxu0
  %v1128 = vpop.f32.mrb[0].mxu0
  %v1129 = vadd.f32 %v180, %v1128
  %v1130 = vpop.f32.mrb[0].mxu0
  %1131 = vmatprep.mubr.bf16.mxu0 0
  %1132 = vmatmul.mubr.bf16.gmra.mrb[0].mxu0 %v679
  %v1133 = vpop.f32.mrb[0].mxu0
  %v1134 = vadd.f32 %v180, %v1133
  %v1135 = vpop.f32.mrb[0].mxu0
  %v1136 = vpop.f32.mrb[0].mxu0
  %v1137 = vadd.f32 %v180, %v1136
  %v1138 = vpop.f32.mrb[0].mxu0
  %1139 = vmatprep.mubr.bf16.mxu0 0
  %1140 = vmatmul.mubr.bf16.gmra.mrb[0].mxu0 %v682
  %v1141 = vpop.f32.mrb[0].mxu0
  %v1142 = vadd.f32 %v180, %v1141
  %v1143 = vpop.f32.mrb[0].mxu0
  %v1144 = vpop.f32.mrb[0].mxu0
  %v1145 = vadd.f32 %v180, %v1144
  %v1146 = vpop.f32.mrb[0].mxu0
  %1147 = vmatprep.mubr.bf16.mxu0 0
  %1148 = vmatmul.mubr.bf16.gmra.mrb[0].mxu0 %v685
  %v1149 = vpop.f32.mrb[0].mxu0
  %v1150 = vadd.f32 %v180, %v1149
  %v1151 = vpop.f32.mrb[0].mxu0
  %v1152 = vpop.f32.mrb[0].mxu0
  %v1153 = vadd.f32 %v180, %v1152
  %v1154 = vpop.f32.mrb[0].mxu0
  %1155 = vmatprep.mubr.bf16.mxu0 0
  %1156 = vmatmul.mubr.bf16.gmra.mrb[0].mxu0 %v688
  %v1157 = vpop.f32.mrb[0].mxu0
  %v1158 = vadd.f32 %v180, %v1157
  %v1159 = vpop.f32.mrb[0].mxu0
  %v1160 = vpop.f32.mrb[0].mxu0
  %v1161 = vadd.f32 %v180, %v1160
  %v1162 = vpop.f32.mrb[0].mxu0
  %1163 = vmatprep.mubr.bf16.mxu0 0
  %1164 = vmatmul.mubr.bf16.gmra.mrb[0].mxu0 %v691
  %v1165 = vpop.f32.mrb[0].mxu0
  %v1166 = vadd.f32 %v180, %v1165
  %v1167 = vpop.f32.mrb[0].mxu0
  %v1168 = vpop.f32.mrb[0].mxu0
  %v1169 = vadd.f32 %v180, %v1168
  %v1170 = vpop.f32.mrb[0].mxu0
  %1171 = vmatprep.mubr.bf16.mxu0 0
  %1172 = vmatmul.mubr.bf16.gmra.mrb[0].mxu0 %v694
  %v1173 = vpop.f32.mrb[0].mxu0
  %v1174 = vadd.f32 %v180, %v1173
  %v1175 = vpop.f32.mrb[0].mxu0
  %v1176 = vpop.f32.mrb[0].mxu0
  %v1177 = vadd.f32 %v180, %v1176
  %v1178 = vpop.f32.mrb[0].mxu0
  %1179 = vmatprep.mubr.bf16.mxu0 0
  %1180 = vmatmul.mubr.bf16.gmra.mrb[0].mxu0 %v697
  %v1181 = vpop.f32.mrb[0].mxu0
  %v1182 = vadd.f32 %v180, %v1181
  %v1183 = vpop.f32.mrb[0].mxu0
  %v1184 = vpop.f32.mrb[0].mxu0
  %v1185 = vadd.f32 %v180, %v1184
  %v1186 = vpop.f32.mrb[0].mxu0
  %1187 = vmatprep.mubr.bf16.mxu0 0
  %1188 = vmatmul.mubr.bf16.gmra.mrb[0].mxu0 %v700
  %v1189 = vpop.f32.mrb[0].mxu0
  %v1190 = vadd.f32 %v180, %v1189
  %v1191 = vpop.f32.mrb[0].mxu0
  %v1192 = vpop.f32.mrb[0].mxu0
  %v1193 = vadd.f32 %v180, %v1192
  %v1194 = vpop.f32.mrb[0].mxu0
  %1195 = vmatprep.mubr.bf16.mxu0 0
  %1196 = vmatmul.mubr.bf16.gmra.mrb[0].mxu0 %v703
  %v1197 = vpop.f32.mrb[0].mxu0
  %v1198 = vadd.f32 %v180, %v1197
  %v1199 = vpop.f32.mrb[0].mxu0
  %v1200 = vpop.f32.mrb[0].mxu0
  %v1201 = vadd.f32 %v180, %v1200
  %v1202 = vpop.f32.mrb[0].mxu0
  %1203 = vmatprep.mubr.bf16.mxu0 0
  %1204 = vmatmul.mubr.bf16.gmra.mrb[0].mxu0 %v706
  %v1205 = vpop.f32.mrb[0].mxu0
  %v1206 = vadd.f32 %v180, %v1205
  %v1207 = vpop.f32.mrb[0].mxu0
  %v1208 = vpop.f32.mrb[0].mxu0
  %v1209 = vadd.f32 %v180, %v1208
  %v1210 = vpop.f32.mrb[0].mxu0
  %1211 = vmatprep.mubr.bf16.mxu0 0
  %1212 = vmatmul.mubr.bf16.gmra.mrb[0].mxu0 %v709
  %v1213 = vpop.f32.mrb[0].mxu0
  %v1214 = vadd.f32 %v180, %v1213
  %v1215 = vpop.f32.mrb[0].mxu0
  %v1216 = vpop.f32.mrb[0].mxu0
  %v1217 = vadd.f32 %v180, %v1216
  %v1218 = vpop.f32.mrb[0].mxu0
  %1219 = vmatprep.mubr.bf16.mxu0 0
  %1220 = vmatmul.mubr.bf16.gmra.mrb[0].mxu0 %v712
  %v1221 = vpop.f32.mrb[0].mxu0
  %v1222 = vadd.f32 %v180, %v1221
  %v1223 = vpop.f32.mrb[0].mxu0
  %v1224 = vpop.f32.mrb[0].mxu0
  %v1225 = vadd.f32 %v180, %v1224
  %v1226 = vpop.f32.mrb[0].mxu0
  %1227 = vmatprep.mubr.bf16.mxu0 0
  %1228 = vmatmul.mubr.bf16.gmra.mrb[0].mxu0 %v715
  %v1229 = vpop.f32.mrb[0].mxu0
  %v1230 = vadd.f32 %v180, %v1229
  %v1231 = vpop.f32.mrb[0].mxu0
  %v1232 = vpop.f32.mrb[0].mxu0
  %v1233 = vadd.f32 %v180, %v1232
  %v1234 = vpop.f32.mrb[0].mxu0
  %1235 = vmatprep.mubr.bf16.mxu0 0
  %1236 = vmatmul.mubr.bf16.gmra.mrb[0].mxu0 %v718
  %v1237 = vpop.f32.mrb[0].mxu0
  %v1238 = vadd.f32 %v180, %v1237
  %v1239 = vpop.f32.mrb[0].mxu0
  %v1240 = vpop.f32.mrb[0].mxu0
  %v1241 = vadd.f32 %v180, %v1240
  %v1242 = vpop.f32.mrb[0].mxu0
  %1243 = vmatprep.mubr.bf16.mxu0 0
  %1244 = vmatmul.mubr.bf16.gmra.mrb[0].mxu0 %v721
  %v1245 = vpop.f32.mrb[0].mxu0
  %v1246 = vadd.f32 %v180, %v1245
  %v1247 = vpop.f32.mrb[0].mxu0
  %v1248 = vpop.f32.mrb[0].mxu0
  %v1249 = vadd.f32 %v180, %v1248
  %v1250 = vpop.f32.mrb[0].mxu0
  %1251 = vmatprep.mubr.bf16.mxu0 0
  %1252 = vmatmul.mubr.bf16.gmra.mrb[0].mxu0 %v724
  %v1253 = vpop.f32.mrb[0].mxu0
  %v1254 = vadd.f32 %v180, %v1253
  %v1255 = vpop.f32.mrb[0].mxu0
  %v1256 = vpop.f32.mrb[0].mxu0
  %v1257 = vadd.f32 %v180, %v1256
  %v1258 = vpop.f32.mrb[0].mxu0
  %1259 = vmatprep.mubr.bf16.mxu0 0
  %1260 = vmatmul.mubr.bf16.gmra.mrb[0].mxu0 %v727
  %v1261 = vpop.f32.mrb[0].mxu0
  %v1262 = vadd.f32 %v180, %v1261
  %v1263 = vpop.f32.mrb[0].mxu0
  %v1264 = vpop.f32.mrb[0].mxu0
  %v1265 = vadd.f32 %v180, %v1264
  %v1266 = vpop.f32.mrb[0].mxu0
  %1267 = vmatprep.mubr.bf16.mxu0 0
  %1268 = vmatmul.mubr.bf16.gmra.mrb[0].mxu0 %v730
  %v1269 = vpop.f32.mrb[0].mxu0
  %v1270 = vadd.f32 %v180, %v1269
  %v1271 = vpop.f32.mrb[0].mxu0
  %v1272 = vpop.f32.mrb[0].mxu0
  %v1273 = vadd.f32 %v180, %v1272
  %v1274 = vpop.f32.mrb[0].mxu0
  %1275 = vmatprep.mubr.bf16.mxu0 0
  %1276 = vmatmul.mubr.bf16.gmra.mrb[0].mxu0 %v733
  %v1277 = vpop.f32.mrb[0].mxu0
  %v1278 = vadd.f32 %v180, %v1277
  %v1279 = vpop.f32.mrb[0].mxu0
  %v1280 = vpop.f32.mrb[0].mxu0
  %v1281 = vadd.f32 %v180, %v1280
  %v1282 = vpop.f32.mrb[0].mxu0
  %1283 = vmatprep.mubr.bf16.mxu0 0
  %1284 = vmatmul.mubr.bf16.gmra.mrb[0].mxu0 %v736
  %v1285 = vpop.f32.mrb[0].mxu0
  %v1286 = vadd.f32 %v180, %v1285
  %v1287 = vpop.f32.mrb[0].mxu0
  %v1288 = vpop.f32.mrb[0].mxu0
  %v1289 = vadd.f32 %v180, %v1288
  %v1290 = vpop.f32.mrb[0].mxu0
  %1291 = vmatprep.mubr.bf16.mxu0 0
  %1292 = vmatmul.mubr.bf16.gmra.mrb[0].mxu0 %v739
  %v1293 = vpop.f32.mrb[0].mxu0
  %v1294 = vadd.f32 %v180, %v1293
  %v1295 = vpop.f32.mrb[0].mxu0
  %v1296 = vpop.f32.mrb[0].mxu0
  %v1297 = vadd.f32 %v180, %v1296
  %v1298 = vpop.f32.mrb[0].mxu0
  %1299 = vmatprep.mubr.bf16.mxu0 0
  %1300 = vmatmul.mubr.bf16.gmra.mrb[0].mxu0 %v742
  %v1301 = vpop.f32.mrb[0].mxu0
  %v1302 = vadd.f32 %v180, %v1301
  %v1303 = vpop.f32.mrb[0].mxu0
  %v1304 = vpop.f32.mrb[0].mxu0
  %v1305 = vadd.f32 %v180, %v1304
  %v1306 = vpop.f32.mrb[0].mxu0
  %1307 = vmatprep.mubr.bf16.mxu0 0
  %1308 = vmatmul.mubr.bf16.gmra.mrb[0].mxu0 %v745
  %v1309 = vpop.f32.mrb[0].mxu0
  %v1310 = vadd.f32 %v180, %v1309
  %v1311 = vpop.f32.mrb[0].mxu0
  %v1312 = vpop.f32.mrb[0].mxu0
  %v1313 = vadd.f32 %v180, %v1312
  %v1314 = vpop.f32.mrb[0].mxu0
  %1315 = vmatprep.mubr.bf16.mxu0 0
  %1316 = vmatmul.mubr.bf16.gmra.mrb[0].mxu0 %v748
  %v1317 = vpop.f32.mrb[0].mxu0
  %v1318 = vadd.f32 %v180, %v1317
  %v1319 = vpop.f32.mrb[0].mxu0
  %v1320 = vpop.f32.mrb[0].mxu0
  %v1321 = vadd.f32 %v180, %v1320
  %v1322 = vpop.f32.mrb[0].mxu0
  %1323 = vmatprep.mubr.bf16.mxu0 0
  %1324 = vmatmul.mubr.bf16.gmra.mrb[0].mxu0 %v751
  %v1325 = vpop.f32.mrb[0].mxu0
  %v1326 = vadd.f32 %v180, %v1325
  %v1327 = vpop.f32.mrb[0].mxu0
  %v1328 = vpop.f32.mrb[0].mxu0
  %v1329 = vadd.f32 %v180, %v1328
  %v1330 = vpop.f32.mrb[0].mxu0
  %1331 = vmatprep.mubr.bf16.mxu0 0
  %1332 = vmatmul.mubr.bf16.gmra.mrb[0].mxu0 %v754
  %v1333 = vpop.f32.mrb[0].mxu0
  %v1334 = vadd.f32 %v180, %v1333
  %v1335 = vpop.f32.mrb[0].mxu0
  %v1336 = vpop.f32.mrb[0].mxu0
  %v1337 = vadd.f32 %v180, %v1336
  %v1338 = vpop.f32.mrb[0].mxu0
  %1339 = vmatprep.mubr.bf16.mxu0 0
  %1340 = vmatmul.mubr.bf16.gmra.mrb[0].mxu0 %v757
  %v1341 = vpop.f32.mrb[0].mxu0
  %v1342 = vadd.f32 %v180, %v1341
  %v1343 = vpop.f32.mrb[0].mxu0
  %v1344 = vpop.f32.mrb[0].mxu0
  %v1345 = vadd.f32 %v180, %v1344
  %v1346 = vpop.f32.mrb[0].mxu0
  %1347 = vmatprep.mubr.bf16.mxu0 0
  %1348 = vmatmul.mubr.bf16.gmra.mrb[0].mxu0 %v760
  %v1349 = vpop.f32.mrb[0].mxu0
  %v1350 = vadd.f32 %v180, %v1349
  %v1351 = vpop.f32.mrb[0].mxu0
  %v1352 = vpop.f32.mrb[0].mxu0
  %v1353 = vadd.f32 %v180, %v1352
  %v1354 = vpop.f32.mrb[0].mxu0
  %1355 = vmatprep.mubr.bf16.mxu0 0
  %1356 = vmatmul.mubr.bf16.gmra.mrb[0].mxu0 %v763
  %v1357 = vpop.f32.mrb[0].mxu0
  %v1358 = vadd.f32 %v180, %v1357
  %v1359 = vpop.f32.mrb[0].mxu0
  %v1360 = vpop.f32.mrb[0].mxu0
  %v1361 = vadd.f32 %v180, %v1360
  %v1362 = vpop.f32.mrb[0].mxu0
  %1363 = vmatprep.mubr.bf16.mxu0 0
  %1364 = vmatmul.mubr.bf16.gmra.mrb[0].mxu0 %v766
  %v1365 = vpop.f32.mrb[0].mxu0
  %v1366 = vadd.f32 %v180, %v1365
  %v1367 = vpop.f32.mrb[0].mxu0
  %v1368 = vpop.f32.mrb[0].mxu0
  %v1369 = vadd.f32 %v180, %v1368
  %v1370 = vpop.f32.mrb[0].mxu0
  %1371 = vmatprep.mubr.bf16.mxu0 0
  %1372 = vmatmul.mubr.bf16.gmra.mrb[0].mxu0 %v769
  %v1373 = vpop.f32.mrb[0].mxu0
  %v1374 = vadd.f32 %v180, %v1373
  %v1375 = vpop.f32.mrb[0].mxu0
  %v1376 = vpop.f32.mrb[0].mxu0
  %v1377 = vadd.f32 %v180, %v1376
  %v1378 = vpop.f32.mrb[0].mxu0
  %1379 = vdwg.mxu0
  %v1380 = vmax.f32 %v806, 0.0
  %v1381 = vmax.f32 %v809, 0.0
  %v1382 = vmax.f32 %v814, 0.0
  %v1383 = vmax.f32 %v817, 0.0
  %v1384 = vmax.f32 %v822, 0.0
  %v1385 = vmax.f32 %v825, 0.0
  %v1386 = vmax.f32 %v830, 0.0
  %v1387 = vmax.f32 %v833, 0.0
  %v1388 = vmax.f32 %v838, 0.0
  %v1389 = vmax.f32 %v841, 0.0
  %v1390 = vmax.f32 %v846, 0.0
  %v1391 = vmax.f32 %v849, 0.0
  %v1392 = vmax.f32 %v854, 0.0
  %v1393 = vmax.f32 %v857, 0.0
  %v1394 = vmax.f32 %v862, 0.0
  %v1395 = vmax.f32 %v865, 0.0
  %v1396 = vmax.f32 %v870, 0.0
  %v1397 = vmax.f32 %v873, 0.0
  %v1398 = vmax.f32 %v878, 0.0
  %v1399 = vmax.f32 %v881, 0.0
  %v1400 = vmax.f32 %v886, 0.0
  %v1401 = vmax.f32 %v889, 0.0
  %v1402 = vmax.f32 %v894, 0.0
  %v1403 = vmax.f32 %v897, 0.0
  %v1404 = vmax.f32 %v902, 0.0
  %v1405 = vmax.f32 %v905, 0.0
  %v1406 = vmax.f32 %v910, 0.0
  %v1407 = vmax.f32 %v913, 0.0
  %v1408 = vmax.f32 %v918, 0.0
  %v1409 = vmax.f32 %v921, 0.0
  %v1410 = vmax.f32 %v926, 0.0
  %v1411 = vmax.f32 %v929, 0.0
  %v1412 = vmax.f32 %v934, 0.0
  %v1413 = vmax.f32 %v937, 0.0
  %v1414 = vmax.f32 %v942, 0.0
  %v1415 = vmax.f32 %v945, 0.0
  %v1416 = vmax.f32 %v950, 0.0
  %v1417 = vmax.f32 %v953, 0.0
  %v1418 = vmax.f32 %v958, 0.0
  %v1419 = vmax.f32 %v961, 0.0
  %v1420 = vmax.f32 %v966, 0.0
  %v1421 = vmax.f32 %v969, 0.0
  %v1422 = vmax.f32 %v974, 0.0
  %v1423 = vmax.f32 %v977, 0.0
  %v1424 = vmax.f32 %v982, 0.0
  %v1425 = vmax.f32 %v985, 0.0
  %v1426 = vmax.f32 %v990, 0.0
  %v1427 = vmax.f32 %v993, 0.0
  %v1428 = vmax.f32 %v998, 0.0
  %v1429 = vmax.f32 %v1001, 0.0
  %v1430 = vmax.f32 %v1006, 0.0
  %v1431 = vmax.f32 %v1009, 0.0
  %v1432 = vmax.f32 %v1014, 0.0
  %v1433 = vmax.f32 %v1017, 0.0
  %v1434 = vmax.f32 %v1022, 0.0
  %v1435 = vmax.f32 %v1025, 0.0
  %v1436 = vmax.f32 %v1030, 0.0
  %v1437 = vmax.f32 %v1033, 0.0
  %v1438 = vmax.f32 %v1038, 0.0
  %v1439 = vmax.f32 %v1041, 0.0
  %v1440 = vmax.f32 %v1046, 0.0
  %v1441 = vmax.f32 %v1049, 0.0
  %v1442 = vmax.f32 %v1054, 0.0
  %v1443 = vmax.f32 %v1057, 0.0
  %v1444 = vmax.f32 %v1062, 0.0
  %v1445 = vmax.f32 %v1065, 0.0
  %v1446 = vmax.f32 %v1070, 0.0
  %v1447 = vmax.f32 %v1073, 0.0
  %v1448 = vmax.f32 %v1078, 0.0
  %v1449 = vmax.f32 %v1081, 0.0
  %v1450 = vmax.f32 %v1086, 0.0
  %v1451 = vmax.f32 %v1089, 0.0
  %v1452 = vmax.f32 %v1094, 0.0
  %v1453 = vmax.f32 %v1097, 0.0
  %v1454 = vmax.f32 %v1102, 0.0
  %v1455 = vmax.f32 %v1105, 0.0
  %v1456 = vmax.f32 %v1110, 0.0
  %v1457 = vmax.f32 %v1113, 0.0
  %v1458 = vmax.f32 %v1118, 0.0
  %v1459 = vmax.f32 %v1121, 0.0
  %v1460 = vmax.f32 %v1126, 0.0
  %v1461 = vmax.f32 %v1129, 0.0
  %v1462 = vmax.f32 %v1134, 0.0
  %v1463 = vmax.f32 %v1137, 0.0
  %v1464 = vmax.f32 %v1142, 0.0
  %v1465 = vmax.f32 %v1145, 0.0
  %v1466 = vmax.f32 %v1150, 0.0
  %v1467 = vmax.f32 %v1153, 0.0
  %v1468 = vmax.f32 %v1158, 0.0
  %v1469 = vmax.f32 %v1161, 0.0
  %v1470 = vmax.f32 %v1166, 0.0
  %v1471 = vmax.f32 %v1169, 0.0
  %v1472 = vmax.f32 %v1174, 0.0
  %v1473 = vmax.f32 %v1177, 0.0
  %v1474 = vmax.f32 %v1182, 0.0
  %v1475 = vmax.f32 %v1185, 0.0
  %v1476 = vmax.f32 %v1190, 0.0
  %v1477 = vmax.f32 %v1193, 0.0
  %v1478 = vmax.f32 %v1198, 0.0
  %v1479 = vmax.f32 %v1201, 0.0
  %v1480 = vmax.f32 %v1206, 0.0
  %v1481 = vmax.f32 %v1209, 0.0
  %v1482 = vmax.f32 %v1214, 0.0
  %v1483 = vmax.f32 %v1217, 0.0
  %v1484 = vmax.f32 %v1222, 0.0
  %v1485 = vmax.f32 %v1225, 0.0
  %v1486 = vmax.f32 %v1230, 0.0
  %v1487 = vmax.f32 %v1233, 0.0
  %v1488 = vmax.f32 %v1238, 0.0
  %v1489 = vmax.f32 %v1241, 0.0
  %v1490 = vmax.f32 %v1246, 0.0
  %v1491 = vmax.f32 %v1249, 0.0
  %v1492 = vmax.f32 %v1254, 0.0
  %v1493 = vmax.f32 %v1257, 0.0
  %v1494 = vmax.f32 %v1262, 0.0
  %v1495 = vmax.f32 %v1265, 0.0
  %v1496 = vmax.f32 %v1270, 0.0
  %v1497 = vmax.f32 %v1273, 0.0
  %v1498 = vmax.f32 %v1278, 0.0
  %v1499 = vmax.f32 %v1281, 0.0
  %v1500 = vmax.f32 %v1286, 0.0
  %v1501 = vmax.f32 %v1289, 0.0
  %v1502 = vmax.f32 %v1294, 0.0
  %v1503 = vmax.f32 %v1297, 0.0
  %v1504 = vmax.f32 %v1302, 0.0
  %v1505 = vmax.f32 %v1305, 0.0
  %v1506 = vmax.f32 %v1310, 0.0
  %v1507 = vmax.f32 %v1313, 0.0
  %v1508 = vmax.f32 %v1318, 0.0
  %v1509 = vmax.f32 %v1321, 0.0
  %v1510 = vmax.f32 %v1326, 0.0
  %v1511 = vmax.f32 %v1329, 0.0
  %v1512 = vmax.f32 %v1334, 0.0
  %v1513 = vmax.f32 %v1337, 0.0
  %v1514 = vmax.f32 %v1342, 0.0
  %v1515 = vmax.f32 %v1345, 0.0
  %v1516 = vmax.f32 %v1350, 0.0
  %v1517 = vmax.f32 %v1353, 0.0
  %v1518 = vmax.f32 %v1358, 0.0
  %v1519 = vmax.f32 %v1361, 0.0
  %v1520 = vmax.f32 %v1366, 0.0
  %v1521 = vmax.f32 %v1369, 0.0
  %v1522 = vmax.f32 %v1374, 0.0
  %v1523 = vmax.f32 %v1377, 0.0
  %1524 = vst [vmem:[#allocation2] sm:$0xff] %v1380
  %1525 = vst [vmem:[#allocation2 + $0x8] sm:$0xff] %v1381
  %1526 = vst [vmem:[#allocation2 + $0x10] sm:$0xff] %v1382
  %1527 = vst [vmem:[#allocation2 + $0x18] sm:$0xff] %v1383
  %1528 = vst [vmem:[#allocation2 + $0x20] sm:$0xff] %v1384
  %1529 = vst [vmem:[#allocation2 + $0x28] sm:$0xff] %v1385
  %1530 = vst [vmem:[#allocation2 + $0x30] sm:$0xff] %v1386
  %1531 = vst [vmem:[#allocation2 + $0x38] sm:$0xff] %v1387
  %1532 = vst [vmem:[#allocation2 + $0x40] sm:$0xff] %v1388
  %1533 = vst [vmem:[#allocation2 + $0x48] sm:$0xff] %v1389
  %1534 = vst [vmem:[#allocation2 + $0x50] sm:$0xff] %v1390
  %1535 = vst [vmem:[#allocation2 + $0x58] sm:$0xff] %v1391
  %1536 = vst [vmem:[#allocation2 + $0x60] sm:$0xff] %v1392
  %1537 = vst [vmem:[#allocation2 + $0x68] sm:$0xff] %v1393
  %1538 = vst [vmem:[#allocation2 + $0x70] sm:$0xff] %v1394
  %1539 = vst [vmem:[#allocation2 + $0x78] sm:$0xff] %v1395
  %1540 = vst [vmem:[#allocation2 + $0x80] sm:$0xff] %v1396
  %1541 = vst [vmem:[#allocation2 + $0x88] sm:$0xff] %v1397
  %1542 = vst [vmem:[#allocation2 + $0x90] sm:$0xff] %v1398
  %1543 = vst [vmem:[#allocation2 + $0x98] sm:$0xff] %v1399
  %1544 = vst [vmem:[#allocation2 + $0xa0] sm:$0xff] %v1400
  %1545 = vst [vmem:[#allocation2 + $0xa8] sm:$0xff] %v1401
  %1546 = vst [vmem:[#allocation2 + $0xb0] sm:$0xff] %v1402
  %1547 = vst [vmem:[#allocation2 + $0xb8] sm:$0xff] %v1403
  %1548 = vst [vmem:[#allocation2 + $0xc0] sm:$0xff] %v1404
  %1549 = vst [vmem:[#allocation2 + $0xc8] sm:$0xff] %v1405
  %1550 = vst [vmem:[#allocation2 + $0xd0] sm:$0xff] %v1406
  %1551 = vst [vmem:[#allocation2 + $0xd8] sm:$0xff] %v1407
  %1552 = vst [vmem:[#allocation2 + $0xe0] sm:$0xff] %v1408
  %1553 = vst [vmem:[#allocation2 + $0xe8] sm:$0xff] %v1409
  %1554 = vst [vmem:[#allocation2 + $0xf0] sm:$0xff] %v1410
  %1555 = vst [vmem:[#allocation2 + $0xf8] sm:$0xff] %v1411
  %1556 = vst [vmem:[#allocation2 + $0x100] sm:$0xff] %v1412
  %1557 = vst [vmem:[#allocation2 + $0x108] sm:$0xff] %v1413
  %1558 = vst [vmem:[#allocation2 + $0x110] sm:$0xff] %v1414
  %1559 = vst [vmem:[#allocation2 + $0x118] sm:$0xff] %v1415
  %1560 = vst [vmem:[#allocation2 + $0x120] sm:$0xff] %v1416
  %1561 = vst [vmem:[#allocation2 + $0x128] sm:$0xff] %v1417
  %1562 = vst [vmem:[#allocation2 + $0x130] sm:$0xff] %v1418
  %1563 = vst [vmem:[#allocation2 + $0x138] sm:$0xff] %v1419
  %1564 = vst [vmem:[#allocation2 + $0x140] sm:$0xff] %v1420
  %1565 = vst [vmem:[#allocation2 + $0x148] sm:$0xff] %v1421
  %1566 = vst [vmem:[#allocation2 + $0x150] sm:$0xff] %v1422
  %1567 = vst [vmem:[#allocation2 + $0x158] sm:$0xff] %v1423
  %1568 = vst [vmem:[#allocation2 + $0x160] sm:$0xff] %v1424
  %1569 = vst [vmem:[#allocation2 + $0x168] sm:$0xff] %v1425
  %1570 = vst [vmem:[#allocation2 + $0x170] sm:$0xff] %v1426
  %1571 = vst [vmem:[#allocation2 + $0x178] sm:$0xff] %v1427
  %1572 = vst [vmem:[#allocation2 + $0x180] sm:$0xff] %v1428
  %1573 = vst [vmem:[#allocation2 + $0x188] sm:$0xff] %v1429
  %1574 = vst [vmem:[#allocation2 + $0x190] sm:$0xff] %v1430
  %1575 = vst [vmem:[#allocation2 + $0x198] sm:$0xff] %v1431
  %1576 = vst [vmem:[#allocation2 + $0x1a0] sm:$0xff] %v1432
  %1577 = vst [vmem:[#allocation2 + $0x1a8] sm:$0xff] %v1433
  %1578 = vst [vmem:[#allocation2 + $0x1b0] sm:$0xff] %v1434
  %1579 = vst [vmem:[#allocation2 + $0x1b8] sm:$0xff] %v1435
  %1580 = vst [vmem:[#allocation2 + $0x1c0] sm:$0xff] %v1436
  %1581 = vst [vmem:[#allocation2 + $0x1c8] sm:$0xff] %v1437
  %1582 = vst [vmem:[#allocation2 + $0x1d0] sm:$0xff] %v1438
  %1583 = vst [vmem:[#allocation2 + $0x1d8] sm:$0xff] %v1439
  %1584 = vst [vmem:[#allocation2 + $0x1e0] sm:$0xff] %v1440
  %1585 = vst [vmem:[#allocation2 + $0x1e8] sm:$0xff] %v1441
  %1586 = vst [vmem:[#allocation2 + $0x1f0] sm:$0xff] %v1442
  %1587 = vst [vmem:[#allocation2 + $0x1f8] sm:$0xff] %v1443
  %1588 = vst [vmem:[#allocation2 + $0x200] sm:$0xff] %v1444
  %1589 = vst [vmem:[#allocation2 + $0x208] sm:$0xff] %v1445
  %1590 = vst [vmem:[#allocation2 + $0x210] sm:$0xff] %v1446
  %1591 = vst [vmem:[#allocation2 + $0x218] sm:$0xff] %v1447
  %1592 = vst [vmem:[#allocation2 + $0x220] sm:$0xff] %v1448
  %1593 = vst [vmem:[#allocation2 + $0x228] sm:$0xff] %v1449
  %1594 = vst [vmem:[#allocation2 + $0x230] sm:$0xff] %v1450
  %1595 = vst [vmem:[#allocation2 + $0x238] sm:$0xff] %v1451
  %1596 = vst [vmem:[#allocation2 + $0x240] sm:$0xff] %v1452
  %1597 = vst [vmem:[#allocation2 + $0x248] sm:$0xff] %v1453
  %1598 = vst [vmem:[#allocation2 + $0x250] sm:$0xff] %v1454
  %1599 = vst [vmem:[#allocation2 + $0x258] sm:$0xff] %v1455
  %1600 = vst [vmem:[#allocation2 + $0x260] sm:$0xff] %v1456
  %1601 = vst [vmem:[#allocation2 + $0x268] sm:$0xff] %v1457
  %1602 = vst [vmem:[#allocation2 + $0x270] sm:$0xff] %v1458
  %1603 = vst [vmem:[#allocation2 + $0x278] sm:$0xff] %v1459
  %1604 = vst [vmem:[#allocation2 + $0x280] sm:$0xff] %v1460
  %1605 = vst [vmem:[#allocation2 + $0x288] sm:$0xff] %v1461
  %1606 = vst [vmem:[#allocation2 + $0x290] sm:$0xff] %v1462
  %1607 = vst [vmem:[#allocation2 + $0x298] sm:$0xff] %v1463
  %1608 = vst [vmem:[#allocation2 + $0x2a0] sm:$0xff] %v1464
  %1609 = vst [vmem:[#allocation2 + $0x2a8] sm:$0xff] %v1465
  %1610 = vst [vmem:[#allocation2 + $0x2b0] sm:$0xff] %v1466
  %1611 = vst [vmem:[#allocation2 + $0x2b8] sm:$0xff] %v1467
  %1612 = vst [vmem:[#allocation2 + $0x2c0] sm:$0xff] %v1468
  %1613 = vst [vmem:[#allocation2 + $0x2c8] sm:$0xff] %v1469
  %1614 = vst [vmem:[#allocation2 + $0x2d0] sm:$0xff] %v1470
  %1615 = vst [vmem:[#allocation2 + $0x2d8] sm:$0xff] %v1471
  %1616 = vst [vmem:[#allocation2 + $0x2e0] sm:$0xff] %v1472
  %1617 = vst [vmem:[#allocation2 + $0x2e8] sm:$0xff] %v1473
  %1618 = vst [vmem:[#allocation2 + $0x2f0] sm:$0xff] %v1474
  %1619 = vst [vmem:[#allocation2 + $0x2f8] sm:$0xff] %v1475
  %1620 = vst [vmem:[#allocation2 + $0x300] sm:$0xff] %v1476
  %1621 = vst [vmem:[#allocation2 + $0x308] sm:$0xff] %v1477
  %1622 = vst [vmem:[#allocation2 + $0x310] sm:$0xff] %v1478
  %1623 = vst [vmem:[#allocation2 + $0x318] sm:$0xff] %v1479
  %1624 = vst [vmem:[#allocation2 + $0x320] sm:$0xff] %v1480
  %1625 = vst [vmem:[#allocation2 + $0x328] sm:$0xff] %v1481
  %1626 = vst [vmem:[#allocation2 + $0x330] sm:$0xff] %v1482
  %1627 = vst [vmem:[#allocation2 + $0x338] sm:$0xff] %v1483
  %1628 = vst [vmem:[#allocation2 + $0x340] sm:$0xff] %v1484
  %1629 = vst [vmem:[#allocation2 + $0x348] sm:$0xff] %v1485
  %1630 = vst [vmem:[#allocation2 + $0x350] sm:$0xff] %v1486
  %1631 = vst [vmem:[#allocation2 + $0x358] sm:$0xff] %v1487
  %1632 = vst [vmem:[#allocation2 + $0x360] sm:$0xff] %v1488
  %1633 = vst [vmem:[#allocation2 + $0x368] sm:$0xff] %v1489
  %1634 = vst [vmem:[#allocation2 + $0x370] sm:$0xff] %v1490
  %1635 = vst [vmem:[#allocation2 + $0x378] sm:$0xff] %v1491
  %1636 = vst [vmem:[#allocation2 + $0x380] sm:$0xff] %v1492
  %1637 = vst [vmem:[#allocation2 + $0x388] sm:$0xff] %v1493
  %1638 = vst [vmem:[#allocation2 + $0x390] sm:$0xff] %v1494
  %1639 = vst [vmem:[#allocation2 + $0x398] sm:$0xff] %v1495
  %1640 = vst [vmem:[#allocation2 + $0x3a0] sm:$0xff] %v1496
  %1641 = vst [vmem:[#allocation2 + $0x3a8] sm:$0xff] %v1497
  %1642 = vst [vmem:[#allocation2 + $0x3b0] sm:$0xff] %v1498
  %1643 = vst [vmem:[#allocation2 + $0x3b8] sm:$0xff] %v1499
  %1644 = vst [vmem:[#allocation2 + $0x3c0] sm:$0xff] %v1500
  %1645 = vst [vmem:[#allocation2 + $0x3c8] sm:$0xff] %v1501
  %1646 = vst [vmem:[#allocation2 + $0x3d0] sm:$0xff] %v1502
  %1647 = vst [vmem:[#allocation2 + $0x3d8] sm:$0xff] %v1503
  %1648 = vst [vmem:[#allocation2 + $0x3e0] sm:$0xff] %v1504
  %1649 = vst [vmem:[#allocation2 + $0x3e8] sm:$0xff] %v1505
  %1650 = vst [vmem:[#allocation2 + $0x3f0] sm:$0xff] %v1506
  %1651 = vst [vmem:[#allocation2 + $0x3f8] sm:$0xff] %v1507
  %1652 = vst [vmem:[#allocation2 + $0x400] sm:$0xff] %v1508
  %1653 = vst [vmem:[#allocation2 + $0x408] sm:$0xff] %v1509
  %1654 = vst [vmem:[#allocation2 + $0x410] sm:$0xff] %v1510
  %1655 = vst [vmem:[#allocation2 + $0x418] sm:$0xff] %v1511
  %1656 = vst [vmem:[#allocation2 + $0x420] sm:$0xff] %v1512
  %1657 = vst [vmem:[#allocation2 + $0x428] sm:$0xff] %v1513
  %1658 = vst [vmem:[#allocation2 + $0x430] sm:$0xff] %v1514
  %1659 = vst [vmem:[#allocation2 + $0x438] sm:$0xff] %v1515
  %1660 = vst [vmem:[#allocation2 + $0x440] sm:$0xff] %v1516
  %1661 = vst [vmem:[#allocation2 + $0x448] sm:$0xff] %v1517
  %1662 = vst [vmem:[#allocation2 + $0x450] sm:$0xff] %v1518
  %1663 = vst [vmem:[#allocation2 + $0x458] sm:$0xff] %v1519
  %1664 = vst [vmem:[#allocation2 + $0x460] sm:$0xff] %v1520
  %1665 = vst [vmem:[#allocation2 + $0x468] sm:$0xff] %v1521
  %1666 = vst [vmem:[#allocation2 + $0x470] sm:$0xff] %v1522
  %1667 = vst [vmem:[#allocation2 + $0x478] sm:$0xff] %v1523
  %v1668 = vld [vmem:[#allocation2] ss:$2 sm:$0xf]
  %s1669 = scalar_lea.vmem [#allocation2], 144
  %v1670 = vld [vmem:[%s1669] ss:$2 sm:$0xf]
  %s1671 = scalar_lea.vmem [#allocation2], 288
  %v1672 = vld [vmem:[%s1671] ss:$2 sm:$0xf]
  %s1673 = scalar_lea.vmem [#allocation2], 432
  %v1674 = vld [vmem:[%s1673] ss:$2 sm:$0xf]
  %s1675 = scalar_lea.vmem [#allocation2], 576
  %v1676 = vld [vmem:[%s1675] ss:$2 sm:$0xf]
  %s1677 = scalar_lea.vmem [#allocation2], 720
  %v1678 = vld [vmem:[%s1677] ss:$2 sm:$0xf]
  %s1679 = scalar_lea.vmem [#allocation2], 864
  %v1680 = vld [vmem:[%s1679] ss:$2 sm:$0xf]
  %s1681 = scalar_lea.vmem [#allocation2], 1008
  %v1682 = vld [vmem:[%s1681] ss:$2 sm:$0xf]
  %v1683 = vpack.c.bf16 %v1668, %v1668
  %v1684 = vpack.c.bf16 %v1670, %v1670
  %v1685 = vpack.c.bf16 %v1672, %v1672
  %v1686 = vpack.c.bf16 %v1674, %v1674
  %v1687 = vpack.c.bf16 %v1676, %v1676
  %v1688 = vpack.c.bf16 %v1678, %v1678
  %v1689 = vpack.c.bf16 %v1680, %v1680
  %v1690 = vpack.c.bf16 %v1682, %v1682
  %1691 = vst [vmem:[#allocation3] sm:$0x3] %v1683
  %1692 = vst [vmem:[#allocation3 + $0xc8] sm:$0x3] %v1684
  %1693 = vst [vmem:[#allocation3 + $0x190] sm:$0x3] %v1685
  %1694 = vst [vmem:[#allocation3 + $0x258] sm:$0x3] %v1686
  %1695 = vst [vmem:[#allocation3 + $0x320] sm:$0x3] %v1687
  %1696 = vst [vmem:[#allocation3 + $0x3e8] sm:$0x3] %v1688
  %1697 = vst [vmem:[#allocation3 + $0x4b0] sm:$0x3] %v1689
  %1698 = vst [vmem:[#allocation3 + $0x578] sm:$0x3] %v1690
  %s1699 = scalar_lea.vmem [#allocation2], 24
  %v1700 = vld [vmem:[%s1699] ss:$2 sm:$0xf]
  %s1701 = scalar_lea.vmem [#allocation2], 168
  %v1702 = vld [vmem:[%s1701] ss:$2 sm:$0xf]
  %s1703 = scalar_lea.vmem [#allocation2], 312
  %v1704 = vld [vmem:[%s1703] ss:$2 sm:$0xf]
  %s1705 = scalar_lea.vmem [#allocation2], 456
  %v1706 = vld [vmem:[%s1705] ss:$2 sm:$0xf]
  %s1707 = scalar_lea.vmem [#allocation2], 600
  %v1708 = vld [vmem:[%s1707] ss:$2 sm:$0xf]
  %s1709 = scalar_lea.vmem [#allocation2], 744
  %v1710 = vld [vmem:[%s1709] ss:$2 sm:$0xf]
  %s1711 = scalar_lea.vmem [#allocation2], 888
  %v1712 = vld [vmem:[%s1711] ss:$2 sm:$0xf]
  %s1713 = scalar_lea.vmem [#allocation2], 1032
  %v1714 = vld [vmem:[%s1713] ss:$2 sm:$0xf]
  %v1715 = vpack.c.bf16 %v1700, %v1700
  %v1716 = vpack.c.bf16 %v1702, %v1702
  %v1717 = vpack.c.bf16 %v1704, %v1704
  %v1718 = vpack.c.bf16 %v1706, %v1706
  %v1719 = vpack.c.bf16 %v1708, %v1708
  %v1720 = vpack.c.bf16 %v1710, %v1710
  %v1721 = vpack.c.bf16 %v1712, %v1712
  %v1722 = vpack.c.bf16 %v1714, %v1714
  %v1731 = vrot.slane %v1715, 6
  %v1732 = vrot.slane %v1716, 6
  %v1733 = vrot.slane %v1717, 6
  %v1734 = vrot.slane %v1718, 6
  %v1735 = vrot.slane %v1719, 6
  %v1736 = vrot.slane %v1720, 6
  %v1737 = vrot.slane %v1721, 6
  %v1738 = vrot.slane %v1722, 6
  %1747 = vst [vmem:[#allocation3] sm:$0xc] %v1731
  %1748 = vst [vmem:[#allocation3 + $0xc8] sm:$0xc] %v1732
  %1749 = vst [vmem:[#allocation3 + $0x190] sm:$0xc] %v1733
  %1750 = vst [vmem:[#allocation3 + $0x258] sm:$0xc] %v1734
  %1751 = vst [vmem:[#allocation3 + $0x320] sm:$0xc] %v1735
  %1752 = vst [vmem:[#allocation3 + $0x3e8] sm:$0xc] %v1736
  %1753 = vst [vmem:[#allocation3 + $0x4b0] sm:$0xc] %v1737
  %1754 = vst [vmem:[#allocation3 + $0x578] sm:$0xc] %v1738
  %s1755 = scalar_lea.vmem [#allocation2], 48
  %v1756 = vld [vmem:[%s1755] ss:$2 sm:$0xf]
  %s1757 = scalar_lea.vmem [#allocation2], 192
  %v1758 = vld [vmem:[%s1757] ss:$2 sm:$0xf]
  %s1759 = scalar_lea.vmem [#allocation2], 336
  %v1760 = vld [vmem:[%s1759] ss:$2 sm:$0xf]
  %s1761 = scalar_lea.vmem [#allocation2], 480
  %v1762 = vld [vmem:[%s1761] ss:$2 sm:$0xf]
  %s1763 = scalar_lea.vmem [#allocation2], 624
  %v1764 = vld [vmem:[%s1763] ss:$2 sm:$0xf]
  %s1765 = scalar_lea.vmem [#allocation2], 768
  %v1766 = vld [vmem:[%s1765] ss:$2 sm:$0xf]
  %s1767 = scalar_lea.vmem [#allocation2], 912
  %v1768 = vld [vmem:[%s1767] ss:$2 sm:$0xf]
  %s1769 = scalar_lea.vmem [#allocation2], 1056
  %v1770 = vld [vmem:[%s1769] ss:$2 sm:$0xf]
  %v1771 = vpack.c.bf16 %v1756, %v1756
  %v1772 = vpack.c.bf16 %v1758, %v1758
  %v1773 = vpack.c.bf16 %v1760, %v1760
  %v1774 = vpack.c.bf16 %v1762, %v1762
  %v1775 = vpack.c.bf16 %v1764, %v1764
  %v1776 = vpack.c.bf16 %v1766, %v1766
  %v1777 = vpack.c.bf16 %v1768, %v1768
  %v1778 = vpack.c.bf16 %v1770, %v1770
  %v1787 = vrot.slane %v1771, 4
  %v1788 = vrot.slane %v1772, 4
  %v1789 = vrot.slane %v1773, 4
  %v1790 = vrot.slane %v1774, 4
  %v1791 = vrot.slane %v1775, 4
  %v1792 = vrot.slane %v1776, 4
  %v1793 = vrot.slane %v1777, 4
  %v1794 = vrot.slane %v1778, 4
  %1803 = vst [vmem:[#allocation3] sm:$0x30] %v1787
  %1804 = vst [vmem:[#allocation3 + $0xc8] sm:$0x30] %v1788
  %1805 = vst [vmem:[#allocation3 + $0x190] sm:$0x30] %v1789
  %1806 = vst [vmem:[#allocation3 + $0x258] sm:$0x30] %v1790
  %1807 = vst [vmem:[#allocation3 + $0x320] sm:$0x30] %v1791
  %1808 = vst [vmem:[#allocation3 + $0x3e8] sm:$0x30] %v1792
  %1809 = vst [vmem:[#allocation3 + $0x4b0] sm:$0x30] %v1793
  %1810 = vst [vmem:[#allocation3 + $0x578] sm:$0x30] %v1794
  %s1811 = scalar_lea.vmem [#allocation2], 72
  %v1812 = vld [vmem:[%s1811] ss:$2 sm:$0xf]
  %s1813 = scalar_lea.vmem [#allocation2], 216
  %v1814 = vld [vmem:[%s1813] ss:$2 sm:$0xf]
  %s1815 = scalar_lea.vmem [#allocation2], 360
  %v1816 = vld [vmem:[%s1815] ss:$2 sm:$0xf]
  %s1817 = scalar_lea.vmem [#allocation2], 504
  %v1818 = vld [vmem:[%s1817] ss:$2 sm:$0xf]
  %s1819 = scalar_lea.vmem [#allocation2], 648
  %v1820 = vld [vmem:[%s1819] ss:$2 sm:$0xf]
  %s1821 = scalar_lea.vmem [#allocation2], 792
  %v1822 = vld [vmem:[%s1821] ss:$2 sm:$0xf]
  %s1823 = scalar_lea.vmem [#allocation2], 936
  %v1824 = vld [vmem:[%s1823] ss:$2 sm:$0xf]
  %s1825 = scalar_lea.vmem [#allocation2], 1080
  %v1826 = vld [vmem:[%s1825] ss:$2 sm:$0xf]
  %v1827 = vpack.c.bf16 %v1812, %v1812
  %v1828 = vpack.c.bf16 %v1814, %v1814
  %v1829 = vpack.c.bf16 %v1816, %v1816
  %v1830 = vpack.c.bf16 %v1818, %v1818
  %v1831 = vpack.c.bf16 %v1820, %v1820
  %v1832 = vpack.c.bf16 %v1822, %v1822
  %v1833 = vpack.c.bf16 %v1824, %v1824
  %v1834 = vpack.c.bf16 %v1826, %v1826
  %v1843 = vrot.slane %v1827, 2
  %v1844 = vrot.slane %v1828, 2
  %v1845 = vrot.slane %v1829, 2
  %v1846 = vrot.slane %v1830, 2
  %v1847 = vrot.slane %v1831, 2
  %v1848 = vrot.slane %v1832, 2
  %v1849 = vrot.slane %v1833, 2
  %v1850 = vrot.slane %v1834, 2
  %1859 = vst [vmem:[#allocation3] sm:$0xc0] %v1843
  %1860 = vst [vmem:[#allocation3 + $0xc8] sm:$0xc0] %v1844
  %1861 = vst [vmem:[#allocation3 + $0x190] sm:$0xc0] %v1845
  %1862 = vst [vmem:[#allocation3 + $0x258] sm:$0xc0] %v1846
  %1863 = vst [vmem:[#allocation3 + $0x320] sm:$0xc0] %v1847
  %1864 = vst [vmem:[#allocation3 + $0x3e8] sm:$0xc0] %v1848
  %1865 = vst [vmem:[#allocation3 + $0x4b0] sm:$0xc0] %v1849
  %1866 = vst [vmem:[#allocation3 + $0x578] sm:$0xc0] %v1850
  %s1867 = scalar_lea.vmem [#allocation2], 1
  %v1868 = vld [vmem:[%s1867] ss:$2 sm:$0xf]
  %s1869 = scalar_lea.vmem [#allocation2], 145
  %v1870 = vld [vmem:[%s1869] ss:$2 sm:$0xf]
  %s1871 = scalar_lea.vmem [#allocation2], 289
  %v1872 = vld [vmem:[%s1871] ss:$2 sm:$0xf]
  %s1873 = scalar_lea.vmem [#allocation2], 433
  %v1874 = vld [vmem:[%s1873] ss:$2 sm:$0xf]
  %s1875 = scalar_lea.vmem [#allocation2], 577
  %v1876 = vld [vmem:[%s1875] ss:$2 sm:$0xf]
  %s1877 = scalar_lea.vmem [#allocation2], 721
  %v1878 = vld [vmem:[%s1877] ss:$2 sm:$0xf]
  %s1879 = scalar_lea.vmem [#allocation2], 865
  %v1880 = vld [vmem:[%s1879] ss:$2 sm:$0xf]
  %s1881 = scalar_lea.vmem [#allocation2], 1009
  %v1882 = vld [vmem:[%s1881] ss:$2 sm:$0xf]
  %v1883 = vpack.c.bf16 %v1868, %v1868
  %v1884 = vpack.c.bf16 %v1870, %v1870
  %v1885 = vpack.c.bf16 %v1872, %v1872
  %v1886 = vpack.c.bf16 %v1874, %v1874
  %v1887 = vpack.c.bf16 %v1876, %v1876
  %v1888 = vpack.c.bf16 %v1878, %v1878
  %v1889 = vpack.c.bf16 %v1880, %v1880
  %v1890 = vpack.c.bf16 %v1882, %v1882
  %1891 = vst [vmem:[#allocation3 + $0x8] sm:$0x3] %v1883
  %1892 = vst [vmem:[#allocation3 + $0xd0] sm:$0x3] %v1884
  %1893 = vst [vmem:[#allocation3 + $0x198] sm:$0x3] %v1885
  %1894 = vst [vmem:[#allocation3 + $0x260] sm:$0x3] %v1886
  %1895 = vst [vmem:[#allocation3 + $0x328] sm:$0x3] %v1887
  %1896 = vst [vmem:[#allocation3 + $0x3f0] sm:$0x3] %v1888
  %1897 = vst [vmem:[#allocation3 + $0x4b8] sm:$0x3] %v1889
  %1898 = vst [vmem:[#allocation3 + $0x580] sm:$0x3] %v1890
  %s1899 = scalar_lea.vmem [#allocation2], 25
  %v1900 = vld [vmem:[%s1899] ss:$2 sm:$0xf]
  %s1901 = scalar_lea.vmem [#allocation2], 169
  %v1902 = vld [vmem:[%s1901] ss:$2 sm:$0xf]
  %s1903 = scalar_lea.vmem [#allocation2], 313
  %v1904 = vld [vmem:[%s1903] ss:$2 sm:$0xf]
  %s1905 = scalar_lea.vmem [#allocation2], 457
  %v1906 = vld [vmem:[%s1905] ss:$2 sm:$0xf]
  %s1907 = scalar_lea.vmem [#allocation2], 601
  %v1908 = vld [vmem:[%s1907] ss:$2 sm:$0xf]
  %s1909 = scalar_lea.vmem [#allocation2], 745
  %v1910 = vld [vmem:[%s1909] ss:$2 sm:$0xf]
  %s1911 = scalar_lea.vmem [#allocation2], 889
  %v1912 = vld [vmem:[%s1911] ss:$2 sm:$0xf]
  %s1913 = scalar_lea.vmem [#allocation2], 1033
  %v1914 = vld [vmem:[%s1913] ss:$2 sm:$0xf]
  %v1915 = vpack.c.bf16 %v1900, %v1900
  %v1916 = vpack.c.bf16 %v1902, %v1902
  %v1917 = vpack.c.bf16 %v1904, %v1904
  %v1918 = vpack.c.bf16 %v1906, %v1906
  %v1919 = vpack.c.bf16 %v1908, %v1908
  %v1920 = vpack.c.bf16 %v1910, %v1910
  %v1921 = vpack.c.bf16 %v1912, %v1912
  %v1922 = vpack.c.bf16 %v1914, %v1914
  %v1931 = vrot.slane %v1915, 6
  %v1932 = vrot.slane %v1916, 6
  %v1933 = vrot.slane %v1917, 6
  %v1934 = vrot.slane %v1918, 6
  %v1935 = vrot.slane %v1919, 6
  %v1936 = vrot.slane %v1920, 6
  %v1937 = vrot.slane %v1921, 6
  %v1938 = vrot.slane %v1922, 6
  %1947 = vst [vmem:[#allocation3 + $0x8] sm:$0xc] %v1931
  %1948 = vst [vmem:[#allocation3 + $0xd0] sm:$0xc] %v1932
  %1949 = vst [vmem:[#allocation3 + $0x198] sm:$0xc] %v1933
  %1950 = vst [vmem:[#allocation3 + $0x260] sm:$0xc] %v1934
  %1951 = vst [vmem:[#allocation3 + $0x328] sm:$0xc] %v1935
  %1952 = vst [vmem:[#allocation3 + $0x3f0] sm:$0xc] %v1936
  %1953 = vst [vmem:[#allocation3 + $0x4b8] sm:$0xc] %v1937
  %1954 = vst [vmem:[#allocation3 + $0x580] sm:$0xc] %v1938
  %s1955 = scalar_lea.vmem [#allocation2], 49
  %v1956 = vld [vmem:[%s1955] ss:$2 sm:$0xf]
  %s1957 = scalar_lea.vmem [#allocation2], 193
  %v1958 = vld [vmem:[%s1957] ss:$2 sm:$0xf]
  %s1959 = scalar_lea.vmem [#allocation2], 337
  %v1960 = vld [vmem:[%s1959] ss:$2 sm:$0xf]
  %s1961 = scalar_lea.vmem [#allocation2], 481
  %v1962 = vld [vmem:[%s1961] ss:$2 sm:$0xf]
  %s1963 = scalar_lea.vmem [#allocation2], 625
  %v1964 = vld [vmem:[%s1963] ss:$2 sm:$0xf]
  %s1965 = scalar_lea.vmem [#allocation2], 769
  %v1966 = vld [vmem:[%s1965] ss:$2 sm:$0xf]
  %s1967 = scalar_lea.vmem [#allocation2], 913
  %v1968 = vld [vmem:[%s1967] ss:$2 sm:$0xf]
  %s1969 = scalar_lea.vmem [#allocation2], 1057
  %v1970 = vld [vmem:[%s1969] ss:$2 sm:$0xf]
  %v1971 = vpack.c.bf16 %v1956, %v1956
  %v1972 = vpack.c.bf16 %v1958, %v1958
  %v1973 = vpack.c.bf16 %v1960, %v1960
  %v1974 = vpack.c.bf16 %v1962, %v1962
  %v1975 = vpack.c.bf16 %v1964, %v1964
  %v1976 = vpack.c.bf16 %v1966, %v1966
  %v1977 = vpack.c.bf16 %v1968, %v1968
  %v1978 = vpack.c.bf16 %v1970, %v1970
  %v1987 = vrot.slane %v1971, 4
  %v1988 = vrot.slane %v1972, 4
  %v1989 = vrot.slane %v1973, 4
  %v1990 = vrot.slane %v1974, 4
  %v1991 = vrot.slane %v1975, 4
  %v1992 = vrot.slane %v1976, 4
  %v1993 = vrot.slane %v1977, 4
  %v1994 = vrot.slane %v1978, 4
  %2003 = vst [vmem:[#allocation3 + $0x8] sm:$0x30] %v1987
  %2004 = vst [vmem:[#allocation3 + $0xd0] sm:$0x30] %v1988
  %2005 = vst [vmem:[#allocation3 + $0x198] sm:$0x30] %v1989
  %2006 = vst [vmem:[#allocation3 + $0x260] sm:$0x30] %v1990
  %2007 = vst [vmem:[#allocation3 + $0x328] sm:$0x30] %v1991
  %2008 = vst [vmem:[#allocation3 + $0x3f0] sm:$0x30] %v1992
  %2009 = vst [vmem:[#allocation3 + $0x4b8] sm:$0x30] %v1993
  %2010 = vst [vmem:[#allocation3 + $0x580] sm:$0x30] %v1994
  %s2011 = scalar_lea.vmem [#allocation2], 73
  %v2012 = vld [vmem:[%s2011] ss:$2 sm:$0xf]
  %s2013 = scalar_lea.vmem [#allocation2], 217
  %v2014 = vld [vmem:[%s2013] ss:$2 sm:$0xf]
  %s2015 = scalar_lea.vmem [#allocation2], 361
  %v2016 = vld [vmem:[%s2015] ss:$2 sm:$0xf]
  %s2017 = scalar_lea.vmem [#allocation2], 505
  %v2018 = vld [vmem:[%s2017] ss:$2 sm:$0xf]
  %s2019 = scalar_lea.vmem [#allocation2], 649
  %v2020 = vld [vmem:[%s2019] ss:$2 sm:$0xf]
  %s2021 = scalar_lea.vmem [#allocation2], 793
  %v2022 = vld [vmem:[%s2021] ss:$2 sm:$0xf]
  %s2023 = scalar_lea.vmem [#allocation2], 937
  %v2024 = vld [vmem:[%s2023] ss:$2 sm:$0xf]
  %s2025 = scalar_lea.vmem [#allocation2], 1081
  %v2026 = vld [vmem:[%s2025] ss:$2 sm:$0xf]
  %v2027 = vpack.c.bf16 %v2012, %v2012
  %v2028 = vpack.c.bf16 %v2014, %v2014
  %v2029 = vpack.c.bf16 %v2016, %v2016
  %v2030 = vpack.c.bf16 %v2018, %v2018
  %v2031 = vpack.c.bf16 %v2020, %v2020
  %v2032 = vpack.c.bf16 %v2022, %v2022
  %v2033 = vpack.c.bf16 %v2024, %v2024
  %v2034 = vpack.c.bf16 %v2026, %v2026
  %v2043 = vrot.slane %v2027, 2
  %v2044 = vrot.slane %v2028, 2
  %v2045 = vrot.slane %v2029, 2
  %v2046 = vrot.slane %v2030, 2
  %v2047 = vrot.slane %v2031, 2
  %v2048 = vrot.slane %v2032, 2
  %v2049 = vrot.slane %v2033, 2
  %v2050 = vrot.slane %v2034, 2
  %2059 = vst [vmem:[#allocation3 + $0x8] sm:$0xc0] %v2043
  %2060 = vst [vmem:[#allocation3 + $0xd0] sm:$0xc0] %v2044
  %2061 = vst [vmem:[#allocation3 + $0x198] sm:$0xc0] %v2045
  %2062 = vst [vmem:[#allocation3 + $0x260] sm:$0xc0] %v2046
  %2063 = vst [vmem:[#allocation3 + $0x328] sm:$0xc0] %v2047
  %2064 = vst [vmem:[#allocation3 + $0x3f0] sm:$0xc0] %v2048
  %2065 = vst [vmem:[#allocation3 + $0x4b8] sm:$0xc0] %v2049
  %2066 = vst [vmem:[#allocation3 + $0x580] sm:$0xc0] %v2050
  %s2067 = scalar_lea.vmem [#allocation2], 2
  %v2068 = vld [vmem:[%s2067] ss:$2 sm:$0xf]
  %s2069 = scalar_lea.vmem [#allocation2], 146
  %v2070 = vld [vmem:[%s2069] ss:$2 sm:$0xf]
  %s2071 = scalar_lea.vmem [#allocation2], 290
  %v2072 = vld [vmem:[%s2071] ss:$2 sm:$0xf]
  %s2073 = scalar_lea.vmem [#allocation2], 434
  %v2074 = vld [vmem:[%s2073] ss:$2 sm:$0xf]
  %s2075 = scalar_lea.vmem [#allocation2], 578
  %v2076 = vld [vmem:[%s2075] ss:$2 sm:$0xf]
  %s2077 = scalar_lea.vmem [#allocation2], 722
  %v2078 = vld [vmem:[%s2077] ss:$2 sm:$0xf]
  %s2079 = scalar_lea.vmem [#allocation2], 866
  %v2080 = vld [vmem:[%s2079] ss:$2 sm:$0xf]
  %s2081 = scalar_lea.vmem [#allocation2], 1010
  %v2082 = vld [vmem:[%s2081] ss:$2 sm:$0xf]
  %v2083 = vpack.c.bf16 %v2068, %v2068
  %v2084 = vpack.c.bf16 %v2070, %v2070
  %v2085 = vpack.c.bf16 %v2072, %v2072
  %v2086 = vpack.c.bf16 %v2074, %v2074
  %v2087 = vpack.c.bf16 %v2076, %v2076
  %v2088 = vpack.c.bf16 %v2078, %v2078
  %v2089 = vpack.c.bf16 %v2080, %v2080
  %v2090 = vpack.c.bf16 %v2082, %v2082
  %2091 = vst [vmem:[#allocation3 + $0x10] sm:$0x3] %v2083
  %2092 = vst [vmem:[#allocation3 + $0xd8] sm:$0x3] %v2084
  %2093 = vst [vmem:[#allocation3 + $0x1a0] sm:$0x3] %v2085
  %2094 = vst [vmem:[#allocation3 + $0x268] sm:$0x3] %v2086
  %2095 = vst [vmem:[#allocation3 + $0x330] sm:$0x3] %v2087
  %2096 = vst [vmem:[#allocation3 + $0x3f8] sm:$0x3] %v2088
  %2097 = vst [vmem:[#allocation3 + $0x4c0] sm:$0x3] %v2089
  %2098 = vst [vmem:[#allocation3 + $0x588] sm:$0x3] %v2090
  %s2099 = scalar_lea.vmem [#allocation2], 26
  %v2100 = vld [vmem:[%s2099] ss:$2 sm:$0xf]
  %s2101 = scalar_lea.vmem [#allocation2], 170
  %v2102 = vld [vmem:[%s2101] ss:$2 sm:$0xf]
  %s2103 = scalar_lea.vmem [#allocation2], 314
  %v2104 = vld [vmem:[%s2103] ss:$2 sm:$0xf]
  %s2105 = scalar_lea.vmem [#allocation2], 458
  %v2106 = vld [vmem:[%s2105] ss:$2 sm:$0xf]
  %s2107 = scalar_lea.vmem [#allocation2], 602
  %v2108 = vld [vmem:[%s2107] ss:$2 sm:$0xf]
  %s2109 = scalar_lea.vmem [#allocation2], 746
  %v2110 = vld [vmem:[%s2109] ss:$2 sm:$0xf]
  %s2111 = scalar_lea.vmem [#allocation2], 890
  %v2112 = vld [vmem:[%s2111] ss:$2 sm:$0xf]
  %s2113 = scalar_lea.vmem [#allocation2], 1034
  %v2114 = vld [vmem:[%s2113] ss:$2 sm:$0xf]
  %v2115 = vpack.c.bf16 %v2100, %v2100
  %v2116 = vpack.c.bf16 %v2102, %v2102
  %v2117 = vpack.c.bf16 %v2104, %v2104
  %v2118 = vpack.c.bf16 %v2106, %v2106
  %v2119 = vpack.c.bf16 %v2108, %v2108
  %v2120 = vpack.c.bf16 %v2110, %v2110
  %v2121 = vpack.c.bf16 %v2112, %v2112
  %v2122 = vpack.c.bf16 %v2114, %v2114
  %v2131 = vrot.slane %v2115, 6
  %v2132 = vrot.slane %v2116, 6
  %v2133 = vrot.slane %v2117, 6
  %v2134 = vrot.slane %v2118, 6
  %v2135 = vrot.slane %v2119, 6
  %v2136 = vrot.slane %v2120, 6
  %v2137 = vrot.slane %v2121, 6
  %v2138 = vrot.slane %v2122, 6
  %2147 = vst [vmem:[#allocation3 + $0x10] sm:$0xc] %v2131
  %2148 = vst [vmem:[#allocation3 + $0xd8] sm:$0xc] %v2132
  %2149 = vst [vmem:[#allocation3 + $0x1a0] sm:$0xc] %v2133
  %2150 = vst [vmem:[#allocation3 + $0x268] sm:$0xc] %v2134
  %2151 = vst [vmem:[#allocation3 + $0x330] sm:$0xc] %v2135
  %2152 = vst [vmem:[#allocation3 + $0x3f8] sm:$0xc] %v2136
  %2153 = vst [vmem:[#allocation3 + $0x4c0] sm:$0xc] %v2137
  %2154 = vst [vmem:[#allocation3 + $0x588] sm:$0xc] %v2138
  %s2155 = scalar_lea.vmem [#allocation2], 50
  %v2156 = vld [vmem:[%s2155] ss:$2 sm:$0xf]
  %s2157 = scalar_lea.vmem [#allocation2], 194
  %v2158 = vld [vmem:[%s2157] ss:$2 sm:$0xf]
  %s2159 = scalar_lea.vmem [#allocation2], 338
  %v2160 = vld [vmem:[%s2159] ss:$2 sm:$0xf]
  %s2161 = scalar_lea.vmem [#allocation2], 482
  %v2162 = vld [vmem:[%s2161] ss:$2 sm:$0xf]
  %s2163 = scalar_lea.vmem [#allocation2], 626
  %v2164 = vld [vmem:[%s2163] ss:$2 sm:$0xf]
  %s2165 = scalar_lea.vmem [#allocation2], 770
  %v2166 = vld [vmem:[%s2165] ss:$2 sm:$0xf]
  %s2167 = scalar_lea.vmem [#allocation2], 914
  %v2168 = vld [vmem:[%s2167] ss:$2 sm:$0xf]
  %s2169 = scalar_lea.vmem [#allocation2], 1058
  %v2170 = vld [vmem:[%s2169] ss:$2 sm:$0xf]
  %v2171 = vpack.c.bf16 %v2156, %v2156
  %v2172 = vpack.c.bf16 %v2158, %v2158
  %v2173 = vpack.c.bf16 %v2160, %v2160
  %v2174 = vpack.c.bf16 %v2162, %v2162
  %v2175 = vpack.c.bf16 %v2164, %v2164
  %v2176 = vpack.c.bf16 %v2166, %v2166
  %v2177 = vpack.c.bf16 %v2168, %v2168
  %v2178 = vpack.c.bf16 %v2170, %v2170
  %v2187 = vrot.slane %v2171, 4
  %v2188 = vrot.slane %v2172, 4
  %v2189 = vrot.slane %v2173, 4
  %v2190 = vrot.slane %v2174, 4
  %v2191 = vrot.slane %v2175, 4
  %v2192 = vrot.slane %v2176, 4
  %v2193 = vrot.slane %v2177, 4
  %v2194 = vrot.slane %v2178, 4
  %2203 = vst [vmem:[#allocation3 + $0x10] sm:$0x30] %v2187
  %2204 = vst [vmem:[#allocation3 + $0xd8] sm:$0x30] %v2188
  %2205 = vst [vmem:[#allocation3 + $0x1a0] sm:$0x30] %v2189
  %2206 = vst [vmem:[#allocation3 + $0x268] sm:$0x30] %v2190
  %2207 = vst [vmem:[#allocation3 + $0x330] sm:$0x30] %v2191
  %2208 = vst [vmem:[#allocation3 + $0x3f8] sm:$0x30] %v2192
  %2209 = vst [vmem:[#allocation3 + $0x4c0] sm:$0x30] %v2193
  %2210 = vst [vmem:[#allocation3 + $0x588] sm:$0x30] %v2194
  %s2211 = scalar_lea.vmem [#allocation2], 74
  %v2212 = vld [vmem:[%s2211] ss:$2 sm:$0xf]
  %s2213 = scalar_lea.vmem [#allocation2], 218
  %v2214 = vld [vmem:[%s2213] ss:$2 sm:$0xf]
  %s2215 = scalar_lea.vmem [#allocation2], 362
  %v2216 = vld [vmem:[%s2215] ss:$2 sm:$0xf]
  %s2217 = scalar_lea.vmem [#allocation2], 506
  %v2218 = vld [vmem:[%s2217] ss:$2 sm:$0xf]
  %s2219 = scalar_lea.vmem [#allocation2], 650
  %v2220 = vld [vmem:[%s2219] ss:$2 sm:$0xf]
  %s2221 = scalar_lea.vmem [#allocation2], 794
  %v2222 = vld [vmem:[%s2221] ss:$2 sm:$0xf]
  %s2223 = scalar_lea.vmem [#allocation2], 938
  %v2224 = vld [vmem:[%s2223] ss:$2 sm:$0xf]
  %s2225 = scalar_lea.vmem [#allocation2], 1082
  %v2226 = vld [vmem:[%s2225] ss:$2 sm:$0xf]
  %v2227 = vpack.c.bf16 %v2212, %v2212
  %v2228 = vpack.c.bf16 %v2214, %v2214
  %v2229 = vpack.c.bf16 %v2216, %v2216
  %v2230 = vpack.c.bf16 %v2218, %v2218
  %v2231 = vpack.c.bf16 %v2220, %v2220
  %v2232 = vpack.c.bf16 %v2222, %v2222
  %v2233 = vpack.c.bf16 %v2224, %v2224
  %v2234 = vpack.c.bf16 %v2226, %v2226
  %v2243 = vrot.slane %v2227, 2
  %v2244 = vrot.slane %v2228, 2
  %v2245 = vrot.slane %v2229, 2
  %v2246 = vrot.slane %v2230, 2
  %v2247 = vrot.slane %v2231, 2
  %v2248 = vrot.slane %v2232, 2
  %v2249 = vrot.slane %v2233, 2
  %v2250 = vrot.slane %v2234, 2
  %2259 = vst [vmem:[#allocation3 + $0x10] sm:$0xc0] %v2243
  %2260 = vst [vmem:[#allocation3 + $0xd8] sm:$0xc0] %v2244
  %2261 = vst [vmem:[#allocation3 + $0x1a0] sm:$0xc0] %v2245
  %2262 = vst [vmem:[#allocation3 + $0x268] sm:$0xc0] %v2246
  %2263 = vst [vmem:[#allocation3 + $0x330] sm:$0xc0] %v2247
  %2264 = vst [vmem:[#allocation3 + $0x3f8] sm:$0xc0] %v2248
  %2265 = vst [vmem:[#allocation3 + $0x4c0] sm:$0xc0] %v2249
  %2266 = vst [vmem:[#allocation3 + $0x588] sm:$0xc0] %v2250
  %s2267 = scalar_lea.vmem [#allocation2], 3
  %v2268 = vld [vmem:[%s2267] ss:$2 sm:$0xf]
  %s2269 = scalar_lea.vmem [#allocation2], 147
  %v2270 = vld [vmem:[%s2269] ss:$2 sm:$0xf]
  %s2271 = scalar_lea.vmem [#allocation2], 291
  %v2272 = vld [vmem:[%s2271] ss:$2 sm:$0xf]
  %s2273 = scalar_lea.vmem [#allocation2], 435
  %v2274 = vld [vmem:[%s2273] ss:$2 sm:$0xf]
  %s2275 = scalar_lea.vmem [#allocation2], 579
  %v2276 = vld [vmem:[%s2275] ss:$2 sm:$0xf]
  %s2277 = scalar_lea.vmem [#allocation2], 723
  %v2278 = vld [vmem:[%s2277] ss:$2 sm:$0xf]
  %s2279 = scalar_lea.vmem [#allocation2], 867
  %v2280 = vld [vmem:[%s2279] ss:$2 sm:$0xf]
  %s2281 = scalar_lea.vmem [#allocation2], 1011
  %v2282 = vld [vmem:[%s2281] ss:$2 sm:$0xf]
  %v2283 = vpack.c.bf16 %v2268, %v2268
  %v2284 = vpack.c.bf16 %v2270, %v2270
  %v2285 = vpack.c.bf16 %v2272, %v2272
  %v2286 = vpack.c.bf16 %v2274, %v2274
  %v2287 = vpack.c.bf16 %v2276, %v2276
  %v2288 = vpack.c.bf16 %v2278, %v2278
  %v2289 = vpack.c.bf16 %v2280, %v2280
  %v2290 = vpack.c.bf16 %v2282, %v2282
  %2291 = vst [vmem:[#allocation3 + $0x18] sm:$0x3] %v2283
  %2292 = vst [vmem:[#allocation3 + $0xe0] sm:$0x3] %v2284
  %2293 = vst [vmem:[#allocation3 + $0x1a8] sm:$0x3] %v2285
  %2294 = vst [vmem:[#allocation3 + $0x270] sm:$0x3] %v2286
  %2295 = vst [vmem:[#allocation3 + $0x338] sm:$0x3] %v2287
  %2296 = vst [vmem:[#allocation3 + $0x400] sm:$0x3] %v2288
  %2297 = vst [vmem:[#allocation3 + $0x4c8] sm:$0x3] %v2289
  %2298 = vst [vmem:[#allocation3 + $0x590] sm:$0x3] %v2290
  %s2299 = scalar_lea.vmem [#allocation2], 27
  %v2300 = vld [vmem:[%s2299] ss:$2 sm:$0xf]
  %s2301 = scalar_lea.vmem [#allocation2], 171
  %v2302 = vld [vmem:[%s2301] ss:$2 sm:$0xf]
  %s2303 = scalar_lea.vmem [#allocation2], 315
  %v2304 = vld [vmem:[%s2303] ss:$2 sm:$0xf]
  %s2305 = scalar_lea.vmem [#allocation2], 459
  %v2306 = vld [vmem:[%s2305] ss:$2 sm:$0xf]
  %s2307 = scalar_lea.vmem [#allocation2], 603
  %v2308 = vld [vmem:[%s2307] ss:$2 sm:$0xf]
  %s2309 = scalar_lea.vmem [#allocation2], 747
  %v2310 = vld [vmem:[%s2309] ss:$2 sm:$0xf]
  %s2311 = scalar_lea.vmem [#allocation2], 891
  %v2312 = vld [vmem:[%s2311] ss:$2 sm:$0xf]
  %s2313 = scalar_lea.vmem [#allocation2], 1035
  %v2314 = vld [vmem:[%s2313] ss:$2 sm:$0xf]
  %v2315 = vpack.c.bf16 %v2300, %v2300
  %v2316 = vpack.c.bf16 %v2302, %v2302
  %v2317 = vpack.c.bf16 %v2304, %v2304
  %v2318 = vpack.c.bf16 %v2306, %v2306
  %v2319 = vpack.c.bf16 %v2308, %v2308
  %v2320 = vpack.c.bf16 %v2310, %v2310
  %v2321 = vpack.c.bf16 %v2312, %v2312
  %v2322 = vpack.c.bf16 %v2314, %v2314
  %v2331 = vrot.slane %v2315, 6
  %v2332 = vrot.slane %v2316, 6
  %v2333 = vrot.slane %v2317, 6
  %v2334 = vrot.slane %v2318, 6
  %v2335 = vrot.slane %v2319, 6
  %v2336 = vrot.slane %v2320, 6
  %v2337 = vrot.slane %v2321, 6
  %v2338 = vrot.slane %v2322, 6
  %2347 = vst [vmem:[#allocation3 + $0x18] sm:$0xc] %v2331
  %2348 = vst [vmem:[#allocation3 + $0xe0] sm:$0xc] %v2332
  %2349 = vst [vmem:[#allocation3 + $0x1a8] sm:$0xc] %v2333
  %2350 = vst [vmem:[#allocation3 + $0x270] sm:$0xc] %v2334
  %2351 = vst [vmem:[#allocation3 + $0x338] sm:$0xc] %v2335
  %2352 = vst [vmem:[#allocation3 + $0x400] sm:$0xc] %v2336
  %2353 = vst [vmem:[#allocation3 + $0x4c8] sm:$0xc] %v2337
  %2354 = vst [vmem:[#allocation3 + $0x590] sm:$0xc] %v2338
  %s2355 = scalar_lea.vmem [#allocation2], 51
  %v2356 = vld [vmem:[%s2355] ss:$2 sm:$0xf]
  %s2357 = scalar_lea.vmem [#allocation2], 195
  %v2358 = vld [vmem:[%s2357] ss:$2 sm:$0xf]
  %s2359 = scalar_lea.vmem [#allocation2], 339
  %v2360 = vld [vmem:[%s2359] ss:$2 sm:$0xf]
  %s2361 = scalar_lea.vmem [#allocation2], 483
  %v2362 = vld [vmem:[%s2361] ss:$2 sm:$0xf]
  %s2363 = scalar_lea.vmem [#allocation2], 627
  %v2364 = vld [vmem:[%s2363] ss:$2 sm:$0xf]
  %s2365 = scalar_lea.vmem [#allocation2], 771
  %v2366 = vld [vmem:[%s2365] ss:$2 sm:$0xf]
  %s2367 = scalar_lea.vmem [#allocation2], 915
  %v2368 = vld [vmem:[%s2367] ss:$2 sm:$0xf]
  %s2369 = scalar_lea.vmem [#allocation2], 1059
  %v2370 = vld [vmem:[%s2369] ss:$2 sm:$0xf]
  %v2371 = vpack.c.bf16 %v2356, %v2356
  %v2372 = vpack.c.bf16 %v2358, %v2358
  %v2373 = vpack.c.bf16 %v2360, %v2360
  %v2374 = vpack.c.bf16 %v2362, %v2362
  %v2375 = vpack.c.bf16 %v2364, %v2364
  %v2376 = vpack.c.bf16 %v2366, %v2366
  %v2377 = vpack.c.bf16 %v2368, %v2368
  %v2378 = vpack.c.bf16 %v2370, %v2370
  %v2387 = vrot.slane %v2371, 4
  %v2388 = vrot.slane %v2372, 4
  %v2389 = vrot.slane %v2373, 4
  %v2390 = vrot.slane %v2374, 4
  %v2391 = vrot.slane %v2375, 4
  %v2392 = vrot.slane %v2376, 4
  %v2393 = vrot.slane %v2377, 4
  %v2394 = vrot.slane %v2378, 4
  %2403 = vst [vmem:[#allocation3 + $0x18] sm:$0x30] %v2387
  %2404 = vst [vmem:[#allocation3 + $0xe0] sm:$0x30] %v2388
  %2405 = vst [vmem:[#allocation3 + $0x1a8] sm:$0x30] %v2389
  %2406 = vst [vmem:[#allocation3 + $0x270] sm:$0x30] %v2390
  %2407 = vst [vmem:[#allocation3 + $0x338] sm:$0x30] %v2391
  %2408 = vst [vmem:[#allocation3 + $0x400] sm:$0x30] %v2392
  %2409 = vst [vmem:[#allocation3 + $0x4c8] sm:$0x30] %v2393
  %2410 = vst [vmem:[#allocation3 + $0x590] sm:$0x30] %v2394
  %s2411 = scalar_lea.vmem [#allocation2], 75
  %v2412 = vld [vmem:[%s2411] ss:$2 sm:$0xf]
  %s2413 = scalar_lea.vmem [#allocation2], 219
  %v2414 = vld [vmem:[%s2413] ss:$2 sm:$0xf]
  %s2415 = scalar_lea.vmem [#allocation2], 363
  %v2416 = vld [vmem:[%s2415] ss:$2 sm:$0xf]
  %s2417 = scalar_lea.vmem [#allocation2], 507
  %v2418 = vld [vmem:[%s2417] ss:$2 sm:$0xf]
  %s2419 = scalar_lea.vmem [#allocation2], 651
  %v2420 = vld [vmem:[%s2419] ss:$2 sm:$0xf]
  %s2421 = scalar_lea.vmem [#allocation2], 795
  %v2422 = vld [vmem:[%s2421] ss:$2 sm:$0xf]
  %s2423 = scalar_lea.vmem [#allocation2], 939
  %v2424 = vld [vmem:[%s2423] ss:$2 sm:$0xf]
  %s2425 = scalar_lea.vmem [#allocation2], 1083
  %v2426 = vld [vmem:[%s2425] ss:$2 sm:$0xf]
  %v2427 = vpack.c.bf16 %v2412, %v2412
  %v2428 = vpack.c.bf16 %v2414, %v2414
  %v2429 = vpack.c.bf16 %v2416, %v2416
  %v2430 = vpack.c.bf16 %v2418, %v2418
  %v2431 = vpack.c.bf16 %v2420, %v2420
  %v2432 = vpack.c.bf16 %v2422, %v2422
  %v2433 = vpack.c.bf16 %v2424, %v2424
  %v2434 = vpack.c.bf16 %v2426, %v2426
  %v2443 = vrot.slane %v2427, 2
  %v2444 = vrot.slane %v2428, 2
  %v2445 = vrot.slane %v2429, 2
  %v2446 = vrot.slane %v2430, 2
  %v2447 = vrot.slane %v2431, 2
  %v2448 = vrot.slane %v2432, 2
  %v2449 = vrot.slane %v2433, 2
  %v2450 = vrot.slane %v2434, 2
  %2459 = vst [vmem:[#allocation3 + $0x18] sm:$0xc0] %v2443
  %2460 = vst [vmem:[#allocation3 + $0xe0] sm:$0xc0] %v2444
  %2461 = vst [vmem:[#allocation3 + $0x1a8] sm:$0xc0] %v2445
  %2462 = vst [vmem:[#allocation3 + $0x270] sm:$0xc0] %v2446
  %2463 = vst [vmem:[#allocation3 + $0x338] sm:$0xc0] %v2447
  %2464 = vst [vmem:[#allocation3 + $0x400] sm:$0xc0] %v2448
  %2465 = vst [vmem:[#allocation3 + $0x4c8] sm:$0xc0] %v2449
  %2466 = vst [vmem:[#allocation3 + $0x590] sm:$0xc0] %v2450
  %s2467 = scalar_lea.vmem [#allocation2], 4
  %v2468 = vld [vmem:[%s2467] ss:$2 sm:$0xf]
  %s2469 = scalar_lea.vmem [#allocation2], 148
  %v2470 = vld [vmem:[%s2469] ss:$2 sm:$0xf]
  %s2471 = scalar_lea.vmem [#allocation2], 292
  %v2472 = vld [vmem:[%s2471] ss:$2 sm:$0xf]
  %s2473 = scalar_lea.vmem [#allocation2], 436
  %v2474 = vld [vmem:[%s2473] ss:$2 sm:$0xf]
  %s2475 = scalar_lea.vmem [#allocation2], 580
  %v2476 = vld [vmem:[%s2475] ss:$2 sm:$0xf]
  %s2477 = scalar_lea.vmem [#allocation2], 724
  %v2478 = vld [vmem:[%s2477] ss:$2 sm:$0xf]
  %s2479 = scalar_lea.vmem [#allocation2], 868
  %v2480 = vld [vmem:[%s2479] ss:$2 sm:$0xf]
  %s2481 = scalar_lea.vmem [#allocation2], 1012
  %v2482 = vld [vmem:[%s2481] ss:$2 sm:$0xf]
  %v2483 = vpack.c.bf16 %v2468, %v2468
  %v2484 = vpack.c.bf16 %v2470, %v2470
  %v2485 = vpack.c.bf16 %v2472, %v2472
  %v2486 = vpack.c.bf16 %v2474, %v2474
  %v2487 = vpack.c.bf16 %v2476, %v2476
  %v2488 = vpack.c.bf16 %v2478, %v2478
  %v2489 = vpack.c.bf16 %v2480, %v2480
  %v2490 = vpack.c.bf16 %v2482, %v2482
  %2491 = vst [vmem:[#allocation3 + $0x20] sm:$0x3] %v2483
  %2492 = vst [vmem:[#allocation3 + $0xe8] sm:$0x3] %v2484
  %2493 = vst [vmem:[#allocation3 + $0x1b0] sm:$0x3] %v2485
  %2494 = vst [vmem:[#allocation3 + $0x278] sm:$0x3] %v2486
  %2495 = vst [vmem:[#allocation3 + $0x340] sm:$0x3] %v2487
  %2496 = vst [vmem:[#allocation3 + $0x408] sm:$0x3] %v2488
  %2497 = vst [vmem:[#allocation3 + $0x4d0] sm:$0x3] %v2489
  %2498 = vst [vmem:[#allocation3 + $0x598] sm:$0x3] %v2490
  %s2499 = scalar_lea.vmem [#allocation2], 28
  %v2500 = vld [vmem:[%s2499] ss:$2 sm:$0xf]
  %s2501 = scalar_lea.vmem [#allocation2], 172
  %v2502 = vld [vmem:[%s2501] ss:$2 sm:$0xf]
  %s2503 = scalar_lea.vmem [#allocation2], 316
  %v2504 = vld [vmem:[%s2503] ss:$2 sm:$0xf]
  %s2505 = scalar_lea.vmem [#allocation2], 460
  %v2506 = vld [vmem:[%s2505] ss:$2 sm:$0xf]
  %s2507 = scalar_lea.vmem [#allocation2], 604
  %v2508 = vld [vmem:[%s2507] ss:$2 sm:$0xf]
  %s2509 = scalar_lea.vmem [#allocation2], 748
  %v2510 = vld [vmem:[%s2509] ss:$2 sm:$0xf]
  %s2511 = scalar_lea.vmem [#allocation2], 892
  %v2512 = vld [vmem:[%s2511] ss:$2 sm:$0xf]
  %s2513 = scalar_lea.vmem [#allocation2], 1036
  %v2514 = vld [vmem:[%s2513] ss:$2 sm:$0xf]
  %v2515 = vpack.c.bf16 %v2500, %v2500
  %v2516 = vpack.c.bf16 %v2502, %v2502
  %v2517 = vpack.c.bf16 %v2504, %v2504
  %v2518 = vpack.c.bf16 %v2506, %v2506
  %v2519 = vpack.c.bf16 %v2508, %v2508
  %v2520 = vpack.c.bf16 %v2510, %v2510
  %v2521 = vpack.c.bf16 %v2512, %v2512
  %v2522 = vpack.c.bf16 %v2514, %v2514
  %v2531 = vrot.slane %v2515, 6
  %v2532 = vrot.slane %v2516, 6
  %v2533 = vrot.slane %v2517, 6
  %v2534 = vrot.slane %v2518, 6
  %v2535 = vrot.slane %v2519, 6
  %v2536 = vrot.slane %v2520, 6
  %v2537 = vrot.slane %v2521, 6
  %v2538 = vrot.slane %v2522, 6
  %2547 = vst [vmem:[#allocation3 + $0x20] sm:$0xc] %v2531
  %2548 = vst [vmem:[#allocation3 + $0xe8] sm:$0xc] %v2532
  %2549 = vst [vmem:[#allocation3 + $0x1b0] sm:$0xc] %v2533
  %2550 = vst [vmem:[#allocation3 + $0x278] sm:$0xc] %v2534
  %2551 = vst [vmem:[#allocation3 + $0x340] sm:$0xc] %v2535
  %2552 = vst [vmem:[#allocation3 + $0x408] sm:$0xc] %v2536
  %2553 = vst [vmem:[#allocation3 + $0x4d0] sm:$0xc] %v2537
  %2554 = vst [vmem:[#allocation3 + $0x598] sm:$0xc] %v2538
  %s2555 = scalar_lea.vmem [#allocation2], 52
  %v2556 = vld [vmem:[%s2555] ss:$2 sm:$0xf]
  %s2557 = scalar_lea.vmem [#allocation2], 196
  %v2558 = vld [vmem:[%s2557] ss:$2 sm:$0xf]
  %s2559 = scalar_lea.vmem [#allocation2], 340
  %v2560 = vld [vmem:[%s2559] ss:$2 sm:$0xf]
  %s2561 = scalar_lea.vmem [#allocation2], 484
  %v2562 = vld [vmem:[%s2561] ss:$2 sm:$0xf]
  %s2563 = scalar_lea.vmem [#allocation2], 628
  %v2564 = vld [vmem:[%s2563] ss:$2 sm:$0xf]
  %s2565 = scalar_lea.vmem [#allocation2], 772
  %v2566 = vld [vmem:[%s2565] ss:$2 sm:$0xf]
  %s2567 = scalar_lea.vmem [#allocation2], 916
  %v2568 = vld [vmem:[%s2567] ss:$2 sm:$0xf]
  %s2569 = scalar_lea.vmem [#allocation2], 1060
  %v2570 = vld [vmem:[%s2569] ss:$2 sm:$0xf]
  %v2571 = vpack.c.bf16 %v2556, %v2556
  %v2572 = vpack.c.bf16 %v2558, %v2558
  %v2573 = vpack.c.bf16 %v2560, %v2560
  %v2574 = vpack.c.bf16 %v2562, %v2562
  %v2575 = vpack.c.bf16 %v2564, %v2564
  %v2576 = vpack.c.bf16 %v2566, %v2566
  %v2577 = vpack.c.bf16 %v2568, %v2568
  %v2578 = vpack.c.bf16 %v2570, %v2570
  %v2587 = vrot.slane %v2571, 4
  %v2588 = vrot.slane %v2572, 4
  %v2589 = vrot.slane %v2573, 4
  %v2590 = vrot.slane %v2574, 4
  %v2591 = vrot.slane %v2575, 4
  %v2592 = vrot.slane %v2576, 4
  %v2593 = vrot.slane %v2577, 4
  %v2594 = vrot.slane %v2578, 4
  %2603 = vst [vmem:[#allocation3 + $0x20] sm:$0x30] %v2587
  %2604 = vst [vmem:[#allocation3 + $0xe8] sm:$0x30] %v2588
  %2605 = vst [vmem:[#allocation3 + $0x1b0] sm:$0x30] %v2589
  %2606 = vst [vmem:[#allocation3 + $0x278] sm:$0x30] %v2590
  %2607 = vst [vmem:[#allocation3 + $0x340] sm:$0x30] %v2591
  %2608 = vst [vmem:[#allocation3 + $0x408] sm:$0x30] %v2592
  %2609 = vst [vmem:[#allocation3 + $0x4d0] sm:$0x30] %v2593
  %2610 = vst [vmem:[#allocation3 + $0x598] sm:$0x30] %v2594
  %s2611 = scalar_lea.vmem [#allocation2], 76
  %v2612 = vld [vmem:[%s2611] ss:$2 sm:$0xf]
  %s2613 = scalar_lea.vmem [#allocation2], 220
  %v2614 = vld [vmem:[%s2613] ss:$2 sm:$0xf]
  %s2615 = scalar_lea.vmem [#allocation2], 364
  %v2616 = vld [vmem:[%s2615] ss:$2 sm:$0xf]
  %s2617 = scalar_lea.vmem [#allocation2], 508
  %v2618 = vld [vmem:[%s2617] ss:$2 sm:$0xf]
  %s2619 = scalar_lea.vmem [#allocation2], 652
  %v2620 = vld [vmem:[%s2619] ss:$2 sm:$0xf]
  %s2621 = scalar_lea.vmem [#allocation2], 796
  %v2622 = vld [vmem:[%s2621] ss:$2 sm:$0xf]
  %s2623 = scalar_lea.vmem [#allocation2], 940
  %v2624 = vld [vmem:[%s2623] ss:$2 sm:$0xf]
  %s2625 = scalar_lea.vmem [#allocation2], 1084
  %v2626 = vld [vmem:[%s2625] ss:$2 sm:$0xf]
  %v2627 = vpack.c.bf16 %v2612, %v2612
  %v2628 = vpack.c.bf16 %v2614, %v2614
  %v2629 = vpack.c.bf16 %v2616, %v2616
  %v2630 = vpack.c.bf16 %v2618, %v2618
  %v2631 = vpack.c.bf16 %v2620, %v2620
  %v2632 = vpack.c.bf16 %v2622, %v2622
  %v2633 = vpack.c.bf16 %v2624, %v2624
  %v2634 = vpack.c.bf16 %v2626, %v2626
  %v2643 = vrot.slane %v2627, 2
  %v2644 = vrot.slane %v2628, 2
  %v2645 = vrot.slane %v2629, 2
  %v2646 = vrot.slane %v2630, 2
  %v2647 = vrot.slane %v2631, 2
  %v2648 = vrot.slane %v2632, 2
  %v2649 = vrot.slane %v2633, 2
  %v2650 = vrot.slane %v2634, 2
  %2659 = vst [vmem:[#allocation3 + $0x20] sm:$0xc0] %v2643
  %2660 = vst [vmem:[#allocation3 + $0xe8] sm:$0xc0] %v2644
  %2661 = vst [vmem:[#allocation3 + $0x1b0] sm:$0xc0] %v2645
  %2662 = vst [vmem:[#allocation3 + $0x278] sm:$0xc0] %v2646
  %2663 = vst [vmem:[#allocation3 + $0x340] sm:$0xc0] %v2647
  %2664 = vst [vmem:[#allocation3 + $0x408] sm:$0xc0] %v2648
  %2665 = vst [vmem:[#allocation3 + $0x4d0] sm:$0xc0] %v2649
  %2666 = vst [vmem:[#allocation3 + $0x598] sm:$0xc0] %v2650
  %s2667 = scalar_lea.vmem [#allocation2], 12
  %v2668 = vld [vmem:[%s2667] ss:$2 sm:$0xf]
  %s2669 = scalar_lea.vmem [#allocation2], 156
  %v2670 = vld [vmem:[%s2669] ss:$2 sm:$0xf]
  %s2671 = scalar_lea.vmem [#allocation2], 300
  %v2672 = vld [vmem:[%s2671] ss:$2 sm:$0xf]
  %s2673 = scalar_lea.vmem [#allocation2], 444
  %v2674 = vld [vmem:[%s2673] ss:$2 sm:$0xf]
  %s2675 = scalar_lea.vmem [#allocation2], 588
  %v2676 = vld [vmem:[%s2675] ss:$2 sm:$0xf]
  %s2677 = scalar_lea.vmem [#allocation2], 732
  %v2678 = vld [vmem:[%s2677] ss:$2 sm:$0xf]
  %s2679 = scalar_lea.vmem [#allocation2], 876
  %v2680 = vld [vmem:[%s2679] ss:$2 sm:$0xf]
  %s2681 = scalar_lea.vmem [#allocation2], 1020
  %v2682 = vld [vmem:[%s2681] ss:$2 sm:$0xf]
  %v2683 = vpack.c.bf16 %v2668, %v2668
  %v2684 = vpack.c.bf16 %v2670, %v2670
  %v2685 = vpack.c.bf16 %v2672, %v2672
  %v2686 = vpack.c.bf16 %v2674, %v2674
  %v2687 = vpack.c.bf16 %v2676, %v2676
  %v2688 = vpack.c.bf16 %v2678, %v2678
  %v2689 = vpack.c.bf16 %v2680, %v2680
  %v2690 = vpack.c.bf16 %v2682, %v2682
  %2691 = vst [vmem:[#allocation3 + $0x28] sm:$0x3] %v2683
  %2692 = vst [vmem:[#allocation3 + $0xf0] sm:$0x3] %v2684
  %2693 = vst [vmem:[#allocation3 + $0x1b8] sm:$0x3] %v2685
  %2694 = vst [vmem:[#allocation3 + $0x280] sm:$0x3] %v2686
  %2695 = vst [vmem:[#allocation3 + $0x348] sm:$0x3] %v2687
  %2696 = vst [vmem:[#allocation3 + $0x410] sm:$0x3] %v2688
  %2697 = vst [vmem:[#allocation3 + $0x4d8] sm:$0x3] %v2689
  %2698 = vst [vmem:[#allocation3 + $0x5a0] sm:$0x3] %v2690
  %s2699 = scalar_lea.vmem [#allocation2], 36
  %v2700 = vld [vmem:[%s2699] ss:$2 sm:$0xf]
  %s2701 = scalar_lea.vmem [#allocation2], 180
  %v2702 = vld [vmem:[%s2701] ss:$2 sm:$0xf]
  %s2703 = scalar_lea.vmem [#allocation2], 324
  %v2704 = vld [vmem:[%s2703] ss:$2 sm:$0xf]
  %s2705 = scalar_lea.vmem [#allocation2], 468
  %v2706 = vld [vmem:[%s2705] ss:$2 sm:$0xf]
  %s2707 = scalar_lea.vmem [#allocation2], 612
  %v2708 = vld [vmem:[%s2707] ss:$2 sm:$0xf]
  %s2709 = scalar_lea.vmem [#allocation2], 756
  %v2710 = vld [vmem:[%s2709] ss:$2 sm:$0xf]
  %s2711 = scalar_lea.vmem [#allocation2], 900
  %v2712 = vld [vmem:[%s2711] ss:$2 sm:$0xf]
  %s2713 = scalar_lea.vmem [#allocation2], 1044
  %v2714 = vld [vmem:[%s2713] ss:$2 sm:$0xf]
  %v2715 = vpack.c.bf16 %v2700, %v2700
  %v2716 = vpack.c.bf16 %v2702, %v2702
  %v2717 = vpack.c.bf16 %v2704, %v2704
  %v2718 = vpack.c.bf16 %v2706, %v2706
  %v2719 = vpack.c.bf16 %v2708, %v2708
  %v2720 = vpack.c.bf16 %v2710, %v2710
  %v2721 = vpack.c.bf16 %v2712, %v2712
  %v2722 = vpack.c.bf16 %v2714, %v2714
  %v2731 = vrot.slane %v2715, 6
  %v2732 = vrot.slane %v2716, 6
  %v2733 = vrot.slane %v2717, 6
  %v2734 = vrot.slane %v2718, 6
  %v2735 = vrot.slane %v2719, 6
  %v2736 = vrot.slane %v2720, 6
  %v2737 = vrot.slane %v2721, 6
  %v2738 = vrot.slane %v2722, 6
  %2747 = vst [vmem:[#allocation3 + $0x28] sm:$0xc] %v2731
  %2748 = vst [vmem:[#allocation3 + $0xf0] sm:$0xc] %v2732
  %2749 = vst [vmem:[#allocation3 + $0x1b8] sm:$0xc] %v2733
  %2750 = vst [vmem:[#allocation3 + $0x280] sm:$0xc] %v2734
  %2751 = vst [vmem:[#allocation3 + $0x348] sm:$0xc] %v2735
  %2752 = vst [vmem:[#allocation3 + $0x410] sm:$0xc] %v2736
  %2753 = vst [vmem:[#allocation3 + $0x4d8] sm:$0xc] %v2737
  %2754 = vst [vmem:[#allocation3 + $0x5a0] sm:$0xc] %v2738
  %s2755 = scalar_lea.vmem [#allocation2], 60
  %v2756 = vld [vmem:[%s2755] ss:$2 sm:$0xf]
  %s2757 = scalar_lea.vmem [#allocation2], 204
  %v2758 = vld [vmem:[%s2757] ss:$2 sm:$0xf]
  %s2759 = scalar_lea.vmem [#allocation2], 348
  %v2760 = vld [vmem:[%s2759] ss:$2 sm:$0xf]
  %s2761 = scalar_lea.vmem [#allocation2], 492
  %v2762 = vld [vmem:[%s2761] ss:$2 sm:$0xf]
  %s2763 = scalar_lea.vmem [#allocation2], 636
  %v2764 = vld [vmem:[%s2763] ss:$2 sm:$0xf]
  %s2765 = scalar_lea.vmem [#allocation2], 780
  %v2766 = vld [vmem:[%s2765] ss:$2 sm:$0xf]
  %s2767 = scalar_lea.vmem [#allocation2], 924
  %v2768 = vld [vmem:[%s2767] ss:$2 sm:$0xf]
  %s2769 = scalar_lea.vmem [#allocation2], 1068
  %v2770 = vld [vmem:[%s2769] ss:$2 sm:$0xf]
  %v2771 = vpack.c.bf16 %v2756, %v2756
  %v2772 = vpack.c.bf16 %v2758, %v2758
  %v2773 = vpack.c.bf16 %v2760, %v2760
  %v2774 = vpack.c.bf16 %v2762, %v2762
  %v2775 = vpack.c.bf16 %v2764, %v2764
  %v2776 = vpack.c.bf16 %v2766, %v2766
  %v2777 = vpack.c.bf16 %v2768, %v2768
  %v2778 = vpack.c.bf16 %v2770, %v2770
  %v2787 = vrot.slane %v2771, 4
  %v2788 = vrot.slane %v2772, 4
  %v2789 = vrot.slane %v2773, 4
  %v2790 = vrot.slane %v2774, 4
  %v2791 = vrot.slane %v2775, 4
  %v2792 = vrot.slane %v2776, 4
  %v2793 = vrot.slane %v2777, 4
  %v2794 = vrot.slane %v2778, 4
  %2803 = vst [vmem:[#allocation3 + $0x28] sm:$0x30] %v2787
  %2804 = vst [vmem:[#allocation3 + $0xf0] sm:$0x30] %v2788
  %2805 = vst [vmem:[#allocation3 + $0x1b8] sm:$0x30] %v2789
  %2806 = vst [vmem:[#allocation3 + $0x280] sm:$0x30] %v2790
  %2807 = vst [vmem:[#allocation3 + $0x348] sm:$0x30] %v2791
  %2808 = vst [vmem:[#allocation3 + $0x410] sm:$0x30] %v2792
  %2809 = vst [vmem:[#allocation3 + $0x4d8] sm:$0x30] %v2793
  %2810 = vst [vmem:[#allocation3 + $0x5a0] sm:$0x30] %v2794
  %s2811 = scalar_lea.vmem [#allocation2], 84
  %v2812 = vld [vmem:[%s2811] ss:$2 sm:$0xf]
  %s2813 = scalar_lea.vmem [#allocation2], 228
  %v2814 = vld [vmem:[%s2813] ss:$2 sm:$0xf]
  %s2815 = scalar_lea.vmem [#allocation2], 372
  %v2816 = vld [vmem:[%s2815] ss:$2 sm:$0xf]
  %s2817 = scalar_lea.vmem [#allocation2], 516
  %v2818 = vld [vmem:[%s2817] ss:$2 sm:$0xf]
  %s2819 = scalar_lea.vmem [#allocation2], 660
  %v2820 = vld [vmem:[%s2819] ss:$2 sm:$0xf]
  %s2821 = scalar_lea.vmem [#allocation2], 804
  %v2822 = vld [vmem:[%s2821] ss:$2 sm:$0xf]
  %s2823 = scalar_lea.vmem [#allocation2], 948
  %v2824 = vld [vmem:[%s2823] ss:$2 sm:$0xf]
  %s2825 = scalar_lea.vmem [#allocation2], 1092
  %v2826 = vld [vmem:[%s2825] ss:$2 sm:$0xf]
  %v2827 = vpack.c.bf16 %v2812, %v2812
  %v2828 = vpack.c.bf16 %v2814, %v2814
  %v2829 = vpack.c.bf16 %v2816, %v2816
  %v2830 = vpack.c.bf16 %v2818, %v2818
  %v2831 = vpack.c.bf16 %v2820, %v2820
  %v2832 = vpack.c.bf16 %v2822, %v2822
  %v2833 = vpack.c.bf16 %v2824, %v2824
  %v2834 = vpack.c.bf16 %v2826, %v2826
  %v2843 = vrot.slane %v2827, 2
  %v2844 = vrot.slane %v2828, 2
  %v2845 = vrot.slane %v2829, 2
  %v2846 = vrot.slane %v2830, 2
  %v2847 = vrot.slane %v2831, 2
  %v2848 = vrot.slane %v2832, 2
  %v2849 = vrot.slane %v2833, 2
  %v2850 = vrot.slane %v2834, 2
  %2859 = vst [vmem:[#allocation3 + $0x28] sm:$0xc0] %v2843
  %2860 = vst [vmem:[#allocation3 + $0xf0] sm:$0xc0] %v2844
  %2861 = vst [vmem:[#allocation3 + $0x1b8] sm:$0xc0] %v2845
  %2862 = vst [vmem:[#allocation3 + $0x280] sm:$0xc0] %v2846
  %2863 = vst [vmem:[#allocation3 + $0x348] sm:$0xc0] %v2847
  %2864 = vst [vmem:[#allocation3 + $0x410] sm:$0xc0] %v2848
  %2865 = vst [vmem:[#allocation3 + $0x4d8] sm:$0xc0] %v2849
  %2866 = vst [vmem:[#allocation3 + $0x5a0] sm:$0xc0] %v2850
  %s2867 = scalar_lea.vmem [#allocation2], 13
  %v2868 = vld [vmem:[%s2867] ss:$2 sm:$0xf]
  %s2869 = scalar_lea.vmem [#allocation2], 157
  %v2870 = vld [vmem:[%s2869] ss:$2 sm:$0xf]
  %s2871 = scalar_lea.vmem [#allocation2], 301
  %v2872 = vld [vmem:[%s2871] ss:$2 sm:$0xf]
  %s2873 = scalar_lea.vmem [#allocation2], 445
  %v2874 = vld [vmem:[%s2873] ss:$2 sm:$0xf]
  %s2875 = scalar_lea.vmem [#allocation2], 589
  %v2876 = vld [vmem:[%s2875] ss:$2 sm:$0xf]
  %s2877 = scalar_lea.vmem [#allocation2], 733
  %v2878 = vld [vmem:[%s2877] ss:$2 sm:$0xf]
  %s2879 = scalar_lea.vmem [#allocation2], 877
  %v2880 = vld [vmem:[%s2879] ss:$2 sm:$0xf]
  %s2881 = scalar_lea.vmem [#allocation2], 1021
  %v2882 = vld [vmem:[%s2881] ss:$2 sm:$0xf]
  %v2883 = vpack.c.bf16 %v2868, %v2868
  %v2884 = vpack.c.bf16 %v2870, %v2870
  %v2885 = vpack.c.bf16 %v2872, %v2872
  %v2886 = vpack.c.bf16 %v2874, %v2874
  %v2887 = vpack.c.bf16 %v2876, %v2876
  %v2888 = vpack.c.bf16 %v2878, %v2878
  %v2889 = vpack.c.bf16 %v2880, %v2880
  %v2890 = vpack.c.bf16 %v2882, %v2882
  %2891 = vst [vmem:[#allocation3 + $0x30] sm:$0x3] %v2883
  %2892 = vst [vmem:[#allocation3 + $0xf8] sm:$0x3] %v2884
  %2893 = vst [vmem:[#allocation3 + $0x1c0] sm:$0x3] %v2885
  %2894 = vst [vmem:[#allocation3 + $0x288] sm:$0x3] %v2886
  %2895 = vst [vmem:[#allocation3 + $0x350] sm:$0x3] %v2887
  %2896 = vst [vmem:[#allocation3 + $0x418] sm:$0x3] %v2888
  %2897 = vst [vmem:[#allocation3 + $0x4e0] sm:$0x3] %v2889
  %2898 = vst [vmem:[#allocation3 + $0x5a8] sm:$0x3] %v2890
  %s2899 = scalar_lea.vmem [#allocation2], 37
  %v2900 = vld [vmem:[%s2899] ss:$2 sm:$0xf]
  %s2901 = scalar_lea.vmem [#allocation2], 181
  %v2902 = vld [vmem:[%s2901] ss:$2 sm:$0xf]
  %s2903 = scalar_lea.vmem [#allocation2], 325
  %v2904 = vld [vmem:[%s2903] ss:$2 sm:$0xf]
  %s2905 = scalar_lea.vmem [#allocation2], 469
  %v2906 = vld [vmem:[%s2905] ss:$2 sm:$0xf]
  %s2907 = scalar_lea.vmem [#allocation2], 613
  %v2908 = vld [vmem:[%s2907] ss:$2 sm:$0xf]
  %s2909 = scalar_lea.vmem [#allocation2], 757
  %v2910 = vld [vmem:[%s2909] ss:$2 sm:$0xf]
  %s2911 = scalar_lea.vmem [#allocation2], 901
  %v2912 = vld [vmem:[%s2911] ss:$2 sm:$0xf]
  %s2913 = scalar_lea.vmem [#allocation2], 1045
  %v2914 = vld [vmem:[%s2913] ss:$2 sm:$0xf]
  %v2915 = vpack.c.bf16 %v2900, %v2900
  %v2916 = vpack.c.bf16 %v2902, %v2902
  %v2917 = vpack.c.bf16 %v2904, %v2904
  %v2918 = vpack.c.bf16 %v2906, %v2906
  %v2919 = vpack.c.bf16 %v2908, %v2908
  %v2920 = vpack.c.bf16 %v2910, %v2910
  %v2921 = vpack.c.bf16 %v2912, %v2912
  %v2922 = vpack.c.bf16 %v2914, %v2914
  %v2931 = vrot.slane %v2915, 6
  %v2932 = vrot.slane %v2916, 6
  %v2933 = vrot.slane %v2917, 6
  %v2934 = vrot.slane %v2918, 6
  %v2935 = vrot.slane %v2919, 6
  %v2936 = vrot.slane %v2920, 6
  %v2937 = vrot.slane %v2921, 6
  %v2938 = vrot.slane %v2922, 6
  %2947 = vst [vmem:[#allocation3 + $0x30] sm:$0xc] %v2931
  %2948 = vst [vmem:[#allocation3 + $0xf8] sm:$0xc] %v2932
  %2949 = vst [vmem:[#allocation3 + $0x1c0] sm:$0xc] %v2933
  %2950 = vst [vmem:[#allocation3 + $0x288] sm:$0xc] %v2934
  %2951 = vst [vmem:[#allocation3 + $0x350] sm:$0xc] %v2935
  %2952 = vst [vmem:[#allocation3 + $0x418] sm:$0xc] %v2936
  %2953 = vst [vmem:[#allocation3 + $0x4e0] sm:$0xc] %v2937
  %2954 = vst [vmem:[#allocation3 + $0x5a8] sm:$0xc] %v2938
  %s2955 = scalar_lea.vmem [#allocation2], 61
  %v2956 = vld [vmem:[%s2955] ss:$2 sm:$0xf]
  %s2957 = scalar_lea.vmem [#allocation2], 205
  %v2958 = vld [vmem:[%s2957] ss:$2 sm:$0xf]
  %s2959 = scalar_lea.vmem [#allocation2], 349
  %v2960 = vld [vmem:[%s2959] ss:$2 sm:$0xf]
  %s2961 = scalar_lea.vmem [#allocation2], 493
  %v2962 = vld [vmem:[%s2961] ss:$2 sm:$0xf]
  %s2963 = scalar_lea.vmem [#allocation2], 637
  %v2964 = vld [vmem:[%s2963] ss:$2 sm:$0xf]
  %s2965 = scalar_lea.vmem [#allocation2], 781
  %v2966 = vld [vmem:[%s2965] ss:$2 sm:$0xf]
  %s2967 = scalar_lea.vmem [#allocation2], 925
  %v2968 = vld [vmem:[%s2967] ss:$2 sm:$0xf]
  %s2969 = scalar_lea.vmem [#allocation2], 1069
  %v2970 = vld [vmem:[%s2969] ss:$2 sm:$0xf]
  %v2971 = vpack.c.bf16 %v2956, %v2956
  %v2972 = vpack.c.bf16 %v2958, %v2958
  %v2973 = vpack.c.bf16 %v2960, %v2960
  %v2974 = vpack.c.bf16 %v2962, %v2962
  %v2975 = vpack.c.bf16 %v2964, %v2964
  %v2976 = vpack.c.bf16 %v2966, %v2966
  %v2977 = vpack.c.bf16 %v2968, %v2968
  %v2978 = vpack.c.bf16 %v2970, %v2970
  %v2987 = vrot.slane %v2971, 4
  %v2988 = vrot.slane %v2972, 4
  %v2989 = vrot.slane %v2973, 4
  %v2990 = vrot.slane %v2974, 4
  %v2991 = vrot.slane %v2975, 4
  %v2992 = vrot.slane %v2976, 4
  %v2993 = vrot.slane %v2977, 4
  %v2994 = vrot.slane %v2978, 4
  %3003 = vst [vmem:[#allocation3 + $0x30] sm:$0x30] %v2987
  %3004 = vst [vmem:[#allocation3 + $0xf8] sm:$0x30] %v2988
  %3005 = vst [vmem:[#allocation3 + $0x1c0] sm:$0x30] %v2989
  %3006 = vst [vmem:[#allocation3 + $0x288] sm:$0x30] %v2990
  %3007 = vst [vmem:[#allocation3 + $0x350] sm:$0x30] %v2991
  %3008 = vst [vmem:[#allocation3 + $0x418] sm:$0x30] %v2992
  %3009 = vst [vmem:[#allocation3 + $0x4e0] sm:$0x30] %v2993
  %3010 = vst [vmem:[#allocation3 + $0x5a8] sm:$0x30] %v2994
  %s3011 = scalar_lea.vmem [#allocation2], 85
  %v3012 = vld [vmem:[%s3011] ss:$2 sm:$0xf]
  %s3013 = scalar_lea.vmem [#allocation2], 229
  %v3014 = vld [vmem:[%s3013] ss:$2 sm:$0xf]
  %s3015 = scalar_lea.vmem [#allocation2], 373
  %v3016 = vld [vmem:[%s3015] ss:$2 sm:$0xf]
  %s3017 = scalar_lea.vmem [#allocation2], 517
  %v3018 = vld [vmem:[%s3017] ss:$2 sm:$0xf]
  %s3019 = scalar_lea.vmem [#allocation2], 661
  %v3020 = vld [vmem:[%s3019] ss:$2 sm:$0xf]
  %s3021 = scalar_lea.vmem [#allocation2], 805
  %v3022 = vld [vmem:[%s3021] ss:$2 sm:$0xf]
  %s3023 = scalar_lea.vmem [#allocation2], 949
  %v3024 = vld [vmem:[%s3023] ss:$2 sm:$0xf]
  %s3025 = scalar_lea.vmem [#allocation2], 1093
  %v3026 = vld [vmem:[%s3025] ss:$2 sm:$0xf]
  %v3027 = vpack.c.bf16 %v3012, %v3012
  %v3028 = vpack.c.bf16 %v3014, %v3014
  %v3029 = vpack.c.bf16 %v3016, %v3016
  %v3030 = vpack.c.bf16 %v3018, %v3018
  %v3031 = vpack.c.bf16 %v3020, %v3020
  %v3032 = vpack.c.bf16 %v3022, %v3022
  %v3033 = vpack.c.bf16 %v3024, %v3024
  %v3034 = vpack.c.bf16 %v3026, %v3026
  %v3043 = vrot.slane %v3027, 2
  %v3044 = vrot.slane %v3028, 2
  %v3045 = vrot.slane %v3029, 2
  %v3046 = vrot.slane %v3030, 2
  %v3047 = vrot.slane %v3031, 2
  %v3048 = vrot.slane %v3032, 2
  %v3049 = vrot.slane %v3033, 2
  %v3050 = vrot.slane %v3034, 2
  %3059 = vst [vmem:[#allocation3 + $0x30] sm:$0xc0] %v3043
  %3060 = vst [vmem:[#allocation3 + $0xf8] sm:$0xc0] %v3044
  %3061 = vst [vmem:[#allocation3 + $0x1c0] sm:$0xc0] %v3045
  %3062 = vst [vmem:[#allocation3 + $0x288] sm:$0xc0] %v3046
  %3063 = vst [vmem:[#allocation3 + $0x350] sm:$0xc0] %v3047
  %3064 = vst [vmem:[#allocation3 + $0x418] sm:$0xc0] %v3048
  %3065 = vst [vmem:[#allocation3 + $0x4e0] sm:$0xc0] %v3049
  %3066 = vst [vmem:[#allocation3 + $0x5a8] sm:$0xc0] %v3050
  %s3067 = scalar_lea.vmem [#allocation2], 14
  %v3068 = vld [vmem:[%s3067] ss:$2 sm:$0xf]
  %s3069 = scalar_lea.vmem [#allocation2], 158
  %v3070 = vld [vmem:[%s3069] ss:$2 sm:$0xf]
  %s3071 = scalar_lea.vmem [#allocation2], 302
  %v3072 = vld [vmem:[%s3071] ss:$2 sm:$0xf]
  %s3073 = scalar_lea.vmem [#allocation2], 446
  %v3074 = vld [vmem:[%s3073] ss:$2 sm:$0xf]
  %s3075 = scalar_lea.vmem [#allocation2], 590
  %v3076 = vld [vmem:[%s3075] ss:$2 sm:$0xf]
  %s3077 = scalar_lea.vmem [#allocation2], 734
  %v3078 = vld [vmem:[%s3077] ss:$2 sm:$0xf]
  %s3079 = scalar_lea.vmem [#allocation2], 878
  %v3080 = vld [vmem:[%s3079] ss:$2 sm:$0xf]
  %s3081 = scalar_lea.vmem [#allocation2], 1022
  %v3082 = vld [vmem:[%s3081] ss:$2 sm:$0xf]
  %v3083 = vpack.c.bf16 %v3068, %v3068
  %v3084 = vpack.c.bf16 %v3070, %v3070
  %v3085 = vpack.c.bf16 %v3072, %v3072
  %v3086 = vpack.c.bf16 %v3074, %v3074
  %v3087 = vpack.c.bf16 %v3076, %v3076
  %v3088 = vpack.c.bf16 %v3078, %v3078
  %v3089 = vpack.c.bf16 %v3080, %v3080
  %v3090 = vpack.c.bf16 %v3082, %v3082
  %3091 = vst [vmem:[#allocation3 + $0x38] sm:$0x3] %v3083
  %3092 = vst [vmem:[#allocation3 + $0x100] sm:$0x3] %v3084
  %3093 = vst [vmem:[#allocation3 + $0x1c8] sm:$0x3] %v3085
  %3094 = vst [vmem:[#allocation3 + $0x290] sm:$0x3] %v3086
  %3095 = vst [vmem:[#allocation3 + $0x358] sm:$0x3] %v3087
  %3096 = vst [vmem:[#allocation3 + $0x420] sm:$0x3] %v3088
  %3097 = vst [vmem:[#allocation3 + $0x4e8] sm:$0x3] %v3089
  %3098 = vst [vmem:[#allocation3 + $0x5b0] sm:$0x3] %v3090
  %s3099 = scalar_lea.vmem [#allocation2], 38
  %v3100 = vld [vmem:[%s3099] ss:$2 sm:$0xf]
  %s3101 = scalar_lea.vmem [#allocation2], 182
  %v3102 = vld [vmem:[%s3101] ss:$2 sm:$0xf]
  %s3103 = scalar_lea.vmem [#allocation2], 326
  %v3104 = vld [vmem:[%s3103] ss:$2 sm:$0xf]
  %s3105 = scalar_lea.vmem [#allocation2], 470
  %v3106 = vld [vmem:[%s3105] ss:$2 sm:$0xf]
  %s3107 = scalar_lea.vmem [#allocation2], 614
  %v3108 = vld [vmem:[%s3107] ss:$2 sm:$0xf]
  %s3109 = scalar_lea.vmem [#allocation2], 758
  %v3110 = vld [vmem:[%s3109] ss:$2 sm:$0xf]
  %s3111 = scalar_lea.vmem [#allocation2], 902
  %v3112 = vld [vmem:[%s3111] ss:$2 sm:$0xf]
  %s3113 = scalar_lea.vmem [#allocation2], 1046
  %v3114 = vld [vmem:[%s3113] ss:$2 sm:$0xf]
  %v3115 = vpack.c.bf16 %v3100, %v3100
  %v3116 = vpack.c.bf16 %v3102, %v3102
  %v3117 = vpack.c.bf16 %v3104, %v3104
  %v3118 = vpack.c.bf16 %v3106, %v3106
  %v3119 = vpack.c.bf16 %v3108, %v3108
  %v3120 = vpack.c.bf16 %v3110, %v3110
  %v3121 = vpack.c.bf16 %v3112, %v3112
  %v3122 = vpack.c.bf16 %v3114, %v3114
  %v3131 = vrot.slane %v3115, 6
  %v3132 = vrot.slane %v3116, 6
  %v3133 = vrot.slane %v3117, 6
  %v3134 = vrot.slane %v3118, 6
  %v3135 = vrot.slane %v3119, 6
  %v3136 = vrot.slane %v3120, 6
  %v3137 = vrot.slane %v3121, 6
  %v3138 = vrot.slane %v3122, 6
  %3147 = vst [vmem:[#allocation3 + $0x38] sm:$0xc] %v3131
  %3148 = vst [vmem:[#allocation3 + $0x100] sm:$0xc] %v3132
  %3149 = vst [vmem:[#allocation3 + $0x1c8] sm:$0xc] %v3133
  %3150 = vst [vmem:[#allocation3 + $0x290] sm:$0xc] %v3134
  %3151 = vst [vmem:[#allocation3 + $0x358] sm:$0xc] %v3135
  %3152 = vst [vmem:[#allocation3 + $0x420] sm:$0xc] %v3136
  %3153 = vst [vmem:[#allocation3 + $0x4e8] sm:$0xc] %v3137
  %3154 = vst [vmem:[#allocation3 + $0x5b0] sm:$0xc] %v3138
  %s3155 = scalar_lea.vmem [#allocation2], 62
  %v3156 = vld [vmem:[%s3155] ss:$2 sm:$0xf]
  %s3157 = scalar_lea.vmem [#allocation2], 206
  %v3158 = vld [vmem:[%s3157] ss:$2 sm:$0xf]
  %s3159 = scalar_lea.vmem [#allocation2], 350
  %v3160 = vld [vmem:[%s3159] ss:$2 sm:$0xf]
  %s3161 = scalar_lea.vmem [#allocation2], 494
  %v3162 = vld [vmem:[%s3161] ss:$2 sm:$0xf]
  %s3163 = scalar_lea.vmem [#allocation2], 638
  %v3164 = vld [vmem:[%s3163] ss:$2 sm:$0xf]
  %s3165 = scalar_lea.vmem [#allocation2], 782
  %v3166 = vld [vmem:[%s3165] ss:$2 sm:$0xf]
  %s3167 = scalar_lea.vmem [#allocation2], 926
  %v3168 = vld [vmem:[%s3167] ss:$2 sm:$0xf]
  %s3169 = scalar_lea.vmem [#allocation2], 1070
  %v3170 = vld [vmem:[%s3169] ss:$2 sm:$0xf]
  %v3171 = vpack.c.bf16 %v3156, %v3156
  %v3172 = vpack.c.bf16 %v3158, %v3158
  %v3173 = vpack.c.bf16 %v3160, %v3160
  %v3174 = vpack.c.bf16 %v3162, %v3162
  %v3175 = vpack.c.bf16 %v3164, %v3164
  %v3176 = vpack.c.bf16 %v3166, %v3166
  %v3177 = vpack.c.bf16 %v3168, %v3168
  %v3178 = vpack.c.bf16 %v3170, %v3170
  %v3187 = vrot.slane %v3171, 4
  %v3188 = vrot.slane %v3172, 4
  %v3189 = vrot.slane %v3173, 4
  %v3190 = vrot.slane %v3174, 4
  %v3191 = vrot.slane %v3175, 4
  %v3192 = vrot.slane %v3176, 4
  %v3193 = vrot.slane %v3177, 4
  %v3194 = vrot.slane %v3178, 4
  %3203 = vst [vmem:[#allocation3 + $0x38] sm:$0x30] %v3187
  %3204 = vst [vmem:[#allocation3 + $0x100] sm:$0x30] %v3188
  %3205 = vst [vmem:[#allocation3 + $0x1c8] sm:$0x30] %v3189
  %3206 = vst [vmem:[#allocation3 + $0x290] sm:$0x30] %v3190
  %3207 = vst [vmem:[#allocation3 + $0x358] sm:$0x30] %v3191
  %3208 = vst [vmem:[#allocation3 + $0x420] sm:$0x30] %v3192
  %3209 = vst [vmem:[#allocation3 + $0x4e8] sm:$0x30] %v3193
  %3210 = vst [vmem:[#allocation3 + $0x5b0] sm:$0x30] %v3194
  %s3211 = scalar_lea.vmem [#allocation2], 86
  %v3212 = vld [vmem:[%s3211] ss:$2 sm:$0xf]
  %s3213 = scalar_lea.vmem [#allocation2], 230
  %v3214 = vld [vmem:[%s3213] ss:$2 sm:$0xf]
  %s3215 = scalar_lea.vmem [#allocation2], 374
  %v3216 = vld [vmem:[%s3215] ss:$2 sm:$0xf]
  %s3217 = scalar_lea.vmem [#allocation2], 518
  %v3218 = vld [vmem:[%s3217] ss:$2 sm:$0xf]
  %s3219 = scalar_lea.vmem [#allocation2], 662
  %v3220 = vld [vmem:[%s3219] ss:$2 sm:$0xf]
  %s3221 = scalar_lea.vmem [#allocation2], 806
  %v3222 = vld [vmem:[%s3221] ss:$2 sm:$0xf]
  %s3223 = scalar_lea.vmem [#allocation2], 950
  %v3224 = vld [vmem:[%s3223] ss:$2 sm:$0xf]
  %s3225 = scalar_lea.vmem [#allocation2], 1094
  %v3226 = vld [vmem:[%s3225] ss:$2 sm:$0xf]
  %v3227 = vpack.c.bf16 %v3212, %v3212
  %v3228 = vpack.c.bf16 %v3214, %v3214
  %v3229 = vpack.c.bf16 %v3216, %v3216
  %v3230 = vpack.c.bf16 %v3218, %v3218
  %v3231 = vpack.c.bf16 %v3220, %v3220
  %v3232 = vpack.c.bf16 %v3222, %v3222
  %v3233 = vpack.c.bf16 %v3224, %v3224
  %v3234 = vpack.c.bf16 %v3226, %v3226
  %v3243 = vrot.slane %v3227, 2
  %v3244 = vrot.slane %v3228, 2
  %v3245 = vrot.slane %v3229, 2
  %v3246 = vrot.slane %v3230, 2
  %v3247 = vrot.slane %v3231, 2
  %v3248 = vrot.slane %v3232, 2
  %v3249 = vrot.slane %v3233, 2
  %v3250 = vrot.slane %v3234, 2
  %3259 = vst [vmem:[#allocation3 + $0x38] sm:$0xc0] %v3243
  %3260 = vst [vmem:[#allocation3 + $0x100] sm:$0xc0] %v3244
  %3261 = vst [vmem:[#allocation3 + $0x1c8] sm:$0xc0] %v3245
  %3262 = vst [vmem:[#allocation3 + $0x290] sm:$0xc0] %v3246
  %3263 = vst [vmem:[#allocation3 + $0x358] sm:$0xc0] %v3247
  %3264 = vst [vmem:[#allocation3 + $0x420] sm:$0xc0] %v3248
  %3265 = vst [vmem:[#allocation3 + $0x4e8] sm:$0xc0] %v3249
  %3266 = vst [vmem:[#allocation3 + $0x5b0] sm:$0xc0] %v3250
  %s3267 = scalar_lea.vmem [#allocation2], 15
  %v3268 = vld [vmem:[%s3267] ss:$2 sm:$0xf]
  %s3269 = scalar_lea.vmem [#allocation2], 159
  %v3270 = vld [vmem:[%s3269] ss:$2 sm:$0xf]
  %s3271 = scalar_lea.vmem [#allocation2], 303
  %v3272 = vld [vmem:[%s3271] ss:$2 sm:$0xf]
  %s3273 = scalar_lea.vmem [#allocation2], 447
  %v3274 = vld [vmem:[%s3273] ss:$2 sm:$0xf]
  %s3275 = scalar_lea.vmem [#allocation2], 591
  %v3276 = vld [vmem:[%s3275] ss:$2 sm:$0xf]
  %s3277 = scalar_lea.vmem [#allocation2], 735
  %v3278 = vld [vmem:[%s3277] ss:$2 sm:$0xf]
  %s3279 = scalar_lea.vmem [#allocation2], 879
  %v3280 = vld [vmem:[%s3279] ss:$2 sm:$0xf]
  %s3281 = scalar_lea.vmem [#allocation2], 1023
  %v3282 = vld [vmem:[%s3281] ss:$2 sm:$0xf]
  %v3283 = vpack.c.bf16 %v3268, %v3268
  %v3284 = vpack.c.bf16 %v3270, %v3270
  %v3285 = vpack.c.bf16 %v3272, %v3272
  %v3286 = vpack.c.bf16 %v3274, %v3274
  %v3287 = vpack.c.bf16 %v3276, %v3276
  %v3288 = vpack.c.bf16 %v3278, %v3278
  %v3289 = vpack.c.bf16 %v3280, %v3280
  %v3290 = vpack.c.bf16 %v3282, %v3282
  %3291 = vst [vmem:[#allocation3 + $0x40] sm:$0x3] %v3283
  %3292 = vst [vmem:[#allocation3 + $0x108] sm:$0x3] %v3284
  %3293 = vst [vmem:[#allocation3 + $0x1d0] sm:$0x3] %v3285
  %3294 = vst [vmem:[#allocation3 + $0x298] sm:$0x3] %v3286
  %3295 = vst [vmem:[#allocation3 + $0x360] sm:$0x3] %v3287
  %3296 = vst [vmem:[#allocation3 + $0x428] sm:$0x3] %v3288
  %3297 = vst [vmem:[#allocation3 + $0x4f0] sm:$0x3] %v3289
  %3298 = vst [vmem:[#allocation3 + $0x5b8] sm:$0x3] %v3290
  %s3299 = scalar_lea.vmem [#allocation2], 39
  %v3300 = vld [vmem:[%s3299] ss:$2 sm:$0xf]
  %s3301 = scalar_lea.vmem [#allocation2], 183
  %v3302 = vld [vmem:[%s3301] ss:$2 sm:$0xf]
  %s3303 = scalar_lea.vmem [#allocation2], 327
  %v3304 = vld [vmem:[%s3303] ss:$2 sm:$0xf]
  %s3305 = scalar_lea.vmem [#allocation2], 471
  %v3306 = vld [vmem:[%s3305] ss:$2 sm:$0xf]
  %s3307 = scalar_lea.vmem [#allocation2], 615
  %v3308 = vld [vmem:[%s3307] ss:$2 sm:$0xf]
  %s3309 = scalar_lea.vmem [#allocation2], 759
  %v3310 = vld [vmem:[%s3309] ss:$2 sm:$0xf]
  %s3311 = scalar_lea.vmem [#allocation2], 903
  %v3312 = vld [vmem:[%s3311] ss:$2 sm:$0xf]
  %s3313 = scalar_lea.vmem [#allocation2], 1047
  %v3314 = vld [vmem:[%s3313] ss:$2 sm:$0xf]
  %v3315 = vpack.c.bf16 %v3300, %v3300
  %v3316 = vpack.c.bf16 %v3302, %v3302
  %v3317 = vpack.c.bf16 %v3304, %v3304
  %v3318 = vpack.c.bf16 %v3306, %v3306
  %v3319 = vpack.c.bf16 %v3308, %v3308
  %v3320 = vpack.c.bf16 %v3310, %v3310
  %v3321 = vpack.c.bf16 %v3312, %v3312
  %v3322 = vpack.c.bf16 %v3314, %v3314
  %v3331 = vrot.slane %v3315, 6
  %v3332 = vrot.slane %v3316, 6
  %v3333 = vrot.slane %v3317, 6
  %v3334 = vrot.slane %v3318, 6
  %v3335 = vrot.slane %v3319, 6
  %v3336 = vrot.slane %v3320, 6
  %v3337 = vrot.slane %v3321, 6
  %v3338 = vrot.slane %v3322, 6
  %3347 = vst [vmem:[#allocation3 + $0x40] sm:$0xc] %v3331
  %3348 = vst [vmem:[#allocation3 + $0x108] sm:$0xc] %v3332
  %3349 = vst [vmem:[#allocation3 + $0x1d0] sm:$0xc] %v3333
  %3350 = vst [vmem:[#allocation3 + $0x298] sm:$0xc] %v3334
  %3351 = vst [vmem:[#allocation3 + $0x360] sm:$0xc] %v3335
  %3352 = vst [vmem:[#allocation3 + $0x428] sm:$0xc] %v3336
  %3353 = vst [vmem:[#allocation3 + $0x4f0] sm:$0xc] %v3337
  %3354 = vst [vmem:[#allocation3 + $0x5b8] sm:$0xc] %v3338
  %s3355 = scalar_lea.vmem [#allocation2], 63
  %v3356 = vld [vmem:[%s3355] ss:$2 sm:$0xf]
  %s3357 = scalar_lea.vmem [#allocation2], 207
  %v3358 = vld [vmem:[%s3357] ss:$2 sm:$0xf]
  %s3359 = scalar_lea.vmem [#allocation2], 351
  %v3360 = vld [vmem:[%s3359] ss:$2 sm:$0xf]
  %s3361 = scalar_lea.vmem [#allocation2], 495
  %v3362 = vld [vmem:[%s3361] ss:$2 sm:$0xf]
  %s3363 = scalar_lea.vmem [#allocation2], 639
  %v3364 = vld [vmem:[%s3363] ss:$2 sm:$0xf]
  %s3365 = scalar_lea.vmem [#allocation2], 783
  %v3366 = vld [vmem:[%s3365] ss:$2 sm:$0xf]
  %s3367 = scalar_lea.vmem [#allocation2], 927
  %v3368 = vld [vmem:[%s3367] ss:$2 sm:$0xf]
  %s3369 = scalar_lea.vmem [#allocation2], 1071
  %v3370 = vld [vmem:[%s3369] ss:$2 sm:$0xf]
  %v3371 = vpack.c.bf16 %v3356, %v3356
  %v3372 = vpack.c.bf16 %v3358, %v3358
  %v3373 = vpack.c.bf16 %v3360, %v3360
  %v3374 = vpack.c.bf16 %v3362, %v3362
  %v3375 = vpack.c.bf16 %v3364, %v3364
  %v3376 = vpack.c.bf16 %v3366, %v3366
  %v3377 = vpack.c.bf16 %v3368, %v3368
  %v3378 = vpack.c.bf16 %v3370, %v3370
  %v3387 = vrot.slane %v3371, 4
  %v3388 = vrot.slane %v3372, 4
  %v3389 = vrot.slane %v3373, 4
  %v3390 = vrot.slane %v3374, 4
  %v3391 = vrot.slane %v3375, 4
  %v3392 = vrot.slane %v3376, 4
  %v3393 = vrot.slane %v3377, 4
  %v3394 = vrot.slane %v3378, 4
  %3403 = vst [vmem:[#allocation3 + $0x40] sm:$0x30] %v3387
  %3404 = vst [vmem:[#allocation3 + $0x108] sm:$0x30] %v3388
  %3405 = vst [vmem:[#allocation3 + $0x1d0] sm:$0x30] %v3389
  %3406 = vst [vmem:[#allocation3 + $0x298] sm:$0x30] %v3390
  %3407 = vst [vmem:[#allocation3 + $0x360] sm:$0x30] %v3391
  %3408 = vst [vmem:[#allocation3 + $0x428] sm:$0x30] %v3392
  %3409 = vst [vmem:[#allocation3 + $0x4f0] sm:$0x30] %v3393
  %3410 = vst [vmem:[#allocation3 + $0x5b8] sm:$0x30] %v3394
  %s3411 = scalar_lea.vmem [#allocation2], 87
  %v3412 = vld [vmem:[%s3411] ss:$2 sm:$0xf]
  %s3413 = scalar_lea.vmem [#allocation2], 231
  %v3414 = vld [vmem:[%s3413] ss:$2 sm:$0xf]
  %s3415 = scalar_lea.vmem [#allocation2], 375
  %v3416 = vld [vmem:[%s3415] ss:$2 sm:$0xf]
  %s3417 = scalar_lea.vmem [#allocation2], 519
  %v3418 = vld [vmem:[%s3417] ss:$2 sm:$0xf]
  %s3419 = scalar_lea.vmem [#allocation2], 663
  %v3420 = vld [vmem:[%s3419] ss:$2 sm:$0xf]
  %s3421 = scalar_lea.vmem [#allocation2], 807
  %v3422 = vld [vmem:[%s3421] ss:$2 sm:$0xf]
  %s3423 = scalar_lea.vmem [#allocation2], 951
  %v3424 = vld [vmem:[%s3423] ss:$2 sm:$0xf]
  %s3425 = scalar_lea.vmem [#allocation2], 1095
  %v3426 = vld [vmem:[%s3425] ss:$2 sm:$0xf]
  %v3427 = vpack.c.bf16 %v3412, %v3412
  %v3428 = vpack.c.bf16 %v3414, %v3414
  %v3429 = vpack.c.bf16 %v3416, %v3416
  %v3430 = vpack.c.bf16 %v3418, %v3418
  %v3431 = vpack.c.bf16 %v3420, %v3420
  %v3432 = vpack.c.bf16 %v3422, %v3422
  %v3433 = vpack.c.bf16 %v3424, %v3424
  %v3434 = vpack.c.bf16 %v3426, %v3426
  %v3443 = vrot.slane %v3427, 2
  %v3444 = vrot.slane %v3428, 2
  %v3445 = vrot.slane %v3429, 2
  %v3446 = vrot.slane %v3430, 2
  %v3447 = vrot.slane %v3431, 2
  %v3448 = vrot.slane %v3432, 2
  %v3449 = vrot.slane %v3433, 2
  %v3450 = vrot.slane %v3434, 2
  %3459 = vst [vmem:[#allocation3 + $0x40] sm:$0xc0] %v3443
  %3460 = vst [vmem:[#allocation3 + $0x108] sm:$0xc0] %v3444
  %3461 = vst [vmem:[#allocation3 + $0x1d0] sm:$0xc0] %v3445
  %3462 = vst [vmem:[#allocation3 + $0x298] sm:$0xc0] %v3446
  %3463 = vst [vmem:[#allocation3 + $0x360] sm:$0xc0] %v3447
  %3464 = vst [vmem:[#allocation3 + $0x428] sm:$0xc0] %v3448
  %3465 = vst [vmem:[#allocation3 + $0x4f0] sm:$0xc0] %v3449
  %3466 = vst [vmem:[#allocation3 + $0x5b8] sm:$0xc0] %v3450
  %s3467 = scalar_lea.vmem [#allocation2], 16
  %v3468 = vld [vmem:[%s3467] ss:$2 sm:$0xf]
  %s3469 = scalar_lea.vmem [#allocation2], 160
  %v3470 = vld [vmem:[%s3469] ss:$2 sm:$0xf]
  %s3471 = scalar_lea.vmem [#allocation2], 304
  %v3472 = vld [vmem:[%s3471] ss:$2 sm:$0xf]
  %s3473 = scalar_lea.vmem [#allocation2], 448
  %v3474 = vld [vmem:[%s3473] ss:$2 sm:$0xf]
  %s3475 = scalar_lea.vmem [#allocation2], 592
  %v3476 = vld [vmem:[%s3475] ss:$2 sm:$0xf]
  %s3477 = scalar_lea.vmem [#allocation2], 736
  %v3478 = vld [vmem:[%s3477] ss:$2 sm:$0xf]
  %s3479 = scalar_lea.vmem [#allocation2], 880
  %v3480 = vld [vmem:[%s3479] ss:$2 sm:$0xf]
  %s3481 = scalar_lea.vmem [#allocation2], 1024
  %v3482 = vld [vmem:[%s3481] ss:$2 sm:$0xf]
  %v3483 = vpack.c.bf16 %v3468, %v3468
  %v3484 = vpack.c.bf16 %v3470, %v3470
  %v3485 = vpack.c.bf16 %v3472, %v3472
  %v3486 = vpack.c.bf16 %v3474, %v3474
  %v3487 = vpack.c.bf16 %v3476, %v3476
  %v3488 = vpack.c.bf16 %v3478, %v3478
  %v3489 = vpack.c.bf16 %v3480, %v3480
  %v3490 = vpack.c.bf16 %v3482, %v3482
  %3491 = vst [vmem:[#allocation3 + $0x48] sm:$0x3] %v3483
  %3492 = vst [vmem:[#allocation3 + $0x110] sm:$0x3] %v3484
  %3493 = vst [vmem:[#allocation3 + $0x1d8] sm:$0x3] %v3485
  %3494 = vst [vmem:[#allocation3 + $0x2a0] sm:$0x3] %v3486
  %3495 = vst [vmem:[#allocation3 + $0x368] sm:$0x3] %v3487
  %3496 = vst [vmem:[#allocation3 + $0x430] sm:$0x3] %v3488
  %3497 = vst [vmem:[#allocation3 + $0x4f8] sm:$0x3] %v3489
  %3498 = vst [vmem:[#allocation3 + $0x5c0] sm:$0x3] %v3490
  %s3499 = scalar_lea.vmem [#allocation2], 40
  %v3500 = vld [vmem:[%s3499] ss:$2 sm:$0xf]
  %s3501 = scalar_lea.vmem [#allocation2], 184
  %v3502 = vld [vmem:[%s3501] ss:$2 sm:$0xf]
  %s3503 = scalar_lea.vmem [#allocation2], 328
  %v3504 = vld [vmem:[%s3503] ss:$2 sm:$0xf]
  %s3505 = scalar_lea.vmem [#allocation2], 472
  %v3506 = vld [vmem:[%s3505] ss:$2 sm:$0xf]
  %s3507 = scalar_lea.vmem [#allocation2], 616
  %v3508 = vld [vmem:[%s3507] ss:$2 sm:$0xf]
  %s3509 = scalar_lea.vmem [#allocation2], 760
  %v3510 = vld [vmem:[%s3509] ss:$2 sm:$0xf]
  %s3511 = scalar_lea.vmem [#allocation2], 904
  %v3512 = vld [vmem:[%s3511] ss:$2 sm:$0xf]
  %s3513 = scalar_lea.vmem [#allocation2], 1048
  %v3514 = vld [vmem:[%s3513] ss:$2 sm:$0xf]
  %v3515 = vpack.c.bf16 %v3500, %v3500
  %v3516 = vpack.c.bf16 %v3502, %v3502
  %v3517 = vpack.c.bf16 %v3504, %v3504
  %v3518 = vpack.c.bf16 %v3506, %v3506
  %v3519 = vpack.c.bf16 %v3508, %v3508
  %v3520 = vpack.c.bf16 %v3510, %v3510
  %v3521 = vpack.c.bf16 %v3512, %v3512
  %v3522 = vpack.c.bf16 %v3514, %v3514
  %v3531 = vrot.slane %v3515, 6
  %v3532 = vrot.slane %v3516, 6
  %v3533 = vrot.slane %v3517, 6
  %v3534 = vrot.slane %v3518, 6
  %v3535 = vrot.slane %v3519, 6
  %v3536 = vrot.slane %v3520, 6
  %v3537 = vrot.slane %v3521, 6
  %v3538 = vrot.slane %v3522, 6
  %3547 = vst [vmem:[#allocation3 + $0x48] sm:$0xc] %v3531
  %3548 = vst [vmem:[#allocation3 + $0x110] sm:$0xc] %v3532
  %3549 = vst [vmem:[#allocation3 + $0x1d8] sm:$0xc] %v3533
  %3550 = vst [vmem:[#allocation3 + $0x2a0] sm:$0xc] %v3534
  %3551 = vst [vmem:[#allocation3 + $0x368] sm:$0xc] %v3535
  %3552 = vst [vmem:[#allocation3 + $0x430] sm:$0xc] %v3536
  %3553 = vst [vmem:[#allocation3 + $0x4f8] sm:$0xc] %v3537
  %3554 = vst [vmem:[#allocation3 + $0x5c0] sm:$0xc] %v3538
  %s3555 = scalar_lea.vmem [#allocation2], 64
  %v3556 = vld [vmem:[%s3555] ss:$2 sm:$0xf]
  %s3557 = scalar_lea.vmem [#allocation2], 208
  %v3558 = vld [vmem:[%s3557] ss:$2 sm:$0xf]
  %s3559 = scalar_lea.vmem [#allocation2], 352
  %v3560 = vld [vmem:[%s3559] ss:$2 sm:$0xf]
  %s3561 = scalar_lea.vmem [#allocation2], 496
  %v3562 = vld [vmem:[%s3561] ss:$2 sm:$0xf]
  %s3563 = scalar_lea.vmem [#allocation2], 640
  %v3564 = vld [vmem:[%s3563] ss:$2 sm:$0xf]
  %s3565 = scalar_lea.vmem [#allocation2], 784
  %v3566 = vld [vmem:[%s3565] ss:$2 sm:$0xf]
  %s3567 = scalar_lea.vmem [#allocation2], 928
  %v3568 = vld [vmem:[%s3567] ss:$2 sm:$0xf]
  %s3569 = scalar_lea.vmem [#allocation2], 1072
  %v3570 = vld [vmem:[%s3569] ss:$2 sm:$0xf]
  %v3571 = vpack.c.bf16 %v3556, %v3556
  %v3572 = vpack.c.bf16 %v3558, %v3558
  %v3573 = vpack.c.bf16 %v3560, %v3560
  %v3574 = vpack.c.bf16 %v3562, %v3562
  %v3575 = vpack.c.bf16 %v3564, %v3564
  %v3576 = vpack.c.bf16 %v3566, %v3566
  %v3577 = vpack.c.bf16 %v3568, %v3568
  %v3578 = vpack.c.bf16 %v3570, %v3570
  %v3587 = vrot.slane %v3571, 4
  %v3588 = vrot.slane %v3572, 4
  %v3589 = vrot.slane %v3573, 4
  %v3590 = vrot.slane %v3574, 4
  %v3591 = vrot.slane %v3575, 4
  %v3592 = vrot.slane %v3576, 4
  %v3593 = vrot.slane %v3577, 4
  %v3594 = vrot.slane %v3578, 4
  %3603 = vst [vmem:[#allocation3 + $0x48] sm:$0x30] %v3587
  %3604 = vst [vmem:[#allocation3 + $0x110] sm:$0x30] %v3588
  %3605 = vst [vmem:[#allocation3 + $0x1d8] sm:$0x30] %v3589
  %3606 = vst [vmem:[#allocation3 + $0x2a0] sm:$0x30] %v3590
  %3607 = vst [vmem:[#allocation3 + $0x368] sm:$0x30] %v3591
  %3608 = vst [vmem:[#allocation3 + $0x430] sm:$0x30] %v3592
  %3609 = vst [vmem:[#allocation3 + $0x4f8] sm:$0x30] %v3593
  %3610 = vst [vmem:[#allocation3 + $0x5c0] sm:$0x30] %v3594
  %s3611 = scalar_lea.vmem [#allocation2], 88
  %v3612 = vld [vmem:[%s3611] ss:$2 sm:$0xf]
  %s3613 = scalar_lea.vmem [#allocation2], 232
  %v3614 = vld [vmem:[%s3613] ss:$2 sm:$0xf]
  %s3615 = scalar_lea.vmem [#allocation2], 376
  %v3616 = vld [vmem:[%s3615] ss:$2 sm:$0xf]
  %s3617 = scalar_lea.vmem [#allocation2], 520
  %v3618 = vld [vmem:[%s3617] ss:$2 sm:$0xf]
  %s3619 = scalar_lea.vmem [#allocation2], 664
  %v3620 = vld [vmem:[%s3619] ss:$2 sm:$0xf]
  %s3621 = scalar_lea.vmem [#allocation2], 808
  %v3622 = vld [vmem:[%s3621] ss:$2 sm:$0xf]
  %s3623 = scalar_lea.vmem [#allocation2], 952
  %v3624 = vld [vmem:[%s3623] ss:$2 sm:$0xf]
  %s3625 = scalar_lea.vmem [#allocation2], 1096
  %v3626 = vld [vmem:[%s3625] ss:$2 sm:$0xf]
  %v3627 = vpack.c.bf16 %v3612, %v3612
  %v3628 = vpack.c.bf16 %v3614, %v3614
  %v3629 = vpack.c.bf16 %v3616, %v3616
  %v3630 = vpack.c.bf16 %v3618, %v3618
  %v3631 = vpack.c.bf16 %v3620, %v3620
  %v3632 = vpack.c.bf16 %v3622, %v3622
  %v3633 = vpack.c.bf16 %v3624, %v3624
  %v3634 = vpack.c.bf16 %v3626, %v3626
  %v3643 = vrot.slane %v3627, 2
  %v3644 = vrot.slane %v3628, 2
  %v3645 = vrot.slane %v3629, 2
  %v3646 = vrot.slane %v3630, 2
  %v3647 = vrot.slane %v3631, 2
  %v3648 = vrot.slane %v3632, 2
  %v3649 = vrot.slane %v3633, 2
  %v3650 = vrot.slane %v3634, 2
  %3659 = vst [vmem:[#allocation3 + $0x48] sm:$0xc0] %v3643
  %3660 = vst [vmem:[#allocation3 + $0x110] sm:$0xc0] %v3644
  %3661 = vst [vmem:[#allocation3 + $0x1d8] sm:$0xc0] %v3645
  %3662 = vst [vmem:[#allocation3 + $0x2a0] sm:$0xc0] %v3646
  %3663 = vst [vmem:[#allocation3 + $0x368] sm:$0xc0] %v3647
  %3664 = vst [vmem:[#allocation3 + $0x430] sm:$0xc0] %v3648
  %3665 = vst [vmem:[#allocation3 + $0x4f8] sm:$0xc0] %v3649
  %3666 = vst [vmem:[#allocation3 + $0x5c0] sm:$0xc0] %v3650
  %v3667 = vld [vmem:[%s1699] ss:$2 sm:$0xf]
  %v3668 = vld [vmem:[%s1701] ss:$2 sm:$0xf]
  %v3669 = vld [vmem:[%s1703] ss:$2 sm:$0xf]
  %v3670 = vld [vmem:[%s1705] ss:$2 sm:$0xf]
  %v3671 = vld [vmem:[%s1707] ss:$2 sm:$0xf]
  %v3672 = vld [vmem:[%s1709] ss:$2 sm:$0xf]
  %v3673 = vld [vmem:[%s1711] ss:$2 sm:$0xf]
  %v3674 = vld [vmem:[%s1713] ss:$2 sm:$0xf]
  %v3675 = vpack.c.bf16 %v3667, %v3667
  %v3676 = vpack.c.bf16 %v3668, %v3668
  %v3677 = vpack.c.bf16 %v3669, %v3669
  %v3678 = vpack.c.bf16 %v3670, %v3670
  %v3679 = vpack.c.bf16 %v3671, %v3671
  %v3680 = vpack.c.bf16 %v3672, %v3672
  %v3681 = vpack.c.bf16 %v3673, %v3673
  %v3682 = vpack.c.bf16 %v3674, %v3674
  %3683 = vst [vmem:[#allocation3 + $0x50] sm:$0x3] %v3675
  %3684 = vst [vmem:[#allocation3 + $0x118] sm:$0x3] %v3676
  %3685 = vst [vmem:[#allocation3 + $0x1e0] sm:$0x3] %v3677
  %3686 = vst [vmem:[#allocation3 + $0x2a8] sm:$0x3] %v3678
  %3687 = vst [vmem:[#allocation3 + $0x370] sm:$0x3] %v3679
  %3688 = vst [vmem:[#allocation3 + $0x438] sm:$0x3] %v3680
  %3689 = vst [vmem:[#allocation3 + $0x500] sm:$0x3] %v3681
  %3690 = vst [vmem:[#allocation3 + $0x5c8] sm:$0x3] %v3682
  %v3691 = vld [vmem:[%s1755] ss:$2 sm:$0xf]
  %v3692 = vld [vmem:[%s1757] ss:$2 sm:$0xf]
  %v3693 = vld [vmem:[%s1759] ss:$2 sm:$0xf]
  %v3694 = vld [vmem:[%s1761] ss:$2 sm:$0xf]
  %v3695 = vld [vmem:[%s1763] ss:$2 sm:$0xf]
  %v3696 = vld [vmem:[%s1765] ss:$2 sm:$0xf]
  %v3697 = vld [vmem:[%s1767] ss:$2 sm:$0xf]
  %v3698 = vld [vmem:[%s1769] ss:$2 sm:$0xf]
  %v3699 = vpack.c.bf16 %v3691, %v3691
  %v3700 = vpack.c.bf16 %v3692, %v3692
  %v3701 = vpack.c.bf16 %v3693, %v3693
  %v3702 = vpack.c.bf16 %v3694, %v3694
  %v3703 = vpack.c.bf16 %v3695, %v3695
  %v3704 = vpack.c.bf16 %v3696, %v3696
  %v3705 = vpack.c.bf16 %v3697, %v3697
  %v3706 = vpack.c.bf16 %v3698, %v3698
  %v3715 = vrot.slane %v3699, 6
  %v3716 = vrot.slane %v3700, 6
  %v3717 = vrot.slane %v3701, 6
  %v3718 = vrot.slane %v3702, 6
  %v3719 = vrot.slane %v3703, 6
  %v3720 = vrot.slane %v3704, 6
  %v3721 = vrot.slane %v3705, 6
  %v3722 = vrot.slane %v3706, 6
  %3731 = vst [vmem:[#allocation3 + $0x50] sm:$0xc] %v3715
  %3732 = vst [vmem:[#allocation3 + $0x118] sm:$0xc] %v3716
  %3733 = vst [vmem:[#allocation3 + $0x1e0] sm:$0xc] %v3717
  %3734 = vst [vmem:[#allocation3 + $0x2a8] sm:$0xc] %v3718
  %3735 = vst [vmem:[#allocation3 + $0x370] sm:$0xc] %v3719
  %3736 = vst [vmem:[#allocation3 + $0x438] sm:$0xc] %v3720
  %3737 = vst [vmem:[#allocation3 + $0x500] sm:$0xc] %v3721
  %3738 = vst [vmem:[#allocation3 + $0x5c8] sm:$0xc] %v3722
  %v3739 = vld [vmem:[%s1811] ss:$2 sm:$0xf]
  %v3740 = vld [vmem:[%s1813] ss:$2 sm:$0xf]
  %v3741 = vld [vmem:[%s1815] ss:$2 sm:$0xf]
  %v3742 = vld [vmem:[%s1817] ss:$2 sm:$0xf]
  %v3743 = vld [vmem:[%s1819] ss:$2 sm:$0xf]
  %v3744 = vld [vmem:[%s1821] ss:$2 sm:$0xf]
  %v3745 = vld [vmem:[%s1823] ss:$2 sm:$0xf]
  %v3746 = vld [vmem:[%s1825] ss:$2 sm:$0xf]
  %v3747 = vpack.c.bf16 %v3739, %v3739
  %v3748 = vpack.c.bf16 %v3740, %v3740
  %v3749 = vpack.c.bf16 %v3741, %v3741
  %v3750 = vpack.c.bf16 %v3742, %v3742
  %v3751 = vpack.c.bf16 %v3743, %v3743
  %v3752 = vpack.c.bf16 %v3744, %v3744
  %v3753 = vpack.c.bf16 %v3745, %v3745
  %v3754 = vpack.c.bf16 %v3746, %v3746
  %v3763 = vrot.slane %v3747, 4
  %v3764 = vrot.slane %v3748, 4
  %v3765 = vrot.slane %v3749, 4
  %v3766 = vrot.slane %v3750, 4
  %v3767 = vrot.slane %v3751, 4
  %v3768 = vrot.slane %v3752, 4
  %v3769 = vrot.slane %v3753, 4
  %v3770 = vrot.slane %v3754, 4
  %3779 = vst [vmem:[#allocation3 + $0x50] sm:$0x30] %v3763
  %3780 = vst [vmem:[#allocation3 + $0x118] sm:$0x30] %v3764
  %3781 = vst [vmem:[#allocation3 + $0x1e0] sm:$0x30] %v3765
  %3782 = vst [vmem:[#allocation3 + $0x2a8] sm:$0x30] %v3766
  %3783 = vst [vmem:[#allocation3 + $0x370] sm:$0x30] %v3767
  %3784 = vst [vmem:[#allocation3 + $0x438] sm:$0x30] %v3768
  %3785 = vst [vmem:[#allocation3 + $0x500] sm:$0x30] %v3769
  %3786 = vst [vmem:[#allocation3 + $0x5c8] sm:$0x30] %v3770
  %s3787 = scalar_lea.vmem [#allocation2], 96
  %v3788 = vld [vmem:[%s3787] ss:$2 sm:$0xf]
  %s3789 = scalar_lea.vmem [#allocation2], 240
  %v3790 = vld [vmem:[%s3789] ss:$2 sm:$0xf]
  %s3791 = scalar_lea.vmem [#allocation2], 384
  %v3792 = vld [vmem:[%s3791] ss:$2 sm:$0xf]
  %s3793 = scalar_lea.vmem [#allocation2], 528
  %v3794 = vld [vmem:[%s3793] ss:$2 sm:$0xf]
  %s3795 = scalar_lea.vmem [#allocation2], 672
  %v3796 = vld [vmem:[%s3795] ss:$2 sm:$0xf]
  %s3797 = scalar_lea.vmem [#allocation2], 816
  %v3798 = vld [vmem:[%s3797] ss:$2 sm:$0xf]
  %s3799 = scalar_lea.vmem [#allocation2], 960
  %v3800 = vld [vmem:[%s3799] ss:$2 sm:$0xf]
  %s3801 = scalar_lea.vmem [#allocation2], 1104
  %v3802 = vld [vmem:[%s3801] ss:$2 sm:$0xf]
  %v3803 = vpack.c.bf16 %v3788, %v3788
  %v3804 = vpack.c.bf16 %v3790, %v3790
  %v3805 = vpack.c.bf16 %v3792, %v3792
  %v3806 = vpack.c.bf16 %v3794, %v3794
  %v3807 = vpack.c.bf16 %v3796, %v3796
  %v3808 = vpack.c.bf16 %v3798, %v3798
  %v3809 = vpack.c.bf16 %v3800, %v3800
  %v3810 = vpack.c.bf16 %v3802, %v3802
  %v3819 = vrot.slane %v3803, 2
  %v3820 = vrot.slane %v3804, 2
  %v3821 = vrot.slane %v3805, 2
  %v3822 = vrot.slane %v3806, 2
  %v3823 = vrot.slane %v3807, 2
  %v3824 = vrot.slane %v3808, 2
  %v3825 = vrot.slane %v3809, 2
  %v3826 = vrot.slane %v3810, 2
  %3835 = vst [vmem:[#allocation3 + $0x50] sm:$0xc0] %v3819
  %3836 = vst [vmem:[#allocation3 + $0x118] sm:$0xc0] %v3820
  %3837 = vst [vmem:[#allocation3 + $0x1e0] sm:$0xc0] %v3821
  %3838 = vst [vmem:[#allocation3 + $0x2a8] sm:$0xc0] %v3822
  %3839 = vst [vmem:[#allocation3 + $0x370] sm:$0xc0] %v3823
  %3840 = vst [vmem:[#allocation3 + $0x438] sm:$0xc0] %v3824
  %3841 = vst [vmem:[#allocation3 + $0x500] sm:$0xc0] %v3825
  %3842 = vst [vmem:[#allocation3 + $0x5c8] sm:$0xc0] %v3826
  %v3843 = vld [vmem:[%s1899] ss:$2 sm:$0xf]
  %v3844 = vld [vmem:[%s1901] ss:$2 sm:$0xf]
  %v3845 = vld [vmem:[%s1903] ss:$2 sm:$0xf]
  %v3846 = vld [vmem:[%s1905] ss:$2 sm:$0xf]
  %v3847 = vld [vmem:[%s1907] ss:$2 sm:$0xf]
  %v3848 = vld [vmem:[%s1909] ss:$2 sm:$0xf]
  %v3849 = vld [vmem:[%s1911] ss:$2 sm:$0xf]
  %v3850 = vld [vmem:[%s1913] ss:$2 sm:$0xf]
  %v3851 = vpack.c.bf16 %v3843, %v3843
  %v3852 = vpack.c.bf16 %v3844, %v3844
  %v3853 = vpack.c.bf16 %v3845, %v3845
  %v3854 = vpack.c.bf16 %v3846, %v3846
  %v3855 = vpack.c.bf16 %v3847, %v3847
  %v3856 = vpack.c.bf16 %v3848, %v3848
  %v3857 = vpack.c.bf16 %v3849, %v3849
  %v3858 = vpack.c.bf16 %v3850, %v3850
  %3859 = vst [vmem:[#allocation3 + $0x58] sm:$0x3] %v3851
  %3860 = vst [vmem:[#allocation3 + $0x120] sm:$0x3] %v3852
  %3861 = vst [vmem:[#allocation3 + $0x1e8] sm:$0x3] %v3853
  %3862 = vst [vmem:[#allocation3 + $0x2b0] sm:$0x3] %v3854
  %3863 = vst [vmem:[#allocation3 + $0x378] sm:$0x3] %v3855
  %3864 = vst [vmem:[#allocation3 + $0x440] sm:$0x3] %v3856
  %3865 = vst [vmem:[#allocation3 + $0x508] sm:$0x3] %v3857
  %3866 = vst [vmem:[#allocation3 + $0x5d0] sm:$0x3] %v3858
  %v3867 = vld [vmem:[%s1955] ss:$2 sm:$0xf]
  %v3868 = vld [vmem:[%s1957] ss:$2 sm:$0xf]
  %v3869 = vld [vmem:[%s1959] ss:$2 sm:$0xf]
  %v3870 = vld [vmem:[%s1961] ss:$2 sm:$0xf]
  %v3871 = vld [vmem:[%s1963] ss:$2 sm:$0xf]
  %v3872 = vld [vmem:[%s1965] ss:$2 sm:$0xf]
  %v3873 = vld [vmem:[%s1967] ss:$2 sm:$0xf]
  %v3874 = vld [vmem:[%s1969] ss:$2 sm:$0xf]
  %v3875 = vpack.c.bf16 %v3867, %v3867
  %v3876 = vpack.c.bf16 %v3868, %v3868
  %v3877 = vpack.c.bf16 %v3869, %v3869
  %v3878 = vpack.c.bf16 %v3870, %v3870
  %v3879 = vpack.c.bf16 %v3871, %v3871
  %v3880 = vpack.c.bf16 %v3872, %v3872
  %v3881 = vpack.c.bf16 %v3873, %v3873
  %v3882 = vpack.c.bf16 %v3874, %v3874
  %v3891 = vrot.slane %v3875, 6
  %v3892 = vrot.slane %v3876, 6
  %v3893 = vrot.slane %v3877, 6
  %v3894 = vrot.slane %v3878, 6
  %v3895 = vrot.slane %v3879, 6
  %v3896 = vrot.slane %v3880, 6
  %v3897 = vrot.slane %v3881, 6
  %v3898 = vrot.slane %v3882, 6
  %3907 = vst [vmem:[#allocation3 + $0x58] sm:$0xc] %v3891
  %3908 = vst [vmem:[#allocation3 + $0x120] sm:$0xc] %v3892
  %3909 = vst [vmem:[#allocation3 + $0x1e8] sm:$0xc] %v3893
  %3910 = vst [vmem:[#allocation3 + $0x2b0] sm:$0xc] %v3894
  %3911 = vst [vmem:[#allocation3 + $0x378] sm:$0xc] %v3895
  %3912 = vst [vmem:[#allocation3 + $0x440] sm:$0xc] %v3896
  %3913 = vst [vmem:[#allocation3 + $0x508] sm:$0xc] %v3897
  %3914 = vst [vmem:[#allocation3 + $0x5d0] sm:$0xc] %v3898
  %v3915 = vld [vmem:[%s2011] ss:$2 sm:$0xf]
  %v3916 = vld [vmem:[%s2013] ss:$2 sm:$0xf]
  %v3917 = vld [vmem:[%s2015] ss:$2 sm:$0xf]
  %v3918 = vld [vmem:[%s2017] ss:$2 sm:$0xf]
  %v3919 = vld [vmem:[%s2019] ss:$2 sm:$0xf]
  %v3920 = vld [vmem:[%s2021] ss:$2 sm:$0xf]
  %v3921 = vld [vmem:[%s2023] ss:$2 sm:$0xf]
  %v3922 = vld [vmem:[%s2025] ss:$2 sm:$0xf]
  %v3923 = vpack.c.bf16 %v3915, %v3915
  %v3924 = vpack.c.bf16 %v3916, %v3916
  %v3925 = vpack.c.bf16 %v3917, %v3917
  %v3926 = vpack.c.bf16 %v3918, %v3918
  %v3927 = vpack.c.bf16 %v3919, %v3919
  %v3928 = vpack.c.bf16 %v3920, %v3920
  %v3929 = vpack.c.bf16 %v3921, %v3921
  %v3930 = vpack.c.bf16 %v3922, %v3922
  %v3939 = vrot.slane %v3923, 4
  %v3940 = vrot.slane %v3924, 4
  %v3941 = vrot.slane %v3925, 4
  %v3942 = vrot.slane %v3926, 4
  %v3943 = vrot.slane %v3927, 4
  %v3944 = vrot.slane %v3928, 4
  %v3945 = vrot.slane %v3929, 4
  %v3946 = vrot.slane %v3930, 4
  %3955 = vst [vmem:[#allocation3 + $0x58] sm:$0x30] %v3939
  %3956 = vst [vmem:[#allocation3 + $0x120] sm:$0x30] %v3940
  %3957 = vst [vmem:[#allocation3 + $0x1e8] sm:$0x30] %v3941
  %3958 = vst [vmem:[#allocation3 + $0x2b0] sm:$0x30] %v3942
  %3959 = vst [vmem:[#allocation3 + $0x378] sm:$0x30] %v3943
  %3960 = vst [vmem:[#allocation3 + $0x440] sm:$0x30] %v3944
  %3961 = vst [vmem:[#allocation3 + $0x508] sm:$0x30] %v3945
  %3962 = vst [vmem:[#allocation3 + $0x5d0] sm:$0x30] %v3946
  %s3963 = scalar_lea.vmem [#allocation2], 97
  %v3964 = vld [vmem:[%s3963] ss:$2 sm:$0xf]
  %s3965 = scalar_lea.vmem [#allocation2], 241
  %v3966 = vld [vmem:[%s3965] ss:$2 sm:$0xf]
  %s3967 = scalar_lea.vmem [#allocation2], 385
  %v3968 = vld [vmem:[%s3967] ss:$2 sm:$0xf]
  %s3969 = scalar_lea.vmem [#allocation2], 529
  %v3970 = vld [vmem:[%s3969] ss:$2 sm:$0xf]
  %s3971 = scalar_lea.vmem [#allocation2], 673
  %v3972 = vld [vmem:[%s3971] ss:$2 sm:$0xf]
  %s3973 = scalar_lea.vmem [#allocation2], 817
  %v3974 = vld [vmem:[%s3973] ss:$2 sm:$0xf]
  %s3975 = scalar_lea.vmem [#allocation2], 961
  %v3976 = vld [vmem:[%s3975] ss:$2 sm:$0xf]
  %s3977 = scalar_lea.vmem [#allocation2], 1105
  %v3978 = vld [vmem:[%s3977] ss:$2 sm:$0xf]
  %v3979 = vpack.c.bf16 %v3964, %v3964
  %v3980 = vpack.c.bf16 %v3966, %v3966
  %v3981 = vpack.c.bf16 %v3968, %v3968
  %v3982 = vpack.c.bf16 %v3970, %v3970
  %v3983 = vpack.c.bf16 %v3972, %v3972
  %v3984 = vpack.c.bf16 %v3974, %v3974
  %v3985 = vpack.c.bf16 %v3976, %v3976
  %v3986 = vpack.c.bf16 %v3978, %v3978
  %v3995 = vrot.slane %v3979, 2
  %v3996 = vrot.slane %v3980, 2
  %v3997 = vrot.slane %v3981, 2
  %v3998 = vrot.slane %v3982, 2
  %v3999 = vrot.slane %v3983, 2
  %v4000 = vrot.slane %v3984, 2
  %v4001 = vrot.slane %v3985, 2
  %v4002 = vrot.slane %v3986, 2
  %4011 = vst [vmem:[#allocation3 + $0x58] sm:$0xc0] %v3995
  %4012 = vst [vmem:[#allocation3 + $0x120] sm:$0xc0] %v3996
  %4013 = vst [vmem:[#allocation3 + $0x1e8] sm:$0xc0] %v3997
  %4014 = vst [vmem:[#allocation3 + $0x2b0] sm:$0xc0] %v3998
  %4015 = vst [vmem:[#allocation3 + $0x378] sm:$0xc0] %v3999
  %4016 = vst [vmem:[#allocation3 + $0x440] sm:$0xc0] %v4000
  %4017 = vst [vmem:[#allocation3 + $0x508] sm:$0xc0] %v4001
  %4018 = vst [vmem:[#allocation3 + $0x5d0] sm:$0xc0] %v4002
  %v4019 = vld [vmem:[%s2099] ss:$2 sm:$0xf]
  %v4020 = vld [vmem:[%s2101] ss:$2 sm:$0xf]
  %v4021 = vld [vmem:[%s2103] ss:$2 sm:$0xf]
  %v4022 = vld [vmem:[%s2105] ss:$2 sm:$0xf]
  %v4023 = vld [vmem:[%s2107] ss:$2 sm:$0xf]
  %v4024 = vld [vmem:[%s2109] ss:$2 sm:$0xf]
  %v4025 = vld [vmem:[%s2111] ss:$2 sm:$0xf]
  %v4026 = vld [vmem:[%s2113] ss:$2 sm:$0xf]
  %v4027 = vpack.c.bf16 %v4019, %v4019
  %v4028 = vpack.c.bf16 %v4020, %v4020
  %v4029 = vpack.c.bf16 %v4021, %v4021
  %v4030 = vpack.c.bf16 %v4022, %v4022
  %v4031 = vpack.c.bf16 %v4023, %v4023
  %v4032 = vpack.c.bf16 %v4024, %v4024
  %v4033 = vpack.c.bf16 %v4025, %v4025
  %v4034 = vpack.c.bf16 %v4026, %v4026
  %4035 = vst [vmem:[#allocation3 + $0x60] sm:$0x3] %v4027
  %4036 = vst [vmem:[#allocation3 + $0x128] sm:$0x3] %v4028
  %4037 = vst [vmem:[#allocation3 + $0x1f0] sm:$0x3] %v4029
  %4038 = vst [vmem:[#allocation3 + $0x2b8] sm:$0x3] %v4030
  %4039 = vst [vmem:[#allocation3 + $0x380] sm:$0x3] %v4031
  %4040 = vst [vmem:[#allocation3 + $0x448] sm:$0x3] %v4032
  %4041 = vst [vmem:[#allocation3 + $0x510] sm:$0x3] %v4033
  %4042 = vst [vmem:[#allocation3 + $0x5d8] sm:$0x3] %v4034
  %v4043 = vld [vmem:[%s2155] ss:$2 sm:$0xf]
  %v4044 = vld [vmem:[%s2157] ss:$2 sm:$0xf]
  %v4045 = vld [vmem:[%s2159] ss:$2 sm:$0xf]
  %v4046 = vld [vmem:[%s2161] ss:$2 sm:$0xf]
  %v4047 = vld [vmem:[%s2163] ss:$2 sm:$0xf]
  %v4048 = vld [vmem:[%s2165] ss:$2 sm:$0xf]
  %v4049 = vld [vmem:[%s2167] ss:$2 sm:$0xf]
  %v4050 = vld [vmem:[%s2169] ss:$2 sm:$0xf]
  %v4051 = vpack.c.bf16 %v4043, %v4043
  %v4052 = vpack.c.bf16 %v4044, %v4044
  %v4053 = vpack.c.bf16 %v4045, %v4045
  %v4054 = vpack.c.bf16 %v4046, %v4046
  %v4055 = vpack.c.bf16 %v4047, %v4047
  %v4056 = vpack.c.bf16 %v4048, %v4048
  %v4057 = vpack.c.bf16 %v4049, %v4049
  %v4058 = vpack.c.bf16 %v4050, %v4050
  %v4067 = vrot.slane %v4051, 6
  %v4068 = vrot.slane %v4052, 6
  %v4069 = vrot.slane %v4053, 6
  %v4070 = vrot.slane %v4054, 6
  %v4071 = vrot.slane %v4055, 6
  %v4072 = vrot.slane %v4056, 6
  %v4073 = vrot.slane %v4057, 6
  %v4074 = vrot.slane %v4058, 6
  %4083 = vst [vmem:[#allocation3 + $0x60] sm:$0xc] %v4067
  %4084 = vst [vmem:[#allocation3 + $0x128] sm:$0xc] %v4068
  %4085 = vst [vmem:[#allocation3 + $0x1f0] sm:$0xc] %v4069
  %4086 = vst [vmem:[#allocation3 + $0x2b8] sm:$0xc] %v4070
  %4087 = vst [vmem:[#allocation3 + $0x380] sm:$0xc] %v4071
  %4088 = vst [vmem:[#allocation3 + $0x448] sm:$0xc] %v4072
  %4089 = vst [vmem:[#allocation3 + $0x510] sm:$0xc] %v4073
  %4090 = vst [vmem:[#allocation3 + $0x5d8] sm:$0xc] %v4074
  %v4091 = vld [vmem:[%s2211] ss:$2 sm:$0xf]
  %v4092 = vld [vmem:[%s2213] ss:$2 sm:$0xf]
  %v4093 = vld [vmem:[%s2215] ss:$2 sm:$0xf]
  %v4094 = vld [vmem:[%s2217] ss:$2 sm:$0xf]
  %v4095 = vld [vmem:[%s2219] ss:$2 sm:$0xf]
  %v4096 = vld [vmem:[%s2221] ss:$2 sm:$0xf]
  %v4097 = vld [vmem:[%s2223] ss:$2 sm:$0xf]
  %v4098 = vld [vmem:[%s2225] ss:$2 sm:$0xf]
  %v4099 = vpack.c.bf16 %v4091, %v4091
  %v4100 = vpack.c.bf16 %v4092, %v4092
  %v4101 = vpack.c.bf16 %v4093, %v4093
  %v4102 = vpack.c.bf16 %v4094, %v4094
  %v4103 = vpack.c.bf16 %v4095, %v4095
  %v4104 = vpack.c.bf16 %v4096, %v4096
  %v4105 = vpack.c.bf16 %v4097, %v4097
  %v4106 = vpack.c.bf16 %v4098, %v4098
  %v4115 = vrot.slane %v4099, 4
  %v4116 = vrot.slane %v4100, 4
  %v4117 = vrot.slane %v4101, 4
  %v4118 = vrot.slane %v4102, 4
  %v4119 = vrot.slane %v4103, 4
  %v4120 = vrot.slane %v4104, 4
  %v4121 = vrot.slane %v4105, 4
  %v4122 = vrot.slane %v4106, 4
  %4131 = vst [vmem:[#allocation3 + $0x60] sm:$0x30] %v4115
  %4132 = vst [vmem:[#allocation3 + $0x128] sm:$0x30] %v4116
  %4133 = vst [vmem:[#allocation3 + $0x1f0] sm:$0x30] %v4117
  %4134 = vst [vmem:[#allocation3 + $0x2b8] sm:$0x30] %v4118
  %4135 = vst [vmem:[#allocation3 + $0x380] sm:$0x30] %v4119
  %4136 = vst [vmem:[#allocation3 + $0x448] sm:$0x30] %v4120
  %4137 = vst [vmem:[#allocation3 + $0x510] sm:$0x30] %v4121
  %4138 = vst [vmem:[#allocation3 + $0x5d8] sm:$0x30] %v4122
  %s4139 = scalar_lea.vmem [#allocation2], 98
  %v4140 = vld [vmem:[%s4139] ss:$2 sm:$0xf]
  %s4141 = scalar_lea.vmem [#allocation2], 242
  %v4142 = vld [vmem:[%s4141] ss:$2 sm:$0xf]
  %s4143 = scalar_lea.vmem [#allocation2], 386
  %v4144 = vld [vmem:[%s4143] ss:$2 sm:$0xf]
  %s4145 = scalar_lea.vmem [#allocation2], 530
  %v4146 = vld [vmem:[%s4145] ss:$2 sm:$0xf]
  %s4147 = scalar_lea.vmem [#allocation2], 674
  %v4148 = vld [vmem:[%s4147] ss:$2 sm:$0xf]
  %s4149 = scalar_lea.vmem [#allocation2], 818
  %v4150 = vld [vmem:[%s4149] ss:$2 sm:$0xf]
  %s4151 = scalar_lea.vmem [#allocation2], 962
  %v4152 = vld [vmem:[%s4151] ss:$2 sm:$0xf]
  %s4153 = scalar_lea.vmem [#allocation2], 1106
  %v4154 = vld [vmem:[%s4153] ss:$2 sm:$0xf]
  %v4155 = vpack.c.bf16 %v4140, %v4140
  %v4156 = vpack.c.bf16 %v4142, %v4142
  %v4157 = vpack.c.bf16 %v4144, %v4144
  %v4158 = vpack.c.bf16 %v4146, %v4146
  %v4159 = vpack.c.bf16 %v4148, %v4148
  %v4160 = vpack.c.bf16 %v4150, %v4150
  %v4161 = vpack.c.bf16 %v4152, %v4152
  %v4162 = vpack.c.bf16 %v4154, %v4154
  %v4171 = vrot.slane %v4155, 2
  %v4172 = vrot.slane %v4156, 2
  %v4173 = vrot.slane %v4157, 2
  %v4174 = vrot.slane %v4158, 2
  %v4175 = vrot.slane %v4159, 2
  %v4176 = vrot.slane %v4160, 2
  %v4177 = vrot.slane %v4161, 2
  %v4178 = vrot.slane %v4162, 2
  %4187 = vst [vmem:[#allocation3 + $0x60] sm:$0xc0] %v4171
  %4188 = vst [vmem:[#allocation3 + $0x128] sm:$0xc0] %v4172
  %4189 = vst [vmem:[#allocation3 + $0x1f0] sm:$0xc0] %v4173
  %4190 = vst [vmem:[#allocation3 + $0x2b8] sm:$0xc0] %v4174
  %4191 = vst [vmem:[#allocation3 + $0x380] sm:$0xc0] %v4175
  %4192 = vst [vmem:[#allocation3 + $0x448] sm:$0xc0] %v4176
  %4193 = vst [vmem:[#allocation3 + $0x510] sm:$0xc0] %v4177
  %4194 = vst [vmem:[#allocation3 + $0x5d8] sm:$0xc0] %v4178
  %v4195 = vld [vmem:[%s2299] ss:$2 sm:$0xf]
  %v4196 = vld [vmem:[%s2301] ss:$2 sm:$0xf]
  %v4197 = vld [vmem:[%s2303] ss:$2 sm:$0xf]
  %v4198 = vld [vmem:[%s2305] ss:$2 sm:$0xf]
  %v4199 = vld [vmem:[%s2307] ss:$2 sm:$0xf]
  %v4200 = vld [vmem:[%s2309] ss:$2 sm:$0xf]
  %v4201 = vld [vmem:[%s2311] ss:$2 sm:$0xf]
  %v4202 = vld [vmem:[%s2313] ss:$2 sm:$0xf]
  %v4203 = vpack.c.bf16 %v4195, %v4195
  %v4204 = vpack.c.bf16 %v4196, %v4196
  %v4205 = vpack.c.bf16 %v4197, %v4197
  %v4206 = vpack.c.bf16 %v4198, %v4198
  %v4207 = vpack.c.bf16 %v4199, %v4199
  %v4208 = vpack.c.bf16 %v4200, %v4200
  %v4209 = vpack.c.bf16 %v4201, %v4201
  %v4210 = vpack.c.bf16 %v4202, %v4202
  %4211 = vst [vmem:[#allocation3 + $0x68] sm:$0x3] %v4203
  %4212 = vst [vmem:[#allocation3 + $0x130] sm:$0x3] %v4204
  %4213 = vst [vmem:[#allocation3 + $0x1f8] sm:$0x3] %v4205
  %4214 = vst [vmem:[#allocation3 + $0x2c0] sm:$0x3] %v4206
  %4215 = vst [vmem:[#allocation3 + $0x388] sm:$0x3] %v4207
  %4216 = vst [vmem:[#allocation3 + $0x450] sm:$0x3] %v4208
  %4217 = vst [vmem:[#allocation3 + $0x518] sm:$0x3] %v4209
  %4218 = vst [vmem:[#allocation3 + $0x5e0] sm:$0x3] %v4210
  %v4219 = vld [vmem:[%s2355] ss:$2 sm:$0xf]
  %v4220 = vld [vmem:[%s2357] ss:$2 sm:$0xf]
  %v4221 = vld [vmem:[%s2359] ss:$2 sm:$0xf]
  %v4222 = vld [vmem:[%s2361] ss:$2 sm:$0xf]
  %v4223 = vld [vmem:[%s2363] ss:$2 sm:$0xf]
  %v4224 = vld [vmem:[%s2365] ss:$2 sm:$0xf]
  %v4225 = vld [vmem:[%s2367] ss:$2 sm:$0xf]
  %v4226 = vld [vmem:[%s2369] ss:$2 sm:$0xf]
  %v4227 = vpack.c.bf16 %v4219, %v4219
  %v4228 = vpack.c.bf16 %v4220, %v4220
  %v4229 = vpack.c.bf16 %v4221, %v4221
  %v4230 = vpack.c.bf16 %v4222, %v4222
  %v4231 = vpack.c.bf16 %v4223, %v4223
  %v4232 = vpack.c.bf16 %v4224, %v4224
  %v4233 = vpack.c.bf16 %v4225, %v4225
  %v4234 = vpack.c.bf16 %v4226, %v4226
  %v4243 = vrot.slane %v4227, 6
  %v4244 = vrot.slane %v4228, 6
  %v4245 = vrot.slane %v4229, 6
  %v4246 = vrot.slane %v4230, 6
  %v4247 = vrot.slane %v4231, 6
  %v4248 = vrot.slane %v4232, 6
  %v4249 = vrot.slane %v4233, 6
  %v4250 = vrot.slane %v4234, 6
  %4259 = vst [vmem:[#allocation3 + $0x68] sm:$0xc] %v4243
  %4260 = vst [vmem:[#allocation3 + $0x130] sm:$0xc] %v4244
  %4261 = vst [vmem:[#allocation3 + $0x1f8] sm:$0xc] %v4245
  %4262 = vst [vmem:[#allocation3 + $0x2c0] sm:$0xc] %v4246
  %4263 = vst [vmem:[#allocation3 + $0x388] sm:$0xc] %v4247
  %4264 = vst [vmem:[#allocation3 + $0x450] sm:$0xc] %v4248
  %4265 = vst [vmem:[#allocation3 + $0x518] sm:$0xc] %v4249
  %4266 = vst [vmem:[#allocation3 + $0x5e0] sm:$0xc] %v4250
  %v4267 = vld [vmem:[%s2411] ss:$2 sm:$0xf]
  %v4268 = vld [vmem:[%s2413] ss:$2 sm:$0xf]
  %v4269 = vld [vmem:[%s2415] ss:$2 sm:$0xf]
  %v4270 = vld [vmem:[%s2417] ss:$2 sm:$0xf]
  %v4271 = vld [vmem:[%s2419] ss:$2 sm:$0xf]
  %v4272 = vld [vmem:[%s2421] ss:$2 sm:$0xf]
  %v4273 = vld [vmem:[%s2423] ss:$2 sm:$0xf]
  %v4274 = vld [vmem:[%s2425] ss:$2 sm:$0xf]
  %v4275 = vpack.c.bf16 %v4267, %v4267
  %v4276 = vpack.c.bf16 %v4268, %v4268
  %v4277 = vpack.c.bf16 %v4269, %v4269
  %v4278 = vpack.c.bf16 %v4270, %v4270
  %v4279 = vpack.c.bf16 %v4271, %v4271
  %v4280 = vpack.c.bf16 %v4272, %v4272
  %v4281 = vpack.c.bf16 %v4273, %v4273
  %v4282 = vpack.c.bf16 %v4274, %v4274
  %v4291 = vrot.slane %v4275, 4
  %v4292 = vrot.slane %v4276, 4
  %v4293 = vrot.slane %v4277, 4
  %v4294 = vrot.slane %v4278, 4
  %v4295 = vrot.slane %v4279, 4
  %v4296 = vrot.slane %v4280, 4
  %v4297 = vrot.slane %v4281, 4
  %v4298 = vrot.slane %v4282, 4
  %4307 = vst [vmem:[#allocation3 + $0x68] sm:$0x30] %v4291
  %4308 = vst [vmem:[#allocation3 + $0x130] sm:$0x30] %v4292
  %4309 = vst [vmem:[#allocation3 + $0x1f8] sm:$0x30] %v4293
  %4310 = vst [vmem:[#allocation3 + $0x2c0] sm:$0x30] %v4294
  %4311 = vst [vmem:[#allocation3 + $0x388] sm:$0x30] %v4295
  %4312 = vst [vmem:[#allocation3 + $0x450] sm:$0x30] %v4296
  %4313 = vst [vmem:[#allocation3 + $0x518] sm:$0x30] %v4297
  %4314 = vst [vmem:[#allocation3 + $0x5e0] sm:$0x30] %v4298
  %s4315 = scalar_lea.vmem [#allocation2], 99
  %v4316 = vld [vmem:[%s4315] ss:$2 sm:$0xf]
  %s4317 = scalar_lea.vmem [#allocation2], 243
  %v4318 = vld [vmem:[%s4317] ss:$2 sm:$0xf]
  %s4319 = scalar_lea.vmem [#allocation2], 387
  %v4320 = vld [vmem:[%s4319] ss:$2 sm:$0xf]
  %s4321 = scalar_lea.vmem [#allocation2], 531
  %v4322 = vld [vmem:[%s4321] ss:$2 sm:$0xf]
  %s4323 = scalar_lea.vmem [#allocation2], 675
  %v4324 = vld [vmem:[%s4323] ss:$2 sm:$0xf]
  %s4325 = scalar_lea.vmem [#allocation2], 819
  %v4326 = vld [vmem:[%s4325] ss:$2 sm:$0xf]
  %s4327 = scalar_lea.vmem [#allocation2], 963
  %v4328 = vld [vmem:[%s4327] ss:$2 sm:$0xf]
  %s4329 = scalar_lea.vmem [#allocation2], 1107
  %v4330 = vld [vmem:[%s4329] ss:$2 sm:$0xf]
  %v4331 = vpack.c.bf16 %v4316, %v4316
  %v4332 = vpack.c.bf16 %v4318, %v4318
  %v4333 = vpack.c.bf16 %v4320, %v4320
  %v4334 = vpack.c.bf16 %v4322, %v4322
  %v4335 = vpack.c.bf16 %v4324, %v4324
  %v4336 = vpack.c.bf16 %v4326, %v4326
  %v4337 = vpack.c.bf16 %v4328, %v4328
  %v4338 = vpack.c.bf16 %v4330, %v4330
  %v4347 = vrot.slane %v4331, 2
  %v4348 = vrot.slane %v4332, 2
  %v4349 = vrot.slane %v4333, 2
  %v4350 = vrot.slane %v4334, 2
  %v4351 = vrot.slane %v4335, 2
  %v4352 = vrot.slane %v4336, 2
  %v4353 = vrot.slane %v4337, 2
  %v4354 = vrot.slane %v4338, 2
  %4363 = vst [vmem:[#allocation3 + $0x68] sm:$0xc0] %v4347
  %4364 = vst [vmem:[#allocation3 + $0x130] sm:$0xc0] %v4348
  %4365 = vst [vmem:[#allocation3 + $0x1f8] sm:$0xc0] %v4349
  %4366 = vst [vmem:[#allocation3 + $0x2c0] sm:$0xc0] %v4350
  %4367 = vst [vmem:[#allocation3 + $0x388] sm:$0xc0] %v4351
  %4368 = vst [vmem:[#allocation3 + $0x450] sm:$0xc0] %v4352
  %4369 = vst [vmem:[#allocation3 + $0x518] sm:$0xc0] %v4353
  %4370 = vst [vmem:[#allocation3 + $0x5e0] sm:$0xc0] %v4354
  %v4371 = vld [vmem:[%s2499] ss:$2 sm:$0xf]
  %v4372 = vld [vmem:[%s2501] ss:$2 sm:$0xf]
  %v4373 = vld [vmem:[%s2503] ss:$2 sm:$0xf]
  %v4374 = vld [vmem:[%s2505] ss:$2 sm:$0xf]
  %v4375 = vld [vmem:[%s2507] ss:$2 sm:$0xf]
  %v4376 = vld [vmem:[%s2509] ss:$2 sm:$0xf]
  %v4377 = vld [vmem:[%s2511] ss:$2 sm:$0xf]
  %v4378 = vld [vmem:[%s2513] ss:$2 sm:$0xf]
  %v4379 = vpack.c.bf16 %v4371, %v4371
  %v4380 = vpack.c.bf16 %v4372, %v4372
  %v4381 = vpack.c.bf16 %v4373, %v4373
  %v4382 = vpack.c.bf16 %v4374, %v4374
  %v4383 = vpack.c.bf16 %v4375, %v4375
  %v4384 = vpack.c.bf16 %v4376, %v4376
  %v4385 = vpack.c.bf16 %v4377, %v4377
  %v4386 = vpack.c.bf16 %v4378, %v4378
  %4387 = vst [vmem:[#allocation3 + $0x70] sm:$0x3] %v4379
  %4388 = vst [vmem:[#allocation3 + $0x138] sm:$0x3] %v4380
  %4389 = vst [vmem:[#allocation3 + $0x200] sm:$0x3] %v4381
  %4390 = vst [vmem:[#allocation3 + $0x2c8] sm:$0x3] %v4382
  %4391 = vst [vmem:[#allocation3 + $0x390] sm:$0x3] %v4383
  %4392 = vst [vmem:[#allocation3 + $0x458] sm:$0x3] %v4384
  %4393 = vst [vmem:[#allocation3 + $0x520] sm:$0x3] %v4385
  %4394 = vst [vmem:[#allocation3 + $0x5e8] sm:$0x3] %v4386
  %v4395 = vld [vmem:[%s2555] ss:$2 sm:$0xf]
  %v4396 = vld [vmem:[%s2557] ss:$2 sm:$0xf]
  %v4397 = vld [vmem:[%s2559] ss:$2 sm:$0xf]
  %v4398 = vld [vmem:[%s2561] ss:$2 sm:$0xf]
  %v4399 = vld [vmem:[%s2563] ss:$2 sm:$0xf]
  %v4400 = vld [vmem:[%s2565] ss:$2 sm:$0xf]
  %v4401 = vld [vmem:[%s2567] ss:$2 sm:$0xf]
  %v4402 = vld [vmem:[%s2569] ss:$2 sm:$0xf]
  %v4403 = vpack.c.bf16 %v4395, %v4395
  %v4404 = vpack.c.bf16 %v4396, %v4396
  %v4405 = vpack.c.bf16 %v4397, %v4397
  %v4406 = vpack.c.bf16 %v4398, %v4398
  %v4407 = vpack.c.bf16 %v4399, %v4399
  %v4408 = vpack.c.bf16 %v4400, %v4400
  %v4409 = vpack.c.bf16 %v4401, %v4401
  %v4410 = vpack.c.bf16 %v4402, %v4402
  %v4419 = vrot.slane %v4403, 6
  %v4420 = vrot.slane %v4404, 6
  %v4421 = vrot.slane %v4405, 6
  %v4422 = vrot.slane %v4406, 6
  %v4423 = vrot.slane %v4407, 6
  %v4424 = vrot.slane %v4408, 6
  %v4425 = vrot.slane %v4409, 6
  %v4426 = vrot.slane %v4410, 6
  %4435 = vst [vmem:[#allocation3 + $0x70] sm:$0xc] %v4419
  %4436 = vst [vmem:[#allocation3 + $0x138] sm:$0xc] %v4420
  %4437 = vst [vmem:[#allocation3 + $0x200] sm:$0xc] %v4421
  %4438 = vst [vmem:[#allocation3 + $0x2c8] sm:$0xc] %v4422
  %4439 = vst [vmem:[#allocation3 + $0x390] sm:$0xc] %v4423
  %4440 = vst [vmem:[#allocation3 + $0x458] sm:$0xc] %v4424
  %4441 = vst [vmem:[#allocation3 + $0x520] sm:$0xc] %v4425
  %4442 = vst [vmem:[#allocation3 + $0x5e8] sm:$0xc] %v4426
  %v4443 = vld [vmem:[%s2611] ss:$2 sm:$0xf]
  %v4444 = vld [vmem:[%s2613] ss:$2 sm:$0xf]
  %v4445 = vld [vmem:[%s2615] ss:$2 sm:$0xf]
  %v4446 = vld [vmem:[%s2617] ss:$2 sm:$0xf]
  %v4447 = vld [vmem:[%s2619] ss:$2 sm:$0xf]
  %v4448 = vld [vmem:[%s2621] ss:$2 sm:$0xf]
  %v4449 = vld [vmem:[%s2623] ss:$2 sm:$0xf]
  %v4450 = vld [vmem:[%s2625] ss:$2 sm:$0xf]
  %v4451 = vpack.c.bf16 %v4443, %v4443
  %v4452 = vpack.c.bf16 %v4444, %v4444
  %v4453 = vpack.c.bf16 %v4445, %v4445
  %v4454 = vpack.c.bf16 %v4446, %v4446
  %v4455 = vpack.c.bf16 %v4447, %v4447
  %v4456 = vpack.c.bf16 %v4448, %v4448
  %v4457 = vpack.c.bf16 %v4449, %v4449
  %v4458 = vpack.c.bf16 %v4450, %v4450
  %v4467 = vrot.slane %v4451, 4
  %v4468 = vrot.slane %v4452, 4
  %v4469 = vrot.slane %v4453, 4
  %v4470 = vrot.slane %v4454, 4
  %v4471 = vrot.slane %v4455, 4
  %v4472 = vrot.slane %v4456, 4
  %v4473 = vrot.slane %v4457, 4
  %v4474 = vrot.slane %v4458, 4
  %4483 = vst [vmem:[#allocation3 + $0x70] sm:$0x30] %v4467
  %4484 = vst [vmem:[#allocation3 + $0x138] sm:$0x30] %v4468
  %4485 = vst [vmem:[#allocation3 + $0x200] sm:$0x30] %v4469
  %4486 = vst [vmem:[#allocation3 + $0x2c8] sm:$0x30] %v4470
  %4487 = vst [vmem:[#allocation3 + $0x390] sm:$0x30] %v4471
  %4488 = vst [vmem:[#allocation3 + $0x458] sm:$0x30] %v4472
  %4489 = vst [vmem:[#allocation3 + $0x520] sm:$0x30] %v4473
  %4490 = vst [vmem:[#allocation3 + $0x5e8] sm:$0x30] %v4474
  %s4491 = scalar_lea.vmem [#allocation2], 100
  %v4492 = vld [vmem:[%s4491] ss:$2 sm:$0xf]
  %s4493 = scalar_lea.vmem [#allocation2], 244
  %v4494 = vld [vmem:[%s4493] ss:$2 sm:$0xf]
  %s4495 = scalar_lea.vmem [#allocation2], 388
  %v4496 = vld [vmem:[%s4495] ss:$2 sm:$0xf]
  %s4497 = scalar_lea.vmem [#allocation2], 532
  %v4498 = vld [vmem:[%s4497] ss:$2 sm:$0xf]
  %s4499 = scalar_lea.vmem [#allocation2], 676
  %v4500 = vld [vmem:[%s4499] ss:$2 sm:$0xf]
  %s4501 = scalar_lea.vmem [#allocation2], 820
  %v4502 = vld [vmem:[%s4501] ss:$2 sm:$0xf]
  %s4503 = scalar_lea.vmem [#allocation2], 964
  %v4504 = vld [vmem:[%s4503] ss:$2 sm:$0xf]
  %s4505 = scalar_lea.vmem [#allocation2], 1108
  %v4506 = vld [vmem:[%s4505] ss:$2 sm:$0xf]
  %v4507 = vpack.c.bf16 %v4492, %v4492
  %v4508 = vpack.c.bf16 %v4494, %v4494
  %v4509 = vpack.c.bf16 %v4496, %v4496
  %v4510 = vpack.c.bf16 %v4498, %v4498
  %v4511 = vpack.c.bf16 %v4500, %v4500
  %v4512 = vpack.c.bf16 %v4502, %v4502
  %v4513 = vpack.c.bf16 %v4504, %v4504
  %v4514 = vpack.c.bf16 %v4506, %v4506
  %v4523 = vrot.slane %v4507, 2
  %v4524 = vrot.slane %v4508, 2
  %v4525 = vrot.slane %v4509, 2
  %v4526 = vrot.slane %v4510, 2
  %v4527 = vrot.slane %v4511, 2
  %v4528 = vrot.slane %v4512, 2
  %v4529 = vrot.slane %v4513, 2
  %v4530 = vrot.slane %v4514, 2
  %4539 = vst [vmem:[#allocation3 + $0x70] sm:$0xc0] %v4523
  %4540 = vst [vmem:[#allocation3 + $0x138] sm:$0xc0] %v4524
  %4541 = vst [vmem:[#allocation3 + $0x200] sm:$0xc0] %v4525
  %4542 = vst [vmem:[#allocation3 + $0x2c8] sm:$0xc0] %v4526
  %4543 = vst [vmem:[#allocation3 + $0x390] sm:$0xc0] %v4527
  %4544 = vst [vmem:[#allocation3 + $0x458] sm:$0xc0] %v4528
  %4545 = vst [vmem:[#allocation3 + $0x520] sm:$0xc0] %v4529
  %4546 = vst [vmem:[#allocation3 + $0x5e8] sm:$0xc0] %v4530
  %v4547 = vld [vmem:[%s2699] ss:$2 sm:$0xf]
  %v4548 = vld [vmem:[%s2701] ss:$2 sm:$0xf]
  %v4549 = vld [vmem:[%s2703] ss:$2 sm:$0xf]
  %v4550 = vld [vmem:[%s2705] ss:$2 sm:$0xf]
  %v4551 = vld [vmem:[%s2707] ss:$2 sm:$0xf]
  %v4552 = vld [vmem:[%s2709] ss:$2 sm:$0xf]
  %v4553 = vld [vmem:[%s2711] ss:$2 sm:$0xf]
  %v4554 = vld [vmem:[%s2713] ss:$2 sm:$0xf]
  %v4555 = vpack.c.bf16 %v4547, %v4547
  %v4556 = vpack.c.bf16 %v4548, %v4548
  %v4557 = vpack.c.bf16 %v4549, %v4549
  %v4558 = vpack.c.bf16 %v4550, %v4550
  %v4559 = vpack.c.bf16 %v4551, %v4551
  %v4560 = vpack.c.bf16 %v4552, %v4552
  %v4561 = vpack.c.bf16 %v4553, %v4553
  %v4562 = vpack.c.bf16 %v4554, %v4554
  %4563 = vst [vmem:[#allocation3 + $0x78] sm:$0x3] %v4555
  %4564 = vst [vmem:[#allocation3 + $0x140] sm:$0x3] %v4556
  %4565 = vst [vmem:[#allocation3 + $0x208] sm:$0x3] %v4557
  %4566 = vst [vmem:[#allocation3 + $0x2d0] sm:$0x3] %v4558
  %4567 = vst [vmem:[#allocation3 + $0x398] sm:$0x3] %v4559
  %4568 = vst [vmem:[#allocation3 + $0x460] sm:$0x3] %v4560
  %4569 = vst [vmem:[#allocation3 + $0x528] sm:$0x3] %v4561
  %4570 = vst [vmem:[#allocation3 + $0x5f0] sm:$0x3] %v4562
  %v4571 = vld [vmem:[%s2755] ss:$2 sm:$0xf]
  %v4572 = vld [vmem:[%s2757] ss:$2 sm:$0xf]
  %v4573 = vld [vmem:[%s2759] ss:$2 sm:$0xf]
  %v4574 = vld [vmem:[%s2761] ss:$2 sm:$0xf]
  %v4575 = vld [vmem:[%s2763] ss:$2 sm:$0xf]
  %v4576 = vld [vmem:[%s2765] ss:$2 sm:$0xf]
  %v4577 = vld [vmem:[%s2767] ss:$2 sm:$0xf]
  %v4578 = vld [vmem:[%s2769] ss:$2 sm:$0xf]
  %v4579 = vpack.c.bf16 %v4571, %v4571
  %v4580 = vpack.c.bf16 %v4572, %v4572
  %v4581 = vpack.c.bf16 %v4573, %v4573
  %v4582 = vpack.c.bf16 %v4574, %v4574
  %v4583 = vpack.c.bf16 %v4575, %v4575
  %v4584 = vpack.c.bf16 %v4576, %v4576
  %v4585 = vpack.c.bf16 %v4577, %v4577
  %v4586 = vpack.c.bf16 %v4578, %v4578
  %v4595 = vrot.slane %v4579, 6
  %v4596 = vrot.slane %v4580, 6
  %v4597 = vrot.slane %v4581, 6
  %v4598 = vrot.slane %v4582, 6
  %v4599 = vrot.slane %v4583, 6
  %v4600 = vrot.slane %v4584, 6
  %v4601 = vrot.slane %v4585, 6
  %v4602 = vrot.slane %v4586, 6
  %4611 = vst [vmem:[#allocation3 + $0x78] sm:$0xc] %v4595
  %4612 = vst [vmem:[#allocation3 + $0x140] sm:$0xc] %v4596
  %4613 = vst [vmem:[#allocation3 + $0x208] sm:$0xc] %v4597
  %4614 = vst [vmem:[#allocation3 + $0x2d0] sm:$0xc] %v4598
  %4615 = vst [vmem:[#allocation3 + $0x398] sm:$0xc] %v4599
  %4616 = vst [vmem:[#allocation3 + $0x460] sm:$0xc] %v4600
  %4617 = vst [vmem:[#allocation3 + $0x528] sm:$0xc] %v4601
  %4618 = vst [vmem:[#allocation3 + $0x5f0] sm:$0xc] %v4602
  %v4619 = vld [vmem:[%s2811] ss:$2 sm:$0xf]
  %v4620 = vld [vmem:[%s2813] ss:$2 sm:$0xf]
  %v4621 = vld [vmem:[%s2815] ss:$2 sm:$0xf]
  %v4622 = vld [vmem:[%s2817] ss:$2 sm:$0xf]
  %v4623 = vld [vmem:[%s2819] ss:$2 sm:$0xf]
  %v4624 = vld [vmem:[%s2821] ss:$2 sm:$0xf]
  %v4625 = vld [vmem:[%s2823] ss:$2 sm:$0xf]
  %v4626 = vld [vmem:[%s2825] ss:$2 sm:$0xf]
  %v4627 = vpack.c.bf16 %v4619, %v4619
  %v4628 = vpack.c.bf16 %v4620, %v4620
  %v4629 = vpack.c.bf16 %v4621, %v4621
  %v4630 = vpack.c.bf16 %v4622, %v4622
  %v4631 = vpack.c.bf16 %v4623, %v4623
  %v4632 = vpack.c.bf16 %v4624, %v4624
  %v4633 = vpack.c.bf16 %v4625, %v4625
  %v4634 = vpack.c.bf16 %v4626, %v4626
  %v4643 = vrot.slane %v4627, 4
  %v4644 = vrot.slane %v4628, 4
  %v4645 = vrot.slane %v4629, 4
  %v4646 = vrot.slane %v4630, 4
  %v4647 = vrot.slane %v4631, 4
  %v4648 = vrot.slane %v4632, 4
  %v4649 = vrot.slane %v4633, 4
  %v4650 = vrot.slane %v4634, 4
  %4659 = vst [vmem:[#allocation3 + $0x78] sm:$0x30] %v4643
  %4660 = vst [vmem:[#allocation3 + $0x140] sm:$0x30] %v4644
  %4661 = vst [vmem:[#allocation3 + $0x208] sm:$0x30] %v4645
  %4662 = vst [vmem:[#allocation3 + $0x2d0] sm:$0x30] %v4646
  %4663 = vst [vmem:[#allocation3 + $0x398] sm:$0x30] %v4647
  %4664 = vst [vmem:[#allocation3 + $0x460] sm:$0x30] %v4648
  %4665 = vst [vmem:[#allocation3 + $0x528] sm:$0x30] %v4649
  %4666 = vst [vmem:[#allocation3 + $0x5f0] sm:$0x30] %v4650
  %s4667 = scalar_lea.vmem [#allocation2], 108
  %v4668 = vld [vmem:[%s4667] ss:$2 sm:$0xf]
  %s4669 = scalar_lea.vmem [#allocation2], 252
  %v4670 = vld [vmem:[%s4669] ss:$2 sm:$0xf]
  %s4671 = scalar_lea.vmem [#allocation2], 396
  %v4672 = vld [vmem:[%s4671] ss:$2 sm:$0xf]
  %s4673 = scalar_lea.vmem [#allocation2], 540
  %v4674 = vld [vmem:[%s4673] ss:$2 sm:$0xf]
  %s4675 = scalar_lea.vmem [#allocation2], 684
  %v4676 = vld [vmem:[%s4675] ss:$2 sm:$0xf]
  %s4677 = scalar_lea.vmem [#allocation2], 828
  %v4678 = vld [vmem:[%s4677] ss:$2 sm:$0xf]
  %s4679 = scalar_lea.vmem [#allocation2], 972
  %v4680 = vld [vmem:[%s4679] ss:$2 sm:$0xf]
  %s4681 = scalar_lea.vmem [#allocation2], 1116
  %v4682 = vld [vmem:[%s4681] ss:$2 sm:$0xf]
  %v4683 = vpack.c.bf16 %v4668, %v4668
  %v4684 = vpack.c.bf16 %v4670, %v4670
  %v4685 = vpack.c.bf16 %v4672, %v4672
  %v4686 = vpack.c.bf16 %v4674, %v4674
  %v4687 = vpack.c.bf16 %v4676, %v4676
  %v4688 = vpack.c.bf16 %v4678, %v4678
  %v4689 = vpack.c.bf16 %v4680, %v4680
  %v4690 = vpack.c.bf16 %v4682, %v4682
  %v4699 = vrot.slane %v4683, 2
  %v4700 = vrot.slane %v4684, 2
  %v4701 = vrot.slane %v4685, 2
  %v4702 = vrot.slane %v4686, 2
  %v4703 = vrot.slane %v4687, 2
  %v4704 = vrot.slane %v4688, 2
  %v4705 = vrot.slane %v4689, 2
  %v4706 = vrot.slane %v4690, 2
  %4715 = vst [vmem:[#allocation3 + $0x78] sm:$0xc0] %v4699
  %4716 = vst [vmem:[#allocation3 + $0x140] sm:$0xc0] %v4700
  %4717 = vst [vmem:[#allocation3 + $0x208] sm:$0xc0] %v4701
  %4718 = vst [vmem:[#allocation3 + $0x2d0] sm:$0xc0] %v4702
  %4719 = vst [vmem:[#allocation3 + $0x398] sm:$0xc0] %v4703
  %4720 = vst [vmem:[#allocation3 + $0x460] sm:$0xc0] %v4704
  %4721 = vst [vmem:[#allocation3 + $0x528] sm:$0xc0] %v4705
  %4722 = vst [vmem:[#allocation3 + $0x5f0] sm:$0xc0] %v4706
  %v4723 = vld [vmem:[%s2899] ss:$2 sm:$0xf]
  %v4724 = vld [vmem:[%s2901] ss:$2 sm:$0xf]
  %v4725 = vld [vmem:[%s2903] ss:$2 sm:$0xf]
  %v4726 = vld [vmem:[%s2905] ss:$2 sm:$0xf]
  %v4727 = vld [vmem:[%s2907] ss:$2 sm:$0xf]
  %v4728 = vld [vmem:[%s2909] ss:$2 sm:$0xf]
  %v4729 = vld [vmem:[%s2911] ss:$2 sm:$0xf]
  %v4730 = vld [vmem:[%s2913] ss:$2 sm:$0xf]
  %v4731 = vpack.c.bf16 %v4723, %v4723
  %v4732 = vpack.c.bf16 %v4724, %v4724
  %v4733 = vpack.c.bf16 %v4725, %v4725
  %v4734 = vpack.c.bf16 %v4726, %v4726
  %v4735 = vpack.c.bf16 %v4727, %v4727
  %v4736 = vpack.c.bf16 %v4728, %v4728
  %v4737 = vpack.c.bf16 %v4729, %v4729
  %v4738 = vpack.c.bf16 %v4730, %v4730
  %4739 = vst [vmem:[#allocation3 + $0x80] sm:$0x3] %v4731
  %4740 = vst [vmem:[#allocation3 + $0x148] sm:$0x3] %v4732
  %4741 = vst [vmem:[#allocation3 + $0x210] sm:$0x3] %v4733
  %4742 = vst [vmem:[#allocation3 + $0x2d8] sm:$0x3] %v4734
  %4743 = vst [vmem:[#allocation3 + $0x3a0] sm:$0x3] %v4735
  %4744 = vst [vmem:[#allocation3 + $0x468] sm:$0x3] %v4736
  %4745 = vst [vmem:[#allocation3 + $0x530] sm:$0x3] %v4737
  %4746 = vst [vmem:[#allocation3 + $0x5f8] sm:$0x3] %v4738
  %v4747 = vld [vmem:[%s2955] ss:$2 sm:$0xf]
  %v4748 = vld [vmem:[%s2957] ss:$2 sm:$0xf]
  %v4749 = vld [vmem:[%s2959] ss:$2 sm:$0xf]
  %v4750 = vld [vmem:[%s2961] ss:$2 sm:$0xf]
  %v4751 = vld [vmem:[%s2963] ss:$2 sm:$0xf]
  %v4752 = vld [vmem:[%s2965] ss:$2 sm:$0xf]
  %v4753 = vld [vmem:[%s2967] ss:$2 sm:$0xf]
  %v4754 = vld [vmem:[%s2969] ss:$2 sm:$0xf]
  %v4755 = vpack.c.bf16 %v4747, %v4747
  %v4756 = vpack.c.bf16 %v4748, %v4748
  %v4757 = vpack.c.bf16 %v4749, %v4749
  %v4758 = vpack.c.bf16 %v4750, %v4750
  %v4759 = vpack.c.bf16 %v4751, %v4751
  %v4760 = vpack.c.bf16 %v4752, %v4752
  %v4761 = vpack.c.bf16 %v4753, %v4753
  %v4762 = vpack.c.bf16 %v4754, %v4754
  %v4771 = vrot.slane %v4755, 6
  %v4772 = vrot.slane %v4756, 6
  %v4773 = vrot.slane %v4757, 6
  %v4774 = vrot.slane %v4758, 6
  %v4775 = vrot.slane %v4759, 6
  %v4776 = vrot.slane %v4760, 6
  %v4777 = vrot.slane %v4761, 6
  %v4778 = vrot.slane %v4762, 6
  %4787 = vst [vmem:[#allocation3 + $0x80] sm:$0xc] %v4771
  %4788 = vst [vmem:[#allocation3 + $0x148] sm:$0xc] %v4772
  %4789 = vst [vmem:[#allocation3 + $0x210] sm:$0xc] %v4773
  %4790 = vst [vmem:[#allocation3 + $0x2d8] sm:$0xc] %v4774
  %4791 = vst [vmem:[#allocation3 + $0x3a0] sm:$0xc] %v4775
  %4792 = vst [vmem:[#allocation3 + $0x468] sm:$0xc] %v4776
  %4793 = vst [vmem:[#allocation3 + $0x530] sm:$0xc] %v4777
  %4794 = vst [vmem:[#allocation3 + $0x5f8] sm:$0xc] %v4778
  %v4795 = vld [vmem:[%s3011] ss:$2 sm:$0xf]
  %v4796 = vld [vmem:[%s3013] ss:$2 sm:$0xf]
  %v4797 = vld [vmem:[%s3015] ss:$2 sm:$0xf]
  %v4798 = vld [vmem:[%s3017] ss:$2 sm:$0xf]
  %v4799 = vld [vmem:[%s3019] ss:$2 sm:$0xf]
  %v4800 = vld [vmem:[%s3021] ss:$2 sm:$0xf]
  %v4801 = vld [vmem:[%s3023] ss:$2 sm:$0xf]
  %v4802 = vld [vmem:[%s3025] ss:$2 sm:$0xf]
  %v4803 = vpack.c.bf16 %v4795, %v4795
  %v4804 = vpack.c.bf16 %v4796, %v4796
  %v4805 = vpack.c.bf16 %v4797, %v4797
  %v4806 = vpack.c.bf16 %v4798, %v4798
  %v4807 = vpack.c.bf16 %v4799, %v4799
  %v4808 = vpack.c.bf16 %v4800, %v4800
  %v4809 = vpack.c.bf16 %v4801, %v4801
  %v4810 = vpack.c.bf16 %v4802, %v4802
  %v4819 = vrot.slane %v4803, 4
  %v4820 = vrot.slane %v4804, 4
  %v4821 = vrot.slane %v4805, 4
  %v4822 = vrot.slane %v4806, 4
  %v4823 = vrot.slane %v4807, 4
  %v4824 = vrot.slane %v4808, 4
  %v4825 = vrot.slane %v4809, 4
  %v4826 = vrot.slane %v4810, 4
  %4835 = vst [vmem:[#allocation3 + $0x80] sm:$0x30] %v4819
  %4836 = vst [vmem:[#allocation3 + $0x148] sm:$0x30] %v4820
  %4837 = vst [vmem:[#allocation3 + $0x210] sm:$0x30] %v4821
  %4838 = vst [vmem:[#allocation3 + $0x2d8] sm:$0x30] %v4822
  %4839 = vst [vmem:[#allocation3 + $0x3a0] sm:$0x30] %v4823
  %4840 = vst [vmem:[#allocation3 + $0x468] sm:$0x30] %v4824
  %4841 = vst [vmem:[#allocation3 + $0x530] sm:$0x30] %v4825
  %4842 = vst [vmem:[#allocation3 + $0x5f8] sm:$0x30] %v4826
  %s4843 = scalar_lea.vmem [#allocation2], 109
  %v4844 = vld [vmem:[%s4843] ss:$2 sm:$0xf]
  %s4845 = scalar_lea.vmem [#allocation2], 253
  %v4846 = vld [vmem:[%s4845] ss:$2 sm:$0xf]
  %s4847 = scalar_lea.vmem [#allocation2], 397
  %v4848 = vld [vmem:[%s4847] ss:$2 sm:$0xf]
  %s4849 = scalar_lea.vmem [#allocation2], 541
  %v4850 = vld [vmem:[%s4849] ss:$2 sm:$0xf]
  %s4851 = scalar_lea.vmem [#allocation2], 685
  %v4852 = vld [vmem:[%s4851] ss:$2 sm:$0xf]
  %s4853 = scalar_lea.vmem [#allocation2], 829
  %v4854 = vld [vmem:[%s4853] ss:$2 sm:$0xf]
  %s4855 = scalar_lea.vmem [#allocation2], 973
  %v4856 = vld [vmem:[%s4855] ss:$2 sm:$0xf]
  %s4857 = scalar_lea.vmem [#allocation2], 1117
  %v4858 = vld [vmem:[%s4857] ss:$2 sm:$0xf]
  %v4859 = vpack.c.bf16 %v4844, %v4844
  %v4860 = vpack.c.bf16 %v4846, %v4846
  %v4861 = vpack.c.bf16 %v4848, %v4848
  %v4862 = vpack.c.bf16 %v4850, %v4850
  %v4863 = vpack.c.bf16 %v4852, %v4852
  %v4864 = vpack.c.bf16 %v4854, %v4854
  %v4865 = vpack.c.bf16 %v4856, %v4856
  %v4866 = vpack.c.bf16 %v4858, %v4858
  %v4875 = vrot.slane %v4859, 2
  %v4876 = vrot.slane %v4860, 2
  %v4877 = vrot.slane %v4861, 2
  %v4878 = vrot.slane %v4862, 2
  %v4879 = vrot.slane %v4863, 2
  %v4880 = vrot.slane %v4864, 2
  %v4881 = vrot.slane %v4865, 2
  %v4882 = vrot.slane %v4866, 2
  %4891 = vst [vmem:[#allocation3 + $0x80] sm:$0xc0] %v4875
  %4892 = vst [vmem:[#allocation3 + $0x148] sm:$0xc0] %v4876
  %4893 = vst [vmem:[#allocation3 + $0x210] sm:$0xc0] %v4877
  %4894 = vst [vmem:[#allocation3 + $0x2d8] sm:$0xc0] %v4878
  %4895 = vst [vmem:[#allocation3 + $0x3a0] sm:$0xc0] %v4879
  %4896 = vst [vmem:[#allocation3 + $0x468] sm:$0xc0] %v4880
  %4897 = vst [vmem:[#allocation3 + $0x530] sm:$0xc0] %v4881
  %4898 = vst [vmem:[#allocation3 + $0x5f8] sm:$0xc0] %v4882
  %v4899 = vld [vmem:[%s3099] ss:$2 sm:$0xf]
  %v4900 = vld [vmem:[%s3101] ss:$2 sm:$0xf]
  %v4901 = vld [vmem:[%s3103] ss:$2 sm:$0xf]
  %v4902 = vld [vmem:[%s3105] ss:$2 sm:$0xf]
  %v4903 = vld [vmem:[%s3107] ss:$2 sm:$0xf]
  %v4904 = vld [vmem:[%s3109] ss:$2 sm:$0xf]
  %v4905 = vld [vmem:[%s3111] ss:$2 sm:$0xf]
  %v4906 = vld [vmem:[%s3113] ss:$2 sm:$0xf]
  %v4907 = vpack.c.bf16 %v4899, %v4899
  %v4908 = vpack.c.bf16 %v4900, %v4900
  %v4909 = vpack.c.bf16 %v4901, %v4901
  %v4910 = vpack.c.bf16 %v4902, %v4902
  %v4911 = vpack.c.bf16 %v4903, %v4903
  %v4912 = vpack.c.bf16 %v4904, %v4904
  %v4913 = vpack.c.bf16 %v4905, %v4905
  %v4914 = vpack.c.bf16 %v4906, %v4906
  %4915 = vst [vmem:[#allocation3 + $0x88] sm:$0x3] %v4907
  %4916 = vst [vmem:[#allocation3 + $0x150] sm:$0x3] %v4908
  %4917 = vst [vmem:[#allocation3 + $0x218] sm:$0x3] %v4909
  %4918 = vst [vmem:[#allocation3 + $0x2e0] sm:$0x3] %v4910
  %4919 = vst [vmem:[#allocation3 + $0x3a8] sm:$0x3] %v4911
  %4920 = vst [vmem:[#allocation3 + $0x470] sm:$0x3] %v4912
  %4921 = vst [vmem:[#allocation3 + $0x538] sm:$0x3] %v4913
  %4922 = vst [vmem:[#allocation3 + $0x600] sm:$0x3] %v4914
  %v4923 = vld [vmem:[%s3155] ss:$2 sm:$0xf]
  %v4924 = vld [vmem:[%s3157] ss:$2 sm:$0xf]
  %v4925 = vld [vmem:[%s3159] ss:$2 sm:$0xf]
  %v4926 = vld [vmem:[%s3161] ss:$2 sm:$0xf]
  %v4927 = vld [vmem:[%s3163] ss:$2 sm:$0xf]
  %v4928 = vld [vmem:[%s3165] ss:$2 sm:$0xf]
  %v4929 = vld [vmem:[%s3167] ss:$2 sm:$0xf]
  %v4930 = vld [vmem:[%s3169] ss:$2 sm:$0xf]
  %v4931 = vpack.c.bf16 %v4923, %v4923
  %v4932 = vpack.c.bf16 %v4924, %v4924
  %v4933 = vpack.c.bf16 %v4925, %v4925
  %v4934 = vpack.c.bf16 %v4926, %v4926
  %v4935 = vpack.c.bf16 %v4927, %v4927
  %v4936 = vpack.c.bf16 %v4928, %v4928
  %v4937 = vpack.c.bf16 %v4929, %v4929
  %v4938 = vpack.c.bf16 %v4930, %v4930
  %v4947 = vrot.slane %v4931, 6
  %v4948 = vrot.slane %v4932, 6
  %v4949 = vrot.slane %v4933, 6
  %v4950 = vrot.slane %v4934, 6
  %v4951 = vrot.slane %v4935, 6
  %v4952 = vrot.slane %v4936, 6
  %v4953 = vrot.slane %v4937, 6
  %v4954 = vrot.slane %v4938, 6
  %4963 = vst [vmem:[#allocation3 + $0x88] sm:$0xc] %v4947
  %4964 = vst [vmem:[#allocation3 + $0x150] sm:$0xc] %v4948
  %4965 = vst [vmem:[#allocation3 + $0x218] sm:$0xc] %v4949
  %4966 = vst [vmem:[#allocation3 + $0x2e0] sm:$0xc] %v4950
  %4967 = vst [vmem:[#allocation3 + $0x3a8] sm:$0xc] %v4951
  %4968 = vst [vmem:[#allocation3 + $0x470] sm:$0xc] %v4952
  %4969 = vst [vmem:[#allocation3 + $0x538] sm:$0xc] %v4953
  %4970 = vst [vmem:[#allocation3 + $0x600] sm:$0xc] %v4954
  %v4971 = vld [vmem:[%s3211] ss:$2 sm:$0xf]
  %v4972 = vld [vmem:[%s3213] ss:$2 sm:$0xf]
  %v4973 = vld [vmem:[%s3215] ss:$2 sm:$0xf]
  %v4974 = vld [vmem:[%s3217] ss:$2 sm:$0xf]
  %v4975 = vld [vmem:[%s3219] ss:$2 sm:$0xf]
  %v4976 = vld [vmem:[%s3221] ss:$2 sm:$0xf]
  %v4977 = vld [vmem:[%s3223] ss:$2 sm:$0xf]
  %v4978 = vld [vmem:[%s3225] ss:$2 sm:$0xf]
  %v4979 = vpack.c.bf16 %v4971, %v4971
  %v4980 = vpack.c.bf16 %v4972, %v4972
  %v4981 = vpack.c.bf16 %v4973, %v4973
  %v4982 = vpack.c.bf16 %v4974, %v4974
  %v4983 = vpack.c.bf16 %v4975, %v4975
  %v4984 = vpack.c.bf16 %v4976, %v4976
  %v4985 = vpack.c.bf16 %v4977, %v4977
  %v4986 = vpack.c.bf16 %v4978, %v4978
  %v4995 = vrot.slane %v4979, 4
  %v4996 = vrot.slane %v4980, 4
  %v4997 = vrot.slane %v4981, 4
  %v4998 = vrot.slane %v4982, 4
  %v4999 = vrot.slane %v4983, 4
  %v5000 = vrot.slane %v4984, 4
  %v5001 = vrot.slane %v4985, 4
  %v5002 = vrot.slane %v4986, 4
  %5011 = vst [vmem:[#allocation3 + $0x88] sm:$0x30] %v4995
  %5012 = vst [vmem:[#allocation3 + $0x150] sm:$0x30] %v4996
  %5013 = vst [vmem:[#allocation3 + $0x218] sm:$0x30] %v4997
  %5014 = vst [vmem:[#allocation3 + $0x2e0] sm:$0x30] %v4998
  %5015 = vst [vmem:[#allocation3 + $0x3a8] sm:$0x30] %v4999
  %5016 = vst [vmem:[#allocation3 + $0x470] sm:$0x30] %v5000
  %5017 = vst [vmem:[#allocation3 + $0x538] sm:$0x30] %v5001
  %5018 = vst [vmem:[#allocation3 + $0x600] sm:$0x30] %v5002
  %s5019 = scalar_lea.vmem [#allocation2], 110
  %v5020 = vld [vmem:[%s5019] ss:$2 sm:$0xf]
  %s5021 = scalar_lea.vmem [#allocation2], 254
  %v5022 = vld [vmem:[%s5021] ss:$2 sm:$0xf]
  %s5023 = scalar_lea.vmem [#allocation2], 398
  %v5024 = vld [vmem:[%s5023] ss:$2 sm:$0xf]
  %s5025 = scalar_lea.vmem [#allocation2], 542
  %v5026 = vld [vmem:[%s5025] ss:$2 sm:$0xf]
  %s5027 = scalar_lea.vmem [#allocation2], 686
  %v5028 = vld [vmem:[%s5027] ss:$2 sm:$0xf]
  %s5029 = scalar_lea.vmem [#allocation2], 830
  %v5030 = vld [vmem:[%s5029] ss:$2 sm:$0xf]
  %s5031 = scalar_lea.vmem [#allocation2], 974
  %v5032 = vld [vmem:[%s5031] ss:$2 sm:$0xf]
  %s5033 = scalar_lea.vmem [#allocation2], 1118
  %v5034 = vld [vmem:[%s5033] ss:$2 sm:$0xf]
  %v5035 = vpack.c.bf16 %v5020, %v5020
  %v5036 = vpack.c.bf16 %v5022, %v5022
  %v5037 = vpack.c.bf16 %v5024, %v5024
  %v5038 = vpack.c.bf16 %v5026, %v5026
  %v5039 = vpack.c.bf16 %v5028, %v5028
  %v5040 = vpack.c.bf16 %v5030, %v5030
  %v5041 = vpack.c.bf16 %v5032, %v5032
  %v5042 = vpack.c.bf16 %v5034, %v5034
  %v5051 = vrot.slane %v5035, 2
  %v5052 = vrot.slane %v5036, 2
  %v5053 = vrot.slane %v5037, 2
  %v5054 = vrot.slane %v5038, 2
  %v5055 = vrot.slane %v5039, 2
  %v5056 = vrot.slane %v5040, 2
  %v5057 = vrot.slane %v5041, 2
  %v5058 = vrot.slane %v5042, 2
  %5067 = vst [vmem:[#allocation3 + $0x88] sm:$0xc0] %v5051
  %5068 = vst [vmem:[#allocation3 + $0x150] sm:$0xc0] %v5052
  %5069 = vst [vmem:[#allocation3 + $0x218] sm:$0xc0] %v5053
  %5070 = vst [vmem:[#allocation3 + $0x2e0] sm:$0xc0] %v5054
  %5071 = vst [vmem:[#allocation3 + $0x3a8] sm:$0xc0] %v5055
  %5072 = vst [vmem:[#allocation3 + $0x470] sm:$0xc0] %v5056
  %5073 = vst [vmem:[#allocation3 + $0x538] sm:$0xc0] %v5057
  %5074 = vst [vmem:[#allocation3 + $0x600] sm:$0xc0] %v5058
  %v5075 = vld [vmem:[%s3299] ss:$2 sm:$0xf]
  %v5076 = vld [vmem:[%s3301] ss:$2 sm:$0xf]
  %v5077 = vld [vmem:[%s3303] ss:$2 sm:$0xf]
  %v5078 = vld [vmem:[%s3305] ss:$2 sm:$0xf]
  %v5079 = vld [vmem:[%s3307] ss:$2 sm:$0xf]
  %v5080 = vld [vmem:[%s3309] ss:$2 sm:$0xf]
  %v5081 = vld [vmem:[%s3311] ss:$2 sm:$0xf]
  %v5082 = vld [vmem:[%s3313] ss:$2 sm:$0xf]
  %v5083 = vpack.c.bf16 %v5075, %v5075
  %v5084 = vpack.c.bf16 %v5076, %v5076
  %v5085 = vpack.c.bf16 %v5077, %v5077
  %v5086 = vpack.c.bf16 %v5078, %v5078
  %v5087 = vpack.c.bf16 %v5079, %v5079
  %v5088 = vpack.c.bf16 %v5080, %v5080
  %v5089 = vpack.c.bf16 %v5081, %v5081
  %v5090 = vpack.c.bf16 %v5082, %v5082
  %5091 = vst [vmem:[#allocation3 + $0x90] sm:$0x3] %v5083
  %5092 = vst [vmem:[#allocation3 + $0x158] sm:$0x3] %v5084
  %5093 = vst [vmem:[#allocation3 + $0x220] sm:$0x3] %v5085
  %5094 = vst [vmem:[#allocation3 + $0x2e8] sm:$0x3] %v5086
  %5095 = vst [vmem:[#allocation3 + $0x3b0] sm:$0x3] %v5087
  %5096 = vst [vmem:[#allocation3 + $0x478] sm:$0x3] %v5088
  %5097 = vst [vmem:[#allocation3 + $0x540] sm:$0x3] %v5089
  %5098 = vst [vmem:[#allocation3 + $0x608] sm:$0x3] %v5090
  %v5099 = vld [vmem:[%s3355] ss:$2 sm:$0xf]
  %v5100 = vld [vmem:[%s3357] ss:$2 sm:$0xf]
  %v5101 = vld [vmem:[%s3359] ss:$2 sm:$0xf]
  %v5102 = vld [vmem:[%s3361] ss:$2 sm:$0xf]
  %v5103 = vld [vmem:[%s3363] ss:$2 sm:$0xf]
  %v5104 = vld [vmem:[%s3365] ss:$2 sm:$0xf]
  %v5105 = vld [vmem:[%s3367] ss:$2 sm:$0xf]
  %v5106 = vld [vmem:[%s3369] ss:$2 sm:$0xf]
  %v5107 = vpack.c.bf16 %v5099, %v5099
  %v5108 = vpack.c.bf16 %v5100, %v5100
  %v5109 = vpack.c.bf16 %v5101, %v5101
  %v5110 = vpack.c.bf16 %v5102, %v5102
  %v5111 = vpack.c.bf16 %v5103, %v5103
  %v5112 = vpack.c.bf16 %v5104, %v5104
  %v5113 = vpack.c.bf16 %v5105, %v5105
  %v5114 = vpack.c.bf16 %v5106, %v5106
  %v5123 = vrot.slane %v5107, 6
  %v5124 = vrot.slane %v5108, 6
  %v5125 = vrot.slane %v5109, 6
  %v5126 = vrot.slane %v5110, 6
  %v5127 = vrot.slane %v5111, 6
  %v5128 = vrot.slane %v5112, 6
  %v5129 = vrot.slane %v5113, 6
  %v5130 = vrot.slane %v5114, 6
  %5139 = vst [vmem:[#allocation3 + $0x90] sm:$0xc] %v5123
  %5140 = vst [vmem:[#allocation3 + $0x158] sm:$0xc] %v5124
  %5141 = vst [vmem:[#allocation3 + $0x220] sm:$0xc] %v5125
  %5142 = vst [vmem:[#allocation3 + $0x2e8] sm:$0xc] %v5126
  %5143 = vst [vmem:[#allocation3 + $0x3b0] sm:$0xc] %v5127
  %5144 = vst [vmem:[#allocation3 + $0x478] sm:$0xc] %v5128
  %5145 = vst [vmem:[#allocation3 + $0x540] sm:$0xc] %v5129
  %5146 = vst [vmem:[#allocation3 + $0x608] sm:$0xc] %v5130
  %v5147 = vld [vmem:[%s3411] ss:$2 sm:$0xf]
  %v5148 = vld [vmem:[%s3413] ss:$2 sm:$0xf]
  %v5149 = vld [vmem:[%s3415] ss:$2 sm:$0xf]
  %v5150 = vld [vmem:[%s3417] ss:$2 sm:$0xf]
  %v5151 = vld [vmem:[%s3419] ss:$2 sm:$0xf]
  %v5152 = vld [vmem:[%s3421] ss:$2 sm:$0xf]
  %v5153 = vld [vmem:[%s3423] ss:$2 sm:$0xf]
  %v5154 = vld [vmem:[%s3425] ss:$2 sm:$0xf]
  %v5155 = vpack.c.bf16 %v5147, %v5147
  %v5156 = vpack.c.bf16 %v5148, %v5148
  %v5157 = vpack.c.bf16 %v5149, %v5149
  %v5158 = vpack.c.bf16 %v5150, %v5150
  %v5159 = vpack.c.bf16 %v5151, %v5151
  %v5160 = vpack.c.bf16 %v5152, %v5152
  %v5161 = vpack.c.bf16 %v5153, %v5153
  %v5162 = vpack.c.bf16 %v5154, %v5154
  %v5171 = vrot.slane %v5155, 4
  %v5172 = vrot.slane %v5156, 4
  %v5173 = vrot.slane %v5157, 4
  %v5174 = vrot.slane %v5158, 4
  %v5175 = vrot.slane %v5159, 4
  %v5176 = vrot.slane %v5160, 4
  %v5177 = vrot.slane %v5161, 4
  %v5178 = vrot.slane %v5162, 4
  %5187 = vst [vmem:[#allocation3 + $0x90] sm:$0x30] %v5171
  %5188 = vst [vmem:[#allocation3 + $0x158] sm:$0x30] %v5172
  %5189 = vst [vmem:[#allocation3 + $0x220] sm:$0x30] %v5173
  %5190 = vst [vmem:[#allocation3 + $0x2e8] sm:$0x30] %v5174
  %5191 = vst [vmem:[#allocation3 + $0x3b0] sm:$0x30] %v5175
  %5192 = vst [vmem:[#allocation3 + $0x478] sm:$0x30] %v5176
  %5193 = vst [vmem:[#allocation3 + $0x540] sm:$0x30] %v5177
  %5194 = vst [vmem:[#allocation3 + $0x608] sm:$0x30] %v5178
  %s5195 = scalar_lea.vmem [#allocation2], 111
  %v5196 = vld [vmem:[%s5195] ss:$2 sm:$0xf]
  %s5197 = scalar_lea.vmem [#allocation2], 255
  %v5198 = vld [vmem:[%s5197] ss:$2 sm:$0xf]
  %s5199 = scalar_lea.vmem [#allocation2], 399
  %v5200 = vld [vmem:[%s5199] ss:$2 sm:$0xf]
  %s5201 = scalar_lea.vmem [#allocation2], 543
  %v5202 = vld [vmem:[%s5201] ss:$2 sm:$0xf]
  %s5203 = scalar_lea.vmem [#allocation2], 687
  %v5204 = vld [vmem:[%s5203] ss:$2 sm:$0xf]
  %s5205 = scalar_lea.vmem [#allocation2], 831
  %v5206 = vld [vmem:[%s5205] ss:$2 sm:$0xf]
  %s5207 = scalar_lea.vmem [#allocation2], 975
  %v5208 = vld [vmem:[%s5207] ss:$2 sm:$0xf]
  %s5209 = scalar_lea.vmem [#allocation2], 1119
  %v5210 = vld [vmem:[%s5209] ss:$2 sm:$0xf]
  %v5211 = vpack.c.bf16 %v5196, %v5196
  %v5212 = vpack.c.bf16 %v5198, %v5198
  %v5213 = vpack.c.bf16 %v5200, %v5200
  %v5214 = vpack.c.bf16 %v5202, %v5202
  %v5215 = vpack.c.bf16 %v5204, %v5204
  %v5216 = vpack.c.bf16 %v5206, %v5206
  %v5217 = vpack.c.bf16 %v5208, %v5208
  %v5218 = vpack.c.bf16 %v5210, %v5210
  %v5227 = vrot.slane %v5211, 2
  %v5228 = vrot.slane %v5212, 2
  %v5229 = vrot.slane %v5213, 2
  %v5230 = vrot.slane %v5214, 2
  %v5231 = vrot.slane %v5215, 2
  %v5232 = vrot.slane %v5216, 2
  %v5233 = vrot.slane %v5217, 2
  %v5234 = vrot.slane %v5218, 2
  %5243 = vst [vmem:[#allocation3 + $0x90] sm:$0xc0] %v5227
  %5244 = vst [vmem:[#allocation3 + $0x158] sm:$0xc0] %v5228
  %5245 = vst [vmem:[#allocation3 + $0x220] sm:$0xc0] %v5229
  %5246 = vst [vmem:[#allocation3 + $0x2e8] sm:$0xc0] %v5230
  %5247 = vst [vmem:[#allocation3 + $0x3b0] sm:$0xc0] %v5231
  %5248 = vst [vmem:[#allocation3 + $0x478] sm:$0xc0] %v5232
  %5249 = vst [vmem:[#allocation3 + $0x540] sm:$0xc0] %v5233
  %5250 = vst [vmem:[#allocation3 + $0x608] sm:$0xc0] %v5234
  %v5251 = vld [vmem:[%s3499] ss:$2 sm:$0xf]
  %v5252 = vld [vmem:[%s3501] ss:$2 sm:$0xf]
  %v5253 = vld [vmem:[%s3503] ss:$2 sm:$0xf]
  %v5254 = vld [vmem:[%s3505] ss:$2 sm:$0xf]
  %v5255 = vld [vmem:[%s3507] ss:$2 sm:$0xf]
  %v5256 = vld [vmem:[%s3509] ss:$2 sm:$0xf]
  %v5257 = vld [vmem:[%s3511] ss:$2 sm:$0xf]
  %v5258 = vld [vmem:[%s3513] ss:$2 sm:$0xf]
  %v5259 = vpack.c.bf16 %v5251, %v5251
  %v5260 = vpack.c.bf16 %v5252, %v5252
  %v5261 = vpack.c.bf16 %v5253, %v5253
  %v5262 = vpack.c.bf16 %v5254, %v5254
  %v5263 = vpack.c.bf16 %v5255, %v5255
  %v5264 = vpack.c.bf16 %v5256, %v5256
  %v5265 = vpack.c.bf16 %v5257, %v5257
  %v5266 = vpack.c.bf16 %v5258, %v5258
  %5267 = vst [vmem:[#allocation3 + $0x98] sm:$0x3] %v5259
  %5268 = vst [vmem:[#allocation3 + $0x160] sm:$0x3] %v5260
  %5269 = vst [vmem:[#allocation3 + $0x228] sm:$0x3] %v5261
  %5270 = vst [vmem:[#allocation3 + $0x2f0] sm:$0x3] %v5262
  %5271 = vst [vmem:[#allocation3 + $0x3b8] sm:$0x3] %v5263
  %5272 = vst [vmem:[#allocation3 + $0x480] sm:$0x3] %v5264
  %5273 = vst [vmem:[#allocation3 + $0x548] sm:$0x3] %v5265
  %5274 = vst [vmem:[#allocation3 + $0x610] sm:$0x3] %v5266
  %v5275 = vld [vmem:[%s3555] ss:$2 sm:$0xf]
  %v5276 = vld [vmem:[%s3557] ss:$2 sm:$0xf]
  %v5277 = vld [vmem:[%s3559] ss:$2 sm:$0xf]
  %v5278 = vld [vmem:[%s3561] ss:$2 sm:$0xf]
  %v5279 = vld [vmem:[%s3563] ss:$2 sm:$0xf]
  %v5280 = vld [vmem:[%s3565] ss:$2 sm:$0xf]
  %v5281 = vld [vmem:[%s3567] ss:$2 sm:$0xf]
  %v5282 = vld [vmem:[%s3569] ss:$2 sm:$0xf]
  %v5283 = vpack.c.bf16 %v5275, %v5275
  %v5284 = vpack.c.bf16 %v5276, %v5276
  %v5285 = vpack.c.bf16 %v5277, %v5277
  %v5286 = vpack.c.bf16 %v5278, %v5278
  %v5287 = vpack.c.bf16 %v5279, %v5279
  %v5288 = vpack.c.bf16 %v5280, %v5280
  %v5289 = vpack.c.bf16 %v5281, %v5281
  %v5290 = vpack.c.bf16 %v5282, %v5282
  %v5299 = vrot.slane %v5283, 6
  %v5300 = vrot.slane %v5284, 6
  %v5301 = vrot.slane %v5285, 6
  %v5302 = vrot.slane %v5286, 6
  %v5303 = vrot.slane %v5287, 6
  %v5304 = vrot.slane %v5288, 6
  %v5305 = vrot.slane %v5289, 6
  %v5306 = vrot.slane %v5290, 6
  %5315 = vst [vmem:[#allocation3 + $0x98] sm:$0xc] %v5299
  %5316 = vst [vmem:[#allocation3 + $0x160] sm:$0xc] %v5300
  %5317 = vst [vmem:[#allocation3 + $0x228] sm:$0xc] %v5301
  %5318 = vst [vmem:[#allocation3 + $0x2f0] sm:$0xc] %v5302
  %5319 = vst [vmem:[#allocation3 + $0x3b8] sm:$0xc] %v5303
  %5320 = vst [vmem:[#allocation3 + $0x480] sm:$0xc] %v5304
  %5321 = vst [vmem:[#allocation3 + $0x548] sm:$0xc] %v5305
  %5322 = vst [vmem:[#allocation3 + $0x610] sm:$0xc] %v5306
  %v5323 = vld [vmem:[%s3611] ss:$2 sm:$0xf]
  %v5324 = vld [vmem:[%s3613] ss:$2 sm:$0xf]
  %v5325 = vld [vmem:[%s3615] ss:$2 sm:$0xf]
  %v5326 = vld [vmem:[%s3617] ss:$2 sm:$0xf]
  %v5327 = vld [vmem:[%s3619] ss:$2 sm:$0xf]
  %v5328 = vld [vmem:[%s3621] ss:$2 sm:$0xf]
  %v5329 = vld [vmem:[%s3623] ss:$2 sm:$0xf]
  %v5330 = vld [vmem:[%s3625] ss:$2 sm:$0xf]
  %v5331 = vpack.c.bf16 %v5323, %v5323
  %v5332 = vpack.c.bf16 %v5324, %v5324
  %v5333 = vpack.c.bf16 %v5325, %v5325
  %v5334 = vpack.c.bf16 %v5326, %v5326
  %v5335 = vpack.c.bf16 %v5327, %v5327
  %v5336 = vpack.c.bf16 %v5328, %v5328
  %v5337 = vpack.c.bf16 %v5329, %v5329
  %v5338 = vpack.c.bf16 %v5330, %v5330
  %v5347 = vrot.slane %v5331, 4
  %v5348 = vrot.slane %v5332, 4
  %v5349 = vrot.slane %v5333, 4
  %v5350 = vrot.slane %v5334, 4
  %v5351 = vrot.slane %v5335, 4
  %v5352 = vrot.slane %v5336, 4
  %v5353 = vrot.slane %v5337, 4
  %v5354 = vrot.slane %v5338, 4
  %5363 = vst [vmem:[#allocation3 + $0x98] sm:$0x30] %v5347
  %5364 = vst [vmem:[#allocation3 + $0x160] sm:$0x30] %v5348
  %5365 = vst [vmem:[#allocation3 + $0x228] sm:$0x30] %v5349
  %5366 = vst [vmem:[#allocation3 + $0x2f0] sm:$0x30] %v5350
  %5367 = vst [vmem:[#allocation3 + $0x3b8] sm:$0x30] %v5351
  %5368 = vst [vmem:[#allocation3 + $0x480] sm:$0x30] %v5352
  %5369 = vst [vmem:[#allocation3 + $0x548] sm:$0x30] %v5353
  %5370 = vst [vmem:[#allocation3 + $0x610] sm:$0x30] %v5354
  %s5371 = scalar_lea.vmem [#allocation2], 112
  %v5372 = vld [vmem:[%s5371] ss:$2 sm:$0xf]
  %s5373 = scalar_lea.vmem [#allocation2], 256
  %v5374 = vld [vmem:[%s5373] ss:$2 sm:$0xf]
  %s5375 = scalar_lea.vmem [#allocation2], 400
  %v5376 = vld [vmem:[%s5375] ss:$2 sm:$0xf]
  %s5377 = scalar_lea.vmem [#allocation2], 544
  %v5378 = vld [vmem:[%s5377] ss:$2 sm:$0xf]
  %s5379 = scalar_lea.vmem [#allocation2], 688
  %v5380 = vld [vmem:[%s5379] ss:$2 sm:$0xf]
  %s5381 = scalar_lea.vmem [#allocation2], 832
  %v5382 = vld [vmem:[%s5381] ss:$2 sm:$0xf]
  %s5383 = scalar_lea.vmem [#allocation2], 976
  %v5384 = vld [vmem:[%s5383] ss:$2 sm:$0xf]
  %s5385 = scalar_lea.vmem [#allocation2], 1120
  %v5386 = vld [vmem:[%s5385] ss:$2 sm:$0xf]
  %v5387 = vpack.c.bf16 %v5372, %v5372
  %v5388 = vpack.c.bf16 %v5374, %v5374
  %v5389 = vpack.c.bf16 %v5376, %v5376
  %v5390 = vpack.c.bf16 %v5378, %v5378
  %v5391 = vpack.c.bf16 %v5380, %v5380
  %v5392 = vpack.c.bf16 %v5382, %v5382
  %v5393 = vpack.c.bf16 %v5384, %v5384
  %v5394 = vpack.c.bf16 %v5386, %v5386
  %v5403 = vrot.slane %v5387, 2
  %v5404 = vrot.slane %v5388, 2
  %v5405 = vrot.slane %v5389, 2
  %v5406 = vrot.slane %v5390, 2
  %v5407 = vrot.slane %v5391, 2
  %v5408 = vrot.slane %v5392, 2
  %v5409 = vrot.slane %v5393, 2
  %v5410 = vrot.slane %v5394, 2
  %5419 = vst [vmem:[#allocation3 + $0x98] sm:$0xc0] %v5403
  %5420 = vst [vmem:[#allocation3 + $0x160] sm:$0xc0] %v5404
  %5421 = vst [vmem:[#allocation3 + $0x228] sm:$0xc0] %v5405
  %5422 = vst [vmem:[#allocation3 + $0x2f0] sm:$0xc0] %v5406
  %5423 = vst [vmem:[#allocation3 + $0x3b8] sm:$0xc0] %v5407
  %5424 = vst [vmem:[#allocation3 + $0x480] sm:$0xc0] %v5408
  %5425 = vst [vmem:[#allocation3 + $0x548] sm:$0xc0] %v5409
  %5426 = vst [vmem:[#allocation3 + $0x610] sm:$0xc0] %v5410
  %v5427 = vld [vmem:[%s1755] ss:$2 sm:$0xf]
  %v5428 = vld [vmem:[%s1757] ss:$2 sm:$0xf]
  %v5429 = vld [vmem:[%s1759] ss:$2 sm:$0xf]
  %v5430 = vld [vmem:[%s1761] ss:$2 sm:$0xf]
  %v5431 = vld [vmem:[%s1763] ss:$2 sm:$0xf]
  %v5432 = vld [vmem:[%s1765] ss:$2 sm:$0xf]
  %v5433 = vld [vmem:[%s1767] ss:$2 sm:$0xf]
  %v5434 = vld [vmem:[%s1769] ss:$2 sm:$0xf]
  %v5435 = vpack.c.bf16 %v5427, %v5427
  %v5436 = vpack.c.bf16 %v5428, %v5428
  %v5437 = vpack.c.bf16 %v5429, %v5429
  %v5438 = vpack.c.bf16 %v5430, %v5430
  %v5439 = vpack.c.bf16 %v5431, %v5431
  %v5440 = vpack.c.bf16 %v5432, %v5432
  %v5441 = vpack.c.bf16 %v5433, %v5433
  %v5442 = vpack.c.bf16 %v5434, %v5434
  %5443 = vst [vmem:[#allocation3 + $0xa0] sm:$0x3] %v5435
  %5444 = vst [vmem:[#allocation3 + $0x168] sm:$0x3] %v5436
  %5445 = vst [vmem:[#allocation3 + $0x230] sm:$0x3] %v5437
  %5446 = vst [vmem:[#allocation3 + $0x2f8] sm:$0x3] %v5438
  %5447 = vst [vmem:[#allocation3 + $0x3c0] sm:$0x3] %v5439
  %5448 = vst [vmem:[#allocation3 + $0x488] sm:$0x3] %v5440
  %5449 = vst [vmem:[#allocation3 + $0x550] sm:$0x3] %v5441
  %5450 = vst [vmem:[#allocation3 + $0x618] sm:$0x3] %v5442
  %v5451 = vld [vmem:[%s1811] ss:$2 sm:$0xf]
  %v5452 = vld [vmem:[%s1813] ss:$2 sm:$0xf]
  %v5453 = vld [vmem:[%s1815] ss:$2 sm:$0xf]
  %v5454 = vld [vmem:[%s1817] ss:$2 sm:$0xf]
  %v5455 = vld [vmem:[%s1819] ss:$2 sm:$0xf]
  %v5456 = vld [vmem:[%s1821] ss:$2 sm:$0xf]
  %v5457 = vld [vmem:[%s1823] ss:$2 sm:$0xf]
  %v5458 = vld [vmem:[%s1825] ss:$2 sm:$0xf]
  %v5459 = vpack.c.bf16 %v5451, %v5451
  %v5460 = vpack.c.bf16 %v5452, %v5452
  %v5461 = vpack.c.bf16 %v5453, %v5453
  %v5462 = vpack.c.bf16 %v5454, %v5454
  %v5463 = vpack.c.bf16 %v5455, %v5455
  %v5464 = vpack.c.bf16 %v5456, %v5456
  %v5465 = vpack.c.bf16 %v5457, %v5457
  %v5466 = vpack.c.bf16 %v5458, %v5458
  %v5475 = vrot.slane %v5459, 6
  %v5476 = vrot.slane %v5460, 6
  %v5477 = vrot.slane %v5461, 6
  %v5478 = vrot.slane %v5462, 6
  %v5479 = vrot.slane %v5463, 6
  %v5480 = vrot.slane %v5464, 6
  %v5481 = vrot.slane %v5465, 6
  %v5482 = vrot.slane %v5466, 6
  %5491 = vst [vmem:[#allocation3 + $0xa0] sm:$0xc] %v5475
  %5492 = vst [vmem:[#allocation3 + $0x168] sm:$0xc] %v5476
  %5493 = vst [vmem:[#allocation3 + $0x230] sm:$0xc] %v5477
  %5494 = vst [vmem:[#allocation3 + $0x2f8] sm:$0xc] %v5478
  %5495 = vst [vmem:[#allocation3 + $0x3c0] sm:$0xc] %v5479
  %5496 = vst [vmem:[#allocation3 + $0x488] sm:$0xc] %v5480
  %5497 = vst [vmem:[#allocation3 + $0x550] sm:$0xc] %v5481
  %5498 = vst [vmem:[#allocation3 + $0x618] sm:$0xc] %v5482
  %v5499 = vld [vmem:[%s3787] ss:$2 sm:$0xf]
  %v5500 = vld [vmem:[%s3789] ss:$2 sm:$0xf]
  %v5501 = vld [vmem:[%s3791] ss:$2 sm:$0xf]
  %v5502 = vld [vmem:[%s3793] ss:$2 sm:$0xf]
  %v5503 = vld [vmem:[%s3795] ss:$2 sm:$0xf]
  %v5504 = vld [vmem:[%s3797] ss:$2 sm:$0xf]
  %v5505 = vld [vmem:[%s3799] ss:$2 sm:$0xf]
  %v5506 = vld [vmem:[%s3801] ss:$2 sm:$0xf]
  %v5507 = vpack.c.bf16 %v5499, %v5499
  %v5508 = vpack.c.bf16 %v5500, %v5500
  %v5509 = vpack.c.bf16 %v5501, %v5501
  %v5510 = vpack.c.bf16 %v5502, %v5502
  %v5511 = vpack.c.bf16 %v5503, %v5503
  %v5512 = vpack.c.bf16 %v5504, %v5504
  %v5513 = vpack.c.bf16 %v5505, %v5505
  %v5514 = vpack.c.bf16 %v5506, %v5506
  %v5523 = vrot.slane %v5507, 4
  %v5524 = vrot.slane %v5508, 4
  %v5525 = vrot.slane %v5509, 4
  %v5526 = vrot.slane %v5510, 4
  %v5527 = vrot.slane %v5511, 4
  %v5528 = vrot.slane %v5512, 4
  %v5529 = vrot.slane %v5513, 4
  %v5530 = vrot.slane %v5514, 4
  %5539 = vst [vmem:[#allocation3 + $0xa0] sm:$0x30] %v5523
  %5540 = vst [vmem:[#allocation3 + $0x168] sm:$0x30] %v5524
  %5541 = vst [vmem:[#allocation3 + $0x230] sm:$0x30] %v5525
  %5542 = vst [vmem:[#allocation3 + $0x2f8] sm:$0x30] %v5526
  %5543 = vst [vmem:[#allocation3 + $0x3c0] sm:$0x30] %v5527
  %5544 = vst [vmem:[#allocation3 + $0x488] sm:$0x30] %v5528
  %5545 = vst [vmem:[#allocation3 + $0x550] sm:$0x30] %v5529
  %5546 = vst [vmem:[#allocation3 + $0x618] sm:$0x30] %v5530
  %s5547 = scalar_lea.vmem [#allocation2], 120
  %v5548 = vld [vmem:[%s5547] ss:$2 sm:$0xf]
  %s5549 = scalar_lea.vmem [#allocation2], 264
  %v5550 = vld [vmem:[%s5549] ss:$2 sm:$0xf]
  %s5551 = scalar_lea.vmem [#allocation2], 408
  %v5552 = vld [vmem:[%s5551] ss:$2 sm:$0xf]
  %s5553 = scalar_lea.vmem [#allocation2], 552
  %v5554 = vld [vmem:[%s5553] ss:$2 sm:$0xf]
  %s5555 = scalar_lea.vmem [#allocation2], 696
  %v5556 = vld [vmem:[%s5555] ss:$2 sm:$0xf]
  %s5557 = scalar_lea.vmem [#allocation2], 840
  %v5558 = vld [vmem:[%s5557] ss:$2 sm:$0xf]
  %s5559 = scalar_lea.vmem [#allocation2], 984
  %v5560 = vld [vmem:[%s5559] ss:$2 sm:$0xf]
  %s5561 = scalar_lea.vmem [#allocation2], 1128
  %v5562 = vld [vmem:[%s5561] ss:$2 sm:$0xf]
  %v5563 = vpack.c.bf16 %v5548, %v5548
  %v5564 = vpack.c.bf16 %v5550, %v5550
  %v5565 = vpack.c.bf16 %v5552, %v5552
  %v5566 = vpack.c.bf16 %v5554, %v5554
  %v5567 = vpack.c.bf16 %v5556, %v5556
  %v5568 = vpack.c.bf16 %v5558, %v5558
  %v5569 = vpack.c.bf16 %v5560, %v5560
  %v5570 = vpack.c.bf16 %v5562, %v5562
  %v5579 = vrot.slane %v5563, 2
  %v5580 = vrot.slane %v5564, 2
  %v5581 = vrot.slane %v5565, 2
  %v5582 = vrot.slane %v5566, 2
  %v5583 = vrot.slane %v5567, 2
  %v5584 = vrot.slane %v5568, 2
  %v5585 = vrot.slane %v5569, 2
  %v5586 = vrot.slane %v5570, 2
  %5595 = vst [vmem:[#allocation3 + $0xa0] sm:$0xc0] %v5579
  %5596 = vst [vmem:[#allocation3 + $0x168] sm:$0xc0] %v5580
  %5597 = vst [vmem:[#allocation3 + $0x230] sm:$0xc0] %v5581
  %5598 = vst [vmem:[#allocation3 + $0x2f8] sm:$0xc0] %v5582
  %5599 = vst [vmem:[#allocation3 + $0x3c0] sm:$0xc0] %v5583
  %5600 = vst [vmem:[#allocation3 + $0x488] sm:$0xc0] %v5584
  %5601 = vst [vmem:[#allocation3 + $0x550] sm:$0xc0] %v5585
  %5602 = vst [vmem:[#allocation3 + $0x618] sm:$0xc0] %v5586
  %v5603 = vld [vmem:[%s1955] ss:$2 sm:$0xf]
  %v5604 = vld [vmem:[%s1957] ss:$2 sm:$0xf]
  %v5605 = vld [vmem:[%s1959] ss:$2 sm:$0xf]
  %v5606 = vld [vmem:[%s1961] ss:$2 sm:$0xf]
  %v5607 = vld [vmem:[%s1963] ss:$2 sm:$0xf]
  %v5608 = vld [vmem:[%s1965] ss:$2 sm:$0xf]
  %v5609 = vld [vmem:[%s1967] ss:$2 sm:$0xf]
  %v5610 = vld [vmem:[%s1969] ss:$2 sm:$0xf]
  %v5611 = vpack.c.bf16 %v5603, %v5603
  %v5612 = vpack.c.bf16 %v5604, %v5604
  %v5613 = vpack.c.bf16 %v5605, %v5605
  %v5614 = vpack.c.bf16 %v5606, %v5606
  %v5615 = vpack.c.bf16 %v5607, %v5607
  %v5616 = vpack.c.bf16 %v5608, %v5608
  %v5617 = vpack.c.bf16 %v5609, %v5609
  %v5618 = vpack.c.bf16 %v5610, %v5610
  %5619 = vst [vmem:[#allocation3 + $0xa8] sm:$0x3] %v5611
  %5620 = vst [vmem:[#allocation3 + $0x170] sm:$0x3] %v5612
  %5621 = vst [vmem:[#allocation3 + $0x238] sm:$0x3] %v5613
  %5622 = vst [vmem:[#allocation3 + $0x300] sm:$0x3] %v5614
  %5623 = vst [vmem:[#allocation3 + $0x3c8] sm:$0x3] %v5615
  %5624 = vst [vmem:[#allocation3 + $0x490] sm:$0x3] %v5616
  %5625 = vst [vmem:[#allocation3 + $0x558] sm:$0x3] %v5617
  %5626 = vst [vmem:[#allocation3 + $0x620] sm:$0x3] %v5618
  %v5627 = vld [vmem:[%s2011] ss:$2 sm:$0xf]
  %v5628 = vld [vmem:[%s2013] ss:$2 sm:$0xf]
  %v5629 = vld [vmem:[%s2015] ss:$2 sm:$0xf]
  %v5630 = vld [vmem:[%s2017] ss:$2 sm:$0xf]
  %v5631 = vld [vmem:[%s2019] ss:$2 sm:$0xf]
  %v5632 = vld [vmem:[%s2021] ss:$2 sm:$0xf]
  %v5633 = vld [vmem:[%s2023] ss:$2 sm:$0xf]
  %v5634 = vld [vmem:[%s2025] ss:$2 sm:$0xf]
  %v5635 = vpack.c.bf16 %v5627, %v5627
  %v5636 = vpack.c.bf16 %v5628, %v5628
  %v5637 = vpack.c.bf16 %v5629, %v5629
  %v5638 = vpack.c.bf16 %v5630, %v5630
  %v5639 = vpack.c.bf16 %v5631, %v5631
  %v5640 = vpack.c.bf16 %v5632, %v5632
  %v5641 = vpack.c.bf16 %v5633, %v5633
  %v5642 = vpack.c.bf16 %v5634, %v5634
  %v5651 = vrot.slane %v5635, 6
  %v5652 = vrot.slane %v5636, 6
  %v5653 = vrot.slane %v5637, 6
  %v5654 = vrot.slane %v5638, 6
  %v5655 = vrot.slane %v5639, 6
  %v5656 = vrot.slane %v5640, 6
  %v5657 = vrot.slane %v5641, 6
  %v5658 = vrot.slane %v5642, 6
  %5667 = vst [vmem:[#allocation3 + $0xa8] sm:$0xc] %v5651
  %5668 = vst [vmem:[#allocation3 + $0x170] sm:$0xc] %v5652
  %5669 = vst [vmem:[#allocation3 + $0x238] sm:$0xc] %v5653
  %5670 = vst [vmem:[#allocation3 + $0x300] sm:$0xc] %v5654
  %5671 = vst [vmem:[#allocation3 + $0x3c8] sm:$0xc] %v5655
  %5672 = vst [vmem:[#allocation3 + $0x490] sm:$0xc] %v5656
  %5673 = vst [vmem:[#allocation3 + $0x558] sm:$0xc] %v5657
  %5674 = vst [vmem:[#allocation3 + $0x620] sm:$0xc] %v5658
  %v5675 = vld [vmem:[%s3963] ss:$2 sm:$0xf]
  %v5676 = vld [vmem:[%s3965] ss:$2 sm:$0xf]
  %v5677 = vld [vmem:[%s3967] ss:$2 sm:$0xf]
  %v5678 = vld [vmem:[%s3969] ss:$2 sm:$0xf]
  %v5679 = vld [vmem:[%s3971] ss:$2 sm:$0xf]
  %v5680 = vld [vmem:[%s3973] ss:$2 sm:$0xf]
  %v5681 = vld [vmem:[%s3975] ss:$2 sm:$0xf]
  %v5682 = vld [vmem:[%s3977] ss:$2 sm:$0xf]
  %v5683 = vpack.c.bf16 %v5675, %v5675
  %v5684 = vpack.c.bf16 %v5676, %v5676
  %v5685 = vpack.c.bf16 %v5677, %v5677
  %v5686 = vpack.c.bf16 %v5678, %v5678
  %v5687 = vpack.c.bf16 %v5679, %v5679
  %v5688 = vpack.c.bf16 %v5680, %v5680
  %v5689 = vpack.c.bf16 %v5681, %v5681
  %v5690 = vpack.c.bf16 %v5682, %v5682
  %v5699 = vrot.slane %v5683, 4
  %v5700 = vrot.slane %v5684, 4
  %v5701 = vrot.slane %v5685, 4
  %v5702 = vrot.slane %v5686, 4
  %v5703 = vrot.slane %v5687, 4
  %v5704 = vrot.slane %v5688, 4
  %v5705 = vrot.slane %v5689, 4
  %v5706 = vrot.slane %v5690, 4
  %5715 = vst [vmem:[#allocation3 + $0xa8] sm:$0x30] %v5699
  %5716 = vst [vmem:[#allocation3 + $0x170] sm:$0x30] %v5700
  %5717 = vst [vmem:[#allocation3 + $0x238] sm:$0x30] %v5701
  %5718 = vst [vmem:[#allocation3 + $0x300] sm:$0x30] %v5702
  %5719 = vst [vmem:[#allocation3 + $0x3c8] sm:$0x30] %v5703
  %5720 = vst [vmem:[#allocation3 + $0x490] sm:$0x30] %v5704
  %5721 = vst [vmem:[#allocation3 + $0x558] sm:$0x30] %v5705
  %5722 = vst [vmem:[#allocation3 + $0x620] sm:$0x30] %v5706
  %s5723 = scalar_lea.vmem [#allocation2], 121
  %v5724 = vld [vmem:[%s5723] ss:$2 sm:$0xf]
  %s5725 = scalar_lea.vmem [#allocation2], 265
  %v5726 = vld [vmem:[%s5725] ss:$2 sm:$0xf]
  %s5727 = scalar_lea.vmem [#allocation2], 409
  %v5728 = vld [vmem:[%s5727] ss:$2 sm:$0xf]
  %s5729 = scalar_lea.vmem [#allocation2], 553
  %v5730 = vld [vmem:[%s5729] ss:$2 sm:$0xf]
  %s5731 = scalar_lea.vmem [#allocation2], 697
  %v5732 = vld [vmem:[%s5731] ss:$2 sm:$0xf]
  %s5733 = scalar_lea.vmem [#allocation2], 841
  %v5734 = vld [vmem:[%s5733] ss:$2 sm:$0xf]
  %s5735 = scalar_lea.vmem [#allocation2], 985
  %v5736 = vld [vmem:[%s5735] ss:$2 sm:$0xf]
  %s5737 = scalar_lea.vmem [#allocation2], 1129
  %v5738 = vld [vmem:[%s5737] ss:$2 sm:$0xf]
  %v5739 = vpack.c.bf16 %v5724, %v5724
  %v5740 = vpack.c.bf16 %v5726, %v5726
  %v5741 = vpack.c.bf16 %v5728, %v5728
  %v5742 = vpack.c.bf16 %v5730, %v5730
  %v5743 = vpack.c.bf16 %v5732, %v5732
  %v5744 = vpack.c.bf16 %v5734, %v5734
  %v5745 = vpack.c.bf16 %v5736, %v5736
  %v5746 = vpack.c.bf16 %v5738, %v5738
  %v5755 = vrot.slane %v5739, 2
  %v5756 = vrot.slane %v5740, 2
  %v5757 = vrot.slane %v5741, 2
  %v5758 = vrot.slane %v5742, 2
  %v5759 = vrot.slane %v5743, 2
  %v5760 = vrot.slane %v5744, 2
  %v5761 = vrot.slane %v5745, 2
  %v5762 = vrot.slane %v5746, 2
  %5771 = vst [vmem:[#allocation3 + $0xa8] sm:$0xc0] %v5755
  %5772 = vst [vmem:[#allocation3 + $0x170] sm:$0xc0] %v5756
  %5773 = vst [vmem:[#allocation3 + $0x238] sm:$0xc0] %v5757
  %5774 = vst [vmem:[#allocation3 + $0x300] sm:$0xc0] %v5758
  %5775 = vst [vmem:[#allocation3 + $0x3c8] sm:$0xc0] %v5759
  %5776 = vst [vmem:[#allocation3 + $0x490] sm:$0xc0] %v5760
  %5777 = vst [vmem:[#allocation3 + $0x558] sm:$0xc0] %v5761
  %5778 = vst [vmem:[#allocation3 + $0x620] sm:$0xc0] %v5762
  %v5779 = vld [vmem:[%s2155] ss:$2 sm:$0xf]
  %v5780 = vld [vmem:[%s2157] ss:$2 sm:$0xf]
  %v5781 = vld [vmem:[%s2159] ss:$2 sm:$0xf]
  %v5782 = vld [vmem:[%s2161] ss:$2 sm:$0xf]
  %v5783 = vld [vmem:[%s2163] ss:$2 sm:$0xf]
  %v5784 = vld [vmem:[%s2165] ss:$2 sm:$0xf]
  %v5785 = vld [vmem:[%s2167] ss:$2 sm:$0xf]
  %v5786 = vld [vmem:[%s2169] ss:$2 sm:$0xf]
  %v5787 = vpack.c.bf16 %v5779, %v5779
  %v5788 = vpack.c.bf16 %v5780, %v5780
  %v5789 = vpack.c.bf16 %v5781, %v5781
  %v5790 = vpack.c.bf16 %v5782, %v5782
  %v5791 = vpack.c.bf16 %v5783, %v5783
  %v5792 = vpack.c.bf16 %v5784, %v5784
  %v5793 = vpack.c.bf16 %v5785, %v5785
  %v5794 = vpack.c.bf16 %v5786, %v5786
  %5795 = vst [vmem:[#allocation3 + $0xb0] sm:$0x3] %v5787
  %5796 = vst [vmem:[#allocation3 + $0x178] sm:$0x3] %v5788
  %5797 = vst [vmem:[#allocation3 + $0x240] sm:$0x3] %v5789
  %5798 = vst [vmem:[#allocation3 + $0x308] sm:$0x3] %v5790
  %5799 = vst [vmem:[#allocation3 + $0x3d0] sm:$0x3] %v5791
  %5800 = vst [vmem:[#allocation3 + $0x498] sm:$0x3] %v5792
  %5801 = vst [vmem:[#allocation3 + $0x560] sm:$0x3] %v5793
  %5802 = vst [vmem:[#allocation3 + $0x628] sm:$0x3] %v5794
  %v5803 = vld [vmem:[%s2211] ss:$2 sm:$0xf]
  %v5804 = vld [vmem:[%s2213] ss:$2 sm:$0xf]
  %v5805 = vld [vmem:[%s2215] ss:$2 sm:$0xf]
  %v5806 = vld [vmem:[%s2217] ss:$2 sm:$0xf]
  %v5807 = vld [vmem:[%s2219] ss:$2 sm:$0xf]
  %v5808 = vld [vmem:[%s2221] ss:$2 sm:$0xf]
  %v5809 = vld [vmem:[%s2223] ss:$2 sm:$0xf]
  %v5810 = vld [vmem:[%s2225] ss:$2 sm:$0xf]
  %v5811 = vpack.c.bf16 %v5803, %v5803
  %v5812 = vpack.c.bf16 %v5804, %v5804
  %v5813 = vpack.c.bf16 %v5805, %v5805
  %v5814 = vpack.c.bf16 %v5806, %v5806
  %v5815 = vpack.c.bf16 %v5807, %v5807
  %v5816 = vpack.c.bf16 %v5808, %v5808
  %v5817 = vpack.c.bf16 %v5809, %v5809
  %v5818 = vpack.c.bf16 %v5810, %v5810
  %v5827 = vrot.slane %v5811, 6
  %v5828 = vrot.slane %v5812, 6
  %v5829 = vrot.slane %v5813, 6
  %v5830 = vrot.slane %v5814, 6
  %v5831 = vrot.slane %v5815, 6
  %v5832 = vrot.slane %v5816, 6
  %v5833 = vrot.slane %v5817, 6
  %v5834 = vrot.slane %v5818, 6
  %5843 = vst [vmem:[#allocation3 + $0xb0] sm:$0xc] %v5827
  %5844 = vst [vmem:[#allocation3 + $0x178] sm:$0xc] %v5828
  %5845 = vst [vmem:[#allocation3 + $0x240] sm:$0xc] %v5829
  %5846 = vst [vmem:[#allocation3 + $0x308] sm:$0xc] %v5830
  %5847 = vst [vmem:[#allocation3 + $0x3d0] sm:$0xc] %v5831
  %5848 = vst [vmem:[#allocation3 + $0x498] sm:$0xc] %v5832
  %5849 = vst [vmem:[#allocation3 + $0x560] sm:$0xc] %v5833
  %5850 = vst [vmem:[#allocation3 + $0x628] sm:$0xc] %v5834
  %v5851 = vld [vmem:[%s4139] ss:$2 sm:$0xf]
  %v5852 = vld [vmem:[%s4141] ss:$2 sm:$0xf]
  %v5853 = vld [vmem:[%s4143] ss:$2 sm:$0xf]
  %v5854 = vld [vmem:[%s4145] ss:$2 sm:$0xf]
  %v5855 = vld [vmem:[%s4147] ss:$2 sm:$0xf]
  %v5856 = vld [vmem:[%s4149] ss:$2 sm:$0xf]
  %v5857 = vld [vmem:[%s4151] ss:$2 sm:$0xf]
  %v5858 = vld [vmem:[%s4153] ss:$2 sm:$0xf]
  %v5859 = vpack.c.bf16 %v5851, %v5851
  %v5860 = vpack.c.bf16 %v5852, %v5852
  %v5861 = vpack.c.bf16 %v5853, %v5853
  %v5862 = vpack.c.bf16 %v5854, %v5854
  %v5863 = vpack.c.bf16 %v5855, %v5855
  %v5864 = vpack.c.bf16 %v5856, %v5856
  %v5865 = vpack.c.bf16 %v5857, %v5857
  %v5866 = vpack.c.bf16 %v5858, %v5858
  %v5875 = vrot.slane %v5859, 4
  %v5876 = vrot.slane %v5860, 4
  %v5877 = vrot.slane %v5861, 4
  %v5878 = vrot.slane %v5862, 4
  %v5879 = vrot.slane %v5863, 4
  %v5880 = vrot.slane %v5864, 4
  %v5881 = vrot.slane %v5865, 4
  %v5882 = vrot.slane %v5866, 4
  %5891 = vst [vmem:[#allocation3 + $0xb0] sm:$0x30] %v5875
  %5892 = vst [vmem:[#allocation3 + $0x178] sm:$0x30] %v5876
  %5893 = vst [vmem:[#allocation3 + $0x240] sm:$0x30] %v5877
  %5894 = vst [vmem:[#allocation3 + $0x308] sm:$0x30] %v5878
  %5895 = vst [vmem:[#allocation3 + $0x3d0] sm:$0x30] %v5879
  %5896 = vst [vmem:[#allocation3 + $0x498] sm:$0x30] %v5880
  %5897 = vst [vmem:[#allocation3 + $0x560] sm:$0x30] %v5881
  %5898 = vst [vmem:[#allocation3 + $0x628] sm:$0x30] %v5882
  %s5899 = scalar_lea.vmem [#allocation2], 122
  %v5900 = vld [vmem:[%s5899] ss:$2 sm:$0xf]
  %s5901 = scalar_lea.vmem [#allocation2], 266
  %v5902 = vld [vmem:[%s5901] ss:$2 sm:$0xf]
  %s5903 = scalar_lea.vmem [#allocation2], 410
  %v5904 = vld [vmem:[%s5903] ss:$2 sm:$0xf]
  %s5905 = scalar_lea.vmem [#allocation2], 554
  %v5906 = vld [vmem:[%s5905] ss:$2 sm:$0xf]
  %s5907 = scalar_lea.vmem [#allocation2], 698
  %v5908 = vld [vmem:[%s5907] ss:$2 sm:$0xf]
  %s5909 = scalar_lea.vmem [#allocation2], 842
  %v5910 = vld [vmem:[%s5909] ss:$2 sm:$0xf]
  %s5911 = scalar_lea.vmem [#allocation2], 986
  %v5912 = vld [vmem:[%s5911] ss:$2 sm:$0xf]
  %s5913 = scalar_lea.vmem [#allocation2], 1130
  %v5914 = vld [vmem:[%s5913] ss:$2 sm:$0xf]
  %v5915 = vpack.c.bf16 %v5900, %v5900
  %v5916 = vpack.c.bf16 %v5902, %v5902
  %v5917 = vpack.c.bf16 %v5904, %v5904
  %v5918 = vpack.c.bf16 %v5906, %v5906
  %v5919 = vpack.c.bf16 %v5908, %v5908
  %v5920 = vpack.c.bf16 %v5910, %v5910
  %v5921 = vpack.c.bf16 %v5912, %v5912
  %v5922 = vpack.c.bf16 %v5914, %v5914
  %v5931 = vrot.slane %v5915, 2
  %v5932 = vrot.slane %v5916, 2
  %v5933 = vrot.slane %v5917, 2
  %v5934 = vrot.slane %v5918, 2
  %v5935 = vrot.slane %v5919, 2
  %v5936 = vrot.slane %v5920, 2
  %v5937 = vrot.slane %v5921, 2
  %v5938 = vrot.slane %v5922, 2
  %5947 = vst [vmem:[#allocation3 + $0xb0] sm:$0xc0] %v5931
  %5948 = vst [vmem:[#allocation3 + $0x178] sm:$0xc0] %v5932
  %5949 = vst [vmem:[#allocation3 + $0x240] sm:$0xc0] %v5933
  %5950 = vst [vmem:[#allocation3 + $0x308] sm:$0xc0] %v5934
  %5951 = vst [vmem:[#allocation3 + $0x3d0] sm:$0xc0] %v5935
  %5952 = vst [vmem:[#allocation3 + $0x498] sm:$0xc0] %v5936
  %5953 = vst [vmem:[#allocation3 + $0x560] sm:$0xc0] %v5937
  %5954 = vst [vmem:[#allocation3 + $0x628] sm:$0xc0] %v5938
  %v5955 = vld [vmem:[%s2355] ss:$2 sm:$0xf]
  %v5956 = vld [vmem:[%s2357] ss:$2 sm:$0xf]
  %v5957 = vld [vmem:[%s2359] ss:$2 sm:$0xf]
  %v5958 = vld [vmem:[%s2361] ss:$2 sm:$0xf]
  %v5959 = vld [vmem:[%s2363] ss:$2 sm:$0xf]
  %v5960 = vld [vmem:[%s2365] ss:$2 sm:$0xf]
  %v5961 = vld [vmem:[%s2367] ss:$2 sm:$0xf]
  %v5962 = vld [vmem:[%s2369] ss:$2 sm:$0xf]
  %v5963 = vpack.c.bf16 %v5955, %v5955
  %v5964 = vpack.c.bf16 %v5956, %v5956
  %v5965 = vpack.c.bf16 %v5957, %v5957
  %v5966 = vpack.c.bf16 %v5958, %v5958
  %v5967 = vpack.c.bf16 %v5959, %v5959
  %v5968 = vpack.c.bf16 %v5960, %v5960
  %v5969 = vpack.c.bf16 %v5961, %v5961
  %v5970 = vpack.c.bf16 %v5962, %v5962
  %5971 = vst [vmem:[#allocation3 + $0xb8] sm:$0x3] %v5963
  %5972 = vst [vmem:[#allocation3 + $0x180] sm:$0x3] %v5964
  %5973 = vst [vmem:[#allocation3 + $0x248] sm:$0x3] %v5965
  %5974 = vst [vmem:[#allocation3 + $0x310] sm:$0x3] %v5966
  %5975 = vst [vmem:[#allocation3 + $0x3d8] sm:$0x3] %v5967
  %5976 = vst [vmem:[#allocation3 + $0x4a0] sm:$0x3] %v5968
  %5977 = vst [vmem:[#allocation3 + $0x568] sm:$0x3] %v5969
  %5978 = vst [vmem:[#allocation3 + $0x630] sm:$0x3] %v5970
  %v5979 = vld [vmem:[%s2411] ss:$2 sm:$0xf]
  %v5980 = vld [vmem:[%s2413] ss:$2 sm:$0xf]
  %v5981 = vld [vmem:[%s2415] ss:$2 sm:$0xf]
  %v5982 = vld [vmem:[%s2417] ss:$2 sm:$0xf]
  %v5983 = vld [vmem:[%s2419] ss:$2 sm:$0xf]
  %v5984 = vld [vmem:[%s2421] ss:$2 sm:$0xf]
  %v5985 = vld [vmem:[%s2423] ss:$2 sm:$0xf]
  %v5986 = vld [vmem:[%s2425] ss:$2 sm:$0xf]
  %v5987 = vpack.c.bf16 %v5979, %v5979
  %v5988 = vpack.c.bf16 %v5980, %v5980
  %v5989 = vpack.c.bf16 %v5981, %v5981
  %v5990 = vpack.c.bf16 %v5982, %v5982
  %v5991 = vpack.c.bf16 %v5983, %v5983
  %v5992 = vpack.c.bf16 %v5984, %v5984
  %v5993 = vpack.c.bf16 %v5985, %v5985
  %v5994 = vpack.c.bf16 %v5986, %v5986
  %v6003 = vrot.slane %v5987, 6
  %v6004 = vrot.slane %v5988, 6
  %v6005 = vrot.slane %v5989, 6
  %v6006 = vrot.slane %v5990, 6
  %v6007 = vrot.slane %v5991, 6
  %v6008 = vrot.slane %v5992, 6
  %v6009 = vrot.slane %v5993, 6
  %v6010 = vrot.slane %v5994, 6
  %6019 = vst [vmem:[#allocation3 + $0xb8] sm:$0xc] %v6003
  %6020 = vst [vmem:[#allocation3 + $0x180] sm:$0xc] %v6004
  %6021 = vst [vmem:[#allocation3 + $0x248] sm:$0xc] %v6005
  %6022 = vst [vmem:[#allocation3 + $0x310] sm:$0xc] %v6006
  %6023 = vst [vmem:[#allocation3 + $0x3d8] sm:$0xc] %v6007
  %6024 = vst [vmem:[#allocation3 + $0x4a0] sm:$0xc] %v6008
  %6025 = vst [vmem:[#allocation3 + $0x568] sm:$0xc] %v6009
  %6026 = vst [vmem:[#allocation3 + $0x630] sm:$0xc] %v6010
  %v6027 = vld [vmem:[%s4315] ss:$2 sm:$0xf]
  %v6028 = vld [vmem:[%s4317] ss:$2 sm:$0xf]
  %v6029 = vld [vmem:[%s4319] ss:$2 sm:$0xf]
  %v6030 = vld [vmem:[%s4321] ss:$2 sm:$0xf]
  %v6031 = vld [vmem:[%s4323] ss:$2 sm:$0xf]
  %v6032 = vld [vmem:[%s4325] ss:$2 sm:$0xf]
  %v6033 = vld [vmem:[%s4327] ss:$2 sm:$0xf]
  %v6034 = vld [vmem:[%s4329] ss:$2 sm:$0xf]
  %v6035 = vpack.c.bf16 %v6027, %v6027
  %v6036 = vpack.c.bf16 %v6028, %v6028
  %v6037 = vpack.c.bf16 %v6029, %v6029
  %v6038 = vpack.c.bf16 %v6030, %v6030
  %v6039 = vpack.c.bf16 %v6031, %v6031
  %v6040 = vpack.c.bf16 %v6032, %v6032
  %v6041 = vpack.c.bf16 %v6033, %v6033
  %v6042 = vpack.c.bf16 %v6034, %v6034
  %v6051 = vrot.slane %v6035, 4
  %v6052 = vrot.slane %v6036, 4
  %v6053 = vrot.slane %v6037, 4
  %v6054 = vrot.slane %v6038, 4
  %v6055 = vrot.slane %v6039, 4
  %v6056 = vrot.slane %v6040, 4
  %v6057 = vrot.slane %v6041, 4
  %v6058 = vrot.slane %v6042, 4
  %6067 = vst [vmem:[#allocation3 + $0xb8] sm:$0x30] %v6051
  %6068 = vst [vmem:[#allocation3 + $0x180] sm:$0x30] %v6052
  %6069 = vst [vmem:[#allocation3 + $0x248] sm:$0x30] %v6053
  %6070 = vst [vmem:[#allocation3 + $0x310] sm:$0x30] %v6054
  %6071 = vst [vmem:[#allocation3 + $0x3d8] sm:$0x30] %v6055
  %6072 = vst [vmem:[#allocation3 + $0x4a0] sm:$0x30] %v6056
  %6073 = vst [vmem:[#allocation3 + $0x568] sm:$0x30] %v6057
  %6074 = vst [vmem:[#allocation3 + $0x630] sm:$0x30] %v6058
  %s6075 = scalar_lea.vmem [#allocation2], 123
  %v6076 = vld [vmem:[%s6075] ss:$2 sm:$0xf]
  %s6077 = scalar_lea.vmem [#allocation2], 267
  %v6078 = vld [vmem:[%s6077] ss:$2 sm:$0xf]
  %s6079 = scalar_lea.vmem [#allocation2], 411
  %v6080 = vld [vmem:[%s6079] ss:$2 sm:$0xf]
  %s6081 = scalar_lea.vmem [#allocation2], 555
  %v6082 = vld [vmem:[%s6081] ss:$2 sm:$0xf]
  %s6083 = scalar_lea.vmem [#allocation2], 699
  %v6084 = vld [vmem:[%s6083] ss:$2 sm:$0xf]
  %s6085 = scalar_lea.vmem [#allocation2], 843
  %v6086 = vld [vmem:[%s6085] ss:$2 sm:$0xf]
  %s6087 = scalar_lea.vmem [#allocation2], 987
  %v6088 = vld [vmem:[%s6087] ss:$2 sm:$0xf]
  %s6089 = scalar_lea.vmem [#allocation2], 1131
  %v6090 = vld [vmem:[%s6089] ss:$2 sm:$0xf]
  %v6091 = vpack.c.bf16 %v6076, %v6076
  %v6092 = vpack.c.bf16 %v6078, %v6078
  %v6093 = vpack.c.bf16 %v6080, %v6080
  %v6094 = vpack.c.bf16 %v6082, %v6082
  %v6095 = vpack.c.bf16 %v6084, %v6084
  %v6096 = vpack.c.bf16 %v6086, %v6086
  %v6097 = vpack.c.bf16 %v6088, %v6088
  %v6098 = vpack.c.bf16 %v6090, %v6090
  %v6107 = vrot.slane %v6091, 2
  %v6108 = vrot.slane %v6092, 2
  %v6109 = vrot.slane %v6093, 2
  %v6110 = vrot.slane %v6094, 2
  %v6111 = vrot.slane %v6095, 2
  %v6112 = vrot.slane %v6096, 2
  %v6113 = vrot.slane %v6097, 2
  %v6114 = vrot.slane %v6098, 2
  %6123 = vst [vmem:[#allocation3 + $0xb8] sm:$0xc0] %v6107
  %6124 = vst [vmem:[#allocation3 + $0x180] sm:$0xc0] %v6108
  %6125 = vst [vmem:[#allocation3 + $0x248] sm:$0xc0] %v6109
  %6126 = vst [vmem:[#allocation3 + $0x310] sm:$0xc0] %v6110
  %6127 = vst [vmem:[#allocation3 + $0x3d8] sm:$0xc0] %v6111
  %6128 = vst [vmem:[#allocation3 + $0x4a0] sm:$0xc0] %v6112
  %6129 = vst [vmem:[#allocation3 + $0x568] sm:$0xc0] %v6113
  %6130 = vst [vmem:[#allocation3 + $0x630] sm:$0xc0] %v6114
  %v6131 = vld [vmem:[%s2555] ss:$2 sm:$0xf]
  %v6132 = vld [vmem:[%s2557] ss:$2 sm:$0xf]
  %v6133 = vld [vmem:[%s2559] ss:$2 sm:$0xf]
  %v6134 = vld [vmem:[%s2561] ss:$2 sm:$0xf]
  %v6135 = vld [vmem:[%s2563] ss:$2 sm:$0xf]
  %v6136 = vld [vmem:[%s2565] ss:$2 sm:$0xf]
  %v6137 = vld [vmem:[%s2567] ss:$2 sm:$0xf]
  %v6138 = vld [vmem:[%s2569] ss:$2 sm:$0xf]
  %v6139 = vpack.c.bf16 %v6131, %v6131
  %v6140 = vpack.c.bf16 %v6132, %v6132
  %v6141 = vpack.c.bf16 %v6133, %v6133
  %v6142 = vpack.c.bf16 %v6134, %v6134
  %v6143 = vpack.c.bf16 %v6135, %v6135
  %v6144 = vpack.c.bf16 %v6136, %v6136
  %v6145 = vpack.c.bf16 %v6137, %v6137
  %v6146 = vpack.c.bf16 %v6138, %v6138
  %6147 = vst [vmem:[#allocation3 + $0xc0] sm:$0x3] %v6139
  %6148 = vst [vmem:[#allocation3 + $0x188] sm:$0x3] %v6140
  %6149 = vst [vmem:[#allocation3 + $0x250] sm:$0x3] %v6141
  %6150 = vst [vmem:[#allocation3 + $0x318] sm:$0x3] %v6142
  %6151 = vst [vmem:[#allocation3 + $0x3e0] sm:$0x3] %v6143
  %6152 = vst [vmem:[#allocation3 + $0x4a8] sm:$0x3] %v6144
  %6153 = vst [vmem:[#allocation3 + $0x570] sm:$0x3] %v6145
  %6154 = vst [vmem:[#allocation3 + $0x638] sm:$0x3] %v6146
  %v6155 = vld [vmem:[%s2611] ss:$2 sm:$0xf]
  %v6156 = vld [vmem:[%s2613] ss:$2 sm:$0xf]
  %v6157 = vld [vmem:[%s2615] ss:$2 sm:$0xf]
  %v6158 = vld [vmem:[%s2617] ss:$2 sm:$0xf]
  %v6159 = vld [vmem:[%s2619] ss:$2 sm:$0xf]
  %v6160 = vld [vmem:[%s2621] ss:$2 sm:$0xf]
  %v6161 = vld [vmem:[%s2623] ss:$2 sm:$0xf]
  %v6162 = vld [vmem:[%s2625] ss:$2 sm:$0xf]
  %v6163 = vpack.c.bf16 %v6155, %v6155
  %v6164 = vpack.c.bf16 %v6156, %v6156
  %v6165 = vpack.c.bf16 %v6157, %v6157
  %v6166 = vpack.c.bf16 %v6158, %v6158
  %v6167 = vpack.c.bf16 %v6159, %v6159
  %v6168 = vpack.c.bf16 %v6160, %v6160
  %v6169 = vpack.c.bf16 %v6161, %v6161
  %v6170 = vpack.c.bf16 %v6162, %v6162
  %v6179 = vrot.slane %v6163, 6
  %v6180 = vrot.slane %v6164, 6
  %v6181 = vrot.slane %v6165, 6
  %v6182 = vrot.slane %v6166, 6
  %v6183 = vrot.slane %v6167, 6
  %v6184 = vrot.slane %v6168, 6
  %v6185 = vrot.slane %v6169, 6
  %v6186 = vrot.slane %v6170, 6
  %6195 = vst [vmem:[#allocation3 + $0xc0] sm:$0xc] %v6179
  %6196 = vst [vmem:[#allocation3 + $0x188] sm:$0xc] %v6180
  %6197 = vst [vmem:[#allocation3 + $0x250] sm:$0xc] %v6181
  %6198 = vst [vmem:[#allocation3 + $0x318] sm:$0xc] %v6182
  %6199 = vst [vmem:[#allocation3 + $0x3e0] sm:$0xc] %v6183
  %6200 = vst [vmem:[#allocation3 + $0x4a8] sm:$0xc] %v6184
  %6201 = vst [vmem:[#allocation3 + $0x570] sm:$0xc] %v6185
  %6202 = vst [vmem:[#allocation3 + $0x638] sm:$0xc] %v6186
  %v6203 = vld [vmem:[%s4491] ss:$2 sm:$0xf]
  %v6204 = vld [vmem:[%s4493] ss:$2 sm:$0xf]
  %v6205 = vld [vmem:[%s4495] ss:$2 sm:$0xf]
  %v6206 = vld [vmem:[%s4497] ss:$2 sm:$0xf]
  %v6207 = vld [vmem:[%s4499] ss:$2 sm:$0xf]
  %v6208 = vld [vmem:[%s4501] ss:$2 sm:$0xf]
  %v6209 = vld [vmem:[%s4503] ss:$2 sm:$0xf]
  %v6210 = vld [vmem:[%s4505] ss:$2 sm:$0xf]
  %v6211 = vpack.c.bf16 %v6203, %v6203
  %v6212 = vpack.c.bf16 %v6204, %v6204
  %v6213 = vpack.c.bf16 %v6205, %v6205
  %v6214 = vpack.c.bf16 %v6206, %v6206
  %v6215 = vpack.c.bf16 %v6207, %v6207
  %v6216 = vpack.c.bf16 %v6208, %v6208
  %v6217 = vpack.c.bf16 %v6209, %v6209
  %v6218 = vpack.c.bf16 %v6210, %v6210
  %v6227 = vrot.slane %v6211, 4
  %v6228 = vrot.slane %v6212, 4
  %v6229 = vrot.slane %v6213, 4
  %v6230 = vrot.slane %v6214, 4
  %v6231 = vrot.slane %v6215, 4
  %v6232 = vrot.slane %v6216, 4
  %v6233 = vrot.slane %v6217, 4
  %v6234 = vrot.slane %v6218, 4
  %6243 = vst [vmem:[#allocation3 + $0xc0] sm:$0x30] %v6227
  %6244 = vst [vmem:[#allocation3 + $0x188] sm:$0x30] %v6228
  %6245 = vst [vmem:[#allocation3 + $0x250] sm:$0x30] %v6229
  %6246 = vst [vmem:[#allocation3 + $0x318] sm:$0x30] %v6230
  %6247 = vst [vmem:[#allocation3 + $0x3e0] sm:$0x30] %v6231
  %6248 = vst [vmem:[#allocation3 + $0x4a8] sm:$0x30] %v6232
  %6249 = vst [vmem:[#allocation3 + $0x570] sm:$0x30] %v6233
  %6250 = vst [vmem:[#allocation3 + $0x638] sm:$0x30] %v6234
  %s6251 = scalar_lea.vmem [#allocation2], 124
  %v6252 = vld [vmem:[%s6251] ss:$2 sm:$0xf]
  %s6253 = scalar_lea.vmem [#allocation2], 268
  %v6254 = vld [vmem:[%s6253] ss:$2 sm:$0xf]
  %s6255 = scalar_lea.vmem [#allocation2], 412
  %v6256 = vld [vmem:[%s6255] ss:$2 sm:$0xf]
  %s6257 = scalar_lea.vmem [#allocation2], 556
  %v6258 = vld [vmem:[%s6257] ss:$2 sm:$0xf]
  %s6259 = scalar_lea.vmem [#allocation2], 700
  %v6260 = vld [vmem:[%s6259] ss:$2 sm:$0xf]
  %s6261 = scalar_lea.vmem [#allocation2], 844
  %v6262 = vld [vmem:[%s6261] ss:$2 sm:$0xf]
  %s6263 = scalar_lea.vmem [#allocation2], 988
  %v6264 = vld [vmem:[%s6263] ss:$2 sm:$0xf]
  %s6265 = scalar_lea.vmem [#allocation2], 1132
  %v6266 = vld [vmem:[%s6265] ss:$2 sm:$0xf]
  %v6267 = vpack.c.bf16 %v6252, %v6252
  %v6268 = vpack.c.bf16 %v6254, %v6254
  %v6269 = vpack.c.bf16 %v6256, %v6256
  %v6270 = vpack.c.bf16 %v6258, %v6258
  %v6271 = vpack.c.bf16 %v6260, %v6260
  %v6272 = vpack.c.bf16 %v6262, %v6262
  %v6273 = vpack.c.bf16 %v6264, %v6264
  %v6274 = vpack.c.bf16 %v6266, %v6266
  %v6283 = vrot.slane %v6267, 2
  %v6284 = vrot.slane %v6268, 2
  %v6285 = vrot.slane %v6269, 2
  %v6286 = vrot.slane %v6270, 2
  %v6287 = vrot.slane %v6271, 2
  %v6288 = vrot.slane %v6272, 2
  %v6289 = vrot.slane %v6273, 2
  %v6290 = vrot.slane %v6274, 2
  %6299 = vst [vmem:[#allocation3 + $0xc0] sm:$0xc0] %v6283
  %6300 = vst [vmem:[#allocation3 + $0x188] sm:$0xc0] %v6284
  %6301 = vst [vmem:[#allocation3 + $0x250] sm:$0xc0] %v6285
  %6302 = vst [vmem:[#allocation3 + $0x318] sm:$0xc0] %v6286
  %6303 = vst [vmem:[#allocation3 + $0x3e0] sm:$0xc0] %v6287
  %6304 = vst [vmem:[#allocation3 + $0x4a8] sm:$0xc0] %v6288
  %6305 = vst [vmem:[#allocation3 + $0x570] sm:$0xc0] %v6289
  %6306 = vst [vmem:[#allocation3 + $0x638] sm:$0xc0] %v6290
  %v6307 = vld [vmem:[#allocation3] sm:$0xff]
  %v6308 = vld [vmem:[#allocation3 + $0x8] sm:$0xff]
  %v6309 = vld [vmem:[#allocation3 + $0x10] sm:$0xff]
  %v6310 = vld [vmem:[#allocation3 + $0x18] sm:$0xff]
  %v6311 = vld [vmem:[#allocation3 + $0x20] sm:$0xff]
  %v6312 = vld [vmem:[#allocation3 + $0x28] sm:$0xff]
  %v6313 = vld [vmem:[#allocation3 + $0x30] sm:$0xff]
  %v6314 = vld [vmem:[#allocation3 + $0x38] sm:$0xff]
  %v6315 = vld [vmem:[#allocation3 + $0x40] sm:$0xff]
  %v6316 = vld [vmem:[#allocation3 + $0x48] sm:$0xff]
  %v6317 = vld [vmem:[#allocation3 + $0x50] sm:$0xff]
  %v6318 = vld [vmem:[#allocation3 + $0x58] sm:$0xff]
  %v6319 = vld [vmem:[#allocation3 + $0x60] sm:$0xff]
  %v6320 = vld [vmem:[#allocation3 + $0x68] sm:$0xff]
  %v6321 = vld [vmem:[#allocation3 + $0x70] sm:$0xff]
  %v6322 = vld [vmem:[#allocation3 + $0x78] sm:$0xff]
  %v6323 = vld [vmem:[#allocation3 + $0x80] sm:$0xff]
  %v6324 = vld [vmem:[#allocation3 + $0x88] sm:$0xff]
  %v6325 = vld [vmem:[#allocation3 + $0x90] sm:$0xff]
  %v6326 = vld [vmem:[#allocation3 + $0x98] sm:$0xff]
  %v6327 = vld [vmem:[#allocation3 + $0xa0] sm:$0xff]
  %v6328 = vld [vmem:[#allocation3 + $0xa8] sm:$0xff]
  %v6329 = vld [vmem:[#allocation3 + $0xb0] sm:$0xff]
  %v6330 = vld [vmem:[#allocation3 + $0xb8] sm:$0xff]
  %v6331 = vld [vmem:[#allocation3 + $0xc0] sm:$0xff]
  %v6332 = vld [vmem:[#allocation3 + $0xc8] sm:$0xff]
  %v6333 = vld [vmem:[#allocation3 + $0xd0] sm:$0xff]
  %v6334 = vld [vmem:[#allocation3 + $0xd8] sm:$0xff]
  %v6335 = vld [vmem:[#allocation3 + $0xe0] sm:$0xff]
  %v6336 = vld [vmem:[#allocation3 + $0xe8] sm:$0xff]
  %v6337 = vld [vmem:[#allocation3 + $0xf0] sm:$0xff]
  %v6338 = vld [vmem:[#allocation3 + $0xf8] sm:$0xff]
  %v6339 = vld [vmem:[#allocation3 + $0x100] sm:$0xff]
  %v6340 = vld [vmem:[#allocation3 + $0x108] sm:$0xff]
  %v6341 = vld [vmem:[#allocation3 + $0x110] sm:$0xff]
  %v6342 = vld [vmem:[#allocation3 + $0x118] sm:$0xff]
  %v6343 = vld [vmem:[#allocation3 + $0x120] sm:$0xff]
  %v6344 = vld [vmem:[#allocation3 + $0x128] sm:$0xff]
  %v6345 = vld [vmem:[#allocation3 + $0x130] sm:$0xff]
  %v6346 = vld [vmem:[#allocation3 + $0x138] sm:$0xff]
  %v6347 = vld [vmem:[#allocation3 + $0x140] sm:$0xff]
  %v6348 = vld [vmem:[#allocation3 + $0x148] sm:$0xff]
  %v6349 = vld [vmem:[#allocation3 + $0x150] sm:$0xff]
  %v6350 = vld [vmem:[#allocation3 + $0x158] sm:$0xff]
  %v6351 = vld [vmem:[#allocation3 + $0x160] sm:$0xff]
  %v6352 = vld [vmem:[#allocation3 + $0x168] sm:$0xff]
  %v6353 = vld [vmem:[#allocation3 + $0x170] sm:$0xff]
  %v6354 = vld [vmem:[#allocation3 + $0x178] sm:$0xff]
  %v6355 = vld [vmem:[#allocation3 + $0x180] sm:$0xff]
  %v6356 = vld [vmem:[#allocation3 + $0x188] sm:$0xff]
  %v6357 = vld [vmem:[#allocation3 + $0x190] sm:$0xff]
  %v6358 = vld [vmem:[#allocation3 + $0x198] sm:$0xff]
  %v6359 = vld [vmem:[#allocation3 + $0x1a0] sm:$0xff]
  %v6360 = vld [vmem:[#allocation3 + $0x1a8] sm:$0xff]
  %v6361 = vld [vmem:[#allocation3 + $0x1b0] sm:$0xff]
  %v6362 = vld [vmem:[#allocation3 + $0x1b8] sm:$0xff]
  %v6363 = vld [vmem:[#allocation3 + $0x1c0] sm:$0xff]
  %v6364 = vld [vmem:[#allocation3 + $0x1c8] sm:$0xff]
  %v6365 = vld [vmem:[#allocation3 + $0x1d0] sm:$0xff]
  %v6366 = vld [vmem:[#allocation3 + $0x1d8] sm:$0xff]
  %v6367 = vld [vmem:[#allocation3 + $0x1e0] sm:$0xff]
  %v6368 = vld [vmem:[#allocation3 + $0x1e8] sm:$0xff]
  %v6369 = vld [vmem:[#allocation3 + $0x1f0] sm:$0xff]
  %v6370 = vld [vmem:[#allocation3 + $0x1f8] sm:$0xff]
  %v6371 = vld [vmem:[#allocation3 + $0x200] sm:$0xff]
  %v6372 = vld [vmem:[#allocation3 + $0x208] sm:$0xff]
  %v6373 = vld [vmem:[#allocation3 + $0x210] sm:$0xff]
  %v6374 = vld [vmem:[#allocation3 + $0x218] sm:$0xff]
  %v6375 = vld [vmem:[#allocation3 + $0x220] sm:$0xff]
  %v6376 = vld [vmem:[#allocation3 + $0x228] sm:$0xff]
  %v6377 = vld [vmem:[#allocation3 + $0x230] sm:$0xff]
  %v6378 = vld [vmem:[#allocation3 + $0x238] sm:$0xff]
  %v6379 = vld [vmem:[#allocation3 + $0x240] sm:$0xff]
  %v6380 = vld [vmem:[#allocation3 + $0x248] sm:$0xff]
  %v6381 = vld [vmem:[#allocation3 + $0x250] sm:$0xff]
  %v6382 = vld [vmem:[#allocation3 + $0x258] sm:$0xff]
  %v6383 = vld [vmem:[#allocation3 + $0x260] sm:$0xff]
  %v6384 = vld [vmem:[#allocation3 + $0x268] sm:$0xff]
  %v6385 = vld [vmem:[#allocation3 + $0x270] sm:$0xff]
  %v6386 = vld [vmem:[#allocation3 + $0x278] sm:$0xff]
  %v6387 = vld [vmem:[#allocation3 + $0x280] sm:$0xff]
  %v6388 = vld [vmem:[#allocation3 + $0x288] sm:$0xff]
  %v6389 = vld [vmem:[#allocation3 + $0x290] sm:$0xff]
  %v6390 = vld [vmem:[#allocation3 + $0x298] sm:$0xff]
  %v6391 = vld [vmem:[#allocation3 + $0x2a0] sm:$0xff]
  %v6392 = vld [vmem:[#allocation3 + $0x2a8] sm:$0xff]
  %v6393 = vld [vmem:[#allocation3 + $0x2b0] sm:$0xff]
  %v6394 = vld [vmem:[#allocation3 + $0x2b8] sm:$0xff]
  %v6395 = vld [vmem:[#allocation3 + $0x2c0] sm:$0xff]
  %v6396 = vld [vmem:[#allocation3 + $0x2c8] sm:$0xff]
  %v6397 = vld [vmem:[#allocation3 + $0x2d0] sm:$0xff]
  %v6398 = vld [vmem:[#allocation3 + $0x2d8] sm:$0xff]
  %v6399 = vld [vmem:[#allocation3 + $0x2e0] sm:$0xff]
  %v6400 = vld [vmem:[#allocation3 + $0x2e8] sm:$0xff]
  %v6401 = vld [vmem:[#allocation3 + $0x2f0] sm:$0xff]
  %v6402 = vld [vmem:[#allocation3 + $0x2f8] sm:$0xff]
  %v6403 = vld [vmem:[#allocation3 + $0x300] sm:$0xff]
  %v6404 = vld [vmem:[#allocation3 + $0x308] sm:$0xff]
  %v6405 = vld [vmem:[#allocation3 + $0x310] sm:$0xff]
  %v6406 = vld [vmem:[#allocation3 + $0x318] sm:$0xff]
  %v6407 = vld [vmem:[#allocation3 + $0x320] sm:$0xff]
  %v6408 = vld [vmem:[#allocation3 + $0x328] sm:$0xff]
  %v6409 = vld [vmem:[#allocation3 + $0x330] sm:$0xff]
  %v6410 = vld [vmem:[#allocation3 + $0x338] sm:$0xff]
  %v6411 = vld [vmem:[#allocation3 + $0x340] sm:$0xff]
  %v6412 = vld [vmem:[#allocation3 + $0x348] sm:$0xff]
  %v6413 = vld [vmem:[#allocation3 + $0x350] sm:$0xff]
  %v6414 = vld [vmem:[#allocation3 + $0x358] sm:$0xff]
  %v6415 = vld [vmem:[#allocation3 + $0x360] sm:$0xff]
  %v6416 = vld [vmem:[#allocation3 + $0x368] sm:$0xff]
  %v6417 = vld [vmem:[#allocation3 + $0x370] sm:$0xff]
  %v6418 = vld [vmem:[#allocation3 + $0x378] sm:$0xff]
  %v6419 = vld [vmem:[#allocation3 + $0x380] sm:$0xff]
  %v6420 = vld [vmem:[#allocation3 + $0x388] sm:$0xff]
  %v6421 = vld [vmem:[#allocation3 + $0x390] sm:$0xff]
  %v6422 = vld [vmem:[#allocation3 + $0x398] sm:$0xff]
  %v6423 = vld [vmem:[#allocation3 + $0x3a0] sm:$0xff]
  %v6424 = vld [vmem:[#allocation3 + $0x3a8] sm:$0xff]
  %v6425 = vld [vmem:[#allocation3 + $0x3b0] sm:$0xff]
  %v6426 = vld [vmem:[#allocation3 + $0x3b8] sm:$0xff]
  %v6427 = vld [vmem:[#allocation3 + $0x3c0] sm:$0xff]
  %v6428 = vld [vmem:[#allocation3 + $0x3c8] sm:$0xff]
  %v6429 = vld [vmem:[#allocation3 + $0x3d0] sm:$0xff]
  %v6430 = vld [vmem:[#allocation3 + $0x3d8] sm:$0xff]
  %v6431 = vld [vmem:[#allocation3 + $0x3e0] sm:$0xff]
  %v6432 = vld [vmem:[#allocation3 + $0x3e8] sm:$0xff]
  %v6433 = vld [vmem:[#allocation3 + $0x3f0] sm:$0xff]
  %v6434 = vld [vmem:[#allocation3 + $0x3f8] sm:$0xff]
  %v6435 = vld [vmem:[#allocation3 + $0x400] sm:$0xff]
  %v6436 = vld [vmem:[#allocation3 + $0x408] sm:$0xff]
  %v6437 = vld [vmem:[#allocation3 + $0x410] sm:$0xff]
  %v6438 = vld [vmem:[#allocation3 + $0x418] sm:$0xff]
  %v6439 = vld [vmem:[#allocation3 + $0x420] sm:$0xff]
  %v6440 = vld [vmem:[#allocation3 + $0x428] sm:$0xff]
  %v6441 = vld [vmem:[#allocation3 + $0x430] sm:$0xff]
  %v6442 = vld [vmem:[#allocation3 + $0x438] sm:$0xff]
  %v6443 = vld [vmem:[#allocation3 + $0x440] sm:$0xff]
  %v6444 = vld [vmem:[#allocation3 + $0x448] sm:$0xff]
  %v6445 = vld [vmem:[#allocation3 + $0x450] sm:$0xff]
  %v6446 = vld [vmem:[#allocation3 + $0x458] sm:$0xff]
  %v6447 = vld [vmem:[#allocation3 + $0x460] sm:$0xff]
  %v6448 = vld [vmem:[#allocation3 + $0x468] sm:$0xff]
  %v6449 = vld [vmem:[#allocation3 + $0x470] sm:$0xff]
  %v6450 = vld [vmem:[#allocation3 + $0x478] sm:$0xff]
  %v6451 = vld [vmem:[#allocation3 + $0x480] sm:$0xff]
  %v6452 = vld [vmem:[#allocation3 + $0x488] sm:$0xff]
  %v6453 = vld [vmem:[#allocation3 + $0x490] sm:$0xff]
  %v6454 = vld [vmem:[#allocation3 + $0x498] sm:$0xff]
  %v6455 = vld [vmem:[#allocation3 + $0x4a0] sm:$0xff]
  %v6456 = vld [vmem:[#allocation3 + $0x4a8] sm:$0xff]
  %v6457 = vld [vmem:[#allocation3 + $0x4b0] sm:$0xff]
  %v6458 = vld [vmem:[#allocation3 + $0x4b8] sm:$0xff]
  %v6459 = vld [vmem:[#allocation3 + $0x4c0] sm:$0xff]
  %v6460 = vld [vmem:[#allocation3 + $0x4c8] sm:$0xff]
  %v6461 = vld [vmem:[#allocation3 + $0x4d0] sm:$0xff]
  %v6462 = vld [vmem:[#allocation3 + $0x4d8] sm:$0xff]
  %v6463 = vld [vmem:[#allocation3 + $0x4e0] sm:$0xff]
  %v6464 = vld [vmem:[#allocation3 + $0x4e8] sm:$0xff]
  %v6465 = vld [vmem:[#allocation3 + $0x4f0] sm:$0xff]
  %v6466 = vld [vmem:[#allocation3 + $0x4f8] sm:$0xff]
  %v6467 = vld [vmem:[#allocation3 + $0x500] sm:$0xff]
  %v6468 = vld [vmem:[#allocation3 + $0x508] sm:$0xff]
  %v6469 = vld [vmem:[#allocation3 + $0x510] sm:$0xff]
  %v6470 = vld [vmem:[#allocation3 + $0x518] sm:$0xff]
  %v6471 = vld [vmem:[#allocation3 + $0x520] sm:$0xff]
  %v6472 = vld [vmem:[#allocation3 + $0x528] sm:$0xff]
  %v6473 = vld [vmem:[#allocation3 + $0x530] sm:$0xff]
  %v6474 = vld [vmem:[#allocation3 + $0x538] sm:$0xff]
  %v6475 = vld [vmem:[#allocation3 + $0x540] sm:$0xff]
  %v6476 = vld [vmem:[#allocation3 + $0x548] sm:$0xff]
  %v6477 = vld [vmem:[#allocation3 + $0x550] sm:$0xff]
  %v6478 = vld [vmem:[#allocation3 + $0x558] sm:$0xff]
  %v6479 = vld [vmem:[#allocation3 + $0x560] sm:$0xff]
  %v6480 = vld [vmem:[#allocation3 + $0x568] sm:$0xff]
  %v6481 = vld [vmem:[#allocation3 + $0x570] sm:$0xff]
  %v6482 = vld [vmem:[#allocation3 + $0x578] sm:$0xff]
  %v6483 = vld [vmem:[#allocation3 + $0x580] sm:$0xff]
  %v6484 = vld [vmem:[#allocation3 + $0x588] sm:$0xff]
  %v6485 = vld [vmem:[#allocation3 + $0x590] sm:$0xff]
  %v6486 = vld [vmem:[#allocation3 + $0x598] sm:$0xff]
  %v6487 = vld [vmem:[#allocation3 + $0x5a0] sm:$0xff]
  %v6488 = vld [vmem:[#allocation3 + $0x5a8] sm:$0xff]
  %v6489 = vld [vmem:[#allocation3 + $0x5b0] sm:$0xff]
  %v6490 = vld [vmem:[#allocation3 + $0x5b8] sm:$0xff]
  %v6491 = vld [vmem:[#allocation3 + $0x5c0] sm:$0xff]
  %v6492 = vld [vmem:[#allocation3 + $0x5c8] sm:$0xff]
  %v6493 = vld [vmem:[#allocation3 + $0x5d0] sm:$0xff]
  %v6494 = vld [vmem:[#allocation3 + $0x5d8] sm:$0xff]
  %v6495 = vld [vmem:[#allocation3 + $0x5e0] sm:$0xff]
  %v6496 = vld [vmem:[#allocation3 + $0x5e8] sm:$0xff]
  %v6497 = vld [vmem:[#allocation3 + $0x5f0] sm:$0xff]
  %v6498 = vld [vmem:[#allocation3 + $0x5f8] sm:$0xff]
  %v6499 = vld [vmem:[#allocation3 + $0x600] sm:$0xff]
  %v6500 = vld [vmem:[#allocation3 + $0x608] sm:$0xff]
  %v6501 = vld [vmem:[#allocation3 + $0x610] sm:$0xff]
  %v6502 = vld [vmem:[#allocation3 + $0x618] sm:$0xff]
  %v6503 = vld [vmem:[#allocation3 + $0x620] sm:$0xff]
  %v6504 = vld [vmem:[#allocation3 + $0x628] sm:$0xff]
  %v6505 = vld [vmem:[#allocation3 + $0x630] sm:$0xff]
  %v6506 = vld [vmem:[#allocation3 + $0x638] sm:$0xff]
  %v6507 = vld [vmem:[%s3] sm:$0xf]
  %v6508 = vld [vmem:[%s3 + $0x4] sm:$0xf]
  %v6509 = vld [vmem:[%s3 + $0x8] sm:$0xf]
  %v6510 = vld [vmem:[%s3 + $0xc] sm:$0xf]
  %v6511 = vld [vmem:[%s3 + $0x10] sm:$0xf]
  %v6512 = vld [vmem:[%s3 + $0x14] sm:$0xf]
  %v6513 = vld [vmem:[%s3 + $0x18] sm:$0xf]
  %v6514 = vld [vmem:[%s3 + $0x1c] sm:$0xf]
  %v6515 = vld [vmem:[%s3 + $0x20] sm:$0xf]
  %v6516 = vld [vmem:[%s3 + $0x24] sm:$0xf]
  %v6517 = vld [vmem:[%s3 + $0x28] sm:$0xf]
  %v6518 = vld [vmem:[%s3 + $0x2c] sm:$0xf]
  %v6519 = vld [vmem:[%s3 + $0x30] sm:$0xf]
  %v6520 = vld [vmem:[%s3 + $0x34] sm:$0xf]
  %v6521 = vld [vmem:[%s3 + $0x38] sm:$0xf]
  %v6522 = vld [vmem:[%s3 + $0x3c] sm:$0xf]
  %v6523 = vld [vmem:[%s3 + $0x40] sm:$0xf]
  %v6524 = vld [vmem:[%s3 + $0x44] sm:$0xf]
  %v6525 = vld [vmem:[%s3 + $0x48] sm:$0xf]
  %v6526 = vld [vmem:[%s3 + $0x4c] sm:$0xf]
  %v6527 = vld [vmem:[%s3 + $0x50] sm:$0xf]
  %v6528 = vld [vmem:[%s3 + $0x54] sm:$0xf]
  %v6529 = vld [vmem:[%s3 + $0x58] sm:$0xf]
  %v6530 = vld [vmem:[%s3 + $0x5c] sm:$0xf]
  %v6531 = vld [vmem:[%s3 + $0x60] sm:$0xf]
  %v6532 = vld [vmem:[%s3 + $0x64] sm:$0xf]
  %v6533 = vld [vmem:[%s3 + $0x68] sm:$0xf]
  %v6534 = vld [vmem:[%s3 + $0x6c] sm:$0xf]
  %v6535 = vld [vmem:[%s3 + $0x70] sm:$0xf]
  %v6536 = vld [vmem:[%s3 + $0x74] sm:$0xf]
  %v6537 = vld [vmem:[%s3 + $0x78] sm:$0xf]
  %v6538 = vld [vmem:[%s3 + $0x7c] sm:$0xf]
  %v6539 = vld [vmem:[%s3 + $0x80] sm:$0xf]
  %v6540 = vld [vmem:[%s3 + $0x84] sm:$0xf]
  %v6541 = vld [vmem:[%s3 + $0x88] sm:$0xf]
  %v6542 = vld [vmem:[%s3 + $0x8c] sm:$0xf]
  %v6543 = vld [vmem:[%s3 + $0x90] sm:$0xf]
  %v6544 = vld [vmem:[%s3 + $0x94] sm:$0xf]
  %v6545 = vld [vmem:[%s3 + $0x98] sm:$0xf]
  %v6546 = vld [vmem:[%s3 + $0x9c] sm:$0xf]
  %v6547 = vld [vmem:[%s3 + $0xa0] sm:$0xf]
  %v6548 = vld [vmem:[%s3 + $0xa4] sm:$0xf]
  %v6549 = vld [vmem:[%s3 + $0xa8] sm:$0xf]
  %v6550 = vld [vmem:[%s3 + $0xac] sm:$0xf]
  %v6551 = vld [vmem:[%s3 + $0xb0] sm:$0xf]
  %v6552 = vld [vmem:[%s3 + $0xb4] sm:$0xf]
  %v6553 = vld [vmem:[%s3 + $0xb8] sm:$0xf]
  %v6554 = vld [vmem:[%s3 + $0xbc] sm:$0xf]
  %v6555 = vld [vmem:[%s3 + $0xc0] sm:$0xf]
  %v6556 = vld [vmem:[%s3 + $0xc4] sm:$0xf]
  %v6557 = vld [vmem:[%s3 + $0xc8] sm:$0xf]
  %v6558 = vld [vmem:[%s3 + $0xcc] sm:$0xf]
  %v6559 = vld [vmem:[%s3 + $0xd0] sm:$0xf]
  %v6560 = vld [vmem:[%s3 + $0xd4] sm:$0xf]
  %v6561 = vld [vmem:[%s3 + $0xd8] sm:$0xf]
  %v6562 = vld [vmem:[%s3 + $0xdc] sm:$0xf]
  %v6563 = vld [vmem:[%s3 + $0xe0] sm:$0xf]
  %v6564 = vld [vmem:[%s3 + $0xe4] sm:$0xf]
  %v6565 = vld [vmem:[%s3 + $0xe8] sm:$0xf]
  %v6566 = vld [vmem:[%s3 + $0xec] sm:$0xf]
  %v6567 = vld [vmem:[%s3 + $0xf0] sm:$0xf]
  %v6568 = vld [vmem:[%s3 + $0xf4] sm:$0xf]
  %v6569 = vld [vmem:[%s3 + $0xf8] sm:$0xf]
  %v6570 = vld [vmem:[%s3 + $0xfc] sm:$0xf]
  %v6571 = vld [vmem:[%s3 + $0x100] sm:$0xf]
  %v6572 = vld [vmem:[%s3 + $0x104] sm:$0xf]
  %v6573 = vld [vmem:[%s3 + $0x108] sm:$0xf]
  %v6574 = vld [vmem:[%s3 + $0x10c] sm:$0xf]
  %v6575 = vld [vmem:[%s3 + $0x110] sm:$0xf]
  %v6576 = vld [vmem:[%s3 + $0x114] sm:$0xf]
  %v6577 = vld [vmem:[%s3 + $0x118] sm:$0xf]
  %v6578 = vld [vmem:[%s3 + $0x11c] sm:$0xf]
  %v6579 = vld [vmem:[%s3 + $0x120] sm:$0xf]
  %v6580 = vld [vmem:[%s3 + $0x124] sm:$0xf]
  %v6581 = vld [vmem:[%s3 + $0x128] sm:$0xf]
  %v6582 = vld [vmem:[%s3 + $0x12c] sm:$0xf]
  %v6583 = vld [vmem:[%s3 + $0x130] sm:$0xf]
  %v6584 = vld [vmem:[%s3 + $0x134] sm:$0xf]
  %v6585 = vld [vmem:[%s3 + $0x138] sm:$0xf]
  %v6586 = vld [vmem:[%s3 + $0x13c] sm:$0xf]
  %v6587 = vld [vmem:[%s3 + $0x140] sm:$0xf]
  %v6588 = vld [vmem:[%s3 + $0x144] sm:$0xf]
  %v6589 = vld [vmem:[%s3 + $0x148] sm:$0xf]
  %v6590 = vld [vmem:[%s3 + $0x14c] sm:$0xf]
  %v6591 = vld [vmem:[%s3 + $0x150] sm:$0xf]
  %v6592 = vld [vmem:[%s3 + $0x154] sm:$0xf]
  %v6593 = vld [vmem:[%s3 + $0x158] sm:$0xf]
  %v6594 = vld [vmem:[%s3 + $0x15c] sm:$0xf]
  %v6595 = vld [vmem:[%s3 + $0x160] sm:$0xf]
  %v6596 = vld [vmem:[%s3 + $0x164] sm:$0xf]
  %v6597 = vld [vmem:[%s3 + $0x168] sm:$0xf]
  %v6598 = vld [vmem:[%s3 + $0x16c] sm:$0xf]
  %v6599 = vld [vmem:[%s3 + $0x170] sm:$0xf]
  %v6600 = vld [vmem:[%s3 + $0x174] sm:$0xf]
  %v6601 = vld [vmem:[%s3 + $0x178] sm:$0xf]
  %v6602 = vld [vmem:[%s3 + $0x17c] sm:$0xf]
  %v6603 = vld [vmem:[%s3 + $0x180] sm:$0xf]
  %v6604 = vld [vmem:[%s3 + $0x184] sm:$0xf]
  %v6605 = vld [vmem:[%s3 + $0x188] sm:$0xf]
  %v6606 = vld [vmem:[%s3 + $0x18c] sm:$0xf]
  %v6607 = vld [vmem:[%s3 + $0x190] sm:$0xf]
  %v6608 = vld [vmem:[%s3 + $0x194] sm:$0xf]
  %v6609 = vld [vmem:[%s3 + $0x198] sm:$0xf]
  %v6610 = vld [vmem:[%s3 + $0x19c] sm:$0xf]
  %v6611 = vld [vmem:[%s3 + $0x1a0] sm:$0xf]
  %v6612 = vld [vmem:[%s3 + $0x1a4] sm:$0xf]
  %v6613 = vld [vmem:[%s3 + $0x1a8] sm:$0xf]
  %v6614 = vld [vmem:[%s3 + $0x1ac] sm:$0xf]
  %v6615 = vld [vmem:[%s3 + $0x1b0] sm:$0xf]
  %v6616 = vld [vmem:[%s3 + $0x1b4] sm:$0xf]
  %v6617 = vld [vmem:[%s3 + $0x1b8] sm:$0xf]
  %v6618 = vld [vmem:[%s3 + $0x1bc] sm:$0xf]
  %v6619 = vld [vmem:[%s3 + $0x1c0] sm:$0xf]
  %v6620 = vld [vmem:[%s3 + $0x1c4] sm:$0xf]
  %v6621 = vld [vmem:[%s3 + $0x1c8] sm:$0xf]
  %v6622 = vld [vmem:[%s3 + $0x1cc] sm:$0xf]
  %v6623 = vld [vmem:[%s3 + $0x1d0] sm:$0xf]
  %v6624 = vld [vmem:[%s3 + $0x1d4] sm:$0xf]
  %v6625 = vld [vmem:[%s3 + $0x1d8] sm:$0xf]
  %v6626 = vld [vmem:[%s3 + $0x1dc] sm:$0xf]
  %v6627 = vld [vmem:[%s3 + $0x1e0] sm:$0xf]
  %v6628 = vld [vmem:[%s3 + $0x1e4] sm:$0xf]
  %v6629 = vld [vmem:[%s3 + $0x1e8] sm:$0xf]
  %v6630 = vld [vmem:[%s3 + $0x1ec] sm:$0xf]
  %v6631 = vld [vmem:[%s3 + $0x1f0] sm:$0xf]
  %v6632 = vld [vmem:[%s3 + $0x1f4] sm:$0xf]
  %v6633 = vld [vmem:[%s3 + $0x1f8] sm:$0xf]
  %v6634 = vld [vmem:[%s3 + $0x1fc] sm:$0xf]
  %v6635 = vld [vmem:[%s3 + $0x200] sm:$0xf]
  %v6636 = vld [vmem:[%s3 + $0x204] sm:$0xf]
  %v6637 = vld [vmem:[%s3 + $0x208] sm:$0xf]
  %v6638 = vld [vmem:[%s3 + $0x20c] sm:$0xf]
  %v6639 = vld [vmem:[%s3 + $0x210] sm:$0xf]
  %v6640 = vld [vmem:[%s3 + $0x214] sm:$0xf]
  %v6641 = vld [vmem:[%s3 + $0x218] sm:$0xf]
  %v6642 = vld [vmem:[%s3 + $0x21c] sm:$0xf]
  %v6643 = vld [vmem:[%s3 + $0x220] sm:$0xf]
  %v6644 = vld [vmem:[%s3 + $0x224] sm:$0xf]
  %v6645 = vld [vmem:[%s3 + $0x228] sm:$0xf]
  %v6646 = vld [vmem:[%s3 + $0x22c] sm:$0xf]
  %v6647 = vld [vmem:[%s3 + $0x230] sm:$0xf]
  %v6648 = vld [vmem:[%s3 + $0x234] sm:$0xf]
  %v6649 = vld [vmem:[%s3 + $0x238] sm:$0xf]
  %v6650 = vld [vmem:[%s3 + $0x23c] sm:$0xf]
  %v6651 = vld [vmem:[%s3 + $0x240] sm:$0xf]
  %v6652 = vld [vmem:[%s3 + $0x244] sm:$0xf]
  %v6653 = vld [vmem:[%s3 + $0x248] sm:$0xf]
  %v6654 = vld [vmem:[%s3 + $0x24c] sm:$0xf]
  %v6655 = vld [vmem:[%s3 + $0x250] sm:$0xf]
  %v6656 = vld [vmem:[%s3 + $0x254] sm:$0xf]
  %v6657 = vld [vmem:[%s3 + $0x258] sm:$0xf]
  %v6658 = vld [vmem:[%s3 + $0x25c] sm:$0xf]
  %v6659 = vld [vmem:[%s3 + $0x260] sm:$0xf]
  %v6660 = vld [vmem:[%s3 + $0x264] sm:$0xf]
  %v6661 = vld [vmem:[%s3 + $0x268] sm:$0xf]
  %v6662 = vld [vmem:[%s3 + $0x26c] sm:$0xf]
  %v6663 = vld [vmem:[%s3 + $0x270] sm:$0xf]
  %v6664 = vld [vmem:[%s3 + $0x274] sm:$0xf]
  %v6665 = vld [vmem:[%s3 + $0x278] sm:$0xf]
  %v6666 = vld [vmem:[%s3 + $0x27c] sm:$0xf]
  %v6667 = vld [vmem:[%s3 + $0x280] sm:$0xf]
  %v6668 = vld [vmem:[%s3 + $0x284] sm:$0xf]
  %v6669 = vld [vmem:[%s3 + $0x288] sm:$0xf]
  %v6670 = vld [vmem:[%s3 + $0x28c] sm:$0xf]
  %v6671 = vld [vmem:[%s3 + $0x290] sm:$0xf]
  %v6672 = vld [vmem:[%s3 + $0x294] sm:$0xf]
  %v6673 = vld [vmem:[%s3 + $0x298] sm:$0xf]
  %v6674 = vld [vmem:[%s3 + $0x29c] sm:$0xf]
  %v6675 = vld [vmem:[%s3 + $0x2a0] sm:$0xf]
  %v6676 = vld [vmem:[%s3 + $0x2a4] sm:$0xf]
  %v6677 = vld [vmem:[%s3 + $0x2a8] sm:$0xf]
  %v6678 = vld [vmem:[%s3 + $0x2ac] sm:$0xf]
  %v6679 = vld [vmem:[%s3 + $0x2b0] sm:$0xf]
  %v6680 = vld [vmem:[%s3 + $0x2b4] sm:$0xf]
  %v6681 = vld [vmem:[%s3 + $0x2b8] sm:$0xf]
  %v6682 = vld [vmem:[%s3 + $0x2bc] sm:$0xf]
  %v6683 = vld [vmem:[%s3 + $0x2c0] sm:$0xf]
  %v6684 = vld [vmem:[%s3 + $0x2c4] sm:$0xf]
  %v6685 = vld [vmem:[%s3 + $0x2c8] sm:$0xf]
  %v6686 = vld [vmem:[%s3 + $0x2cc] sm:$0xf]
  %v6687 = vld [vmem:[%s3 + $0x2d0] sm:$0xf]
  %v6688 = vld [vmem:[%s3 + $0x2d4] sm:$0xf]
  %v6689 = vld [vmem:[%s3 + $0x2d8] sm:$0xf]
  %v6690 = vld [vmem:[%s3 + $0x2dc] sm:$0xf]
  %v6691 = vld [vmem:[%s3 + $0x2e0] sm:$0xf]
  %v6692 = vld [vmem:[%s3 + $0x2e4] sm:$0xf]
  %v6693 = vld [vmem:[%s3 + $0x2e8] sm:$0xf]
  %v6694 = vld [vmem:[%s3 + $0x2ec] sm:$0xf]
  %v6695 = vld [vmem:[%s3 + $0x2f0] sm:$0xf]
  %v6696 = vld [vmem:[%s3 + $0x2f4] sm:$0xf]
  %v6697 = vld [vmem:[%s3 + $0x2f8] sm:$0xf]
  %v6698 = vld [vmem:[%s3 + $0x2fc] sm:$0xf]
  %v6699 = vld [vmem:[%s3 + $0x300] sm:$0xf]
  %v6700 = vld [vmem:[%s3 + $0x304] sm:$0xf]
  %v6701 = vld [vmem:[%s3 + $0x308] sm:$0xf]
  %v6702 = vld [vmem:[%s3 + $0x30c] sm:$0xf]
  %v6703 = vld [vmem:[%s3 + $0x310] sm:$0xf]
  %v6704 = vld [vmem:[%s3 + $0x314] sm:$0xf]
  %v6705 = vld [vmem:[%s3 + $0x318] sm:$0xf]
  %v6706 = vld [vmem:[%s3 + $0x31c] sm:$0xf]
  %v6707 = vld [vmem:[%s3 + $0x320] sm:$0xf]
  %v6708 = vld [vmem:[%s3 + $0x324] sm:$0xf]
  %v6709 = vld [vmem:[%s3 + $0x328] sm:$0xf]
  %v6710 = vld [vmem:[%s3 + $0x32c] sm:$0xf]
  %v6711 = vld [vmem:[%s3 + $0x330] sm:$0xf]
  %v6712 = vld [vmem:[%s3 + $0x334] sm:$0xf]
  %v6713 = vld [vmem:[%s3 + $0x338] sm:$0xf]
  %v6714 = vld [vmem:[%s3 + $0x33c] sm:$0xf]
  %v6715 = vld [vmem:[%s3 + $0x340] sm:$0xf]
  %v6716 = vld [vmem:[%s3 + $0x344] sm:$0xf]
  %v6717 = vld [vmem:[%s3 + $0x348] sm:$0xf]
  %v6718 = vld [vmem:[%s3 + $0x34c] sm:$0xf]
  %v6719 = vld [vmem:[%s3 + $0x350] sm:$0xf]
  %v6720 = vld [vmem:[%s3 + $0x354] sm:$0xf]
  %v6721 = vld [vmem:[%s3 + $0x358] sm:$0xf]
  %v6722 = vld [vmem:[%s3 + $0x35c] sm:$0xf]
  %v6723 = vld [vmem:[%s3 + $0x360] sm:$0xf]
  %v6724 = vld [vmem:[%s3 + $0x364] sm:$0xf]
  %v6725 = vld [vmem:[%s3 + $0x368] sm:$0xf]
  %v6726 = vld [vmem:[%s3 + $0x36c] sm:$0xf]
  %v6727 = vld [vmem:[%s3 + $0x370] sm:$0xf]
  %v6728 = vld [vmem:[%s3 + $0x374] sm:$0xf]
  %v6729 = vld [vmem:[%s3 + $0x378] sm:$0xf]
  %v6730 = vld [vmem:[%s3 + $0x37c] sm:$0xf]
  %v6731 = vld [vmem:[%s3 + $0x380] sm:$0xf]
  %v6732 = vld [vmem:[%s3 + $0x384] sm:$0xf]
  %v6733 = vld [vmem:[%s3 + $0x388] sm:$0xf]
  %v6734 = vld [vmem:[%s3 + $0x38c] sm:$0xf]
  %v6735 = vld [vmem:[%s3 + $0x390] sm:$0xf]
  %v6736 = vld [vmem:[%s3 + $0x394] sm:$0xf]
  %v6737 = vld [vmem:[%s3 + $0x398] sm:$0xf]
  %v6738 = vld [vmem:[%s3 + $0x39c] sm:$0xf]
  %v6739 = vld [vmem:[%s3 + $0x3a0] sm:$0xf]
  %v6740 = vld [vmem:[%s3 + $0x3a4] sm:$0xf]
  %v6741 = vld [vmem:[%s3 + $0x3a8] sm:$0xf]
  %v6742 = vld [vmem:[%s3 + $0x3ac] sm:$0xf]
  %v6743 = vld [vmem:[%s3 + $0x3b0] sm:$0xf]
  %v6744 = vld [vmem:[%s3 + $0x3b4] sm:$0xf]
  %v6745 = vld [vmem:[%s3 + $0x3b8] sm:$0xf]
  %v6746 = vld [vmem:[%s3 + $0x3bc] sm:$0xf]
  %v6747 = vld [vmem:[%s3 + $0x3c0] sm:$0xf]
  %v6748 = vld [vmem:[%s3 + $0x3c4] sm:$0xf]
  %v6749 = vld [vmem:[%s3 + $0x3c8] sm:$0xf]
  %v6750 = vld [vmem:[%s3 + $0x3cc] sm:$0xf]
  %v6751 = vld [vmem:[%s3 + $0x3d0] sm:$0xf]
  %v6752 = vld [vmem:[%s3 + $0x3d4] sm:$0xf]
  %v6753 = vld [vmem:[%s3 + $0x3d8] sm:$0xf]
  %v6754 = vld [vmem:[%s3 + $0x3dc] sm:$0xf]
  %v6755 = vld [vmem:[%s3 + $0x3e0] sm:$0xf]
  %v6756 = vld [vmem:[%s3 + $0x3e4] sm:$0xf]
  %v6757 = vld [vmem:[%s3 + $0x3e8] sm:$0xf]
  %v6758 = vld [vmem:[%s3 + $0x3ec] sm:$0xf]
  %v6759 = vld [vmem:[%s3 + $0x3f0] sm:$0xf]
  %v6760 = vld [vmem:[%s3 + $0x3f4] sm:$0xf]
  %v6761 = vld [vmem:[%s3 + $0x3f8] sm:$0xf]
  %v6762 = vld [vmem:[%s3 + $0x3fc] sm:$0xf]
  %v6763 = vld [vmem:[%s3 + $0x400] sm:$0xf]
  %v6764 = vld [vmem:[%s3 + $0x404] sm:$0xf]
  %v6765 = vld [vmem:[%s3 + $0x408] sm:$0xf]
  %v6766 = vld [vmem:[%s3 + $0x40c] sm:$0xf]
  %v6767 = vld [vmem:[%s3 + $0x410] sm:$0xf]
  %v6768 = vld [vmem:[%s3 + $0x414] sm:$0xf]
  %v6769 = vld [vmem:[%s3 + $0x418] sm:$0xf]
  %v6770 = vld [vmem:[%s3 + $0x41c] sm:$0xf]
  %v6771 = vld [vmem:[%s3 + $0x420] sm:$0xf]
  %v6772 = vld [vmem:[%s3 + $0x424] sm:$0xf]
  %v6773 = vld [vmem:[%s3 + $0x428] sm:$0xf]
  %v6774 = vld [vmem:[%s3 + $0x42c] sm:$0xf]
  %v6775 = vld [vmem:[%s3 + $0x430] sm:$0xf]
  %v6776 = vld [vmem:[%s3 + $0x434] sm:$0xf]
  %v6777 = vld [vmem:[%s3 + $0x438] sm:$0xf]
  %v6778 = vld [vmem:[%s3 + $0x43c] sm:$0xf]
  %v6779 = vld [vmem:[%s3 + $0x440] sm:$0xf]
  %v6780 = vld [vmem:[%s3 + $0x444] sm:$0xf]
  %v6781 = vld [vmem:[%s3 + $0x448] sm:$0xf]
  %v6782 = vld [vmem:[%s3 + $0x44c] sm:$0xf]
  %v6783 = vld [vmem:[%s3 + $0x450] sm:$0xf]
  %v6784 = vld [vmem:[%s3 + $0x454] sm:$0xf]
  %v6785 = vld [vmem:[%s3 + $0x458] sm:$0xf]
  %v6786 = vld [vmem:[%s3 + $0x45c] sm:$0xf]
  %v6787 = vld [vmem:[%s3 + $0x460] sm:$0xf]
  %v6788 = vld [vmem:[%s3 + $0x464] sm:$0xf]
  %v6789 = vld [vmem:[%s3 + $0x468] sm:$0xf]
  %v6790 = vld [vmem:[%s3 + $0x46c] sm:$0xf]
  %v6791 = vld [vmem:[%s3 + $0x470] sm:$0xf]
  %v6792 = vld [vmem:[%s3 + $0x474] sm:$0xf]
  %v6793 = vld [vmem:[%s3 + $0x478] sm:$0xf]
  %v6794 = vld [vmem:[%s3 + $0x47c] sm:$0xf]
  %v6795 = vld [vmem:[%s3 + $0x480] sm:$0xf]
  %v6796 = vld [vmem:[%s3 + $0x484] sm:$0xf]
  %v6797 = vld [vmem:[%s3 + $0x488] sm:$0xf]
  %v6798 = vld [vmem:[%s3 + $0x48c] sm:$0xf]
  %v6799 = vld [vmem:[%s3 + $0x490] sm:$0xf]
  %v6800 = vld [vmem:[%s3 + $0x494] sm:$0xf]
  %v6801 = vld [vmem:[%s3 + $0x498] sm:$0xf]
  %v6802 = vld [vmem:[%s3 + $0x49c] sm:$0xf]
  %v6803 = vld [vmem:[%s3 + $0x4a0] sm:$0xf]
  %v6804 = vld [vmem:[%s3 + $0x4a4] sm:$0xf]
  %v6805 = vld [vmem:[%s3 + $0x4a8] sm:$0xf]
  %v6806 = vld [vmem:[%s3 + $0x4ac] sm:$0xf]
  %v6807 = vld [vmem:[%s3 + $0x4b0] sm:$0xf]
  %v6808 = vld [vmem:[%s3 + $0x4b4] sm:$0xf]
  %v6809 = vld [vmem:[%s3 + $0x4b8] sm:$0xf]
  %v6810 = vld [vmem:[%s3 + $0x4bc] sm:$0xf]
  %v6811 = vld [vmem:[%s3 + $0x4c0] sm:$0xf]
  %v6812 = vld [vmem:[%s3 + $0x4c4] sm:$0xf]
  %v6813 = vld [vmem:[%s3 + $0x4c8] sm:$0xf]
  %v6814 = vld [vmem:[%s3 + $0x4cc] sm:$0xf]
  %v6815 = vld [vmem:[%s3 + $0x4d0] sm:$0xf]
  %v6816 = vld [vmem:[%s3 + $0x4d4] sm:$0xf]
  %v6817 = vld [vmem:[%s3 + $0x4d8] sm:$0xf]
  %v6818 = vld [vmem:[%s3 + $0x4dc] sm:$0xf]
  %v6819 = vld [vmem:[%s3 + $0x4e0] sm:$0xf]
  %v6820 = vld [vmem:[%s3 + $0x4e4] sm:$0xf]
  %v6821 = vld [vmem:[%s3 + $0x4e8] sm:$0xf]
  %v6822 = vld [vmem:[%s3 + $0x4ec] sm:$0xf]
  %v6823 = vld [vmem:[%s3 + $0x4f0] sm:$0xf]
  %v6824 = vld [vmem:[%s3 + $0x4f4] sm:$0xf]
  %v6825 = vld [vmem:[%s3 + $0x4f8] sm:$0xf]
  %v6826 = vld [vmem:[%s3 + $0x4fc] sm:$0xf]
  %v6827 = vld [vmem:[%s3 + $0x500] sm:$0xf]
  %v6828 = vld [vmem:[%s3 + $0x504] sm:$0xf]
  %v6829 = vld [vmem:[%s3 + $0x508] sm:$0xf]
  %v6830 = vld [vmem:[%s3 + $0x50c] sm:$0xf]
  %v6831 = vld [vmem:[%s3 + $0x510] sm:$0xf]
  %v6832 = vld [vmem:[%s3 + $0x514] sm:$0xf]
  %v6833 = vld [vmem:[%s3 + $0x518] sm:$0xf]
  %v6834 = vld [vmem:[%s3 + $0x51c] sm:$0xf]
  %v6835 = vld [vmem:[%s3 + $0x520] sm:$0xf]
  %v6836 = vld [vmem:[%s3 + $0x524] sm:$0xf]
  %v6837 = vld [vmem:[%s3 + $0x528] sm:$0xf]
  %v6838 = vld [vmem:[%s3 + $0x52c] sm:$0xf]
  %v6839 = vld [vmem:[%s3 + $0x530] sm:$0xf]
  %v6840 = vld [vmem:[%s3 + $0x534] sm:$0xf]
  %v6841 = vld [vmem:[%s3 + $0x538] sm:$0xf]
  %v6842 = vld [vmem:[%s3 + $0x53c] sm:$0xf]
  %v6843 = vld [vmem:[%s3 + $0x540] sm:$0xf]
  %v6844 = vld [vmem:[%s3 + $0x544] sm:$0xf]
  %v6845 = vld [vmem:[%s3 + $0x548] sm:$0xf]
  %v6846 = vld [vmem:[%s3 + $0x54c] sm:$0xf]
  %v6847 = vld [vmem:[%s3 + $0x550] sm:$0xf]
  %v6848 = vld [vmem:[%s3 + $0x554] sm:$0xf]
  %v6849 = vld [vmem:[%s3 + $0x558] sm:$0xf]
  %v6850 = vld [vmem:[%s3 + $0x55c] sm:$0xf]
  %v6851 = vld [vmem:[%s3 + $0x560] sm:$0xf]
  %v6852 = vld [vmem:[%s3 + $0x564] sm:$0xf]
  %v6853 = vld [vmem:[%s3 + $0x568] sm:$0xf]
  %v6854 = vld [vmem:[%s3 + $0x56c] sm:$0xf]
  %v6855 = vld [vmem:[%s3 + $0x570] sm:$0xf]
  %v6856 = vld [vmem:[%s3 + $0x574] sm:$0xf]
  %v6857 = vld [vmem:[%s3 + $0x578] sm:$0xf]
  %v6858 = vld [vmem:[%s3 + $0x57c] sm:$0xf]
  %v6859 = vld [vmem:[%s3 + $0x580] sm:$0xf]
  %v6860 = vld [vmem:[%s3 + $0x584] sm:$0xf]
  %v6861 = vld [vmem:[%s3 + $0x588] sm:$0xf]
  %v6862 = vld [vmem:[%s3 + $0x58c] sm:$0xf]
  %v6863 = vld [vmem:[%s3 + $0x590] sm:$0xf]
  %v6864 = vld [vmem:[%s3 + $0x594] sm:$0xf]
  %v6865 = vld [vmem:[%s3 + $0x598] sm:$0xf]
  %v6866 = vld [vmem:[%s3 + $0x59c] sm:$0xf]
  %v6867 = vld [vmem:[%s3 + $0x5a0] sm:$0xf]
  %v6868 = vld [vmem:[%s3 + $0x5a4] sm:$0xf]
  %v6869 = vld [vmem:[%s3 + $0x5a8] sm:$0xf]
  %v6870 = vld [vmem:[%s3 + $0x5ac] sm:$0xf]
  %v6871 = vld [vmem:[%s3 + $0x5b0] sm:$0xf]
  %v6872 = vld [vmem:[%s3 + $0x5b4] sm:$0xf]
  %v6873 = vld [vmem:[%s3 + $0x5b8] sm:$0xf]
  %v6874 = vld [vmem:[%s3 + $0x5bc] sm:$0xf]
  %v6875 = vld [vmem:[%s3 + $0x5c0] sm:$0xf]
  %v6876 = vld [vmem:[%s3 + $0x5c4] sm:$0xf]
  %v6877 = vld [vmem:[%s3 + $0x5c8] sm:$0xf]
  %v6878 = vld [vmem:[%s3 + $0x5cc] sm:$0xf]
  %v6879 = vld [vmem:[%s3 + $0x5d0] sm:$0xf]
  %v6880 = vld [vmem:[%s3 + $0x5d4] sm:$0xf]
  %v6881 = vld [vmem:[%s3 + $0x5d8] sm:$0xf]
  %v6882 = vld [vmem:[%s3 + $0x5dc] sm:$0xf]
  %v6883 = vld [vmem:[%s3 + $0x5e0] sm:$0xf]
  %v6884 = vld [vmem:[%s3 + $0x5e4] sm:$0xf]
  %v6885 = vld [vmem:[%s3 + $0x5e8] sm:$0xf]
  %v6886 = vld [vmem:[%s3 + $0x5ec] sm:$0xf]
  %v6887 = vld [vmem:[%s3 + $0x5f0] sm:$0xf]
  %v6888 = vld [vmem:[%s3 + $0x5f4] sm:$0xf]
  %v6889 = vld [vmem:[%s3 + $0x5f8] sm:$0xf]
  %v6890 = vld [vmem:[%s3 + $0x5fc] sm:$0xf]
  %v6891 = vld [vmem:[%s3 + $0x600] sm:$0xf]
  %v6892 = vld [vmem:[%s3 + $0x604] sm:$0xf]
  %v6893 = vld [vmem:[%s3 + $0x608] sm:$0xf]
  %v6894 = vld [vmem:[%s3 + $0x60c] sm:$0xf]
  %v6895 = vld [vmem:[%s3 + $0x610] sm:$0xf]
  %v6896 = vld [vmem:[%s3 + $0x614] sm:$0xf]
  %v6897 = vld [vmem:[%s3 + $0x618] sm:$0xf]
  %v6898 = vld [vmem:[%s3 + $0x61c] sm:$0xf]
  %v6899 = vld [vmem:[%s3 + $0x620] sm:$0xf]
  %v6900 = vld [vmem:[%s3 + $0x624] sm:$0xf]
  %v6901 = vld [vmem:[%s3 + $0x628] sm:$0xf]
  %v6902 = vld [vmem:[%s3 + $0x62c] sm:$0xf]
  %v6903 = vld [vmem:[%s3 + $0x630] sm:$0xf]
  %v6904 = vld [vmem:[%s3 + $0x634] sm:$0xf]
  %v6905 = vld [vmem:[%s3 + $0x638] sm:$0xf]
  %v6906 = vld [vmem:[%s3 + $0x63c] sm:$0xf]
  %v6907 = vld [vmem:[%s4] sm:$0x1]
  %v6909 = vlaneseq
  %v6910 = vshrl.u32 %v6909, 7
  %v6911 = vsub.s32 0, %v6910
  %v6912 = vrot.slane %v6907, %v6911
  %v7314 = vunpack.c.l.b16 %v6507
  %v7315 = vunpack.c.l.b16 %v6508
  %v7316 = vunpack.c.l.b16 %v6509
  %v7317 = vunpack.c.l.b16 %v6510
  %v7318 = vunpack.c.l.b16 %v6511
  %v7319 = vunpack.c.l.b16 %v6512
  %v7320 = vunpack.c.l.b16 %v6513
  %v7321 = vunpack.c.l.b16 %v6514
  %v7322 = vunpack.c.l.b16 %v6515
  %v7323 = vunpack.c.l.b16 %v6516
  %v7324 = vunpack.c.l.b16 %v6517
  %v7325 = vunpack.c.l.b16 %v6518
  %v7326 = vunpack.c.l.b16 %v6519
  %v7327 = vunpack.c.l.b16 %v6520
  %v7328 = vunpack.c.l.b16 %v6521
  %v7329 = vunpack.c.l.b16 %v6522
  %v7330 = vunpack.c.l.b16 %v6523
  %v7331 = vunpack.c.l.b16 %v6524
  %v7332 = vunpack.c.l.b16 %v6525
  %v7333 = vunpack.c.l.b16 %v6526
  %v7334 = vunpack.c.l.b16 %v6527
  %v7335 = vunpack.c.l.b16 %v6528
  %v7336 = vunpack.c.l.b16 %v6529
  %v7337 = vunpack.c.l.b16 %v6530
  %v7338 = vunpack.c.l.b16 %v6531
  %v7339 = vunpack.c.l.b16 %v6532
  %v7340 = vunpack.c.l.b16 %v6533
  %v7341 = vunpack.c.l.b16 %v6534
  %v7342 = vunpack.c.l.b16 %v6535
  %v7343 = vunpack.c.l.b16 %v6536
  %v7344 = vunpack.c.l.b16 %v6537
  %v7345 = vunpack.c.l.b16 %v6538
  %v7346 = vunpack.c.l.b16 %v6539
  %v7347 = vunpack.c.l.b16 %v6540
  %v7348 = vunpack.c.l.b16 %v6541
  %v7349 = vunpack.c.l.b16 %v6542
  %v7350 = vunpack.c.l.b16 %v6543
  %v7351 = vunpack.c.l.b16 %v6544
  %v7352 = vunpack.c.l.b16 %v6545
  %v7353 = vunpack.c.l.b16 %v6546
  %v7354 = vunpack.c.l.b16 %v6547
  %v7355 = vunpack.c.l.b16 %v6548
  %v7356 = vunpack.c.l.b16 %v6549
  %v7357 = vunpack.c.l.b16 %v6550
  %v7358 = vunpack.c.l.b16 %v6551
  %v7359 = vunpack.c.l.b16 %v6552
  %v7360 = vunpack.c.l.b16 %v6553
  %v7361 = vunpack.c.l.b16 %v6554
  %v7362 = vunpack.c.l.b16 %v6555
  %v7363 = vunpack.c.l.b16 %v6556
  %v7364 = vunpack.c.l.b16 %v6557
  %v7365 = vunpack.c.l.b16 %v6558
  %v7366 = vunpack.c.l.b16 %v6559
  %v7367 = vunpack.c.l.b16 %v6560
  %v7368 = vunpack.c.l.b16 %v6561
  %v7369 = vunpack.c.l.b16 %v6562
  %v7370 = vunpack.c.l.b16 %v6563
  %v7371 = vunpack.c.l.b16 %v6564
  %v7372 = vunpack.c.l.b16 %v6565
  %v7373 = vunpack.c.l.b16 %v6566
  %v7374 = vunpack.c.l.b16 %v6567
  %v7375 = vunpack.c.l.b16 %v6568
  %v7376 = vunpack.c.l.b16 %v6569
  %v7377 = vunpack.c.l.b16 %v6570
  %v7378 = vunpack.c.l.b16 %v6571
  %v7379 = vunpack.c.l.b16 %v6572
  %v7380 = vunpack.c.l.b16 %v6573
  %v7381 = vunpack.c.l.b16 %v6574
  %v7382 = vunpack.c.l.b16 %v6575
  %v7383 = vunpack.c.l.b16 %v6576
  %v7384 = vunpack.c.l.b16 %v6577
  %v7385 = vunpack.c.l.b16 %v6578
  %v7386 = vunpack.c.l.b16 %v6579
  %v7387 = vunpack.c.l.b16 %v6580
  %v7388 = vunpack.c.l.b16 %v6581
  %v7389 = vunpack.c.l.b16 %v6582
  %v7390 = vunpack.c.l.b16 %v6583
  %v7391 = vunpack.c.l.b16 %v6584
  %v7392 = vunpack.c.l.b16 %v6585
  %v7393 = vunpack.c.l.b16 %v6586
  %v7394 = vunpack.c.l.b16 %v6587
  %v7395 = vunpack.c.l.b16 %v6588
  %v7396 = vunpack.c.l.b16 %v6589
  %v7397 = vunpack.c.l.b16 %v6590
  %v7398 = vunpack.c.l.b16 %v6591
  %v7399 = vunpack.c.l.b16 %v6592
  %v7400 = vunpack.c.l.b16 %v6593
  %v7401 = vunpack.c.l.b16 %v6594
  %v7402 = vunpack.c.l.b16 %v6595
  %v7403 = vunpack.c.l.b16 %v6596
  %v7404 = vunpack.c.l.b16 %v6597
  %v7405 = vunpack.c.l.b16 %v6598
  %v7406 = vunpack.c.l.b16 %v6599
  %v7407 = vunpack.c.l.b16 %v6600
  %v7408 = vunpack.c.l.b16 %v6601
  %v7409 = vunpack.c.l.b16 %v6602
  %v7410 = vunpack.c.l.b16 %v6603
  %v7411 = vunpack.c.l.b16 %v6604
  %v7412 = vunpack.c.l.b16 %v6605
  %v7413 = vunpack.c.l.b16 %v6606
  %v7414 = vunpack.c.l.b16 %v6607
  %v7415 = vunpack.c.l.b16 %v6608
  %v7416 = vunpack.c.l.b16 %v6609
  %v7417 = vunpack.c.l.b16 %v6610
  %v7418 = vunpack.c.l.b16 %v6611
  %v7419 = vunpack.c.l.b16 %v6612
  %v7420 = vunpack.c.l.b16 %v6613
  %v7421 = vunpack.c.l.b16 %v6614
  %v7422 = vunpack.c.l.b16 %v6615
  %v7423 = vunpack.c.l.b16 %v6616
  %v7424 = vunpack.c.l.b16 %v6617
  %v7425 = vunpack.c.l.b16 %v6618
  %v7426 = vunpack.c.l.b16 %v6619
  %v7427 = vunpack.c.l.b16 %v6620
  %v7428 = vunpack.c.l.b16 %v6621
  %v7429 = vunpack.c.l.b16 %v6622
  %v7430 = vunpack.c.l.b16 %v6623
  %v7431 = vunpack.c.l.b16 %v6624
  %v7432 = vunpack.c.l.b16 %v6625
  %v7433 = vunpack.c.l.b16 %v6626
  %v7434 = vunpack.c.l.b16 %v6627
  %v7435 = vunpack.c.l.b16 %v6628
  %v7436 = vunpack.c.l.b16 %v6629
  %v7437 = vunpack.c.l.b16 %v6630
  %v7438 = vunpack.c.l.b16 %v6631
  %v7439 = vunpack.c.l.b16 %v6632
  %v7440 = vunpack.c.l.b16 %v6633
  %v7441 = vunpack.c.l.b16 %v6634
  %v7442 = vunpack.c.l.b16 %v6635
  %v7443 = vunpack.c.l.b16 %v6636
  %v7444 = vunpack.c.l.b16 %v6637
  %v7445 = vunpack.c.l.b16 %v6638
  %v7446 = vunpack.c.l.b16 %v6639
  %v7447 = vunpack.c.l.b16 %v6640
  %v7448 = vunpack.c.l.b16 %v6641
  %v7449 = vunpack.c.l.b16 %v6642
  %v7450 = vunpack.c.l.b16 %v6643
  %v7451 = vunpack.c.l.b16 %v6644
  %v7452 = vunpack.c.l.b16 %v6645
  %v7453 = vunpack.c.l.b16 %v6646
  %v7454 = vunpack.c.l.b16 %v6647
  %v7455 = vunpack.c.l.b16 %v6648
  %v7456 = vunpack.c.l.b16 %v6649
  %v7457 = vunpack.c.l.b16 %v6650
  %v7458 = vunpack.c.l.b16 %v6651
  %v7459 = vunpack.c.l.b16 %v6652
  %v7460 = vunpack.c.l.b16 %v6653
  %v7461 = vunpack.c.l.b16 %v6654
  %v7462 = vunpack.c.l.b16 %v6655
  %v7463 = vunpack.c.l.b16 %v6656
  %v7464 = vunpack.c.l.b16 %v6657
  %v7465 = vunpack.c.l.b16 %v6658
  %v7466 = vunpack.c.l.b16 %v6659
  %v7467 = vunpack.c.l.b16 %v6660
  %v7468 = vunpack.c.l.b16 %v6661
  %v7469 = vunpack.c.l.b16 %v6662
  %v7470 = vunpack.c.l.b16 %v6663
  %v7471 = vunpack.c.l.b16 %v6664
  %v7472 = vunpack.c.l.b16 %v6665
  %v7473 = vunpack.c.l.b16 %v6666
  %v7474 = vunpack.c.l.b16 %v6667
  %v7475 = vunpack.c.l.b16 %v6668
  %v7476 = vunpack.c.l.b16 %v6669
  %v7477 = vunpack.c.l.b16 %v6670
  %v7478 = vunpack.c.l.b16 %v6671
  %v7479 = vunpack.c.l.b16 %v6672
  %v7480 = vunpack.c.l.b16 %v6673
  %v7481 = vunpack.c.l.b16 %v6674
  %v7482 = vunpack.c.l.b16 %v6675
  %v7483 = vunpack.c.l.b16 %v6676
  %v7484 = vunpack.c.l.b16 %v6677
  %v7485 = vunpack.c.l.b16 %v6678
  %v7486 = vunpack.c.l.b16 %v6679
  %v7487 = vunpack.c.l.b16 %v6680
  %v7488 = vunpack.c.l.b16 %v6681
  %v7489 = vunpack.c.l.b16 %v6682
  %v7490 = vunpack.c.l.b16 %v6683
  %v7491 = vunpack.c.l.b16 %v6684
  %v7492 = vunpack.c.l.b16 %v6685
  %v7493 = vunpack.c.l.b16 %v6686
  %v7494 = vunpack.c.l.b16 %v6687
  %v7495 = vunpack.c.l.b16 %v6688
  %v7496 = vunpack.c.l.b16 %v6689
  %v7497 = vunpack.c.l.b16 %v6690
  %v7498 = vunpack.c.l.b16 %v6691
  %v7499 = vunpack.c.l.b16 %v6692
  %v7500 = vunpack.c.l.b16 %v6693
  %v7501 = vunpack.c.l.b16 %v6694
  %v7502 = vunpack.c.l.b16 %v6695
  %v7503 = vunpack.c.l.b16 %v6696
  %v7504 = vunpack.c.l.b16 %v6697
  %v7505 = vunpack.c.l.b16 %v6698
  %v7506 = vunpack.c.l.b16 %v6699
  %v7507 = vunpack.c.l.b16 %v6700
  %v7508 = vunpack.c.l.b16 %v6701
  %v7509 = vunpack.c.l.b16 %v6702
  %v7510 = vunpack.c.l.b16 %v6703
  %v7511 = vunpack.c.l.b16 %v6704
  %v7512 = vunpack.c.l.b16 %v6705
  %v7513 = vunpack.c.l.b16 %v6706
  %v7514 = vunpack.c.l.b16 %v6707
  %v7515 = vunpack.c.l.b16 %v6708
  %v7516 = vunpack.c.l.b16 %v6709
  %v7517 = vunpack.c.l.b16 %v6710
  %v7518 = vunpack.c.l.b16 %v6711
  %v7519 = vunpack.c.l.b16 %v6712
  %v7520 = vunpack.c.l.b16 %v6713
  %v7521 = vunpack.c.l.b16 %v6714
  %v7522 = vunpack.c.l.b16 %v6715
  %v7523 = vunpack.c.l.b16 %v6716
  %v7524 = vunpack.c.l.b16 %v6717
  %v7525 = vunpack.c.l.b16 %v6718
  %v7526 = vunpack.c.l.b16 %v6719
  %v7527 = vunpack.c.l.b16 %v6720
  %v7528 = vunpack.c.l.b16 %v6721
  %v7529 = vunpack.c.l.b16 %v6722
  %v7530 = vunpack.c.l.b16 %v6723
  %v7531 = vunpack.c.l.b16 %v6724
  %v7532 = vunpack.c.l.b16 %v6725
  %v7533 = vunpack.c.l.b16 %v6726
  %v7534 = vunpack.c.l.b16 %v6727
  %v7535 = vunpack.c.l.b16 %v6728
  %v7536 = vunpack.c.l.b16 %v6729
  %v7537 = vunpack.c.l.b16 %v6730
  %v7538 = vunpack.c.l.b16 %v6731
  %v7539 = vunpack.c.l.b16 %v6732
  %v7540 = vunpack.c.l.b16 %v6733
  %v7541 = vunpack.c.l.b16 %v6734
  %v7542 = vunpack.c.l.b16 %v6735
  %v7543 = vunpack.c.l.b16 %v6736
  %v7544 = vunpack.c.l.b16 %v6737
  %v7545 = vunpack.c.l.b16 %v6738
  %v7546 = vunpack.c.l.b16 %v6739
  %v7547 = vunpack.c.l.b16 %v6740
  %v7548 = vunpack.c.l.b16 %v6741
  %v7549 = vunpack.c.l.b16 %v6742
  %v7550 = vunpack.c.l.b16 %v6743
  %v7551 = vunpack.c.l.b16 %v6744
  %v7552 = vunpack.c.l.b16 %v6745
  %v7553 = vunpack.c.l.b16 %v6746
  %v7554 = vunpack.c.l.b16 %v6747
  %v7555 = vunpack.c.l.b16 %v6748
  %v7556 = vunpack.c.l.b16 %v6749
  %v7557 = vunpack.c.l.b16 %v6750
  %v7558 = vunpack.c.l.b16 %v6751
  %v7559 = vunpack.c.l.b16 %v6752
  %v7560 = vunpack.c.l.b16 %v6753
  %v7561 = vunpack.c.l.b16 %v6754
  %v7562 = vunpack.c.l.b16 %v6755
  %v7563 = vunpack.c.l.b16 %v6756
  %v7564 = vunpack.c.l.b16 %v6757
  %v7565 = vunpack.c.l.b16 %v6758
  %v7566 = vunpack.c.l.b16 %v6759
  %v7567 = vunpack.c.l.b16 %v6760
  %v7568 = vunpack.c.l.b16 %v6761
  %v7569 = vunpack.c.l.b16 %v6762
  %v7570 = vunpack.c.l.b16 %v6763
  %v7571 = vunpack.c.l.b16 %v6764
  %v7572 = vunpack.c.l.b16 %v6765
  %v7573 = vunpack.c.l.b16 %v6766
  %v7574 = vunpack.c.l.b16 %v6767
  %v7575 = vunpack.c.l.b16 %v6768
  %v7576 = vunpack.c.l.b16 %v6769
  %v7577 = vunpack.c.l.b16 %v6770
  %v7578 = vunpack.c.l.b16 %v6771
  %v7579 = vunpack.c.l.b16 %v6772
  %v7580 = vunpack.c.l.b16 %v6773
  %v7581 = vunpack.c.l.b16 %v6774
  %v7582 = vunpack.c.l.b16 %v6775
  %v7583 = vunpack.c.l.b16 %v6776
  %v7584 = vunpack.c.l.b16 %v6777
  %v7585 = vunpack.c.l.b16 %v6778
  %v7586 = vunpack.c.l.b16 %v6779
  %v7587 = vunpack.c.l.b16 %v6780
  %v7588 = vunpack.c.l.b16 %v6781
  %v7589 = vunpack.c.l.b16 %v6782
  %v7590 = vunpack.c.l.b16 %v6783
  %v7591 = vunpack.c.l.b16 %v6784
  %v7592 = vunpack.c.l.b16 %v6785
  %v7593 = vunpack.c.l.b16 %v6786
  %v7594 = vunpack.c.l.b16 %v6787
  %v7595 = vunpack.c.l.b16 %v6788
  %v7596 = vunpack.c.l.b16 %v6789
  %v7597 = vunpack.c.l.b16 %v6790
  %v7598 = vunpack.c.l.b16 %v6791
  %v7599 = vunpack.c.l.b16 %v6792
  %v7600 = vunpack.c.l.b16 %v6793
  %v7601 = vunpack.c.l.b16 %v6794
  %v7602 = vunpack.c.l.b16 %v6795
  %v7603 = vunpack.c.l.b16 %v6796
  %v7604 = vunpack.c.l.b16 %v6797
  %v7605 = vunpack.c.l.b16 %v6798
  %v7606 = vunpack.c.l.b16 %v6799
  %v7607 = vunpack.c.l.b16 %v6800
  %v7608 = vunpack.c.l.b16 %v6801
  %v7609 = vunpack.c.l.b16 %v6802
  %v7610 = vunpack.c.l.b16 %v6803
  %v7611 = vunpack.c.l.b16 %v6804
  %v7612 = vunpack.c.l.b16 %v6805
  %v7613 = vunpack.c.l.b16 %v6806
  %v7614 = vunpack.c.l.b16 %v6807
  %v7615 = vunpack.c.l.b16 %v6808
  %v7616 = vunpack.c.l.b16 %v6809
  %v7617 = vunpack.c.l.b16 %v6810
  %v7618 = vunpack.c.l.b16 %v6811
  %v7619 = vunpack.c.l.b16 %v6812
  %v7620 = vunpack.c.l.b16 %v6813
  %v7621 = vunpack.c.l.b16 %v6814
  %v7622 = vunpack.c.l.b16 %v6815
  %v7623 = vunpack.c.l.b16 %v6816
  %v7624 = vunpack.c.l.b16 %v6817
  %v7625 = vunpack.c.l.b16 %v6818
  %v7626 = vunpack.c.l.b16 %v6819
  %v7627 = vunpack.c.l.b16 %v6820
  %v7628 = vunpack.c.l.b16 %v6821
  %v7629 = vunpack.c.l.b16 %v6822
  %v7630 = vunpack.c.l.b16 %v6823
  %v7631 = vunpack.c.l.b16 %v6824
  %v7632 = vunpack.c.l.b16 %v6825
  %v7633 = vunpack.c.l.b16 %v6826
  %v7634 = vunpack.c.l.b16 %v6827
  %v7635 = vunpack.c.l.b16 %v6828
  %v7636 = vunpack.c.l.b16 %v6829
  %v7637 = vunpack.c.l.b16 %v6830
  %v7638 = vunpack.c.l.b16 %v6831
  %v7639 = vunpack.c.l.b16 %v6832
  %v7640 = vunpack.c.l.b16 %v6833
  %v7641 = vunpack.c.l.b16 %v6834
  %v7642 = vunpack.c.l.b16 %v6835
  %v7643 = vunpack.c.l.b16 %v6836
  %v7644 = vunpack.c.l.b16 %v6837
  %v7645 = vunpack.c.l.b16 %v6838
  %v7646 = vunpack.c.l.b16 %v6839
  %v7647 = vunpack.c.l.b16 %v6840
  %v7648 = vunpack.c.l.b16 %v6841
  %v7649 = vunpack.c.l.b16 %v6842
  %v7650 = vunpack.c.l.b16 %v6843
  %v7651 = vunpack.c.l.b16 %v6844
  %v7652 = vunpack.c.l.b16 %v6845
  %v7653 = vunpack.c.l.b16 %v6846
  %v7654 = vunpack.c.l.b16 %v6847
  %v7655 = vunpack.c.l.b16 %v6848
  %v7656 = vunpack.c.l.b16 %v6849
  %v7657 = vunpack.c.l.b16 %v6850
  %v7658 = vunpack.c.l.b16 %v6851
  %v7659 = vunpack.c.l.b16 %v6852
  %v7660 = vunpack.c.l.b16 %v6853
  %v7661 = vunpack.c.l.b16 %v6854
  %v7662 = vunpack.c.l.b16 %v6855
  %v7663 = vunpack.c.l.b16 %v6856
  %v7664 = vunpack.c.l.b16 %v6857
  %v7665 = vunpack.c.l.b16 %v6858
  %v7666 = vunpack.c.l.b16 %v6859
  %v7667 = vunpack.c.l.b16 %v6860
  %v7668 = vunpack.c.l.b16 %v6861
  %v7669 = vunpack.c.l.b16 %v6862
  %v7670 = vunpack.c.l.b16 %v6863
  %v7671 = vunpack.c.l.b16 %v6864
  %v7672 = vunpack.c.l.b16 %v6865
  %v7673 = vunpack.c.l.b16 %v6866
  %v7674 = vunpack.c.l.b16 %v6867
  %v7675 = vunpack.c.l.b16 %v6868
  %v7676 = vunpack.c.l.b16 %v6869
  %v7677 = vunpack.c.l.b16 %v6870
  %v7678 = vunpack.c.l.b16 %v6871
  %v7679 = vunpack.c.l.b16 %v6872
  %v7680 = vunpack.c.l.b16 %v6873
  %v7681 = vunpack.c.l.b16 %v6874
  %v7682 = vunpack.c.l.b16 %v6875
  %v7683 = vunpack.c.l.b16 %v6876
  %v7684 = vunpack.c.l.b16 %v6877
  %v7685 = vunpack.c.l.b16 %v6878
  %v7686 = vunpack.c.l.b16 %v6879
  %v7687 = vunpack.c.l.b16 %v6880
  %v7688 = vunpack.c.l.b16 %v6881
  %v7689 = vunpack.c.l.b16 %v6882
  %v7690 = vunpack.c.l.b16 %v6883
  %v7691 = vunpack.c.l.b16 %v6884
  %v7692 = vunpack.c.l.b16 %v6885
  %v7693 = vunpack.c.l.b16 %v6886
  %v7694 = vunpack.c.l.b16 %v6887
  %v7695 = vunpack.c.l.b16 %v6888
  %v7696 = vunpack.c.l.b16 %v6889
  %v7697 = vunpack.c.l.b16 %v6890
  %v7698 = vunpack.c.l.b16 %v6891
  %v7699 = vunpack.c.l.b16 %v6892
  %v7700 = vunpack.c.l.b16 %v6893
  %v7701 = vunpack.c.l.b16 %v6894
  %v7702 = vunpack.c.l.b16 %v6895
  %v7703 = vunpack.c.l.b16 %v6896
  %v7704 = vunpack.c.l.b16 %v6897
  %v7705 = vunpack.c.l.b16 %v6898
  %v7706 = vunpack.c.l.b16 %v6899
  %v7707 = vunpack.c.l.b16 %v6900
  %v7708 = vunpack.c.l.b16 %v6901
  %v7709 = vunpack.c.l.b16 %v6902
  %v7710 = vunpack.c.l.b16 %v6903
  %v7711 = vunpack.c.l.b16 %v6904
  %v7712 = vunpack.c.l.b16 %v6905
  %v7713 = vunpack.c.l.b16 %v6906
  %v7714 = vpack.c.b16 %v7315, %v7314
  %v7715 = vpack.c.b16 %v7317, %v7316
  %v7716 = vpack.c.b16 %v7319, %v7318
  %v7717 = vpack.c.b16 %v7321, %v7320
  %v7718 = vpack.c.b16 %v7323, %v7322
  %v7719 = vpack.c.b16 %v7325, %v7324
  %v7720 = vpack.c.b16 %v7327, %v7326
  %v7721 = vpack.c.b16 %v7329, %v7328
  %v7722 = vpack.c.b16 %v7331, %v7330
  %v7723 = vpack.c.b16 %v7333, %v7332
  %v7724 = vpack.c.b16 %v7335, %v7334
  %v7725 = vpack.c.b16 %v7337, %v7336
  %v7726 = vpack.c.b16 %v7339, %v7338
  %v7727 = vpack.c.b16 %v7341, %v7340
  %v7728 = vpack.c.b16 %v7343, %v7342
  %v7729 = vpack.c.b16 %v7345, %v7344
  %v7730 = vpack.c.b16 %v7347, %v7346
  %v7731 = vpack.c.b16 %v7349, %v7348
  %v7732 = vpack.c.b16 %v7351, %v7350
  %v7733 = vpack.c.b16 %v7353, %v7352
  %v7734 = vpack.c.b16 %v7355, %v7354
  %v7735 = vpack.c.b16 %v7357, %v7356
  %v7736 = vpack.c.b16 %v7359, %v7358
  %v7737 = vpack.c.b16 %v7361, %v7360
  %v7738 = vpack.c.b16 %v7363, %v7362
  %v7739 = vpack.c.b16 %v7365, %v7364
  %v7740 = vpack.c.b16 %v7367, %v7366
  %v7741 = vpack.c.b16 %v7369, %v7368
  %v7742 = vpack.c.b16 %v7371, %v7370
  %v7743 = vpack.c.b16 %v7373, %v7372
  %v7744 = vpack.c.b16 %v7375, %v7374
  %v7745 = vpack.c.b16 %v7377, %v7376
  %v7746 = vpack.c.b16 %v7379, %v7378
  %v7747 = vpack.c.b16 %v7381, %v7380
  %v7748 = vpack.c.b16 %v7383, %v7382
  %v7749 = vpack.c.b16 %v7385, %v7384
  %v7750 = vpack.c.b16 %v7387, %v7386
  %v7751 = vpack.c.b16 %v7389, %v7388
  %v7752 = vpack.c.b16 %v7391, %v7390
  %v7753 = vpack.c.b16 %v7393, %v7392
  %v7754 = vpack.c.b16 %v7395, %v7394
  %v7755 = vpack.c.b16 %v7397, %v7396
  %v7756 = vpack.c.b16 %v7399, %v7398
  %v7757 = vpack.c.b16 %v7401, %v7400
  %v7758 = vpack.c.b16 %v7403, %v7402
  %v7759 = vpack.c.b16 %v7405, %v7404
  %v7760 = vpack.c.b16 %v7407, %v7406
  %v7761 = vpack.c.b16 %v7409, %v7408
  %v7762 = vpack.c.b16 %v7411, %v7410
  %v7763 = vpack.c.b16 %v7413, %v7412
  %v7764 = vpack.c.b16 %v7415, %v7414
  %v7765 = vpack.c.b16 %v7417, %v7416
  %v7766 = vpack.c.b16 %v7419, %v7418
  %v7767 = vpack.c.b16 %v7421, %v7420
  %v7768 = vpack.c.b16 %v7423, %v7422
  %v7769 = vpack.c.b16 %v7425, %v7424
  %v7770 = vpack.c.b16 %v7427, %v7426
  %v7771 = vpack.c.b16 %v7429, %v7428
  %v7772 = vpack.c.b16 %v7431, %v7430
  %v7773 = vpack.c.b16 %v7433, %v7432
  %v7774 = vpack.c.b16 %v7435, %v7434
  %v7775 = vpack.c.b16 %v7437, %v7436
  %v7776 = vpack.c.b16 %v7439, %v7438
  %v7777 = vpack.c.b16 %v7441, %v7440
  %v7778 = vpack.c.b16 %v7443, %v7442
  %v7779 = vpack.c.b16 %v7445, %v7444
  %v7780 = vpack.c.b16 %v7447, %v7446
  %v7781 = vpack.c.b16 %v7449, %v7448
  %v7782 = vpack.c.b16 %v7451, %v7450
  %v7783 = vpack.c.b16 %v7453, %v7452
  %v7784 = vpack.c.b16 %v7455, %v7454
  %v7785 = vpack.c.b16 %v7457, %v7456
  %v7786 = vpack.c.b16 %v7459, %v7458
  %v7787 = vpack.c.b16 %v7461, %v7460
  %v7788 = vpack.c.b16 %v7463, %v7462
  %v7789 = vpack.c.b16 %v7465, %v7464
  %v7790 = vpack.c.b16 %v7467, %v7466
  %v7791 = vpack.c.b16 %v7469, %v7468
  %v7792 = vpack.c.b16 %v7471, %v7470
  %v7793 = vpack.c.b16 %v7473, %v7472
  %v7794 = vpack.c.b16 %v7475, %v7474
  %v7795 = vpack.c.b16 %v7477, %v7476
  %v7796 = vpack.c.b16 %v7479, %v7478
  %v7797 = vpack.c.b16 %v7481, %v7480
  %v7798 = vpack.c.b16 %v7483, %v7482
  %v7799 = vpack.c.b16 %v7485, %v7484
  %v7800 = vpack.c.b16 %v7487, %v7486
  %v7801 = vpack.c.b16 %v7489, %v7488
  %v7802 = vpack.c.b16 %v7491, %v7490
  %v7803 = vpack.c.b16 %v7493, %v7492
  %v7804 = vpack.c.b16 %v7495, %v7494
  %v7805 = vpack.c.b16 %v7497, %v7496
  %v7806 = vpack.c.b16 %v7499, %v7498
  %v7807 = vpack.c.b16 %v7501, %v7500
  %v7808 = vpack.c.b16 %v7503, %v7502
  %v7809 = vpack.c.b16 %v7505, %v7504
  %v7810 = vpack.c.b16 %v7507, %v7506
  %v7811 = vpack.c.b16 %v7509, %v7508
  %v7812 = vpack.c.b16 %v7511, %v7510
  %v7813 = vpack.c.b16 %v7513, %v7512
  %v7814 = vpack.c.b16 %v7515, %v7514
  %v7815 = vpack.c.b16 %v7517, %v7516
  %v7816 = vpack.c.b16 %v7519, %v7518
  %v7817 = vpack.c.b16 %v7521, %v7520
  %v7818 = vpack.c.b16 %v7523, %v7522
  %v7819 = vpack.c.b16 %v7525, %v7524
  %v7820 = vpack.c.b16 %v7527, %v7526
  %v7821 = vpack.c.b16 %v7529, %v7528
  %v7822 = vpack.c.b16 %v7531, %v7530
  %v7823 = vpack.c.b16 %v7533, %v7532
  %v7824 = vpack.c.b16 %v7535, %v7534
  %v7825 = vpack.c.b16 %v7537, %v7536
  %v7826 = vpack.c.b16 %v7539, %v7538
  %v7827 = vpack.c.b16 %v7541, %v7540
  %v7828 = vpack.c.b16 %v7543, %v7542
  %v7829 = vpack.c.b16 %v7545, %v7544
  %v7830 = vpack.c.b16 %v7547, %v7546
  %v7831 = vpack.c.b16 %v7549, %v7548
  %v7832 = vpack.c.b16 %v7551, %v7550
  %v7833 = vpack.c.b16 %v7553, %v7552
  %v7834 = vpack.c.b16 %v7555, %v7554
  %v7835 = vpack.c.b16 %v7557, %v7556
  %v7836 = vpack.c.b16 %v7559, %v7558
  %v7837 = vpack.c.b16 %v7561, %v7560
  %v7838 = vpack.c.b16 %v7563, %v7562
  %v7839 = vpack.c.b16 %v7565, %v7564
  %v7840 = vpack.c.b16 %v7567, %v7566
  %v7841 = vpack.c.b16 %v7569, %v7568
  %v7842 = vpack.c.b16 %v7571, %v7570
  %v7843 = vpack.c.b16 %v7573, %v7572
  %v7844 = vpack.c.b16 %v7575, %v7574
  %v7845 = vpack.c.b16 %v7577, %v7576
  %v7846 = vpack.c.b16 %v7579, %v7578
  %v7847 = vpack.c.b16 %v7581, %v7580
  %v7848 = vpack.c.b16 %v7583, %v7582
  %v7849 = vpack.c.b16 %v7585, %v7584
  %v7850 = vpack.c.b16 %v7587, %v7586
  %v7851 = vpack.c.b16 %v7589, %v7588
  %v7852 = vpack.c.b16 %v7591, %v7590
  %v7853 = vpack.c.b16 %v7593, %v7592
  %v7854 = vpack.c.b16 %v7595, %v7594
  %v7855 = vpack.c.b16 %v7597, %v7596
  %v7856 = vpack.c.b16 %v7599, %v7598
  %v7857 = vpack.c.b16 %v7601, %v7600
  %v7858 = vpack.c.b16 %v7603, %v7602
  %v7859 = vpack.c.b16 %v7605, %v7604
  %v7860 = vpack.c.b16 %v7607, %v7606
  %v7861 = vpack.c.b16 %v7609, %v7608
  %v7862 = vpack.c.b16 %v7611, %v7610
  %v7863 = vpack.c.b16 %v7613, %v7612
  %v7864 = vpack.c.b16 %v7615, %v7614
  %v7865 = vpack.c.b16 %v7617, %v7616
  %v7866 = vpack.c.b16 %v7619, %v7618
  %v7867 = vpack.c.b16 %v7621, %v7620
  %v7868 = vpack.c.b16 %v7623, %v7622
  %v7869 = vpack.c.b16 %v7625, %v7624
  %v7870 = vpack.c.b16 %v7627, %v7626
  %v7871 = vpack.c.b16 %v7629, %v7628
  %v7872 = vpack.c.b16 %v7631, %v7630
  %v7873 = vpack.c.b16 %v7633, %v7632
  %v7874 = vpack.c.b16 %v7635, %v7634
  %v7875 = vpack.c.b16 %v7637, %v7636
  %v7876 = vpack.c.b16 %v7639, %v7638
  %v7877 = vpack.c.b16 %v7641, %v7640
  %v7878 = vpack.c.b16 %v7643, %v7642
  %v7879 = vpack.c.b16 %v7645, %v7644
  %v7880 = vpack.c.b16 %v7647, %v7646
  %v7881 = vpack.c.b16 %v7649, %v7648
  %v7882 = vpack.c.b16 %v7651, %v7650
  %v7883 = vpack.c.b16 %v7653, %v7652
  %v7884 = vpack.c.b16 %v7655, %v7654
  %v7885 = vpack.c.b16 %v7657, %v7656
  %v7886 = vpack.c.b16 %v7659, %v7658
  %v7887 = vpack.c.b16 %v7661, %v7660
  %v7888 = vpack.c.b16 %v7663, %v7662
  %v7889 = vpack.c.b16 %v7665, %v7664
  %v7890 = vpack.c.b16 %v7667, %v7666
  %v7891 = vpack.c.b16 %v7669, %v7668
  %v7892 = vpack.c.b16 %v7671, %v7670
  %v7893 = vpack.c.b16 %v7673, %v7672
  %v7894 = vpack.c.b16 %v7675, %v7674
  %v7895 = vpack.c.b16 %v7677, %v7676
  %v7896 = vpack.c.b16 %v7679, %v7678
  %v7897 = vpack.c.b16 %v7681, %v7680
  %v7898 = vpack.c.b16 %v7683, %v7682
  %v7899 = vpack.c.b16 %v7685, %v7684
  %v7900 = vpack.c.b16 %v7687, %v7686
  %v7901 = vpack.c.b16 %v7689, %v7688
  %v7902 = vpack.c.b16 %v7691, %v7690
  %v7903 = vpack.c.b16 %v7693, %v7692
  %v7904 = vpack.c.b16 %v7695, %v7694
  %v7905 = vpack.c.b16 %v7697, %v7696
  %v7906 = vpack.c.b16 %v7699, %v7698
  %v7907 = vpack.c.b16 %v7701, %v7700
  %v7908 = vpack.c.b16 %v7703, %v7702
  %v7909 = vpack.c.b16 %v7705, %v7704
  %v7910 = vpack.c.b16 %v7707, %v7706
  %v7911 = vpack.c.b16 %v7709, %v7708
  %v7912 = vpack.c.b16 %v7711, %v7710
  %v7913 = vpack.c.b16 %v7713, %v7712
  %8114 = vmatprep.subr.bf16.mxu0 0
  %8115 = vmatpush1.bf16.msra.mxu0 %v7714
  %8116 = vmatprep.subr.bf16.mxu0 0
  %8117 = vmatpush1.bf16.msra.mxu0 %v7715
  %8118 = vmatprep.subr.bf16.mxu0 0
  %8119 = vmatpush1.bf16.msra.mxu0 %v7716
  %8120 = vmatprep.subr.bf16.mxu0 0
  %8121 = vmatpush1.bf16.msra.mxu0 %v7717
  %8122 = vmatprep.subr.bf16.mxu0 0
  %8123 = vmatpush1.bf16.msra.mxu0 %v7718
  %8124 = vmatprep.subr.bf16.mxu0 0
  %8125 = vmatpush1.bf16.msra.mxu0 %v7719
  %8126 = vmatprep.subr.bf16.mxu0 0
  %8127 = vmatpush1.bf16.msra.mxu0 %v7720
  %8128 = vmatprep.subr.bf16.mxu0 0
  %8129 = vmatpush1.bf16.msra.mxu0 %v7721
  %8130 = vmatprep.subr.bf16.mxu0 0
  %8131 = vmatpush1.bf16.msra.mxu0 %v7722
  %8132 = vmatprep.subr.bf16.mxu0 0
  %8133 = vmatpush1.bf16.msra.mxu0 %v7723
  %8134 = vmatprep.subr.bf16.mxu0 0
  %8135 = vmatpush1.bf16.msra.mxu0 %v7724
  %8136 = vmatprep.subr.bf16.mxu0 0
  %8137 = vmatpush1.bf16.msra.mxu0 %v7725
  %8138 = vmatprep.subr.bf16.mxu0 0
  %8139 = vmatpush1.bf16.msra.mxu0 %v7726
  %8140 = vmatprep.subr.bf16.mxu0 0
  %8141 = vmatpush1.bf16.msra.mxu0 %v7727
  %8142 = vmatprep.subr.bf16.mxu0 0
  %8143 = vmatpush1.bf16.msra.mxu0 %v7728
  %8144 = vmatprep.subr.bf16.mxu0 0
  %8145 = vmatpush1.bf16.msra.mxu0 %v7729
  %8146 = vmatprep.mubr.bf16.mxu0 %v6308
  %8147 = vmatmul.mubr.bf16.gmra.mrb[0].mxu0 %v6307
  %v8148 = vpop.f32.mrb[0].mxu0
  %v8149 = vadd.f32 %v6912, %v8148
  %v8150 = vpop.f32.mrb[0].mxu0
  %v8151 = vpop.f32.mrb[0].mxu0
  %v8152 = vadd.f32 %v6912, %v8151
  %v8153 = vpop.f32.mrb[0].mxu0
  %8154 = vmatprep.mubr.bf16.mxu0 %v6333
  %8155 = vmatmul.mubr.bf16.gmra.mrb[0].mxu0 %v6332
  %v8156 = vpop.f32.mrb[0].mxu0
  %v8157 = vadd.f32 %v6912, %v8156
  %v8158 = vpop.f32.mrb[0].mxu0
  %v8159 = vpop.f32.mrb[0].mxu0
  %v8160 = vadd.f32 %v6912, %v8159
  %v8161 = vpop.f32.mrb[0].mxu0
  %8162 = vmatprep.mubr.bf16.mxu0 %v6358
  %8163 = vmatmul.mubr.bf16.gmra.mrb[0].mxu0 %v6357
  %v8164 = vpop.f32.mrb[0].mxu0
  %v8165 = vadd.f32 %v6912, %v8164
  %v8166 = vpop.f32.mrb[0].mxu0
  %v8167 = vpop.f32.mrb[0].mxu0
  %v8168 = vadd.f32 %v6912, %v8167
  %v8169 = vpop.f32.mrb[0].mxu0
  %8170 = vmatprep.mubr.bf16.mxu0 %v6383
  %8171 = vmatmul.mubr.bf16.gmra.mrb[0].mxu0 %v6382
  %v8172 = vpop.f32.mrb[0].mxu0
  %v8173 = vadd.f32 %v6912, %v8172
  %v8174 = vpop.f32.mrb[0].mxu0
  %v8175 = vpop.f32.mrb[0].mxu0
  %v8176 = vadd.f32 %v6912, %v8175
  %v8177 = vpop.f32.mrb[0].mxu0
  %8178 = vmatprep.mubr.bf16.mxu0 %v6408
  %8179 = vmatmul.mubr.bf16.gmra.mrb[0].mxu0 %v6407
  %v8180 = vpop.f32.mrb[0].mxu0
  %v8181 = vadd.f32 %v6912, %v8180
  %v8182 = vpop.f32.mrb[0].mxu0
  %v8183 = vpop.f32.mrb[0].mxu0
  %v8184 = vadd.f32 %v6912, %v8183
  %v8185 = vpop.f32.mrb[0].mxu0
  %8186 = vmatprep.mubr.bf16.mxu0 %v6433
  %8187 = vmatmul.mubr.bf16.gmra.mrb[0].mxu0 %v6432
  %v8188 = vpop.f32.mrb[0].mxu0
  %v8189 = vadd.f32 %v6912, %v8188
  %v8190 = vpop.f32.mrb[0].mxu0
  %v8191 = vpop.f32.mrb[0].mxu0
  %v8192 = vadd.f32 %v6912, %v8191
  %v8193 = vpop.f32.mrb[0].mxu0
  %8194 = vmatprep.mubr.bf16.mxu0 %v6458
  %8195 = vmatmul.mubr.bf16.gmra.mrb[0].mxu0 %v6457
  %v8196 = vpop.f32.mrb[0].mxu0
  %v8197 = vadd.f32 %v6912, %v8196
  %v8198 = vpop.f32.mrb[0].mxu0
  %v8199 = vpop.f32.mrb[0].mxu0
  %v8200 = vadd.f32 %v6912, %v8199
  %v8201 = vpop.f32.mrb[0].mxu0
  %8202 = vmatprep.mubr.bf16.mxu0 %v6483
  %8203 = vmatmul.mubr.bf16.gmra.mrb[0].mxu0 %v6482
  %v8204 = vpop.f32.mrb[0].mxu0
  %v8205 = vadd.f32 %v6912, %v8204
  %v8206 = vpop.f32.mrb[0].mxu0
  %v8207 = vpop.f32.mrb[0].mxu0
  %v8208 = vadd.f32 %v6912, %v8207
  %v8209 = vpop.f32.mrb[0].mxu0
  %8210 = vdwg.mxu0
  %8211 = vmatprep.subr.bf16.mxu0 0
  %8212 = vmatpush1.bf16.msra.mxu0 %v7730
  %8213 = vmatprep.subr.bf16.mxu0 0
  %8214 = vmatpush1.bf16.msra.mxu0 %v7731
  %8215 = vmatprep.subr.bf16.mxu0 0
  %8216 = vmatpush1.bf16.msra.mxu0 %v7732
  %8217 = vmatprep.subr.bf16.mxu0 0
  %8218 = vmatpush1.bf16.msra.mxu0 %v7733
  %8219 = vmatprep.subr.bf16.mxu0 0
  %8220 = vmatpush1.bf16.msra.mxu0 %v7734
  %8221 = vmatprep.subr.bf16.mxu0 0
  %8222 = vmatpush1.bf16.msra.mxu0 %v7735
  %8223 = vmatprep.subr.bf16.mxu0 0
  %8224 = vmatpush1.bf16.msra.mxu0 %v7736
  %8225 = vmatprep.subr.bf16.mxu0 0
  %8226 = vmatpush1.bf16.msra.mxu0 %v7737
  %8227 = vmatprep.subr.bf16.mxu0 0
  %8228 = vmatpush1.bf16.msra.mxu0 %v7738
  %8229 = vmatprep.subr.bf16.mxu0 0
  %8230 = vmatpush1.bf16.msra.mxu0 %v7739
  %8231 = vmatprep.subr.bf16.mxu0 0
  %8232 = vmatpush1.bf16.msra.mxu0 %v7740
  %8233 = vmatprep.subr.bf16.mxu0 0
  %8234 = vmatpush1.bf16.msra.mxu0 %v7741
  %8235 = vmatprep.subr.bf16.mxu0 0
  %8236 = vmatpush1.bf16.msra.mxu0 %v7742
  %8237 = vmatprep.subr.bf16.mxu0 0
  %8238 = vmatpush1.bf16.msra.mxu0 %v7743
  %8239 = vmatprep.subr.bf16.mxu0 0
  %8240 = vmatpush1.bf16.msra.mxu0 %v7744
  %8241 = vmatprep.subr.bf16.mxu0 0
  %8242 = vmatpush1.bf16.msra.mxu0 %v7745
  %8243 = vmatprep.mubr.bf16.mxu0 %v6310
  %8244 = vmatmul.mubr.bf16.gmra.mrb[0].mxu0 %v6309
  %v8245 = vpop.f32.mrb[0].mxu0
  %v8246 = vadd.f32 %v8149, %v8245
  %v8247 = vpop.f32.mrb[0].mxu0
  %v8248 = vpop.f32.mrb[0].mxu0
  %v8249 = vadd.f32 %v8152, %v8248
  %v8250 = vpop.f32.mrb[0].mxu0
  %8251 = vmatprep.mubr.bf16.mxu0 %v6335
  %8252 = vmatmul.mubr.bf16.gmra.mrb[0].mxu0 %v6334
  %v8253 = vpop.f32.mrb[0].mxu0
  %v8254 = vadd.f32 %v8157, %v8253
  %v8255 = vpop.f32.mrb[0].mxu0
  %v8256 = vpop.f32.mrb[0].mxu0
  %v8257 = vadd.f32 %v8160, %v8256
  %v8258 = vpop.f32.mrb[0].mxu0
  %8259 = vmatprep.mubr.bf16.mxu0 %v6360
  %8260 = vmatmul.mubr.bf16.gmra.mrb[0].mxu0 %v6359
  %v8261 = vpop.f32.mrb[0].mxu0
  %v8262 = vadd.f32 %v8165, %v8261
  %v8263 = vpop.f32.mrb[0].mxu0
  %v8264 = vpop.f32.mrb[0].mxu0
  %v8265 = vadd.f32 %v8168, %v8264
  %v8266 = vpop.f32.mrb[0].mxu0
  %8267 = vmatprep.mubr.bf16.mxu0 %v6385
  %8268 = vmatmul.mubr.bf16.gmra.mrb[0].mxu0 %v6384
  %v8269 = vpop.f32.mrb[0].mxu0
  %v8270 = vadd.f32 %v8173, %v8269
  %v8271 = vpop.f32.mrb[0].mxu0
  %v8272 = vpop.f32.mrb[0].mxu0
  %v8273 = vadd.f32 %v8176, %v8272
  %v8274 = vpop.f32.mrb[0].mxu0
  %8275 = vmatprep.mubr.bf16.mxu0 %v6410
  %8276 = vmatmul.mubr.bf16.gmra.mrb[0].mxu0 %v6409
  %v8277 = vpop.f32.mrb[0].mxu0
  %v8278 = vadd.f32 %v8181, %v8277
  %v8279 = vpop.f32.mrb[0].mxu0
  %v8280 = vpop.f32.mrb[0].mxu0
  %v8281 = vadd.f32 %v8184, %v8280
  %v8282 = vpop.f32.mrb[0].mxu0
  %8283 = vmatprep.mubr.bf16.mxu0 %v6435
  %8284 = vmatmul.mubr.bf16.gmra.mrb[0].mxu0 %v6434
  %v8285 = vpop.f32.mrb[0].mxu0
  %v8286 = vadd.f32 %v8189, %v8285
  %v8287 = vpop.f32.mrb[0].mxu0
  %v8288 = vpop.f32.mrb[0].mxu0
  %v8289 = vadd.f32 %v8192, %v8288
  %v8290 = vpop.f32.mrb[0].mxu0
  %8291 = vmatprep.mubr.bf16.mxu0 %v6460
  %8292 = vmatmul.mubr.bf16.gmra.mrb[0].mxu0 %v6459
  %v8293 = vpop.f32.mrb[0].mxu0
  %v8294 = vadd.f32 %v8197, %v8293
  %v8295 = vpop.f32.mrb[0].mxu0
  %v8296 = vpop.f32.mrb[0].mxu0
  %v8297 = vadd.f32 %v8200, %v8296
  %v8298 = vpop.f32.mrb[0].mxu0
  %8299 = vmatprep.mubr.bf16.mxu0 %v6485
  %8300 = vmatmul.mubr.bf16.gmra.mrb[0].mxu0 %v6484
  %v8301 = vpop.f32.mrb[0].mxu0
  %v8302 = vadd.f32 %v8205, %v8301
  %v8303 = vpop.f32.mrb[0].mxu0
  %v8304 = vpop.f32.mrb[0].mxu0
  %v8305 = vadd.f32 %v8208, %v8304
  %v8306 = vpop.f32.mrb[0].mxu0
  %8307 = vdwg.mxu0
  %8308 = vmatprep.subr.bf16.mxu0 0
  %8309 = vmatpush1.bf16.msra.mxu0 %v7746
  %8310 = vmatprep.subr.bf16.mxu0 0
  %8311 = vmatpush1.bf16.msra.mxu0 %v7747
  %8312 = vmatprep.subr.bf16.mxu0 0
  %8313 = vmatpush1.bf16.msra.mxu0 %v7748
  %8314 = vmatprep.subr.bf16.mxu0 0
  %8315 = vmatpush1.bf16.msra.mxu0 %v7749
  %8316 = vmatprep.subr.bf16.mxu0 0
  %8317 = vmatpush1.bf16.msra.mxu0 %v7750
  %8318 = vmatprep.subr.bf16.mxu0 0
  %8319 = vmatpush1.bf16.msra.mxu0 %v7751
  %8320 = vmatprep.subr.bf16.mxu0 0
  %8321 = vmatpush1.bf16.msra.mxu0 %v7752
  %8322 = vmatprep.subr.bf16.mxu0 0
  %8323 = vmatpush1.bf16.msra.mxu0 %v7753
  %8324 = vmatprep.subr.bf16.mxu0 0
  %8325 = vmatpush1.bf16.msra.mxu0 %v7754
  %8326 = vmatprep.subr.bf16.mxu0 0
  %8327 = vmatpush1.bf16.msra.mxu0 %v7755
  %8328 = vmatprep.subr.bf16.mxu0 0
  %8329 = vmatpush1.bf16.msra.mxu0 %v7756
  %8330 = vmatprep.subr.bf16.mxu0 0
  %8331 = vmatpush1.bf16.msra.mxu0 %v7757
  %8332 = vmatprep.subr.bf16.mxu0 0
  %8333 = vmatpush1.bf16.msra.mxu0 %v7758
  %8334 = vmatprep.subr.bf16.mxu0 0
  %8335 = vmatpush1.bf16.msra.mxu0 %v7759
  %8336 = vmatprep.subr.bf16.mxu0 0
  %8337 = vmatpush1.bf16.msra.mxu0 %v7760
  %8338 = vmatprep.subr.bf16.mxu0 0
  %8339 = vmatpush1.bf16.msra.mxu0 %v7761
  %8340 = vmatprep.mubr.bf16.mxu0 %v6312
  %8341 = vmatmul.mubr.bf16.gmra.mrb[0].mxu0 %v6311
  %v8342 = vpop.f32.mrb[0].mxu0
  %v8343 = vadd.f32 %v8246, %v8342
  %v8344 = vpop.f32.mrb[0].mxu0
  %v8345 = vpop.f32.mrb[0].mxu0
  %v8346 = vadd.f32 %v8249, %v8345
  %v8347 = vpop.f32.mrb[0].mxu0
  %8348 = vmatprep.mubr.bf16.mxu0 %v6337
  %8349 = vmatmul.mubr.bf16.gmra.mrb[0].mxu0 %v6336
  %v8350 = vpop.f32.mrb[0].mxu0
  %v8351 = vadd.f32 %v8254, %v8350
  %v8352 = vpop.f32.mrb[0].mxu0
  %v8353 = vpop.f32.mrb[0].mxu0
  %v8354 = vadd.f32 %v8257, %v8353
  %v8355 = vpop.f32.mrb[0].mxu0
  %8356 = vmatprep.mubr.bf16.mxu0 %v6362
  %8357 = vmatmul.mubr.bf16.gmra.mrb[0].mxu0 %v6361
  %v8358 = vpop.f32.mrb[0].mxu0
  %v8359 = vadd.f32 %v8262, %v8358
  %v8360 = vpop.f32.mrb[0].mxu0
  %v8361 = vpop.f32.mrb[0].mxu0
  %v8362 = vadd.f32 %v8265, %v8361
  %v8363 = vpop.f32.mrb[0].mxu0
  %8364 = vmatprep.mubr.bf16.mxu0 %v6387
  %8365 = vmatmul.mubr.bf16.gmra.mrb[0].mxu0 %v6386
  %v8366 = vpop.f32.mrb[0].mxu0
  %v8367 = vadd.f32 %v8270, %v8366
  %v8368 = vpop.f32.mrb[0].mxu0
  %v8369 = vpop.f32.mrb[0].mxu0
  %v8370 = vadd.f32 %v8273, %v8369
  %v8371 = vpop.f32.mrb[0].mxu0
  %8372 = vmatprep.mubr.bf16.mxu0 %v6412
  %8373 = vmatmul.mubr.bf16.gmra.mrb[0].mxu0 %v6411
  %v8374 = vpop.f32.mrb[0].mxu0
  %v8375 = vadd.f32 %v8278, %v8374
  %v8376 = vpop.f32.mrb[0].mxu0
  %v8377 = vpop.f32.mrb[0].mxu0
  %v8378 = vadd.f32 %v8281, %v8377
  %v8379 = vpop.f32.mrb[0].mxu0
  %8380 = vmatprep.mubr.bf16.mxu0 %v6437
  %8381 = vmatmul.mubr.bf16.gmra.mrb[0].mxu0 %v6436
  %v8382 = vpop.f32.mrb[0].mxu0
  %v8383 = vadd.f32 %v8286, %v8382
  %v8384 = vpop.f32.mrb[0].mxu0
  %v8385 = vpop.f32.mrb[0].mxu0
  %v8386 = vadd.f32 %v8289, %v8385
  %v8387 = vpop.f32.mrb[0].mxu0
  %8388 = vmatprep.mubr.bf16.mxu0 %v6462
  %8389 = vmatmul.mubr.bf16.gmra.mrb[0].mxu0 %v6461
  %v8390 = vpop.f32.mrb[0].mxu0
  %v8391 = vadd.f32 %v8294, %v8390
  %v8392 = vpop.f32.mrb[0].mxu0
  %v8393 = vpop.f32.mrb[0].mxu0
  %v8394 = vadd.f32 %v8297, %v8393
  %v8395 = vpop.f32.mrb[0].mxu0
  %8396 = vmatprep.mubr.bf16.mxu0 %v6487
  %8397 = vmatmul.mubr.bf16.gmra.mrb[0].mxu0 %v6486
  %v8398 = vpop.f32.mrb[0].mxu0
  %v8399 = vadd.f32 %v8302, %v8398
  %v8400 = vpop.f32.mrb[0].mxu0
  %v8401 = vpop.f32.mrb[0].mxu0
  %v8402 = vadd.f32 %v8305, %v8401
  %v8403 = vpop.f32.mrb[0].mxu0
  %8404 = vdwg.mxu0
  %8405 = vmatprep.subr.bf16.mxu0 0
  %8406 = vmatpush1.bf16.msra.mxu0 %v7762
  %8407 = vmatprep.subr.bf16.mxu0 0
  %8408 = vmatpush1.bf16.msra.mxu0 %v7763
  %8409 = vmatprep.subr.bf16.mxu0 0
  %8410 = vmatpush1.bf16.msra.mxu0 %v7764
  %8411 = vmatprep.subr.bf16.mxu0 0
  %8412 = vmatpush1.bf16.msra.mxu0 %v7765
  %8413 = vmatprep.subr.bf16.mxu0 0
  %8414 = vmatpush1.bf16.msra.mxu0 %v7766
  %8415 = vmatprep.subr.bf16.mxu0 0
  %8416 = vmatpush1.bf16.msra.mxu0 %v7767
  %8417 = vmatprep.subr.bf16.mxu0 0
  %8418 = vmatpush1.bf16.msra.mxu0 %v7768
  %8419 = vmatprep.subr.bf16.mxu0 0
  %8420 = vmatpush1.bf16.msra.mxu0 %v7769
  %8421 = vmatprep.subr.bf16.mxu0 0
  %8422 = vmatpush1.bf16.msra.mxu0 %v7770
  %8423 = vmatprep.subr.bf16.mxu0 0
  %8424 = vmatpush1.bf16.msra.mxu0 %v7771
  %8425 = vmatprep.subr.bf16.mxu0 0
  %8426 = vmatpush1.bf16.msra.mxu0 %v7772
  %8427 = vmatprep.subr.bf16.mxu0 0
  %8428 = vmatpush1.bf16.msra.mxu0 %v7773
  %8429 = vmatprep.subr.bf16.mxu0 0
  %8430 = vmatpush1.bf16.msra.mxu0 %v7774
  %8431 = vmatprep.subr.bf16.mxu0 0
  %8432 = vmatpush1.bf16.msra.mxu0 %v7775
  %8433 = vmatprep.subr.bf16.mxu0 0
  %8434 = vmatpush1.bf16.msra.mxu0 %v7776
  %8435 = vmatprep.subr.bf16.mxu0 0
  %8436 = vmatpush1.bf16.msra.mxu0 %v7777
  %8437 = vmatprep.mubr.bf16.mxu0 %v6314
  %8438 = vmatmul.mubr.bf16.gmra.mrb[0].mxu0 %v6313
  %v8439 = vpop.f32.mrb[0].mxu0
  %v8440 = vadd.f32 %v8343, %v8439
  %v8441 = vpop.f32.mrb[0].mxu0
  %v8442 = vpop.f32.mrb[0].mxu0
  %v8443 = vadd.f32 %v8346, %v8442
  %v8444 = vpop.f32.mrb[0].mxu0
  %8445 = vmatprep.mubr.bf16.mxu0 %v6339
  %8446 = vmatmul.mubr.bf16.gmra.mrb[0].mxu0 %v6338
  %v8447 = vpop.f32.mrb[0].mxu0
  %v8448 = vadd.f32 %v8351, %v8447
  %v8449 = vpop.f32.mrb[0].mxu0
  %v8450 = vpop.f32.mrb[0].mxu0
  %v8451 = vadd.f32 %v8354, %v8450
  %v8452 = vpop.f32.mrb[0].mxu0
  %8453 = vmatprep.mubr.bf16.mxu0 %v6364
  %8454 = vmatmul.mubr.bf16.gmra.mrb[0].mxu0 %v6363
  %v8455 = vpop.f32.mrb[0].mxu0
  %v8456 = vadd.f32 %v8359, %v8455
  %v8457 = vpop.f32.mrb[0].mxu0
  %v8458 = vpop.f32.mrb[0].mxu0
  %v8459 = vadd.f32 %v8362, %v8458
  %v8460 = vpop.f32.mrb[0].mxu0
  %8461 = vmatprep.mubr.bf16.mxu0 %v6389
  %8462 = vmatmul.mubr.bf16.gmra.mrb[0].mxu0 %v6388
  %v8463 = vpop.f32.mrb[0].mxu0
  %v8464 = vadd.f32 %v8367, %v8463
  %v8465 = vpop.f32.mrb[0].mxu0
  %v8466 = vpop.f32.mrb[0].mxu0
  %v8467 = vadd.f32 %v8370, %v8466
  %v8468 = vpop.f32.mrb[0].mxu0
  %8469 = vmatprep.mubr.bf16.mxu0 %v6414
  %8470 = vmatmul.mubr.bf16.gmra.mrb[0].mxu0 %v6413
  %v8471 = vpop.f32.mrb[0].mxu0
  %v8472 = vadd.f32 %v8375, %v8471
  %v8473 = vpop.f32.mrb[0].mxu0
  %v8474 = vpop.f32.mrb[0].mxu0
  %v8475 = vadd.f32 %v8378, %v8474
  %v8476 = vpop.f32.mrb[0].mxu0
  %8477 = vmatprep.mubr.bf16.mxu0 %v6439
  %8478 = vmatmul.mubr.bf16.gmra.mrb[0].mxu0 %v6438
  %v8479 = vpop.f32.mrb[0].mxu0
  %v8480 = vadd.f32 %v8383, %v8479
  %v8481 = vpop.f32.mrb[0].mxu0
  %v8482 = vpop.f32.mrb[0].mxu0
  %v8483 = vadd.f32 %v8386, %v8482
  %v8484 = vpop.f32.mrb[0].mxu0
  %8485 = vmatprep.mubr.bf16.mxu0 %v6464
  %8486 = vmatmul.mubr.bf16.gmra.mrb[0].mxu0 %v6463
  %v8487 = vpop.f32.mrb[0].mxu0
  %v8488 = vadd.f32 %v8391, %v8487
  %v8489 = vpop.f32.mrb[0].mxu0
  %v8490 = vpop.f32.mrb[0].mxu0
  %v8491 = vadd.f32 %v8394, %v8490
  %v8492 = vpop.f32.mrb[0].mxu0
  %8493 = vmatprep.mubr.bf16.mxu0 %v6489
  %8494 = vmatmul.mubr.bf16.gmra.mrb[0].mxu0 %v6488
  %v8495 = vpop.f32.mrb[0].mxu0
  %v8496 = vadd.f32 %v8399, %v8495
  %v8497 = vpop.f32.mrb[0].mxu0
  %v8498 = vpop.f32.mrb[0].mxu0
  %v8499 = vadd.f32 %v8402, %v8498
  %v8500 = vpop.f32.mrb[0].mxu0
  %8501 = vdwg.mxu0
  %8502 = vmatprep.subr.bf16.mxu0 0
  %8503 = vmatpush1.bf16.msra.mxu0 %v7778
  %8504 = vmatprep.subr.bf16.mxu0 0
  %8505 = vmatpush1.bf16.msra.mxu0 %v7779
  %8506 = vmatprep.subr.bf16.mxu0 0
  %8507 = vmatpush1.bf16.msra.mxu0 %v7780
  %8508 = vmatprep.subr.bf16.mxu0 0
  %8509 = vmatpush1.bf16.msra.mxu0 %v7781
  %8510 = vmatprep.subr.bf16.mxu0 0
  %8511 = vmatpush1.bf16.msra.mxu0 %v7782
  %8512 = vmatprep.subr.bf16.mxu0 0
  %8513 = vmatpush1.bf16.msra.mxu0 %v7783
  %8514 = vmatprep.subr.bf16.mxu0 0
  %8515 = vmatpush1.bf16.msra.mxu0 %v7784
  %8516 = vmatprep.subr.bf16.mxu0 0
  %8517 = vmatpush1.bf16.msra.mxu0 %v7785
  %8518 = vmatprep.subr.bf16.mxu0 0
  %8519 = vmatpush1.bf16.msra.mxu0 %v7786
  %8520 = vmatprep.subr.bf16.mxu0 0
  %8521 = vmatpush1.bf16.msra.mxu0 %v7787
  %8522 = vmatprep.subr.bf16.mxu0 0
  %8523 = vmatpush1.bf16.msra.mxu0 %v7788
  %8524 = vmatprep.subr.bf16.mxu0 0
  %8525 = vmatpush1.bf16.msra.mxu0 %v7789
  %8526 = vmatprep.subr.bf16.mxu0 0
  %8527 = vmatpush1.bf16.msra.mxu0 %v7790
  %8528 = vmatprep.subr.bf16.mxu0 0
  %8529 = vmatpush1.bf16.msra.mxu0 %v7791
  %8530 = vmatprep.subr.bf16.mxu0 0
  %8531 = vmatpush1.bf16.msra.mxu0 %v7792
  %8532 = vmatprep.subr.bf16.mxu0 0
  %8533 = vmatpush1.bf16.msra.mxu0 %v7793
  %8534 = vmatprep.mubr.bf16.mxu0 %v6316
  %8535 = vmatmul.mubr.bf16.gmra.mrb[0].mxu0 %v6315
  %v8536 = vpop.f32.mrb[0].mxu0
  %v8537 = vadd.f32 %v8440, %v8536
  %v8538 = vpop.f32.mrb[0].mxu0
  %v8539 = vpop.f32.mrb[0].mxu0
  %v8540 = vadd.f32 %v8443, %v8539
  %v8541 = vpop.f32.mrb[0].mxu0
  %8542 = vmatprep.mubr.bf16.mxu0 %v6341
  %8543 = vmatmul.mubr.bf16.gmra.mrb[0].mxu0 %v6340
  %v8544 = vpop.f32.mrb[0].mxu0
  %v8545 = vadd.f32 %v8448, %v8544
  %v8546 = vpop.f32.mrb[0].mxu0
  %v8547 = vpop.f32.mrb[0].mxu0
  %v8548 = vadd.f32 %v8451, %v8547
  %v8549 = vpop.f32.mrb[0].mxu0
  %8550 = vmatprep.mubr.bf16.mxu0 %v6366
  %8551 = vmatmul.mubr.bf16.gmra.mrb[0].mxu0 %v6365
  %v8552 = vpop.f32.mrb[0].mxu0
  %v8553 = vadd.f32 %v8456, %v8552
  %v8554 = vpop.f32.mrb[0].mxu0
  %v8555 = vpop.f32.mrb[0].mxu0
  %v8556 = vadd.f32 %v8459, %v8555
  %v8557 = vpop.f32.mrb[0].mxu0
  %8558 = vmatprep.mubr.bf16.mxu0 %v6391
  %8559 = vmatmul.mubr.bf16.gmra.mrb[0].mxu0 %v6390
  %v8560 = vpop.f32.mrb[0].mxu0
  %v8561 = vadd.f32 %v8464, %v8560
  %v8562 = vpop.f32.mrb[0].mxu0
  %v8563 = vpop.f32.mrb[0].mxu0
  %v8564 = vadd.f32 %v8467, %v8563
  %v8565 = vpop.f32.mrb[0].mxu0
  %8566 = vmatprep.mubr.bf16.mxu0 %v6416
  %8567 = vmatmul.mubr.bf16.gmra.mrb[0].mxu0 %v6415
  %v8568 = vpop.f32.mrb[0].mxu0
  %v8569 = vadd.f32 %v8472, %v8568
  %v8570 = vpop.f32.mrb[0].mxu0
  %v8571 = vpop.f32.mrb[0].mxu0
  %v8572 = vadd.f32 %v8475, %v8571
  %v8573 = vpop.f32.mrb[0].mxu0
  %8574 = vmatprep.mubr.bf16.mxu0 %v6441
  %8575 = vmatmul.mubr.bf16.gmra.mrb[0].mxu0 %v6440
  %v8576 = vpop.f32.mrb[0].mxu0
  %v8577 = vadd.f32 %v8480, %v8576
  %v8578 = vpop.f32.mrb[0].mxu0
  %v8579 = vpop.f32.mrb[0].mxu0
  %v8580 = vadd.f32 %v8483, %v8579
  %v8581 = vpop.f32.mrb[0].mxu0
  %8582 = vmatprep.mubr.bf16.mxu0 %v6466
  %8583 = vmatmul.mubr.bf16.gmra.mrb[0].mxu0 %v6465
  %v8584 = vpop.f32.mrb[0].mxu0
  %v8585 = vadd.f32 %v8488, %v8584
  %v8586 = vpop.f32.mrb[0].mxu0
  %v8587 = vpop.f32.mrb[0].mxu0
  %v8588 = vadd.f32 %v8491, %v8587
  %v8589 = vpop.f32.mrb[0].mxu0
  %8590 = vmatprep.mubr.bf16.mxu0 %v6491
  %8591 = vmatmul.mubr.bf16.gmra.mrb[0].mxu0 %v6490
  %v8592 = vpop.f32.mrb[0].mxu0
  %v8593 = vadd.f32 %v8496, %v8592
  %v8594 = vpop.f32.mrb[0].mxu0
  %v8595 = vpop.f32.mrb[0].mxu0
  %v8596 = vadd.f32 %v8499, %v8595
  %v8597 = vpop.f32.mrb[0].mxu0
  %8598 = vdwg.mxu0
  %8599 = vmatprep.subr.bf16.mxu0 0
  %8600 = vmatpush1.bf16.msra.mxu0 %v7794
  %8601 = vmatprep.subr.bf16.mxu0 0
  %8602 = vmatpush1.bf16.msra.mxu0 %v7795
  %8603 = vmatprep.subr.bf16.mxu0 0
  %8604 = vmatpush1.bf16.msra.mxu0 %v7796
  %8605 = vmatprep.subr.bf16.mxu0 0
  %8606 = vmatpush1.bf16.msra.mxu0 %v7797
  %8607 = vmatprep.subr.bf16.mxu0 0
  %8608 = vmatpush1.bf16.msra.mxu0 %v7798
  %8609 = vmatprep.subr.bf16.mxu0 0
  %8610 = vmatpush1.bf16.msra.mxu0 %v7799
  %8611 = vmatprep.subr.bf16.mxu0 0
  %8612 = vmatpush1.bf16.msra.mxu0 %v7800
  %8613 = vmatprep.subr.bf16.mxu0 0
  %8614 = vmatpush1.bf16.msra.mxu0 %v7801
  %8615 = vmatprep.subr.bf16.mxu0 0
  %8616 = vmatpush1.bf16.msra.mxu0 %v7802
  %8617 = vmatprep.subr.bf16.mxu0 0
  %8618 = vmatpush1.bf16.msra.mxu0 %v7803
  %8619 = vmatprep.subr.bf16.mxu0 0
  %8620 = vmatpush1.bf16.msra.mxu0 %v7804
  %8621 = vmatprep.subr.bf16.mxu0 0
  %8622 = vmatpush1.bf16.msra.mxu0 %v7805
  %8623 = vmatprep.subr.bf16.mxu0 0
  %8624 = vmatpush1.bf16.msra.mxu0 %v7806
  %8625 = vmatprep.subr.bf16.mxu0 0
  %8626 = vmatpush1.bf16.msra.mxu0 %v7807
  %8627 = vmatprep.subr.bf16.mxu0 0
  %8628 = vmatpush1.bf16.msra.mxu0 %v7808
  %8629 = vmatprep.subr.bf16.mxu0 0
  %8630 = vmatpush1.bf16.msra.mxu0 %v7809
  %8631 = vmatprep.mubr.bf16.mxu0 %v6318
  %8632 = vmatmul.mubr.bf16.gmra.mrb[0].mxu0 %v6317
  %v8633 = vpop.f32.mrb[0].mxu0
  %v8634 = vadd.f32 %v8537, %v8633
  %v8635 = vpop.f32.mrb[0].mxu0
  %v8636 = vpop.f32.mrb[0].mxu0
  %v8637 = vadd.f32 %v8540, %v8636
  %v8638 = vpop.f32.mrb[0].mxu0
  %8639 = vmatprep.mubr.bf16.mxu0 %v6343
  %8640 = vmatmul.mubr.bf16.gmra.mrb[0].mxu0 %v6342
  %v8641 = vpop.f32.mrb[0].mxu0
  %v8642 = vadd.f32 %v8545, %v8641
  %v8643 = vpop.f32.mrb[0].mxu0
  %v8644 = vpop.f32.mrb[0].mxu0
  %v8645 = vadd.f32 %v8548, %v8644
  %v8646 = vpop.f32.mrb[0].mxu0
  %8647 = vmatprep.mubr.bf16.mxu0 %v6368
  %8648 = vmatmul.mubr.bf16.gmra.mrb[0].mxu0 %v6367
  %v8649 = vpop.f32.mrb[0].mxu0
  %v8650 = vadd.f32 %v8553, %v8649
  %v8651 = vpop.f32.mrb[0].mxu0
  %v8652 = vpop.f32.mrb[0].mxu0
  %v8653 = vadd.f32 %v8556, %v8652
  %v8654 = vpop.f32.mrb[0].mxu0
  %8655 = vmatprep.mubr.bf16.mxu0 %v6393
  %8656 = vmatmul.mubr.bf16.gmra.mrb[0].mxu0 %v6392
  %v8657 = vpop.f32.mrb[0].mxu0
  %v8658 = vadd.f32 %v8561, %v8657
  %v8659 = vpop.f32.mrb[0].mxu0
  %v8660 = vpop.f32.mrb[0].mxu0
  %v8661 = vadd.f32 %v8564, %v8660
  %v8662 = vpop.f32.mrb[0].mxu0
  %8663 = vmatprep.mubr.bf16.mxu0 %v6418
  %8664 = vmatmul.mubr.bf16.gmra.mrb[0].mxu0 %v6417
  %v8665 = vpop.f32.mrb[0].mxu0
  %v8666 = vadd.f32 %v8569, %v8665
  %v8667 = vpop.f32.mrb[0].mxu0
  %v8668 = vpop.f32.mrb[0].mxu0
  %v8669 = vadd.f32 %v8572, %v8668
  %v8670 = vpop.f32.mrb[0].mxu0
  %8671 = vmatprep.mubr.bf16.mxu0 %v6443
  %8672 = vmatmul.mubr.bf16.gmra.mrb[0].mxu0 %v6442
  %v8673 = vpop.f32.mrb[0].mxu0
  %v8674 = vadd.f32 %v8577, %v8673
  %v8675 = vpop.f32.mrb[0].mxu0
  %v8676 = vpop.f32.mrb[0].mxu0
  %v8677 = vadd.f32 %v8580, %v8676
  %v8678 = vpop.f32.mrb[0].mxu0
  %8679 = vmatprep.mubr.bf16.mxu0 %v6468
  %8680 = vmatmul.mubr.bf16.gmra.mrb[0].mxu0 %v6467
  %v8681 = vpop.f32.mrb[0].mxu0
  %v8682 = vadd.f32 %v8585, %v8681
  %v8683 = vpop.f32.mrb[0].mxu0
  %v8684 = vpop.f32.mrb[0].mxu0
  %v8685 = vadd.f32 %v8588, %v8684
  %v8686 = vpop.f32.mrb[0].mxu0
  %8687 = vmatprep.mubr.bf16.mxu0 %v6493
  %8688 = vmatmul.mubr.bf16.gmra.mrb[0].mxu0 %v6492
  %v8689 = vpop.f32.mrb[0].mxu0
  %v8690 = vadd.f32 %v8593, %v8689
  %v8691 = vpop.f32.mrb[0].mxu0
  %v8692 = vpop.f32.mrb[0].mxu0
  %v8693 = vadd.f32 %v8596, %v8692
  %v8694 = vpop.f32.mrb[0].mxu0
  %8695 = vdwg.mxu0
  %8696 = vmatprep.subr.bf16.mxu0 0
  %8697 = vmatpush1.bf16.msra.mxu0 %v7810
  %8698 = vmatprep.subr.bf16.mxu0 0
  %8699 = vmatpush1.bf16.msra.mxu0 %v7811
  %8700 = vmatprep.subr.bf16.mxu0 0
  %8701 = vmatpush1.bf16.msra.mxu0 %v7812
  %8702 = vmatprep.subr.bf16.mxu0 0
  %8703 = vmatpush1.bf16.msra.mxu0 %v7813
  %8704 = vmatprep.subr.bf16.mxu0 0
  %8705 = vmatpush1.bf16.msra.mxu0 %v7814
  %8706 = vmatprep.subr.bf16.mxu0 0
  %8707 = vmatpush1.bf16.msra.mxu0 %v7815
  %8708 = vmatprep.subr.bf16.mxu0 0
  %8709 = vmatpush1.bf16.msra.mxu0 %v7816
  %8710 = vmatprep.subr.bf16.mxu0 0
  %8711 = vmatpush1.bf16.msra.mxu0 %v7817
  %8712 = vmatprep.subr.bf16.mxu0 0
  %8713 = vmatpush1.bf16.msra.mxu0 %v7818
  %8714 = vmatprep.subr.bf16.mxu0 0
  %8715 = vmatpush1.bf16.msra.mxu0 %v7819
  %8716 = vmatprep.subr.bf16.mxu0 0
  %8717 = vmatpush1.bf16.msra.mxu0 %v7820
  %8718 = vmatprep.subr.bf16.mxu0 0
  %8719 = vmatpush1.bf16.msra.mxu0 %v7821
  %8720 = vmatprep.subr.bf16.mxu0 0
  %8721 = vmatpush1.bf16.msra.mxu0 %v7822
  %8722 = vmatprep.subr.bf16.mxu0 0
  %8723 = vmatpush1.bf16.msra.mxu0 %v7823
  %8724 = vmatprep.subr.bf16.mxu0 0
  %8725 = vmatpush1.bf16.msra.mxu0 %v7824
  %8726 = vmatprep.subr.bf16.mxu0 0
  %8727 = vmatpush1.bf16.msra.mxu0 %v7825
  %8728 = vmatprep.mubr.bf16.mxu0 %v6320
  %8729 = vmatmul.mubr.bf16.gmra.mrb[0].mxu0 %v6319
  %v8730 = vpop.f32.mrb[0].mxu0
  %v8731 = vadd.f32 %v8634, %v8730
  %v8732 = vpop.f32.mrb[0].mxu0
  %v8733 = vpop.f32.mrb[0].mxu0
  %v8734 = vadd.f32 %v8637, %v8733
  %v8735 = vpop.f32.mrb[0].mxu0
  %8736 = vmatprep.mubr.bf16.mxu0 %v6345
  %8737 = vmatmul.mubr.bf16.gmra.mrb[0].mxu0 %v6344
  %v8738 = vpop.f32.mrb[0].mxu0
  %v8739 = vadd.f32 %v8642, %v8738
  %v8740 = vpop.f32.mrb[0].mxu0
  %v8741 = vpop.f32.mrb[0].mxu0
  %v8742 = vadd.f32 %v8645, %v8741
  %v8743 = vpop.f32.mrb[0].mxu0
  %8744 = vmatprep.mubr.bf16.mxu0 %v6370
  %8745 = vmatmul.mubr.bf16.gmra.mrb[0].mxu0 %v6369
  %v8746 = vpop.f32.mrb[0].mxu0
  %v8747 = vadd.f32 %v8650, %v8746
  %v8748 = vpop.f32.mrb[0].mxu0
  %v8749 = vpop.f32.mrb[0].mxu0
  %v8750 = vadd.f32 %v8653, %v8749
  %v8751 = vpop.f32.mrb[0].mxu0
  %8752 = vmatprep.mubr.bf16.mxu0 %v6395
  %8753 = vmatmul.mubr.bf16.gmra.mrb[0].mxu0 %v6394
  %v8754 = vpop.f32.mrb[0].mxu0
  %v8755 = vadd.f32 %v8658, %v8754
  %v8756 = vpop.f32.mrb[0].mxu0
  %v8757 = vpop.f32.mrb[0].mxu0
  %v8758 = vadd.f32 %v8661, %v8757
  %v8759 = vpop.f32.mrb[0].mxu0
  %8760 = vmatprep.mubr.bf16.mxu0 %v6420
  %8761 = vmatmul.mubr.bf16.gmra.mrb[0].mxu0 %v6419
  %v8762 = vpop.f32.mrb[0].mxu0
  %v8763 = vadd.f32 %v8666, %v8762
  %v8764 = vpop.f32.mrb[0].mxu0
  %v8765 = vpop.f32.mrb[0].mxu0
  %v8766 = vadd.f32 %v8669, %v8765
  %v8767 = vpop.f32.mrb[0].mxu0
  %8768 = vmatprep.mubr.bf16.mxu0 %v6445
  %8769 = vmatmul.mubr.bf16.gmra.mrb[0].mxu0 %v6444
  %v8770 = vpop.f32.mrb[0].mxu0
  %v8771 = vadd.f32 %v8674, %v8770
  %v8772 = vpop.f32.mrb[0].mxu0
  %v8773 = vpop.f32.mrb[0].mxu0
  %v8774 = vadd.f32 %v8677, %v8773
  %v8775 = vpop.f32.mrb[0].mxu0
  %8776 = vmatprep.mubr.bf16.mxu0 %v6470
  %8777 = vmatmul.mubr.bf16.gmra.mrb[0].mxu0 %v6469
  %v8778 = vpop.f32.mrb[0].mxu0
  %v8779 = vadd.f32 %v8682, %v8778
  %v8780 = vpop.f32.mrb[0].mxu0
  %v8781 = vpop.f32.mrb[0].mxu0
  %v8782 = vadd.f32 %v8685, %v8781
  %v8783 = vpop.f32.mrb[0].mxu0
  %8784 = vmatprep.mubr.bf16.mxu0 %v6495
  %8785 = vmatmul.mubr.bf16.gmra.mrb[0].mxu0 %v6494
  %v8786 = vpop.f32.mrb[0].mxu0
  %v8787 = vadd.f32 %v8690, %v8786
  %v8788 = vpop.f32.mrb[0].mxu0
  %v8789 = vpop.f32.mrb[0].mxu0
  %v8790 = vadd.f32 %v8693, %v8789
  %v8791 = vpop.f32.mrb[0].mxu0
  %8792 = vdwg.mxu0
  %8793 = vmatprep.subr.bf16.mxu0 0
  %8794 = vmatpush1.bf16.msra.mxu0 %v7826
  %8795 = vmatprep.subr.bf16.mxu0 0
  %8796 = vmatpush1.bf16.msra.mxu0 %v7827
  %8797 = vmatprep.subr.bf16.mxu0 0
  %8798 = vmatpush1.bf16.msra.mxu0 %v7828
  %8799 = vmatprep.subr.bf16.mxu0 0
  %8800 = vmatpush1.bf16.msra.mxu0 %v7829
  %8801 = vmatprep.subr.bf16.mxu0 0
  %8802 = vmatpush1.bf16.msra.mxu0 %v7830
  %8803 = vmatprep.subr.bf16.mxu0 0
  %8804 = vmatpush1.bf16.msra.mxu0 %v7831
  %8805 = vmatprep.subr.bf16.mxu0 0
  %8806 = vmatpush1.bf16.msra.mxu0 %v7832
  %8807 = vmatprep.subr.bf16.mxu0 0
  %8808 = vmatpush1.bf16.msra.mxu0 %v7833
  %8809 = vmatprep.subr.bf16.mxu0 0
  %8810 = vmatpush1.bf16.msra.mxu0 %v7834
  %8811 = vmatprep.subr.bf16.mxu0 0
  %8812 = vmatpush1.bf16.msra.mxu0 %v7835
  %8813 = vmatprep.subr.bf16.mxu0 0
  %8814 = vmatpush1.bf16.msra.mxu0 %v7836
  %8815 = vmatprep.subr.bf16.mxu0 0
  %8816 = vmatpush1.bf16.msra.mxu0 %v7837
  %8817 = vmatprep.subr.bf16.mxu0 0
  %8818 = vmatpush1.bf16.msra.mxu0 %v7838
  %8819 = vmatprep.subr.bf16.mxu0 0
  %8820 = vmatpush1.bf16.msra.mxu0 %v7839
  %8821 = vmatprep.subr.bf16.mxu0 0
  %8822 = vmatpush1.bf16.msra.mxu0 %v7840
  %8823 = vmatprep.subr.bf16.mxu0 0
  %8824 = vmatpush1.bf16.msra.mxu0 %v7841
  %8825 = vmatprep.mubr.bf16.mxu0 %v6322
  %8826 = vmatmul.mubr.bf16.gmra.mrb[0].mxu0 %v6321
  %v8827 = vpop.f32.mrb[0].mxu0
  %v8828 = vadd.f32 %v8731, %v8827
  %v8829 = vpop.f32.mrb[0].mxu0
  %v8830 = vpop.f32.mrb[0].mxu0
  %v8831 = vadd.f32 %v8734, %v8830
  %v8832 = vpop.f32.mrb[0].mxu0
  %8833 = vmatprep.mubr.bf16.mxu0 %v6347
  %8834 = vmatmul.mubr.bf16.gmra.mrb[0].mxu0 %v6346
  %v8835 = vpop.f32.mrb[0].mxu0
  %v8836 = vadd.f32 %v8739, %v8835
  %v8837 = vpop.f32.mrb[0].mxu0
  %v8838 = vpop.f32.mrb[0].mxu0
  %v8839 = vadd.f32 %v8742, %v8838
  %v8840 = vpop.f32.mrb[0].mxu0
  %8841 = vmatprep.mubr.bf16.mxu0 %v6372
  %8842 = vmatmul.mubr.bf16.gmra.mrb[0].mxu0 %v6371
  %v8843 = vpop.f32.mrb[0].mxu0
  %v8844 = vadd.f32 %v8747, %v8843
  %v8845 = vpop.f32.mrb[0].mxu0
  %v8846 = vpop.f32.mrb[0].mxu0
  %v8847 = vadd.f32 %v8750, %v8846
  %v8848 = vpop.f32.mrb[0].mxu0
  %8849 = vmatprep.mubr.bf16.mxu0 %v6397
  %8850 = vmatmul.mubr.bf16.gmra.mrb[0].mxu0 %v6396
  %v8851 = vpop.f32.mrb[0].mxu0
  %v8852 = vadd.f32 %v8755, %v8851
  %v8853 = vpop.f32.mrb[0].mxu0
  %v8854 = vpop.f32.mrb[0].mxu0
  %v8855 = vadd.f32 %v8758, %v8854
  %v8856 = vpop.f32.mrb[0].mxu0
  %8857 = vmatprep.mubr.bf16.mxu0 %v6422
  %8858 = vmatmul.mubr.bf16.gmra.mrb[0].mxu0 %v6421
  %v8859 = vpop.f32.mrb[0].mxu0
  %v8860 = vadd.f32 %v8763, %v8859
  %v8861 = vpop.f32.mrb[0].mxu0
  %v8862 = vpop.f32.mrb[0].mxu0
  %v8863 = vadd.f32 %v8766, %v8862
  %v8864 = vpop.f32.mrb[0].mxu0
  %8865 = vmatprep.mubr.bf16.mxu0 %v6447
  %8866 = vmatmul.mubr.bf16.gmra.mrb[0].mxu0 %v6446
  %v8867 = vpop.f32.mrb[0].mxu0
  %v8868 = vadd.f32 %v8771, %v8867
  %v8869 = vpop.f32.mrb[0].mxu0
  %v8870 = vpop.f32.mrb[0].mxu0
  %v8871 = vadd.f32 %v8774, %v8870
  %v8872 = vpop.f32.mrb[0].mxu0
  %8873 = vmatprep.mubr.bf16.mxu0 %v6472
  %8874 = vmatmul.mubr.bf16.gmra.mrb[0].mxu0 %v6471
  %v8875 = vpop.f32.mrb[0].mxu0
  %v8876 = vadd.f32 %v8779, %v8875
  %v8877 = vpop.f32.mrb[0].mxu0
  %v8878 = vpop.f32.mrb[0].mxu0
  %v8879 = vadd.f32 %v8782, %v8878
  %v8880 = vpop.f32.mrb[0].mxu0
  %8881 = vmatprep.mubr.bf16.mxu0 %v6497
  %8882 = vmatmul.mubr.bf16.gmra.mrb[0].mxu0 %v6496
  %v8883 = vpop.f32.mrb[0].mxu0
  %v8884 = vadd.f32 %v8787, %v8883
  %v8885 = vpop.f32.mrb[0].mxu0
  %v8886 = vpop.f32.mrb[0].mxu0
  %v8887 = vadd.f32 %v8790, %v8886
  %v8888 = vpop.f32.mrb[0].mxu0
  %8889 = vdwg.mxu0
  %8890 = vmatprep.subr.bf16.mxu0 0
  %8891 = vmatpush1.bf16.msra.mxu0 %v7842
  %8892 = vmatprep.subr.bf16.mxu0 0
  %8893 = vmatpush1.bf16.msra.mxu0 %v7843
  %8894 = vmatprep.subr.bf16.mxu0 0
  %8895 = vmatpush1.bf16.msra.mxu0 %v7844
  %8896 = vmatprep.subr.bf16.mxu0 0
  %8897 = vmatpush1.bf16.msra.mxu0 %v7845
  %8898 = vmatprep.subr.bf16.mxu0 0
  %8899 = vmatpush1.bf16.msra.mxu0 %v7846
  %8900 = vmatprep.subr.bf16.mxu0 0
  %8901 = vmatpush1.bf16.msra.mxu0 %v7847
  %8902 = vmatprep.subr.bf16.mxu0 0
  %8903 = vmatpush1.bf16.msra.mxu0 %v7848
  %8904 = vmatprep.subr.bf16.mxu0 0
  %8905 = vmatpush1.bf16.msra.mxu0 %v7849
  %8906 = vmatprep.subr.bf16.mxu0 0
  %8907 = vmatpush1.bf16.msra.mxu0 %v7850
  %8908 = vmatprep.subr.bf16.mxu0 0
  %8909 = vmatpush1.bf16.msra.mxu0 %v7851
  %8910 = vmatprep.subr.bf16.mxu0 0
  %8911 = vmatpush1.bf16.msra.mxu0 %v7852
  %8912 = vmatprep.subr.bf16.mxu0 0
  %8913 = vmatpush1.bf16.msra.mxu0 %v7853
  %8914 = vmatprep.subr.bf16.mxu0 0
  %8915 = vmatpush1.bf16.msra.mxu0 %v7854
  %8916 = vmatprep.subr.bf16.mxu0 0
  %8917 = vmatpush1.bf16.msra.mxu0 %v7855
  %8918 = vmatprep.subr.bf16.mxu0 0
  %8919 = vmatpush1.bf16.msra.mxu0 %v7856
  %8920 = vmatprep.subr.bf16.mxu0 0
  %8921 = vmatpush1.bf16.msra.mxu0 %v7857
  %8922 = vmatprep.mubr.bf16.mxu0 %v6324
  %8923 = vmatmul.mubr.bf16.gmra.mrb[0].mxu0 %v6323
  %v8924 = vpop.f32.mrb[0].mxu0
  %v8925 = vadd.f32 %v8828, %v8924
  %v8926 = vpop.f32.mrb[0].mxu0
  %v8927 = vpop.f32.mrb[0].mxu0
  %v8928 = vadd.f32 %v8831, %v8927
  %v8929 = vpop.f32.mrb[0].mxu0
  %8930 = vmatprep.mubr.bf16.mxu0 %v6349
  %8931 = vmatmul.mubr.bf16.gmra.mrb[0].mxu0 %v6348
  %v8932 = vpop.f32.mrb[0].mxu0
  %v8933 = vadd.f32 %v8836, %v8932
  %v8934 = vpop.f32.mrb[0].mxu0
  %v8935 = vpop.f32.mrb[0].mxu0
  %v8936 = vadd.f32 %v8839, %v8935
  %v8937 = vpop.f32.mrb[0].mxu0
  %8938 = vmatprep.mubr.bf16.mxu0 %v6374
  %8939 = vmatmul.mubr.bf16.gmra.mrb[0].mxu0 %v6373
  %v8940 = vpop.f32.mrb[0].mxu0
  %v8941 = vadd.f32 %v8844, %v8940
  %v8942 = vpop.f32.mrb[0].mxu0
  %v8943 = vpop.f32.mrb[0].mxu0
  %v8944 = vadd.f32 %v8847, %v8943
  %v8945 = vpop.f32.mrb[0].mxu0
  %8946 = vmatprep.mubr.bf16.mxu0 %v6399
  %8947 = vmatmul.mubr.bf16.gmra.mrb[0].mxu0 %v6398
  %v8948 = vpop.f32.mrb[0].mxu0
  %v8949 = vadd.f32 %v8852, %v8948
  %v8950 = vpop.f32.mrb[0].mxu0
  %v8951 = vpop.f32.mrb[0].mxu0
  %v8952 = vadd.f32 %v8855, %v8951
  %v8953 = vpop.f32.mrb[0].mxu0
  %8954 = vmatprep.mubr.bf16.mxu0 %v6424
  %8955 = vmatmul.mubr.bf16.gmra.mrb[0].mxu0 %v6423
  %v8956 = vpop.f32.mrb[0].mxu0
  %v8957 = vadd.f32 %v8860, %v8956
  %v8958 = vpop.f32.mrb[0].mxu0
  %v8959 = vpop.f32.mrb[0].mxu0
  %v8960 = vadd.f32 %v8863, %v8959
  %v8961 = vpop.f32.mrb[0].mxu0
  %8962 = vmatprep.mubr.bf16.mxu0 %v6449
  %8963 = vmatmul.mubr.bf16.gmra.mrb[0].mxu0 %v6448
  %v8964 = vpop.f32.mrb[0].mxu0
  %v8965 = vadd.f32 %v8868, %v8964
  %v8966 = vpop.f32.mrb[0].mxu0
  %v8967 = vpop.f32.mrb[0].mxu0
  %v8968 = vadd.f32 %v8871, %v8967
  %v8969 = vpop.f32.mrb[0].mxu0
  %8970 = vmatprep.mubr.bf16.mxu0 %v6474
  %8971 = vmatmul.mubr.bf16.gmra.mrb[0].mxu0 %v6473
  %v8972 = vpop.f32.mrb[0].mxu0
  %v8973 = vadd.f32 %v8876, %v8972
  %v8974 = vpop.f32.mrb[0].mxu0
  %v8975 = vpop.f32.mrb[0].mxu0
  %v8976 = vadd.f32 %v8879, %v8975
  %v8977 = vpop.f32.mrb[0].mxu0
  %8978 = vmatprep.mubr.bf16.mxu0 %v6499
  %8979 = vmatmul.mubr.bf16.gmra.mrb[0].mxu0 %v6498
  %v8980 = vpop.f32.mrb[0].mxu0
  %v8981 = vadd.f32 %v8884, %v8980
  %v8982 = vpop.f32.mrb[0].mxu0
  %v8983 = vpop.f32.mrb[0].mxu0
  %v8984 = vadd.f32 %v8887, %v8983
  %v8985 = vpop.f32.mrb[0].mxu0
  %8986 = vdwg.mxu0
  %8987 = vmatprep.subr.bf16.mxu0 0
  %8988 = vmatpush1.bf16.msra.mxu0 %v7858
  %8989 = vmatprep.subr.bf16.mxu0 0
  %8990 = vmatpush1.bf16.msra.mxu0 %v7859
  %8991 = vmatprep.subr.bf16.mxu0 0
  %8992 = vmatpush1.bf16.msra.mxu0 %v7860
  %8993 = vmatprep.subr.bf16.mxu0 0
  %8994 = vmatpush1.bf16.msra.mxu0 %v7861
  %8995 = vmatprep.subr.bf16.mxu0 0
  %8996 = vmatpush1.bf16.msra.mxu0 %v7862
  %8997 = vmatprep.subr.bf16.mxu0 0
  %8998 = vmatpush1.bf16.msra.mxu0 %v7863
  %8999 = vmatprep.subr.bf16.mxu0 0
  %9000 = vmatpush1.bf16.msra.mxu0 %v7864
  %9001 = vmatprep.subr.bf16.mxu0 0
  %9002 = vmatpush1.bf16.msra.mxu0 %v7865
  %9003 = vmatprep.subr.bf16.mxu0 0
  %9004 = vmatpush1.bf16.msra.mxu0 %v7866
  %9005 = vmatprep.subr.bf16.mxu0 0
  %9006 = vmatpush1.bf16.msra.mxu0 %v7867
  %9007 = vmatprep.subr.bf16.mxu0 0
  %9008 = vmatpush1.bf16.msra.mxu0 %v7868
  %9009 = vmatprep.subr.bf16.mxu0 0
  %9010 = vmatpush1.bf16.msra.mxu0 %v7869
  %9011 = vmatprep.subr.bf16.mxu0 0
  %9012 = vmatpush1.bf16.msra.mxu0 %v7870
  %9013 = vmatprep.subr.bf16.mxu0 0
  %9014 = vmatpush1.bf16.msra.mxu0 %v7871
  %9015 = vmatprep.subr.bf16.mxu0 0
  %9016 = vmatpush1.bf16.msra.mxu0 %v7872
  %9017 = vmatprep.subr.bf16.mxu0 0
  %9018 = vmatpush1.bf16.msra.mxu0 %v7873
  %9019 = vmatprep.mubr.bf16.mxu0 %v6326
  %9020 = vmatmul.mubr.bf16.gmra.mrb[0].mxu0 %v6325
  %v9021 = vpop.f32.mrb[0].mxu0
  %v9022 = vadd.f32 %v8925, %v9021
  %v9023 = vpop.f32.mrb[0].mxu0
  %v9024 = vpop.f32.mrb[0].mxu0
  %v9025 = vadd.f32 %v8928, %v9024
  %v9026 = vpop.f32.mrb[0].mxu0
  %9027 = vmatprep.mubr.bf16.mxu0 %v6351
  %9028 = vmatmul.mubr.bf16.gmra.mrb[0].mxu0 %v6350
  %v9029 = vpop.f32.mrb[0].mxu0
  %v9030 = vadd.f32 %v8933, %v9029
  %v9031 = vpop.f32.mrb[0].mxu0
  %v9032 = vpop.f32.mrb[0].mxu0
  %v9033 = vadd.f32 %v8936, %v9032
  %v9034 = vpop.f32.mrb[0].mxu0
  %9035 = vmatprep.mubr.bf16.mxu0 %v6376
  %9036 = vmatmul.mubr.bf16.gmra.mrb[0].mxu0 %v6375
  %v9037 = vpop.f32.mrb[0].mxu0
  %v9038 = vadd.f32 %v8941, %v9037
  %v9039 = vpop.f32.mrb[0].mxu0
  %v9040 = vpop.f32.mrb[0].mxu0
  %v9041 = vadd.f32 %v8944, %v9040
  %v9042 = vpop.f32.mrb[0].mxu0
  %9043 = vmatprep.mubr.bf16.mxu0 %v6401
  %9044 = vmatmul.mubr.bf16.gmra.mrb[0].mxu0 %v6400
  %v9045 = vpop.f32.mrb[0].mxu0
  %v9046 = vadd.f32 %v8949, %v9045
  %v9047 = vpop.f32.mrb[0].mxu0
  %v9048 = vpop.f32.mrb[0].mxu0
  %v9049 = vadd.f32 %v8952, %v9048
  %v9050 = vpop.f32.mrb[0].mxu0
  %9051 = vmatprep.mubr.bf16.mxu0 %v6426
  %9052 = vmatmul.mubr.bf16.gmra.mrb[0].mxu0 %v6425
  %v9053 = vpop.f32.mrb[0].mxu0
  %v9054 = vadd.f32 %v8957, %v9053
  %v9055 = vpop.f32.mrb[0].mxu0
  %v9056 = vpop.f32.mrb[0].mxu0
  %v9057 = vadd.f32 %v8960, %v9056
  %v9058 = vpop.f32.mrb[0].mxu0
  %9059 = vmatprep.mubr.bf16.mxu0 %v6451
  %9060 = vmatmul.mubr.bf16.gmra.mrb[0].mxu0 %v6450
  %v9061 = vpop.f32.mrb[0].mxu0
  %v9062 = vadd.f32 %v8965, %v9061
  %v9063 = vpop.f32.mrb[0].mxu0
  %v9064 = vpop.f32.mrb[0].mxu0
  %v9065 = vadd.f32 %v8968, %v9064
  %v9066 = vpop.f32.mrb[0].mxu0
  %9067 = vmatprep.mubr.bf16.mxu0 %v6476
  %9068 = vmatmul.mubr.bf16.gmra.mrb[0].mxu0 %v6475
  %v9069 = vpop.f32.mrb[0].mxu0
  %v9070 = vadd.f32 %v8973, %v9069
  %v9071 = vpop.f32.mrb[0].mxu0
  %v9072 = vpop.f32.mrb[0].mxu0
  %v9073 = vadd.f32 %v8976, %v9072
  %v9074 = vpop.f32.mrb[0].mxu0
  %9075 = vmatprep.mubr.bf16.mxu0 %v6501
  %9076 = vmatmul.mubr.bf16.gmra.mrb[0].mxu0 %v6500
  %v9077 = vpop.f32.mrb[0].mxu0
  %v9078 = vadd.f32 %v8981, %v9077
  %v9079 = vpop.f32.mrb[0].mxu0
  %v9080 = vpop.f32.mrb[0].mxu0
  %v9081 = vadd.f32 %v8984, %v9080
  %v9082 = vpop.f32.mrb[0].mxu0
  %9083 = vdwg.mxu0
  %9084 = vmatprep.subr.bf16.mxu0 0
  %9085 = vmatpush1.bf16.msra.mxu0 %v7874
  %9086 = vmatprep.subr.bf16.mxu0 0
  %9087 = vmatpush1.bf16.msra.mxu0 %v7875
  %9088 = vmatprep.subr.bf16.mxu0 0
  %9089 = vmatpush1.bf16.msra.mxu0 %v7876
  %9090 = vmatprep.subr.bf16.mxu0 0
  %9091 = vmatpush1.bf16.msra.mxu0 %v7877
  %9092 = vmatprep.subr.bf16.mxu0 0
  %9093 = vmatpush1.bf16.msra.mxu0 %v7878
  %9094 = vmatprep.subr.bf16.mxu0 0
  %9095 = vmatpush1.bf16.msra.mxu0 %v7879
  %9096 = vmatprep.subr.bf16.mxu0 0
  %9097 = vmatpush1.bf16.msra.mxu0 %v7880
  %9098 = vmatprep.subr.bf16.mxu0 0
  %9099 = vmatpush1.bf16.msra.mxu0 %v7881
  %9100 = vmatprep.subr.bf16.mxu0 0
  %9101 = vmatpush1.bf16.msra.mxu0 %v7882
  %9102 = vmatprep.subr.bf16.mxu0 0
  %9103 = vmatpush1.bf16.msra.mxu0 %v7883
  %9104 = vmatprep.subr.bf16.mxu0 0
  %9105 = vmatpush1.bf16.msra.mxu0 %v7884
  %9106 = vmatprep.subr.bf16.mxu0 0
  %9107 = vmatpush1.bf16.msra.mxu0 %v7885
  %9108 = vmatprep.subr.bf16.mxu0 0
  %9109 = vmatpush1.bf16.msra.mxu0 %v7886
  %9110 = vmatprep.subr.bf16.mxu0 0
  %9111 = vmatpush1.bf16.msra.mxu0 %v7887
  %9112 = vmatprep.subr.bf16.mxu0 0
  %9113 = vmatpush1.bf16.msra.mxu0 %v7888
  %9114 = vmatprep.subr.bf16.mxu0 0
  %9115 = vmatpush1.bf16.msra.mxu0 %v7889
  %9116 = vmatprep.mubr.bf16.mxu0 %v6328
  %9117 = vmatmul.mubr.bf16.gmra.mrb[0].mxu0 %v6327
  %v9118 = vpop.f32.mrb[0].mxu0
  %v9119 = vadd.f32 %v9022, %v9118
  %v9120 = vpop.f32.mrb[0].mxu0
  %v9121 = vpop.f32.mrb[0].mxu0
  %v9122 = vadd.f32 %v9025, %v9121
  %v9123 = vpop.f32.mrb[0].mxu0
  %9124 = vmatprep.mubr.bf16.mxu0 %v6353
  %9125 = vmatmul.mubr.bf16.gmra.mrb[0].mxu0 %v6352
  %v9126 = vpop.f32.mrb[0].mxu0
  %v9127 = vadd.f32 %v9030, %v9126
  %v9128 = vpop.f32.mrb[0].mxu0
  %v9129 = vpop.f32.mrb[0].mxu0
  %v9130 = vadd.f32 %v9033, %v9129
  %v9131 = vpop.f32.mrb[0].mxu0
  %9132 = vmatprep.mubr.bf16.mxu0 %v6378
  %9133 = vmatmul.mubr.bf16.gmra.mrb[0].mxu0 %v6377
  %v9134 = vpop.f32.mrb[0].mxu0
  %v9135 = vadd.f32 %v9038, %v9134
  %v9136 = vpop.f32.mrb[0].mxu0
  %v9137 = vpop.f32.mrb[0].mxu0
  %v9138 = vadd.f32 %v9041, %v9137
  %v9139 = vpop.f32.mrb[0].mxu0
  %9140 = vmatprep.mubr.bf16.mxu0 %v6403
  %9141 = vmatmul.mubr.bf16.gmra.mrb[0].mxu0 %v6402
  %v9142 = vpop.f32.mrb[0].mxu0
  %v9143 = vadd.f32 %v9046, %v9142
  %v9144 = vpop.f32.mrb[0].mxu0
  %v9145 = vpop.f32.mrb[0].mxu0
  %v9146 = vadd.f32 %v9049, %v9145
  %v9147 = vpop.f32.mrb[0].mxu0
  %9148 = vmatprep.mubr.bf16.mxu0 %v6428
  %9149 = vmatmul.mubr.bf16.gmra.mrb[0].mxu0 %v6427
  %v9150 = vpop.f32.mrb[0].mxu0
  %v9151 = vadd.f32 %v9054, %v9150
  %v9152 = vpop.f32.mrb[0].mxu0
  %v9153 = vpop.f32.mrb[0].mxu0
  %v9154 = vadd.f32 %v9057, %v9153
  %v9155 = vpop.f32.mrb[0].mxu0
  %9156 = vmatprep.mubr.bf16.mxu0 %v6453
  %9157 = vmatmul.mubr.bf16.gmra.mrb[0].mxu0 %v6452
  %v9158 = vpop.f32.mrb[0].mxu0
  %v9159 = vadd.f32 %v9062, %v9158
  %v9160 = vpop.f32.mrb[0].mxu0
  %v9161 = vpop.f32.mrb[0].mxu0
  %v9162 = vadd.f32 %v9065, %v9161
  %v9163 = vpop.f32.mrb[0].mxu0
  %9164 = vmatprep.mubr.bf16.mxu0 %v6478
  %9165 = vmatmul.mubr.bf16.gmra.mrb[0].mxu0 %v6477
  %v9166 = vpop.f32.mrb[0].mxu0
  %v9167 = vadd.f32 %v9070, %v9166
  %v9168 = vpop.f32.mrb[0].mxu0
  %v9169 = vpop.f32.mrb[0].mxu0
  %v9170 = vadd.f32 %v9073, %v9169
  %v9171 = vpop.f32.mrb[0].mxu0
  %9172 = vmatprep.mubr.bf16.mxu0 %v6503
  %9173 = vmatmul.mubr.bf16.gmra.mrb[0].mxu0 %v6502
  %v9174 = vpop.f32.mrb[0].mxu0
  %v9175 = vadd.f32 %v9078, %v9174
  %v9176 = vpop.f32.mrb[0].mxu0
  %v9177 = vpop.f32.mrb[0].mxu0
  %v9178 = vadd.f32 %v9081, %v9177
  %v9179 = vpop.f32.mrb[0].mxu0
  %9180 = vdwg.mxu0
  %9181 = vmatprep.subr.bf16.mxu0 0
  %9182 = vmatpush1.bf16.msra.mxu0 %v7890
  %9183 = vmatprep.subr.bf16.mxu0 0
  %9184 = vmatpush1.bf16.msra.mxu0 %v7891
  %9185 = vmatprep.subr.bf16.mxu0 0
  %9186 = vmatpush1.bf16.msra.mxu0 %v7892
  %9187 = vmatprep.subr.bf16.mxu0 0
  %9188 = vmatpush1.bf16.msra.mxu0 %v7893
  %9189 = vmatprep.subr.bf16.mxu0 0
  %9190 = vmatpush1.bf16.msra.mxu0 %v7894
  %9191 = vmatprep.subr.bf16.mxu0 0
  %9192 = vmatpush1.bf16.msra.mxu0 %v7895
  %9193 = vmatprep.subr.bf16.mxu0 0
  %9194 = vmatpush1.bf16.msra.mxu0 %v7896
  %9195 = vmatprep.subr.bf16.mxu0 0
  %9196 = vmatpush1.bf16.msra.mxu0 %v7897
  %9197 = vmatprep.subr.bf16.mxu0 0
  %9198 = vmatpush1.bf16.msra.mxu0 %v7898
  %9199 = vmatprep.subr.bf16.mxu0 0
  %9200 = vmatpush1.bf16.msra.mxu0 %v7899
  %9201 = vmatprep.subr.bf16.mxu0 0
  %9202 = vmatpush1.bf16.msra.mxu0 %v7900
  %9203 = vmatprep.subr.bf16.mxu0 0
  %9204 = vmatpush1.bf16.msra.mxu0 %v7901
  %9205 = vmatprep.subr.bf16.mxu0 0
  %9206 = vmatpush1.bf16.msra.mxu0 %v7902
  %9207 = vmatprep.subr.bf16.mxu0 0
  %9208 = vmatpush1.bf16.msra.mxu0 %v7903
  %9209 = vmatprep.subr.bf16.mxu0 0
  %9210 = vmatpush1.bf16.msra.mxu0 %v7904
  %9211 = vmatprep.subr.bf16.mxu0 0
  %9212 = vmatpush1.bf16.msra.mxu0 %v7905
  %9213 = vmatprep.mubr.bf16.mxu0 %v6330
  %9214 = vmatmul.mubr.bf16.gmra.mrb[0].mxu0 %v6329
  %v9215 = vpop.f32.mrb[0].mxu0
  %v9216 = vadd.f32 %v9119, %v9215
  %v9217 = vpop.f32.mrb[0].mxu0
  %v9218 = vpop.f32.mrb[0].mxu0
  %v9219 = vadd.f32 %v9122, %v9218
  %v9220 = vpop.f32.mrb[0].mxu0
  %9221 = vmatprep.mubr.bf16.mxu0 %v6355
  %9222 = vmatmul.mubr.bf16.gmra.mrb[0].mxu0 %v6354
  %v9223 = vpop.f32.mrb[0].mxu0
  %v9224 = vadd.f32 %v9127, %v9223
  %v9225 = vpop.f32.mrb[0].mxu0
  %v9226 = vpop.f32.mrb[0].mxu0
  %v9227 = vadd.f32 %v9130, %v9226
  %v9228 = vpop.f32.mrb[0].mxu0
  %9229 = vmatprep.mubr.bf16.mxu0 %v6380
  %9230 = vmatmul.mubr.bf16.gmra.mrb[0].mxu0 %v6379
  %v9231 = vpop.f32.mrb[0].mxu0
  %v9232 = vadd.f32 %v9135, %v9231
  %v9233 = vpop.f32.mrb[0].mxu0
  %v9234 = vpop.f32.mrb[0].mxu0
  %v9235 = vadd.f32 %v9138, %v9234
  %v9236 = vpop.f32.mrb[0].mxu0
  %9237 = vmatprep.mubr.bf16.mxu0 %v6405
  %9238 = vmatmul.mubr.bf16.gmra.mrb[0].mxu0 %v6404
  %v9239 = vpop.f32.mrb[0].mxu0
  %v9240 = vadd.f32 %v9143, %v9239
  %v9241 = vpop.f32.mrb[0].mxu0
  %v9242 = vpop.f32.mrb[0].mxu0
  %v9243 = vadd.f32 %v9146, %v9242
  %v9244 = vpop.f32.mrb[0].mxu0
  %9245 = vmatprep.mubr.bf16.mxu0 %v6430
  %9246 = vmatmul.mubr.bf16.gmra.mrb[0].mxu0 %v6429
  %v9247 = vpop.f32.mrb[0].mxu0
  %v9248 = vadd.f32 %v9151, %v9247
  %v9249 = vpop.f32.mrb[0].mxu0
  %v9250 = vpop.f32.mrb[0].mxu0
  %v9251 = vadd.f32 %v9154, %v9250
  %v9252 = vpop.f32.mrb[0].mxu0
  %9253 = vmatprep.mubr.bf16.mxu0 %v6455
  %9254 = vmatmul.mubr.bf16.gmra.mrb[0].mxu0 %v6454
  %v9255 = vpop.f32.mrb[0].mxu0
  %v9256 = vadd.f32 %v9159, %v9255
  %v9257 = vpop.f32.mrb[0].mxu0
  %v9258 = vpop.f32.mrb[0].mxu0
  %v9259 = vadd.f32 %v9162, %v9258
  %v9260 = vpop.f32.mrb[0].mxu0
  %9261 = vmatprep.mubr.bf16.mxu0 %v6480
  %9262 = vmatmul.mubr.bf16.gmra.mrb[0].mxu0 %v6479
  %v9263 = vpop.f32.mrb[0].mxu0
  %v9264 = vadd.f32 %v9167, %v9263
  %v9265 = vpop.f32.mrb[0].mxu0
  %v9266 = vpop.f32.mrb[0].mxu0
  %v9267 = vadd.f32 %v9170, %v9266
  %v9268 = vpop.f32.mrb[0].mxu0
  %9269 = vmatprep.mubr.bf16.mxu0 %v6505
  %9270 = vmatmul.mubr.bf16.gmra.mrb[0].mxu0 %v6504
  %v9271 = vpop.f32.mrb[0].mxu0
  %v9272 = vadd.f32 %v9175, %v9271
  %v9273 = vpop.f32.mrb[0].mxu0
  %v9274 = vpop.f32.mrb[0].mxu0
  %v9275 = vadd.f32 %v9178, %v9274
  %v9276 = vpop.f32.mrb[0].mxu0
  %9277 = vdwg.mxu0
  %9278 = vmatprep.subr.bf16.mxu0 0
  %9279 = vmatpush1.bf16.msra.mxu0 %v7906
  %9280 = vmatprep.subr.bf16.mxu0 0
  %9281 = vmatpush1.bf16.msra.mxu0 %v7907
  %9282 = vmatprep.subr.bf16.mxu0 0
  %9283 = vmatpush1.bf16.msra.mxu0 %v7908
  %9284 = vmatprep.subr.bf16.mxu0 0
  %9285 = vmatpush1.bf16.msra.mxu0 %v7909
  %9286 = vmatprep.subr.bf16.mxu0 0
  %9287 = vmatpush1.bf16.msra.mxu0 %v7910
  %9288 = vmatprep.subr.bf16.mxu0 0
  %9289 = vmatpush1.bf16.msra.mxu0 %v7911
  %9290 = vmatprep.subr.bf16.mxu0 0
  %9291 = vmatpush1.bf16.msra.mxu0 %v7912
  %9292 = vmatprep.subr.bf16.mxu0 0
  %9293 = vmatpush1.bf16.msra.mxu0 %v7913
  %9294 = vmatprep.subr.bf16.mxu0 0
  %9295 = vmatpush1.bf16.msra.mxu0 0
  %9296 = vmatprep.subr.bf16.mxu0 0
  %9297 = vmatpush1.bf16.msra.mxu0 0
  %9298 = vmatprep.subr.bf16.mxu0 0
  %9299 = vmatpush1.bf16.msra.mxu0 0
  %9300 = vmatprep.subr.bf16.mxu0 0
  %9301 = vmatpush1.bf16.msra.mxu0 0
  %9302 = vmatprep.subr.bf16.mxu0 0
  %9303 = vmatpush1.bf16.msra.mxu0 0
  %9304 = vmatprep.subr.bf16.mxu0 0
  %9305 = vmatpush1.bf16.msra.mxu0 0
  %9306 = vmatprep.subr.bf16.mxu0 0
  %9307 = vmatpush1.bf16.msra.mxu0 0
  %9308 = vmatprep.subr.bf16.mxu0 0
  %9309 = vmatpush1.bf16.msra.mxu0 0
  %9310 = vmatprep.mubr.bf16.mxu0 0
  %9311 = vmatmul.mubr.bf16.gmra.mrb[0].mxu0 %v6331
  %v9312 = vpop.f32.mrb[0].mxu0
  %v9313 = vadd.f32 %v9216, %v9312
  %v9314 = vpop.f32.mrb[0].mxu0
  %v9315 = vpop.f32.mrb[0].mxu0
  %v9316 = vadd.f32 %v9219, %v9315
  %v9317 = vpop.f32.mrb[0].mxu0
  %9318 = vmatprep.mubr.bf16.mxu0 0
  %9319 = vmatmul.mubr.bf16.gmra.mrb[0].mxu0 %v6356
  %v9320 = vpop.f32.mrb[0].mxu0
  %v9321 = vadd.f32 %v9224, %v9320
  %v9322 = vpop.f32.mrb[0].mxu0
  %v9323 = vpop.f32.mrb[0].mxu0
  %v9324 = vadd.f32 %v9227, %v9323
  %v9325 = vpop.f32.mrb[0].mxu0
  %9326 = vmatprep.mubr.bf16.mxu0 0
  %9327 = vmatmul.mubr.bf16.gmra.mrb[0].mxu0 %v6381
  %v9328 = vpop.f32.mrb[0].mxu0
  %v9329 = vadd.f32 %v9232, %v9328
  %v9330 = vpop.f32.mrb[0].mxu0
  %v9331 = vpop.f32.mrb[0].mxu0
  %v9332 = vadd.f32 %v9235, %v9331
  %v9333 = vpop.f32.mrb[0].mxu0
  %9334 = vmatprep.mubr.bf16.mxu0 0
  %9335 = vmatmul.mubr.bf16.gmra.mrb[0].mxu0 %v6406
  %v9336 = vpop.f32.mrb[0].mxu0
  %v9337 = vadd.f32 %v9240, %v9336
  %v9338 = vpop.f32.mrb[0].mxu0
  %v9339 = vpop.f32.mrb[0].mxu0
  %v9340 = vadd.f32 %v9243, %v9339
  %v9341 = vpop.f32.mrb[0].mxu0
  %9342 = vmatprep.mubr.bf16.mxu0 0
  %9343 = vmatmul.mubr.bf16.gmra.mrb[0].mxu0 %v6431
  %v9344 = vpop.f32.mrb[0].mxu0
  %v9345 = vadd.f32 %v9248, %v9344
  %v9346 = vpop.f32.mrb[0].mxu0
  %v9347 = vpop.f32.mrb[0].mxu0
  %v9348 = vadd.f32 %v9251, %v9347
  %v9349 = vpop.f32.mrb[0].mxu0
  %9350 = vmatprep.mubr.bf16.mxu0 0
  %9351 = vmatmul.mubr.bf16.gmra.mrb[0].mxu0 %v6456
  %v9352 = vpop.f32.mrb[0].mxu0
  %v9353 = vadd.f32 %v9256, %v9352
  %v9354 = vpop.f32.mrb[0].mxu0
  %v9355 = vpop.f32.mrb[0].mxu0
  %v9356 = vadd.f32 %v9259, %v9355
  %v9357 = vpop.f32.mrb[0].mxu0
  %9358 = vmatprep.mubr.bf16.mxu0 0
  %9359 = vmatmul.mubr.bf16.gmra.mrb[0].mxu0 %v6481
  %v9360 = vpop.f32.mrb[0].mxu0
  %v9361 = vadd.f32 %v9264, %v9360
  %v9362 = vpop.f32.mrb[0].mxu0
  %v9363 = vpop.f32.mrb[0].mxu0
  %v9364 = vadd.f32 %v9267, %v9363
  %v9365 = vpop.f32.mrb[0].mxu0
  %9366 = vmatprep.mubr.bf16.mxu0 0
  %9367 = vmatmul.mubr.bf16.gmra.mrb[0].mxu0 %v6506
  %v9368 = vpop.f32.mrb[0].mxu0
  %v9369 = vadd.f32 %v9272, %v9368
  %v9370 = vpop.f32.mrb[0].mxu0
  %v9371 = vpop.f32.mrb[0].mxu0
  %v9372 = vadd.f32 %v9275, %v9371
  %v9373 = vpop.f32.mrb[0].mxu0
  %9374 = vdwg.mxu0
  %v9375 = vmax.f32 %v9313, 0.0
  %v9376 = vmax.f32 %v9316, 0.0
  %v9377 = vmax.f32 %v9321, 0.0
  %v9378 = vmax.f32 %v9324, 0.0
  %v9379 = vmax.f32 %v9329, 0.0
  %v9380 = vmax.f32 %v9332, 0.0
  %v9381 = vmax.f32 %v9337, 0.0
  %v9382 = vmax.f32 %v9340, 0.0
  %v9383 = vmax.f32 %v9345, 0.0
  %v9384 = vmax.f32 %v9348, 0.0
  %v9385 = vmax.f32 %v9353, 0.0
  %v9386 = vmax.f32 %v9356, 0.0
  %v9387 = vmax.f32 %v9361, 0.0
  %v9388 = vmax.f32 %v9364, 0.0
  %v9389 = vmax.f32 %v9369, 0.0
  %v9390 = vmax.f32 %v9372, 0.0
  %v9391 = vpack.c.bf16 %v9376, %v9375
  %v9392 = vpack.c.bf16 %v9378, %v9377
  %v9393 = vpack.c.bf16 %v9380, %v9379
  %v9394 = vpack.c.bf16 %v9382, %v9381
  %v9395 = vpack.c.bf16 %v9384, %v9383
  %v9396 = vpack.c.bf16 %v9386, %v9385
  %v9397 = vpack.c.bf16 %v9388, %v9387
  %v9398 = vpack.c.bf16 %v9390, %v9389
  %9399 = vst [vmem:[#allocation4] sm:$0xff] %v9391
  %9400 = vst [vmem:[#allocation4 + $0x8] sm:$0xff] %v9392
  %9401 = vst [vmem:[#allocation4 + $0x10] sm:$0xff] %v9393
  %9402 = vst [vmem:[#allocation4 + $0x18] sm:$0xff] %v9394
  %9403 = vst [vmem:[#allocation4 + $0x20] sm:$0xff] %v9395
  %9404 = vst [vmem:[#allocation4 + $0x28] sm:$0xff] %v9396
  %9405 = vst [vmem:[#allocation4 + $0x30] sm:$0xff] %v9397
  %9406 = vst [vmem:[#allocation4 + $0x38] sm:$0xff] %v9398
  %v9407 = vld [vmem:[#allocation4] sm:$0x1]
  %v9408 = vld [vmem:[#allocation4 + $0x8] sm:$0x1]
  %v9409 = vld [vmem:[#allocation4 + $0x10] sm:$0x1]
  %v9410 = vld [vmem:[#allocation4 + $0x18] sm:$0x1]
  %v9411 = vld [vmem:[#allocation4 + $0x20] sm:$0x1]
  %v9412 = vld [vmem:[#allocation4 + $0x28] sm:$0x1]
  %v9413 = vld [vmem:[#allocation4 + $0x30] sm:$0x1]
  %v9414 = vld [vmem:[#allocation4 + $0x38] sm:$0x1]
  %v9415 = vld [vmem:[#allocation4] sm:$0x2]
  %v9416 = vld [vmem:[#allocation4 + $0x8] sm:$0x2]
  %v9417 = vld [vmem:[#allocation4 + $0x10] sm:$0x2]
  %v9418 = vld [vmem:[#allocation4 + $0x18] sm:$0x2]
  %v9419 = vld [vmem:[#allocation4 + $0x20] sm:$0x2]
  %v9420 = vld [vmem:[#allocation4 + $0x28] sm:$0x2]
  %v9421 = vld [vmem:[#allocation4 + $0x30] sm:$0x2]
  %v9422 = vld [vmem:[#allocation4 + $0x38] sm:$0x2]
  %v9423 = vld [vmem:[#allocation4] sm:$0x4]
  %v9424 = vld [vmem:[#allocation4 + $0x8] sm:$0x4]
  %v9425 = vld [vmem:[#allocation4 + $0x10] sm:$0x4]
  %v9426 = vld [vmem:[#allocation4 + $0x18] sm:$0x4]
  %v9427 = vld [vmem:[#allocation4 + $0x20] sm:$0x4]
  %v9428 = vld [vmem:[#allocation4 + $0x28] sm:$0x4]
  %v9429 = vld [vmem:[#allocation4 + $0x30] sm:$0x4]
  %v9430 = vld [vmem:[#allocation4 + $0x38] sm:$0x4]
  %v9431 = vld [vmem:[#allocation4] sm:$0x8]
  %v9432 = vld [vmem:[#allocation4 + $0x8] sm:$0x8]
  %v9433 = vld [vmem:[#allocation4 + $0x10] sm:$0x8]
  %v9434 = vld [vmem:[#allocation4 + $0x18] sm:$0x8]
  %v9435 = vld [vmem:[#allocation4 + $0x20] sm:$0x8]
  %v9436 = vld [vmem:[#allocation4 + $0x28] sm:$0x8]
  %v9437 = vld [vmem:[#allocation4 + $0x30] sm:$0x8]
  %v9438 = vld [vmem:[#allocation4 + $0x38] sm:$0x8]
  %v9439 = vld [vmem:[#allocation4] sm:$0x10]
  %v9440 = vld [vmem:[#allocation4 + $0x8] sm:$0x10]
  %v9441 = vld [vmem:[#allocation4 + $0x10] sm:$0x10]
  %v9442 = vld [vmem:[#allocation4 + $0x18] sm:$0x10]
  %v9443 = vld [vmem:[#allocation4 + $0x20] sm:$0x10]
  %v9444 = vld [vmem:[#allocation4 + $0x28] sm:$0x10]
  %v9445 = vld [vmem:[#allocation4 + $0x30] sm:$0x10]
  %v9446 = vld [vmem:[#allocation4 + $0x38] sm:$0x10]
  %v9447 = vld [vmem:[#allocation4] sm:$0x20]
  %v9448 = vld [vmem:[#allocation4 + $0x8] sm:$0x20]
  %v9449 = vld [vmem:[#allocation4 + $0x10] sm:$0x20]
  %v9450 = vld [vmem:[#allocation4 + $0x18] sm:$0x20]
  %v9451 = vld [vmem:[#allocation4 + $0x20] sm:$0x20]
  %v9452 = vld [vmem:[#allocation4 + $0x28] sm:$0x20]
  %v9453 = vld [vmem:[#allocation4 + $0x30] sm:$0x20]
  %v9454 = vld [vmem:[#allocation4 + $0x38] sm:$0x20]
  %v9455 = vld [vmem:[#allocation4] sm:$0x40]
  %v9456 = vld [vmem:[#allocation4 + $0x8] sm:$0x40]
  %v9457 = vld [vmem:[#allocation4 + $0x10] sm:$0x40]
  %v9458 = vld [vmem:[#allocation4 + $0x18] sm:$0x40]
  %v9459 = vld [vmem:[#allocation4 + $0x20] sm:$0x40]
  %v9460 = vld [vmem:[#allocation4 + $0x28] sm:$0x40]
  %v9461 = vld [vmem:[#allocation4 + $0x30] sm:$0x40]
  %v9462 = vld [vmem:[#allocation4 + $0x38] sm:$0x40]
  %v9463 = vld [vmem:[#allocation4] sm:$0x80]
  %v9464 = vld [vmem:[#allocation4 + $0x8] sm:$0x80]
  %v9465 = vld [vmem:[#allocation4 + $0x10] sm:$0x80]
  %v9466 = vld [vmem:[#allocation4 + $0x18] sm:$0x80]
  %v9467 = vld [vmem:[#allocation4 + $0x20] sm:$0x80]
  %v9468 = vld [vmem:[#allocation4 + $0x28] sm:$0x80]
  %v9469 = vld [vmem:[#allocation4 + $0x30] sm:$0x80]
  %v9470 = vld [vmem:[#allocation4 + $0x38] sm:$0x80]
  %v9479 = vunpack.c.l.b16 %v9407
  %v9480 = vunpack.c.l.b16 %v9408
  %v9481 = vunpack.c.l.b16 %v9409
  %v9482 = vunpack.c.l.b16 %v9410
  %v9483 = vunpack.c.l.b16 %v9411
  %v9484 = vunpack.c.l.b16 %v9412
  %v9485 = vunpack.c.l.b16 %v9413
  %v9486 = vunpack.c.l.b16 %v9414
  %v9487 = vrot.slane %v9480, 7
  %vm9488 = vcmask 1041409
  %v9489 = vsel %vm9488, %v9487, %v9479
  %v9490 = vrot.slane %v9481, 6
  %vm9491 = vcmask 1042434
  %v9492 = vsel %vm9491, %v9490, %v9489
  %v9493 = vrot.slane %v9482, 5
  %vm9494 = vcmask 1043459
  %v9495 = vsel %vm9494, %v9493, %v9492
  %v9496 = vrot.slane %v9483, 4
  %vm9497 = vcmask 1044484
  %v9498 = vsel %vm9497, %v9496, %v9495
  %v9499 = vrot.slane %v9484, 3
  %vm9500 = vcmask 1045509
  %v9501 = vsel %vm9500, %v9499, %v9498
  %v9502 = vrot.slane %v9485, 2
  %vm9503 = vcmask 1046534
  %v9504 = vsel %vm9503, %v9502, %v9501
  %v9505 = vrot.slane %v9486, 1
  %vm9506 = vcmask 1047559
  %v9507 = vsel %vm9506, %v9505, %v9504
  %v9508 = vpack.c.b16 %v9507, %v9507
  %v9510 = vrot.slane %v9479, 1
  %v9511 = vsel %vm9488, %v9480, %v9510
  %v9512 = vrot.slane %v9481, 7
  %v9513 = vsel %vm9491, %v9512, %v9511
  %v9514 = vrot.slane %v9482, 6
  %v9515 = vsel %vm9494, %v9514, %v9513
  %v9516 = vrot.slane %v9483, 5
  %v9517 = vsel %vm9497, %v9516, %v9515
  %v9518 = vrot.slane %v9484, 4
  %v9519 = vsel %vm9500, %v9518, %v9517
  %v9520 = vrot.slane %v9485, 3
  %v9521 = vsel %vm9503, %v9520, %v9519
  %v9522 = vrot.slane %v9486, 2
  %v9523 = vsel %vm9506, %v9522, %v9521
  %v9524 = vpack.c.b16 %v9523, %v9523
  %v9534 = vunpack.c.l.b16 %v9415
  %v9535 = vunpack.c.l.b16 %v9416
  %v9536 = vunpack.c.l.b16 %v9417
  %v9537 = vunpack.c.l.b16 %v9418
  %v9538 = vunpack.c.l.b16 %v9419
  %v9539 = vunpack.c.l.b16 %v9420
  %v9540 = vunpack.c.l.b16 %v9421
  %v9541 = vunpack.c.l.b16 %v9422
  %v9542 = vrot.slane %v9534, 2
  %v9543 = vrot.slane %v9535, 1
  %v9544 = vsel %vm9488, %v9543, %v9542
  %v9545 = vsel %vm9491, %v9536, %v9544
  %v9546 = vrot.slane %v9537, 7
  %v9547 = vsel %vm9494, %v9546, %v9545
  %v9548 = vrot.slane %v9538, 6
  %v9549 = vsel %vm9497, %v9548, %v9547
  %v9550 = vrot.slane %v9539, 5
  %v9551 = vsel %vm9500, %v9550, %v9549
  %v9552 = vrot.slane %v9540, 4
  %v9553 = vsel %vm9503, %v9552, %v9551
  %v9554 = vrot.slane %v9541, 3
  %v9555 = vsel %vm9506, %v9554, %v9553
  %v9556 = vpack.c.b16 %v9555, %v9555
  %v9558 = vrot.slane %v9534, 3
  %v9559 = vrot.slane %v9535, 2
  %v9560 = vsel %vm9488, %v9559, %v9558
  %v9561 = vrot.slane %v9536, 1
  %v9562 = vsel %vm9491, %v9561, %v9560
  %v9563 = vsel %vm9494, %v9537, %v9562
  %v9564 = vrot.slane %v9538, 7
  %v9565 = vsel %vm9497, %v9564, %v9563
  %v9566 = vrot.slane %v9539, 6
  %v9567 = vsel %vm9500, %v9566, %v9565
  %v9568 = vrot.slane %v9540, 5
  %v9569 = vsel %vm9503, %v9568, %v9567
  %v9570 = vrot.slane %v9541, 4
  %v9571 = vsel %vm9506, %v9570, %v9569
  %v9572 = vpack.c.b16 %v9571, %v9571
  %v9582 = vunpack.c.l.b16 %v9423
  %v9583 = vunpack.c.l.b16 %v9424
  %v9584 = vunpack.c.l.b16 %v9425
  %v9585 = vunpack.c.l.b16 %v9426
  %v9586 = vunpack.c.l.b16 %v9427
  %v9587 = vunpack.c.l.b16 %v9428
  %v9588 = vunpack.c.l.b16 %v9429
  %v9589 = vunpack.c.l.b16 %v9430
  %v9590 = vrot.slane %v9582, 4
  %v9591 = vrot.slane %v9583, 3
  %v9592 = vsel %vm9488, %v9591, %v9590
  %v9593 = vrot.slane %v9584, 2
  %v9594 = vsel %vm9491, %v9593, %v9592
  %v9595 = vrot.slane %v9585, 1
  %v9596 = vsel %vm9494, %v9595, %v9594
  %v9597 = vsel %vm9497, %v9586, %v9596
  %v9598 = vrot.slane %v9587, 7
  %v9599 = vsel %vm9500, %v9598, %v9597
  %v9600 = vrot.slane %v9588, 6
  %v9601 = vsel %vm9503, %v9600, %v9599
  %v9602 = vrot.slane %v9589, 5
  %v9603 = vsel %vm9506, %v9602, %v9601
  %v9604 = vpack.c.b16 %v9603, %v9603
  %v9606 = vrot.slane %v9582, 5
  %v9607 = vrot.slane %v9583, 4
  %v9608 = vsel %vm9488, %v9607, %v9606
  %v9609 = vrot.slane %v9584, 3
  %v9610 = vsel %vm9491, %v9609, %v9608
  %v9611 = vrot.slane %v9585, 2
  %v9612 = vsel %vm9494, %v9611, %v9610
  %v9613 = vrot.slane %v9586, 1
  %v9614 = vsel %vm9497, %v9613, %v9612
  %v9615 = vsel %vm9500, %v9587, %v9614
  %v9616 = vrot.slane %v9588, 7
  %v9617 = vsel %vm9503, %v9616, %v9615
  %v9618 = vrot.slane %v9589, 6
  %v9619 = vsel %vm9506, %v9618, %v9617
  %v9620 = vpack.c.b16 %v9619, %v9619
  %v9630 = vunpack.c.l.b16 %v9431
  %v9631 = vunpack.c.l.b16 %v9432
  %v9632 = vunpack.c.l.b16 %v9433
  %v9633 = vunpack.c.l.b16 %v9434
  %v9634 = vunpack.c.l.b16 %v9435
  %v9635 = vunpack.c.l.b16 %v9436
  %v9636 = vunpack.c.l.b16 %v9437
  %v9637 = vunpack.c.l.b16 %v9438
  %v9638 = vrot.slane %v9630, 6
  %v9639 = vrot.slane %v9631, 5
  %v9640 = vsel %vm9488, %v9639, %v9638
  %v9641 = vrot.slane %v9632, 4
  %v9642 = vsel %vm9491, %v9641, %v9640
  %v9643 = vrot.slane %v9633, 3
  %v9644 = vsel %vm9494, %v9643, %v9642
  %v9645 = vrot.slane %v9634, 2
  %v9646 = vsel %vm9497, %v9645, %v9644
  %v9647 = vrot.slane %v9635, 1
  %v9648 = vsel %vm9500, %v9647, %v9646
  %v9649 = vsel %vm9503, %v9636, %v9648
  %v9650 = vrot.slane %v9637, 7
  %v9651 = vsel %vm9506, %v9650, %v9649
  %v9652 = vpack.c.b16 %v9651, %v9651
  %v9654 = vrot.slane %v9630, 7
  %v9655 = vrot.slane %v9631, 6
  %v9656 = vsel %vm9488, %v9655, %v9654
  %v9657 = vrot.slane %v9632, 5
  %v9658 = vsel %vm9491, %v9657, %v9656
  %v9659 = vrot.slane %v9633, 4
  %v9660 = vsel %vm9494, %v9659, %v9658
  %v9661 = vrot.slane %v9634, 3
  %v9662 = vsel %vm9497, %v9661, %v9660
  %v9663 = vrot.slane %v9635, 2
  %v9664 = vsel %vm9500, %v9663, %v9662
  %v9665 = vrot.slane %v9636, 1
  %v9666 = vsel %vm9503, %v9665, %v9664
  %v9667 = vsel %vm9506, %v9637, %v9666
  %v9668 = vpack.c.b16 %v9667, %v9667
  %v9678 = vunpack.c.h.b16 %v9439
  %v9679 = vunpack.c.h.b16 %v9440
  %v9680 = vunpack.c.h.b16 %v9441
  %v9681 = vunpack.c.h.b16 %v9442
  %v9682 = vunpack.c.h.b16 %v9443
  %v9683 = vunpack.c.h.b16 %v9444
  %v9684 = vunpack.c.h.b16 %v9445
  %v9685 = vunpack.c.h.b16 %v9446
  %v9686 = vrot.slane %v9679, 7
  %v9687 = vsel %vm9488, %v9686, %v9678
  %v9688 = vrot.slane %v9680, 6
  %v9689 = vsel %vm9491, %v9688, %v9687
  %v9690 = vrot.slane %v9681, 5
  %v9691 = vsel %vm9494, %v9690, %v9689
  %v9692 = vrot.slane %v9682, 4
  %v9693 = vsel %vm9497, %v9692, %v9691
  %v9694 = vrot.slane %v9683, 3
  %v9695 = vsel %vm9500, %v9694, %v9693
  %v9696 = vrot.slane %v9684, 2
  %v9697 = vsel %vm9503, %v9696, %v9695
  %v9698 = vrot.slane %v9685, 1
  %v9699 = vsel %vm9506, %v9698, %v9697
  %v9700 = vpack.c.b16 %v9699, %v9699
  %v9702 = vrot.slane %v9678, 1
  %v9703 = vsel %vm9488, %v9679, %v9702
  %v9704 = vrot.slane %v9680, 7
  %v9705 = vsel %vm9491, %v9704, %v9703
  %v9706 = vrot.slane %v9681, 6
  %v9707 = vsel %vm9494, %v9706, %v9705
  %v9708 = vrot.slane %v9682, 5
  %v9709 = vsel %vm9497, %v9708, %v9707
  %v9710 = vrot.slane %v9683, 4
  %v9711 = vsel %vm9500, %v9710, %v9709
  %v9712 = vrot.slane %v9684, 3
  %v9713 = vsel %vm9503, %v9712, %v9711
  %v9714 = vrot.slane %v9685, 2
  %v9715 = vsel %vm9506, %v9714, %v9713
  %v9716 = vpack.c.b16 %v9715, %v9715
  %v9726 = vunpack.c.h.b16 %v9447
  %v9727 = vunpack.c.h.b16 %v9448
  %v9728 = vunpack.c.h.b16 %v9449
  %v9729 = vunpack.c.h.b16 %v9450
  %v9730 = vunpack.c.h.b16 %v9451
  %v9731 = vunpack.c.h.b16 %v9452
  %v9732 = vunpack.c.h.b16 %v9453
  %v9733 = vunpack.c.h.b16 %v9454
  %v9734 = vrot.slane %v9726, 2
  %v9735 = vrot.slane %v9727, 1
  %v9736 = vsel %vm9488, %v9735, %v9734
  %v9737 = vsel %vm9491, %v9728, %v9736
  %v9738 = vrot.slane %v9729, 7
  %v9739 = vsel %vm9494, %v9738, %v9737
  %v9740 = vrot.slane %v9730, 6
  %v9741 = vsel %vm9497, %v9740, %v9739
  %v9742 = vrot.slane %v9731, 5
  %v9743 = vsel %vm9500, %v9742, %v9741
  %v9744 = vrot.slane %v9732, 4
  %v9745 = vsel %vm9503, %v9744, %v9743
  %v9746 = vrot.slane %v9733, 3
  %v9747 = vsel %vm9506, %v9746, %v9745
  %v9748 = vpack.c.b16 %v9747, %v9747
  %v9750 = vrot.slane %v9726, 3
  %v9751 = vrot.slane %v9727, 2
  %v9752 = vsel %vm9488, %v9751, %v9750
  %v9753 = vrot.slane %v9728, 1
  %v9754 = vsel %vm9491, %v9753, %v9752
  %v9755 = vsel %vm9494, %v9729, %v9754
  %v9756 = vrot.slane %v9730, 7
  %v9757 = vsel %vm9497, %v9756, %v9755
  %v9758 = vrot.slane %v9731, 6
  %v9759 = vsel %vm9500, %v9758, %v9757
  %v9760 = vrot.slane %v9732, 5
  %v9761 = vsel %vm9503, %v9760, %v9759
  %v9762 = vrot.slane %v9733, 4
  %v9763 = vsel %vm9506, %v9762, %v9761
  %v9764 = vpack.c.b16 %v9763, %v9763
  %v9774 = vunpack.c.h.b16 %v9455
  %v9775 = vunpack.c.h.b16 %v9456
  %v9776 = vunpack.c.h.b16 %v9457
  %v9777 = vunpack.c.h.b16 %v9458
  %v9778 = vunpack.c.h.b16 %v9459
  %v9779 = vunpack.c.h.b16 %v9460
  %v9780 = vunpack.c.h.b16 %v9461
  %v9781 = vunpack.c.h.b16 %v9462
  %v9782 = vrot.slane %v9774, 4
  %v9783 = vrot.slane %v9775, 3
  %v9784 = vsel %vm9488, %v9783, %v9782
  %v9785 = vrot.slane %v9776, 2
  %v9786 = vsel %vm9491, %v9785, %v9784
  %v9787 = vrot.slane %v9777, 1
  %v9788 = vsel %vm9494, %v9787, %v9786
  %v9789 = vsel %vm9497, %v9778, %v9788
  %v9790 = vrot.slane %v9779, 7
  %v9791 = vsel %vm9500, %v9790, %v9789
  %v9792 = vrot.slane %v9780, 6
  %v9793 = vsel %vm9503, %v9792, %v9791
  %v9794 = vrot.slane %v9781, 5
  %v9795 = vsel %vm9506, %v9794, %v9793
  %v9796 = vpack.c.b16 %v9795, %v9795
  %v9798 = vrot.slane %v9774, 5
  %v9799 = vrot.slane %v9775, 4
  %v9800 = vsel %vm9488, %v9799, %v9798
  %v9801 = vrot.slane %v9776, 3
  %v9802 = vsel %vm9491, %v9801, %v9800
  %v9803 = vrot.slane %v9777, 2
  %v9804 = vsel %vm9494, %v9803, %v9802
  %v9805 = vrot.slane %v9778, 1
  %v9806 = vsel %vm9497, %v9805, %v9804
  %v9807 = vsel %vm9500, %v9779, %v9806
  %v9808 = vrot.slane %v9780, 7
  %v9809 = vsel %vm9503, %v9808, %v9807
  %v9810 = vrot.slane %v9781, 6
  %v9811 = vsel %vm9506, %v9810, %v9809
  %v9812 = vpack.c.b16 %v9811, %v9811
  %v9822 = vunpack.c.h.b16 %v9463
  %v9823 = vunpack.c.h.b16 %v9464
  %v9824 = vunpack.c.h.b16 %v9465
  %v9825 = vunpack.c.h.b16 %v9466
  %v9826 = vunpack.c.h.b16 %v9467
  %v9827 = vunpack.c.h.b16 %v9468
  %v9828 = vunpack.c.h.b16 %v9469
  %v9829 = vunpack.c.h.b16 %v9470
  %v9830 = vrot.slane %v9822, 6
  %v9831 = vrot.slane %v9823, 5
  %v9832 = vsel %vm9488, %v9831, %v9830
  %v9833 = vrot.slane %v9824, 4
  %v9834 = vsel %vm9491, %v9833, %v9832
  %v9835 = vrot.slane %v9825, 3
  %v9836 = vsel %vm9494, %v9835, %v9834
  %v9837 = vrot.slane %v9826, 2
  %v9838 = vsel %vm9497, %v9837, %v9836
  %v9839 = vrot.slane %v9827, 1
  %v9840 = vsel %vm9500, %v9839, %v9838
  %v9841 = vsel %vm9503, %v9828, %v9840
  %v9842 = vrot.slane %v9829, 7
  %v9843 = vsel %vm9506, %v9842, %v9841
  %v9844 = vpack.c.b16 %v9843, %v9843
  %v9846 = vrot.slane %v9822, 7
  %v9847 = vrot.slane %v9823, 6
  %v9848 = vsel %vm9488, %v9847, %v9846
  %v9849 = vrot.slane %v9824, 5
  %v9850 = vsel %vm9491, %v9849, %v9848
  %v9851 = vrot.slane %v9825, 4
  %v9852 = vsel %vm9494, %v9851, %v9850
  %v9853 = vrot.slane %v9826, 3
  %v9854 = vsel %vm9497, %v9853, %v9852
  %v9855 = vrot.slane %v9827, 2
  %v9856 = vsel %vm9500, %v9855, %v9854
  %v9857 = vrot.slane %v9828, 1
  %v9858 = vsel %vm9503, %v9857, %v9856
  %v9859 = vsel %vm9506, %v9829, %v9858
  %v9860 = vpack.c.b16 %v9859, %v9859
  %v9862 = vld [vmem:[%s5] sm:$0xf]
  %v9863 = vld [vmem:[%s5 + $0x4] sm:$0xf]
  %v9864 = vld [vmem:[%s5 + $0x8] sm:$0xf]
  %v9865 = vld [vmem:[%s5 + $0xc] sm:$0xf]
  %v9866 = vld [vmem:[%s5 + $0x10] sm:$0xf]
  %v9867 = vld [vmem:[%s5 + $0x14] sm:$0xf]
  %v9868 = vld [vmem:[%s5 + $0x18] sm:$0xf]
  %v9869 = vld [vmem:[%s5 + $0x1c] sm:$0xf]
  %v9870 = vld [vmem:[%s5 + $0x20] sm:$0xf]
  %v9871 = vld [vmem:[%s5 + $0x24] sm:$0xf]
  %v9872 = vld [vmem:[%s5 + $0x28] sm:$0xf]
  %v9873 = vld [vmem:[%s5 + $0x2c] sm:$0xf]
  %v9874 = vld [vmem:[%s5 + $0x30] sm:$0xf]
  %v9875 = vld [vmem:[%s5 + $0x34] sm:$0xf]
  %v9876 = vld [vmem:[%s5 + $0x38] sm:$0xf]
  %v9877 = vld [vmem:[%s5 + $0x3c] sm:$0xf]
  %v9878 = vld [vmem:[%s5 + $0x40] sm:$0xf]
  %v9879 = vld [vmem:[%s5 + $0x44] sm:$0xf]
  %v9880 = vld [vmem:[%s5 + $0x48] sm:$0xf]
  %v9881 = vld [vmem:[%s5 + $0x4c] sm:$0xf]
  %v9882 = vld [vmem:[%s5 + $0x50] sm:$0xf]
  %v9883 = vld [vmem:[%s5 + $0x54] sm:$0xf]
  %v9884 = vld [vmem:[%s5 + $0x58] sm:$0xf]
  %v9885 = vld [vmem:[%s5 + $0x5c] sm:$0xf]
  %v9886 = vld [vmem:[%s5 + $0x60] sm:$0xf]
  %v9887 = vld [vmem:[%s5 + $0x64] sm:$0xf]
  %v9888 = vld [vmem:[%s5 + $0x68] sm:$0xf]
  %v9889 = vld [vmem:[%s5 + $0x6c] sm:$0xf]
  %v9890 = vld [vmem:[%s5 + $0x70] sm:$0xf]
  %v9891 = vld [vmem:[%s5 + $0x74] sm:$0xf]
  %v9892 = vld [vmem:[%s5 + $0x78] sm:$0xf]
  %v9893 = vld [vmem:[%s5 + $0x7c] sm:$0xf]
  %v9894 = vld [vmem:[%s5 + $0x80] sm:$0xf]
  %v9895 = vld [vmem:[%s5 + $0x84] sm:$0xf]
  %v9896 = vld [vmem:[%s5 + $0x88] sm:$0xf]
  %v9897 = vld [vmem:[%s5 + $0x8c] sm:$0xf]
  %v9898 = vld [vmem:[%s5 + $0x90] sm:$0xf]
  %v9899 = vld [vmem:[%s5 + $0x94] sm:$0xf]
  %v9900 = vld [vmem:[%s5 + $0x98] sm:$0xf]
  %v9901 = vld [vmem:[%s5 + $0x9c] sm:$0xf]
  %v9902 = vld [vmem:[%s5 + $0xa0] sm:$0xf]
  %v9903 = vld [vmem:[%s5 + $0xa4] sm:$0xf]
  %v9904 = vld [vmem:[%s5 + $0xa8] sm:$0xf]
  %v9905 = vld [vmem:[%s5 + $0xac] sm:$0xf]
  %v9906 = vld [vmem:[%s5 + $0xb0] sm:$0xf]
  %v9907 = vld [vmem:[%s5 + $0xb4] sm:$0xf]
  %v9908 = vld [vmem:[%s5 + $0xb8] sm:$0xf]
  %v9909 = vld [vmem:[%s5 + $0xbc] sm:$0xf]
  %v9910 = vld [vmem:[%s5 + $0xc0] sm:$0xf]
  %v9911 = vld [vmem:[%s5 + $0xc4] sm:$0xf]
  %v9912 = vld [vmem:[%s5 + $0xc8] sm:$0xf]
  %v9913 = vld [vmem:[%s5 + $0xcc] sm:$0xf]
  %v9914 = vld [vmem:[%s5 + $0xd0] sm:$0xf]
  %v9915 = vld [vmem:[%s5 + $0xd4] sm:$0xf]
  %v9916 = vld [vmem:[%s5 + $0xd8] sm:$0xf]
  %v9917 = vld [vmem:[%s5 + $0xdc] sm:$0xf]
  %v9918 = vld [vmem:[%s5 + $0xe0] sm:$0xf]
  %v9919 = vld [vmem:[%s5 + $0xe4] sm:$0xf]
  %v9920 = vld [vmem:[%s5 + $0xe8] sm:$0xf]
  %v9921 = vld [vmem:[%s5 + $0xec] sm:$0xf]
  %v9922 = vld [vmem:[%s5 + $0xf0] sm:$0xf]
  %v9923 = vld [vmem:[%s5 + $0xf4] sm:$0xf]
  %v9924 = vld [vmem:[%s5 + $0xf8] sm:$0xf]
  %v9925 = vld [vmem:[%s5 + $0xfc] sm:$0xf]
  %v9926 = vld [vmem:[%s5 + $0x100] sm:$0xf]
  %v9927 = vld [vmem:[%s5 + $0x104] sm:$0xf]
  %v9928 = vld [vmem:[%s5 + $0x108] sm:$0xf]
  %v9929 = vld [vmem:[%s5 + $0x10c] sm:$0xf]
  %v9930 = vld [vmem:[%s5 + $0x110] sm:$0xf]
  %v9931 = vld [vmem:[%s5 + $0x114] sm:$0xf]
  %v9932 = vld [vmem:[%s5 + $0x118] sm:$0xf]
  %v9933 = vld [vmem:[%s5 + $0x11c] sm:$0xf]
  %v9934 = vld [vmem:[%s5 + $0x120] sm:$0xf]
  %v9935 = vld [vmem:[%s5 + $0x124] sm:$0xf]
  %v9936 = vld [vmem:[%s5 + $0x128] sm:$0xf]
  %v9937 = vld [vmem:[%s5 + $0x12c] sm:$0xf]
  %v9938 = vld [vmem:[%s5 + $0x130] sm:$0xf]
  %v9939 = vld [vmem:[%s5 + $0x134] sm:$0xf]
  %v9940 = vld [vmem:[%s5 + $0x138] sm:$0xf]
  %v9941 = vld [vmem:[%s5 + $0x13c] sm:$0xf]
  %v9942 = vld [vmem:[%s5 + $0x140] sm:$0xf]
  %v9943 = vld [vmem:[%s5 + $0x144] sm:$0xf]
  %v9944 = vld [vmem:[%s5 + $0x148] sm:$0xf]
  %v9945 = vld [vmem:[%s5 + $0x14c] sm:$0xf]
  %v9946 = vld [vmem:[%s5 + $0x150] sm:$0xf]
  %v9947 = vld [vmem:[%s5 + $0x154] sm:$0xf]
  %v9948 = vld [vmem:[%s5 + $0x158] sm:$0xf]
  %v9949 = vld [vmem:[%s5 + $0x15c] sm:$0xf]
  %v9950 = vld [vmem:[%s5 + $0x160] sm:$0xf]
  %v9951 = vld [vmem:[%s5 + $0x164] sm:$0xf]
  %v9952 = vld [vmem:[%s5 + $0x168] sm:$0xf]
  %v9953 = vld [vmem:[%s5 + $0x16c] sm:$0xf]
  %v9954 = vld [vmem:[%s5 + $0x170] sm:$0xf]
  %v9955 = vld [vmem:[%s5 + $0x174] sm:$0xf]
  %v9956 = vld [vmem:[%s5 + $0x178] sm:$0xf]
  %v9957 = vld [vmem:[%s5 + $0x17c] sm:$0xf]
  %v9958 = vld [vmem:[%s5 + $0x180] sm:$0xf]
  %v9959 = vld [vmem:[%s5 + $0x184] sm:$0xf]
  %v9960 = vld [vmem:[%s5 + $0x188] sm:$0xf]
  %v9961 = vld [vmem:[%s5 + $0x18c] sm:$0xf]
  %v9962 = vld [vmem:[%s5 + $0x190] sm:$0xf]
  %v9963 = vld [vmem:[%s5 + $0x194] sm:$0xf]
  %v9964 = vld [vmem:[%s5 + $0x198] sm:$0xf]
  %v9965 = vld [vmem:[%s5 + $0x19c] sm:$0xf]
  %v9966 = vld [vmem:[%s5 + $0x1a0] sm:$0xf]
  %v9967 = vld [vmem:[%s5 + $0x1a4] sm:$0xf]
  %v9968 = vld [vmem:[%s5 + $0x1a8] sm:$0xf]
  %v9969 = vld [vmem:[%s5 + $0x1ac] sm:$0xf]
  %v9970 = vld [vmem:[%s5 + $0x1b0] sm:$0xf]
  %v9971 = vld [vmem:[%s5 + $0x1b4] sm:$0xf]
  %v9972 = vld [vmem:[%s5 + $0x1b8] sm:$0xf]
  %v9973 = vld [vmem:[%s5 + $0x1bc] sm:$0xf]
  %v9974 = vld [vmem:[%s5 + $0x1c0] sm:$0xf]
  %v9975 = vld [vmem:[%s5 + $0x1c4] sm:$0xf]
  %v9976 = vld [vmem:[%s5 + $0x1c8] sm:$0xf]
  %v9977 = vld [vmem:[%s5 + $0x1cc] sm:$0xf]
  %v9978 = vld [vmem:[%s5 + $0x1d0] sm:$0xf]
  %v9979 = vld [vmem:[%s5 + $0x1d4] sm:$0xf]
  %v9980 = vld [vmem:[%s5 + $0x1d8] sm:$0xf]
  %v9981 = vld [vmem:[%s5 + $0x1dc] sm:$0xf]
  %v9982 = vld [vmem:[%s5 + $0x1e0] sm:$0xf]
  %v9983 = vld [vmem:[%s5 + $0x1e4] sm:$0xf]
  %v9984 = vld [vmem:[%s5 + $0x1e8] sm:$0xf]
  %v9985 = vld [vmem:[%s5 + $0x1ec] sm:$0xf]
  %v9986 = vld [vmem:[%s5 + $0x1f0] sm:$0xf]
  %v9987 = vld [vmem:[%s5 + $0x1f4] sm:$0xf]
  %v9988 = vld [vmem:[%s5 + $0x1f8] sm:$0xf]
  %v9989 = vld [vmem:[%s5 + $0x1fc] sm:$0xf]
  %v9990 = vld [vmem:[%s5 + $0x200] sm:$0xf]
  %v9991 = vld [vmem:[%s5 + $0x204] sm:$0xf]
  %v9992 = vld [vmem:[%s5 + $0x208] sm:$0xf]
  %v9993 = vld [vmem:[%s5 + $0x20c] sm:$0xf]
  %v9994 = vld [vmem:[%s5 + $0x210] sm:$0xf]
  %v9995 = vld [vmem:[%s5 + $0x214] sm:$0xf]
  %v9996 = vld [vmem:[%s5 + $0x218] sm:$0xf]
  %v9997 = vld [vmem:[%s5 + $0x21c] sm:$0xf]
  %v9998 = vld [vmem:[%s5 + $0x220] sm:$0xf]
  %v9999 = vld [vmem:[%s5 + $0x224] sm:$0xf]
  %v10000 = vld [vmem:[%s5 + $0x228] sm:$0xf]
  %v10001 = vld [vmem:[%s5 + $0x22c] sm:$0xf]
  %v10002 = vld [vmem:[%s5 + $0x230] sm:$0xf]
  %v10003 = vld [vmem:[%s5 + $0x234] sm:$0xf]
  %v10004 = vld [vmem:[%s5 + $0x238] sm:$0xf]
  %v10005 = vld [vmem:[%s5 + $0x23c] sm:$0xf]
  %v10006 = vld [vmem:[%s5 + $0x240] sm:$0xf]
  %v10007 = vld [vmem:[%s5 + $0x244] sm:$0xf]
  %v10008 = vld [vmem:[%s5 + $0x248] sm:$0xf]
  %v10009 = vld [vmem:[%s5 + $0x24c] sm:$0xf]
  %v10010 = vld [vmem:[%s5 + $0x250] sm:$0xf]
  %v10011 = vld [vmem:[%s5 + $0x254] sm:$0xf]
  %v10012 = vld [vmem:[%s5 + $0x258] sm:$0xf]
  %v10013 = vld [vmem:[%s5 + $0x25c] sm:$0xf]
  %v10014 = vld [vmem:[%s5 + $0x260] sm:$0xf]
  %v10015 = vld [vmem:[%s5 + $0x264] sm:$0xf]
  %v10016 = vld [vmem:[%s5 + $0x268] sm:$0xf]
  %v10017 = vld [vmem:[%s5 + $0x26c] sm:$0xf]
  %v10018 = vld [vmem:[%s5 + $0x270] sm:$0xf]
  %v10019 = vld [vmem:[%s5 + $0x274] sm:$0xf]
  %v10020 = vld [vmem:[%s5 + $0x278] sm:$0xf]
  %v10021 = vld [vmem:[%s5 + $0x27c] sm:$0xf]
  %v10022 = vld [vmem:[%s5 + $0x280] sm:$0xf]
  %v10023 = vld [vmem:[%s5 + $0x284] sm:$0xf]
  %v10024 = vld [vmem:[%s5 + $0x288] sm:$0xf]
  %v10025 = vld [vmem:[%s5 + $0x28c] sm:$0xf]
  %v10026 = vld [vmem:[%s5 + $0x290] sm:$0xf]
  %v10027 = vld [vmem:[%s5 + $0x294] sm:$0xf]
  %v10028 = vld [vmem:[%s5 + $0x298] sm:$0xf]
  %v10029 = vld [vmem:[%s5 + $0x29c] sm:$0xf]
  %v10030 = vld [vmem:[%s5 + $0x2a0] sm:$0xf]
  %v10031 = vld [vmem:[%s5 + $0x2a4] sm:$0xf]
  %v10032 = vld [vmem:[%s5 + $0x2a8] sm:$0xf]
  %v10033 = vld [vmem:[%s5 + $0x2ac] sm:$0xf]
  %v10034 = vld [vmem:[%s5 + $0x2b0] sm:$0xf]
  %v10035 = vld [vmem:[%s5 + $0x2b4] sm:$0xf]
  %v10036 = vld [vmem:[%s5 + $0x2b8] sm:$0xf]
  %v10037 = vld [vmem:[%s5 + $0x2bc] sm:$0xf]
  %v10038 = vld [vmem:[%s5 + $0x2c0] sm:$0xf]
  %v10039 = vld [vmem:[%s5 + $0x2c4] sm:$0xf]
  %v10040 = vld [vmem:[%s5 + $0x2c8] sm:$0xf]
  %v10041 = vld [vmem:[%s5 + $0x2cc] sm:$0xf]
  %v10042 = vld [vmem:[%s5 + $0x2d0] sm:$0xf]
  %v10043 = vld [vmem:[%s5 + $0x2d4] sm:$0xf]
  %v10044 = vld [vmem:[%s5 + $0x2d8] sm:$0xf]
  %v10045 = vld [vmem:[%s5 + $0x2dc] sm:$0xf]
  %v10046 = vld [vmem:[%s5 + $0x2e0] sm:$0xf]
  %v10047 = vld [vmem:[%s5 + $0x2e4] sm:$0xf]
  %v10048 = vld [vmem:[%s5 + $0x2e8] sm:$0xf]
  %v10049 = vld [vmem:[%s5 + $0x2ec] sm:$0xf]
  %v10050 = vld [vmem:[%s5 + $0x2f0] sm:$0xf]
  %v10051 = vld [vmem:[%s5 + $0x2f4] sm:$0xf]
  %v10052 = vld [vmem:[%s5 + $0x2f8] sm:$0xf]
  %v10053 = vld [vmem:[%s5 + $0x2fc] sm:$0xf]
  %v10054 = vld [vmem:[%s5 + $0x300] sm:$0xf]
  %v10055 = vld [vmem:[%s5 + $0x304] sm:$0xf]
  %v10056 = vld [vmem:[%s5 + $0x308] sm:$0xf]
  %v10057 = vld [vmem:[%s5 + $0x30c] sm:$0xf]
  %v10058 = vld [vmem:[%s5 + $0x310] sm:$0xf]
  %v10059 = vld [vmem:[%s5 + $0x314] sm:$0xf]
  %v10060 = vld [vmem:[%s5 + $0x318] sm:$0xf]
  %v10061 = vld [vmem:[%s5 + $0x31c] sm:$0xf]
  %v10062 = vld [vmem:[%s5 + $0x320] sm:$0xf]
  %v10063 = vld [vmem:[%s5 + $0x324] sm:$0xf]
  %v10064 = vld [vmem:[%s5 + $0x328] sm:$0xf]
  %v10065 = vld [vmem:[%s5 + $0x32c] sm:$0xf]
  %v10066 = vld [vmem:[%s5 + $0x330] sm:$0xf]
  %v10067 = vld [vmem:[%s5 + $0x334] sm:$0xf]
  %v10068 = vld [vmem:[%s5 + $0x338] sm:$0xf]
  %v10069 = vld [vmem:[%s5 + $0x33c] sm:$0xf]
  %v10070 = vld [vmem:[%s5 + $0x340] sm:$0xf]
  %v10071 = vld [vmem:[%s5 + $0x344] sm:$0xf]
  %v10072 = vld [vmem:[%s5 + $0x348] sm:$0xf]
  %v10073 = vld [vmem:[%s5 + $0x34c] sm:$0xf]
  %v10074 = vld [vmem:[%s5 + $0x350] sm:$0xf]
  %v10075 = vld [vmem:[%s5 + $0x354] sm:$0xf]
  %v10076 = vld [vmem:[%s5 + $0x358] sm:$0xf]
  %v10077 = vld [vmem:[%s5 + $0x35c] sm:$0xf]
  %v10078 = vld [vmem:[%s5 + $0x360] sm:$0xf]
  %v10079 = vld [vmem:[%s5 + $0x364] sm:$0xf]
  %v10080 = vld [vmem:[%s5 + $0x368] sm:$0xf]
  %v10081 = vld [vmem:[%s5 + $0x36c] sm:$0xf]
  %v10082 = vld [vmem:[%s5 + $0x370] sm:$0xf]
  %v10083 = vld [vmem:[%s5 + $0x374] sm:$0xf]
  %v10084 = vld [vmem:[%s5 + $0x378] sm:$0xf]
  %v10085 = vld [vmem:[%s5 + $0x37c] sm:$0xf]
  %v10086 = vld [vmem:[%s5 + $0x380] sm:$0xf]
  %v10087 = vld [vmem:[%s5 + $0x384] sm:$0xf]
  %v10088 = vld [vmem:[%s5 + $0x388] sm:$0xf]
  %v10089 = vld [vmem:[%s5 + $0x38c] sm:$0xf]
  %v10090 = vld [vmem:[%s5 + $0x390] sm:$0xf]
  %v10091 = vld [vmem:[%s5 + $0x394] sm:$0xf]
  %v10092 = vld [vmem:[%s5 + $0x398] sm:$0xf]
  %v10093 = vld [vmem:[%s5 + $0x39c] sm:$0xf]
  %v10094 = vld [vmem:[%s5 + $0x3a0] sm:$0xf]
  %v10095 = vld [vmem:[%s5 + $0x3a4] sm:$0xf]
  %v10096 = vld [vmem:[%s5 + $0x3a8] sm:$0xf]
  %v10097 = vld [vmem:[%s5 + $0x3ac] sm:$0xf]
  %v10098 = vld [vmem:[%s5 + $0x3b0] sm:$0xf]
  %v10099 = vld [vmem:[%s5 + $0x3b4] sm:$0xf]
  %v10100 = vld [vmem:[%s5 + $0x3b8] sm:$0xf]
  %v10101 = vld [vmem:[%s5 + $0x3bc] sm:$0xf]
  %v10102 = vld [vmem:[%s5 + $0x3c0] sm:$0xf]
  %v10103 = vld [vmem:[%s5 + $0x3c4] sm:$0xf]
  %v10104 = vld [vmem:[%s5 + $0x3c8] sm:$0xf]
  %v10105 = vld [vmem:[%s5 + $0x3cc] sm:$0xf]
  %v10106 = vld [vmem:[%s5 + $0x3d0] sm:$0xf]
  %v10107 = vld [vmem:[%s5 + $0x3d4] sm:$0xf]
  %v10108 = vld [vmem:[%s5 + $0x3d8] sm:$0xf]
  %v10109 = vld [vmem:[%s5 + $0x3dc] sm:$0xf]
  %v10110 = vld [vmem:[%s5 + $0x3e0] sm:$0xf]
  %v10111 = vld [vmem:[%s5 + $0x3e4] sm:$0xf]
  %v10112 = vld [vmem:[%s5 + $0x3e8] sm:$0xf]
  %v10113 = vld [vmem:[%s5 + $0x3ec] sm:$0xf]
  %v10114 = vld [vmem:[%s5 + $0x3f0] sm:$0xf]
  %v10115 = vld [vmem:[%s5 + $0x3f4] sm:$0xf]
  %v10116 = vld [vmem:[%s5 + $0x3f8] sm:$0xf]
  %v10117 = vld [vmem:[%s5 + $0x3fc] sm:$0xf]
  %v10118 = vld [vmem:[%s6] sm:$0x1]
  %v10120 = vlaneseq
  %v10121 = vshrl.u32 %v10120, 7
  %v10122 = vsub.s32 0, %v10121
  %v10123 = vrot.slane %v10118, %v10122
  %v10381 = vunpack.c.l.b16 %v9862
  %v10382 = vunpack.c.l.b16 %v9863
  %v10383 = vunpack.c.l.b16 %v9864
  %v10384 = vunpack.c.l.b16 %v9865
  %v10385 = vunpack.c.l.b16 %v9866
  %v10386 = vunpack.c.l.b16 %v9867
  %v10387 = vunpack.c.l.b16 %v9868
  %v10388 = vunpack.c.l.b16 %v9869
  %v10389 = vunpack.c.l.b16 %v9870
  %v10390 = vunpack.c.l.b16 %v9871
  %v10391 = vunpack.c.l.b16 %v9872
  %v10392 = vunpack.c.l.b16 %v9873
  %v10393 = vunpack.c.l.b16 %v9874
  %v10394 = vunpack.c.l.b16 %v9875
  %v10395 = vunpack.c.l.b16 %v9876
  %v10396 = vunpack.c.l.b16 %v9877
  %v10397 = vunpack.c.l.b16 %v9878
  %v10398 = vunpack.c.l.b16 %v9879
  %v10399 = vunpack.c.l.b16 %v9880
  %v10400 = vunpack.c.l.b16 %v9881
  %v10401 = vunpack.c.l.b16 %v9882
  %v10402 = vunpack.c.l.b16 %v9883
  %v10403 = vunpack.c.l.b16 %v9884
  %v10404 = vunpack.c.l.b16 %v9885
  %v10405 = vunpack.c.l.b16 %v9886
  %v10406 = vunpack.c.l.b16 %v9887
  %v10407 = vunpack.c.l.b16 %v9888
  %v10408 = vunpack.c.l.b16 %v9889
  %v10409 = vunpack.c.l.b16 %v9890
  %v10410 = vunpack.c.l.b16 %v9891
  %v10411 = vunpack.c.l.b16 %v9892
  %v10412 = vunpack.c.l.b16 %v9893
  %v10413 = vunpack.c.l.b16 %v9894
  %v10414 = vunpack.c.l.b16 %v9895
  %v10415 = vunpack.c.l.b16 %v9896
  %v10416 = vunpack.c.l.b16 %v9897
  %v10417 = vunpack.c.l.b16 %v9898
  %v10418 = vunpack.c.l.b16 %v9899
  %v10419 = vunpack.c.l.b16 %v9900
  %v10420 = vunpack.c.l.b16 %v9901
  %v10421 = vunpack.c.l.b16 %v9902
  %v10422 = vunpack.c.l.b16 %v9903
  %v10423 = vunpack.c.l.b16 %v9904
  %v10424 = vunpack.c.l.b16 %v9905
  %v10425 = vunpack.c.l.b16 %v9906
  %v10426 = vunpack.c.l.b16 %v9907
  %v10427 = vunpack.c.l.b16 %v9908
  %v10428 = vunpack.c.l.b16 %v9909
  %v10429 = vunpack.c.l.b16 %v9910
  %v10430 = vunpack.c.l.b16 %v9911
  %v10431 = vunpack.c.l.b16 %v9912
  %v10432 = vunpack.c.l.b16 %v9913
  %v10433 = vunpack.c.l.b16 %v9914
  %v10434 = vunpack.c.l.b16 %v9915
  %v10435 = vunpack.c.l.b16 %v9916
  %v10436 = vunpack.c.l.b16 %v9917
  %v10437 = vunpack.c.l.b16 %v9918
  %v10438 = vunpack.c.l.b16 %v9919
  %v10439 = vunpack.c.l.b16 %v9920
  %v10440 = vunpack.c.l.b16 %v9921
  %v10441 = vunpack.c.l.b16 %v9922
  %v10442 = vunpack.c.l.b16 %v9923
  %v10443 = vunpack.c.l.b16 %v9924
  %v10444 = vunpack.c.l.b16 %v9925
  %v10445 = vunpack.c.l.b16 %v9926
  %v10446 = vunpack.c.l.b16 %v9927
  %v10447 = vunpack.c.l.b16 %v9928
  %v10448 = vunpack.c.l.b16 %v9929
  %v10449 = vunpack.c.l.b16 %v9930
  %v10450 = vunpack.c.l.b16 %v9931
  %v10451 = vunpack.c.l.b16 %v9932
  %v10452 = vunpack.c.l.b16 %v9933
  %v10453 = vunpack.c.l.b16 %v9934
  %v10454 = vunpack.c.l.b16 %v9935
  %v10455 = vunpack.c.l.b16 %v9936
  %v10456 = vunpack.c.l.b16 %v9937
  %v10457 = vunpack.c.l.b16 %v9938
  %v10458 = vunpack.c.l.b16 %v9939
  %v10459 = vunpack.c.l.b16 %v9940
  %v10460 = vunpack.c.l.b16 %v9941
  %v10461 = vunpack.c.l.b16 %v9942
  %v10462 = vunpack.c.l.b16 %v9943
  %v10463 = vunpack.c.l.b16 %v9944
  %v10464 = vunpack.c.l.b16 %v9945
  %v10465 = vunpack.c.l.b16 %v9946
  %v10466 = vunpack.c.l.b16 %v9947
  %v10467 = vunpack.c.l.b16 %v9948
  %v10468 = vunpack.c.l.b16 %v9949
  %v10469 = vunpack.c.l.b16 %v9950
  %v10470 = vunpack.c.l.b16 %v9951
  %v10471 = vunpack.c.l.b16 %v9952
  %v10472 = vunpack.c.l.b16 %v9953
  %v10473 = vunpack.c.l.b16 %v9954
  %v10474 = vunpack.c.l.b16 %v9955
  %v10475 = vunpack.c.l.b16 %v9956
  %v10476 = vunpack.c.l.b16 %v9957
  %v10477 = vunpack.c.l.b16 %v9958
  %v10478 = vunpack.c.l.b16 %v9959
  %v10479 = vunpack.c.l.b16 %v9960
  %v10480 = vunpack.c.l.b16 %v9961
  %v10481 = vunpack.c.l.b16 %v9962
  %v10482 = vunpack.c.l.b16 %v9963
  %v10483 = vunpack.c.l.b16 %v9964
  %v10484 = vunpack.c.l.b16 %v9965
  %v10485 = vunpack.c.l.b16 %v9966
  %v10486 = vunpack.c.l.b16 %v9967
  %v10487 = vunpack.c.l.b16 %v9968
  %v10488 = vunpack.c.l.b16 %v9969
  %v10489 = vunpack.c.l.b16 %v9970
  %v10490 = vunpack.c.l.b16 %v9971
  %v10491 = vunpack.c.l.b16 %v9972
  %v10492 = vunpack.c.l.b16 %v9973
  %v10493 = vunpack.c.l.b16 %v9974
  %v10494 = vunpack.c.l.b16 %v9975
  %v10495 = vunpack.c.l.b16 %v9976
  %v10496 = vunpack.c.l.b16 %v9977
  %v10497 = vunpack.c.l.b16 %v9978
  %v10498 = vunpack.c.l.b16 %v9979
  %v10499 = vunpack.c.l.b16 %v9980
  %v10500 = vunpack.c.l.b16 %v9981
  %v10501 = vunpack.c.l.b16 %v9982
  %v10502 = vunpack.c.l.b16 %v9983
  %v10503 = vunpack.c.l.b16 %v9984
  %v10504 = vunpack.c.l.b16 %v9985
  %v10505 = vunpack.c.l.b16 %v9986
  %v10506 = vunpack.c.l.b16 %v9987
  %v10507 = vunpack.c.l.b16 %v9988
  %v10508 = vunpack.c.l.b16 %v9989
  %v10509 = vunpack.c.l.b16 %v9990
  %v10510 = vunpack.c.l.b16 %v9991
  %v10511 = vunpack.c.l.b16 %v9992
  %v10512 = vunpack.c.l.b16 %v9993
  %v10513 = vunpack.c.l.b16 %v9994
  %v10514 = vunpack.c.l.b16 %v9995
  %v10515 = vunpack.c.l.b16 %v9996
  %v10516 = vunpack.c.l.b16 %v9997
  %v10517 = vunpack.c.l.b16 %v9998
  %v10518 = vunpack.c.l.b16 %v9999
  %v10519 = vunpack.c.l.b16 %v10000
  %v10520 = vunpack.c.l.b16 %v10001
  %v10521 = vunpack.c.l.b16 %v10002
  %v10522 = vunpack.c.l.b16 %v10003
  %v10523 = vunpack.c.l.b16 %v10004
  %v10524 = vunpack.c.l.b16 %v10005
  %v10525 = vunpack.c.l.b16 %v10006
  %v10526 = vunpack.c.l.b16 %v10007
  %v10527 = vunpack.c.l.b16 %v10008
  %v10528 = vunpack.c.l.b16 %v10009
  %v10529 = vunpack.c.l.b16 %v10010
  %v10530 = vunpack.c.l.b16 %v10011
  %v10531 = vunpack.c.l.b16 %v10012
  %v10532 = vunpack.c.l.b16 %v10013
  %v10533 = vunpack.c.l.b16 %v10014
  %v10534 = vunpack.c.l.b16 %v10015
  %v10535 = vunpack.c.l.b16 %v10016
  %v10536 = vunpack.c.l.b16 %v10017
  %v10537 = vunpack.c.l.b16 %v10018
  %v10538 = vunpack.c.l.b16 %v10019
  %v10539 = vunpack.c.l.b16 %v10020
  %v10540 = vunpack.c.l.b16 %v10021
  %v10541 = vunpack.c.l.b16 %v10022
  %v10542 = vunpack.c.l.b16 %v10023
  %v10543 = vunpack.c.l.b16 %v10024
  %v10544 = vunpack.c.l.b16 %v10025
  %v10545 = vunpack.c.l.b16 %v10026
  %v10546 = vunpack.c.l.b16 %v10027
  %v10547 = vunpack.c.l.b16 %v10028
  %v10548 = vunpack.c.l.b16 %v10029
  %v10549 = vunpack.c.l.b16 %v10030
  %v10550 = vunpack.c.l.b16 %v10031
  %v10551 = vunpack.c.l.b16 %v10032
  %v10552 = vunpack.c.l.b16 %v10033
  %v10553 = vunpack.c.l.b16 %v10034
  %v10554 = vunpack.c.l.b16 %v10035
  %v10555 = vunpack.c.l.b16 %v10036
  %v10556 = vunpack.c.l.b16 %v10037
  %v10557 = vunpack.c.l.b16 %v10038
  %v10558 = vunpack.c.l.b16 %v10039
  %v10559 = vunpack.c.l.b16 %v10040
  %v10560 = vunpack.c.l.b16 %v10041
  %v10561 = vunpack.c.l.b16 %v10042
  %v10562 = vunpack.c.l.b16 %v10043
  %v10563 = vunpack.c.l.b16 %v10044
  %v10564 = vunpack.c.l.b16 %v10045
  %v10565 = vunpack.c.l.b16 %v10046
  %v10566 = vunpack.c.l.b16 %v10047
  %v10567 = vunpack.c.l.b16 %v10048
  %v10568 = vunpack.c.l.b16 %v10049
  %v10569 = vunpack.c.l.b16 %v10050
  %v10570 = vunpack.c.l.b16 %v10051
  %v10571 = vunpack.c.l.b16 %v10052
  %v10572 = vunpack.c.l.b16 %v10053
  %v10573 = vunpack.c.l.b16 %v10054
  %v10574 = vunpack.c.l.b16 %v10055
  %v10575 = vunpack.c.l.b16 %v10056
  %v10576 = vunpack.c.l.b16 %v10057
  %v10577 = vunpack.c.l.b16 %v10058
  %v10578 = vunpack.c.l.b16 %v10059
  %v10579 = vunpack.c.l.b16 %v10060
  %v10580 = vunpack.c.l.b16 %v10061
  %v10581 = vunpack.c.l.b16 %v10062
  %v10582 = vunpack.c.l.b16 %v10063
  %v10583 = vunpack.c.l.b16 %v10064
  %v10584 = vunpack.c.l.b16 %v10065
  %v10585 = vunpack.c.l.b16 %v10066
  %v10586 = vunpack.c.l.b16 %v10067
  %v10587 = vunpack.c.l.b16 %v10068
  %v10588 = vunpack.c.l.b16 %v10069
  %v10589 = vunpack.c.l.b16 %v10070
  %v10590 = vunpack.c.l.b16 %v10071
  %v10591 = vunpack.c.l.b16 %v10072
  %v10592 = vunpack.c.l.b16 %v10073
  %v10593 = vunpack.c.l.b16 %v10074
  %v10594 = vunpack.c.l.b16 %v10075
  %v10595 = vunpack.c.l.b16 %v10076
  %v10596 = vunpack.c.l.b16 %v10077
  %v10597 = vunpack.c.l.b16 %v10078
  %v10598 = vunpack.c.l.b16 %v10079
  %v10599 = vunpack.c.l.b16 %v10080
  %v10600 = vunpack.c.l.b16 %v10081
  %v10601 = vunpack.c.l.b16 %v10082
  %v10602 = vunpack.c.l.b16 %v10083
  %v10603 = vunpack.c.l.b16 %v10084
  %v10604 = vunpack.c.l.b16 %v10085
  %v10605 = vunpack.c.l.b16 %v10086
  %v10606 = vunpack.c.l.b16 %v10087
  %v10607 = vunpack.c.l.b16 %v10088
  %v10608 = vunpack.c.l.b16 %v10089
  %v10609 = vunpack.c.l.b16 %v10090
  %v10610 = vunpack.c.l.b16 %v10091
  %v10611 = vunpack.c.l.b16 %v10092
  %v10612 = vunpack.c.l.b16 %v10093
  %v10613 = vunpack.c.l.b16 %v10094
  %v10614 = vunpack.c.l.b16 %v10095
  %v10615 = vunpack.c.l.b16 %v10096
  %v10616 = vunpack.c.l.b16 %v10097
  %v10617 = vunpack.c.l.b16 %v10098
  %v10618 = vunpack.c.l.b16 %v10099
  %v10619 = vunpack.c.l.b16 %v10100
  %v10620 = vunpack.c.l.b16 %v10101
  %v10621 = vunpack.c.l.b16 %v10102
  %v10622 = vunpack.c.l.b16 %v10103
  %v10623 = vunpack.c.l.b16 %v10104
  %v10624 = vunpack.c.l.b16 %v10105
  %v10625 = vunpack.c.l.b16 %v10106
  %v10626 = vunpack.c.l.b16 %v10107
  %v10627 = vunpack.c.l.b16 %v10108
  %v10628 = vunpack.c.l.b16 %v10109
  %v10629 = vunpack.c.l.b16 %v10110
  %v10630 = vunpack.c.l.b16 %v10111
  %v10631 = vunpack.c.l.b16 %v10112
  %v10632 = vunpack.c.l.b16 %v10113
  %v10633 = vunpack.c.l.b16 %v10114
  %v10634 = vunpack.c.l.b16 %v10115
  %v10635 = vunpack.c.l.b16 %v10116
  %v10636 = vunpack.c.l.b16 %v10117
  %v10637 = vpack.c.b16 %v10382, %v10381
  %v10638 = vpack.c.b16 %v10384, %v10383
  %v10639 = vpack.c.b16 %v10386, %v10385
  %v10640 = vpack.c.b16 %v10388, %v10387
  %v10641 = vpack.c.b16 %v10390, %v10389
  %v10642 = vpack.c.b16 %v10392, %v10391
  %v10643 = vpack.c.b16 %v10394, %v10393
  %v10644 = vpack.c.b16 %v10396, %v10395
  %v10645 = vpack.c.b16 %v10398, %v10397
  %v10646 = vpack.c.b16 %v10400, %v10399
  %v10647 = vpack.c.b16 %v10402, %v10401
  %v10648 = vpack.c.b16 %v10404, %v10403
  %v10649 = vpack.c.b16 %v10406, %v10405
  %v10650 = vpack.c.b16 %v10408, %v10407
  %v10651 = vpack.c.b16 %v10410, %v10409
  %v10652 = vpack.c.b16 %v10412, %v10411
  %v10653 = vpack.c.b16 %v10414, %v10413
  %v10654 = vpack.c.b16 %v10416, %v10415
  %v10655 = vpack.c.b16 %v10418, %v10417
  %v10656 = vpack.c.b16 %v10420, %v10419
  %v10657 = vpack.c.b16 %v10422, %v10421
  %v10658 = vpack.c.b16 %v10424, %v10423
  %v10659 = vpack.c.b16 %v10426, %v10425
  %v10660 = vpack.c.b16 %v10428, %v10427
  %v10661 = vpack.c.b16 %v10430, %v10429
  %v10662 = vpack.c.b16 %v10432, %v10431
  %v10663 = vpack.c.b16 %v10434, %v10433
  %v10664 = vpack.c.b16 %v10436, %v10435
  %v10665 = vpack.c.b16 %v10438, %v10437
  %v10666 = vpack.c.b16 %v10440, %v10439
  %v10667 = vpack.c.b16 %v10442, %v10441
  %v10668 = vpack.c.b16 %v10444, %v10443
  %v10669 = vpack.c.b16 %v10446, %v10445
  %v10670 = vpack.c.b16 %v10448, %v10447
  %v10671 = vpack.c.b16 %v10450, %v10449
  %v10672 = vpack.c.b16 %v10452, %v10451
  %v10673 = vpack.c.b16 %v10454, %v10453
  %v10674 = vpack.c.b16 %v10456, %v10455
  %v10675 = vpack.c.b16 %v10458, %v10457
  %v10676 = vpack.c.b16 %v10460, %v10459
  %v10677 = vpack.c.b16 %v10462, %v10461
  %v10678 = vpack.c.b16 %v10464, %v10463
  %v10679 = vpack.c.b16 %v10466, %v10465
  %v10680 = vpack.c.b16 %v10468, %v10467
  %v10681 = vpack.c.b16 %v10470, %v10469
  %v10682 = vpack.c.b16 %v10472, %v10471
  %v10683 = vpack.c.b16 %v10474, %v10473
  %v10684 = vpack.c.b16 %v10476, %v10475
  %v10685 = vpack.c.b16 %v10478, %v10477
  %v10686 = vpack.c.b16 %v10480, %v10479
  %v10687 = vpack.c.b16 %v10482, %v10481
  %v10688 = vpack.c.b16 %v10484, %v10483
  %v10689 = vpack.c.b16 %v10486, %v10485
  %v10690 = vpack.c.b16 %v10488, %v10487
  %v10691 = vpack.c.b16 %v10490, %v10489
  %v10692 = vpack.c.b16 %v10492, %v10491
  %v10693 = vpack.c.b16 %v10494, %v10493
  %v10694 = vpack.c.b16 %v10496, %v10495
  %v10695 = vpack.c.b16 %v10498, %v10497
  %v10696 = vpack.c.b16 %v10500, %v10499
  %v10697 = vpack.c.b16 %v10502, %v10501
  %v10698 = vpack.c.b16 %v10504, %v10503
  %v10699 = vpack.c.b16 %v10506, %v10505
  %v10700 = vpack.c.b16 %v10508, %v10507
  %v10701 = vpack.c.b16 %v10510, %v10509
  %v10702 = vpack.c.b16 %v10512, %v10511
  %v10703 = vpack.c.b16 %v10514, %v10513
  %v10704 = vpack.c.b16 %v10516, %v10515
  %v10705 = vpack.c.b16 %v10518, %v10517
  %v10706 = vpack.c.b16 %v10520, %v10519
  %v10707 = vpack.c.b16 %v10522, %v10521
  %v10708 = vpack.c.b16 %v10524, %v10523
  %v10709 = vpack.c.b16 %v10526, %v10525
  %v10710 = vpack.c.b16 %v10528, %v10527
  %v10711 = vpack.c.b16 %v10530, %v10529
  %v10712 = vpack.c.b16 %v10532, %v10531
  %v10713 = vpack.c.b16 %v10534, %v10533
  %v10714 = vpack.c.b16 %v10536, %v10535
  %v10715 = vpack.c.b16 %v10538, %v10537
  %v10716 = vpack.c.b16 %v10540, %v10539
  %v10717 = vpack.c.b16 %v10542, %v10541
  %v10718 = vpack.c.b16 %v10544, %v10543
  %v10719 = vpack.c.b16 %v10546, %v10545
  %v10720 = vpack.c.b16 %v10548, %v10547
  %v10721 = vpack.c.b16 %v10550, %v10549
  %v10722 = vpack.c.b16 %v10552, %v10551
  %v10723 = vpack.c.b16 %v10554, %v10553
  %v10724 = vpack.c.b16 %v10556, %v10555
  %v10725 = vpack.c.b16 %v10558, %v10557
  %v10726 = vpack.c.b16 %v10560, %v10559
  %v10727 = vpack.c.b16 %v10562, %v10561
  %v10728 = vpack.c.b16 %v10564, %v10563
  %v10729 = vpack.c.b16 %v10566, %v10565
  %v10730 = vpack.c.b16 %v10568, %v10567
  %v10731 = vpack.c.b16 %v10570, %v10569
  %v10732 = vpack.c.b16 %v10572, %v10571
  %v10733 = vpack.c.b16 %v10574, %v10573
  %v10734 = vpack.c.b16 %v10576, %v10575
  %v10735 = vpack.c.b16 %v10578, %v10577
  %v10736 = vpack.c.b16 %v10580, %v10579
  %v10737 = vpack.c.b16 %v10582, %v10581
  %v10738 = vpack.c.b16 %v10584, %v10583
  %v10739 = vpack.c.b16 %v10586, %v10585
  %v10740 = vpack.c.b16 %v10588, %v10587
  %v10741 = vpack.c.b16 %v10590, %v10589
  %v10742 = vpack.c.b16 %v10592, %v10591
  %v10743 = vpack.c.b16 %v10594, %v10593
  %v10744 = vpack.c.b16 %v10596, %v10595
  %v10745 = vpack.c.b16 %v10598, %v10597
  %v10746 = vpack.c.b16 %v10600, %v10599
  %v10747 = vpack.c.b16 %v10602, %v10601
  %v10748 = vpack.c.b16 %v10604, %v10603
  %v10749 = vpack.c.b16 %v10606, %v10605
  %v10750 = vpack.c.b16 %v10608, %v10607
  %v10751 = vpack.c.b16 %v10610, %v10609
  %v10752 = vpack.c.b16 %v10612, %v10611
  %v10753 = vpack.c.b16 %v10614, %v10613
  %v10754 = vpack.c.b16 %v10616, %v10615
  %v10755 = vpack.c.b16 %v10618, %v10617
  %v10756 = vpack.c.b16 %v10620, %v10619
  %v10757 = vpack.c.b16 %v10622, %v10621
  %v10758 = vpack.c.b16 %v10624, %v10623
  %v10759 = vpack.c.b16 %v10626, %v10625
  %v10760 = vpack.c.b16 %v10628, %v10627
  %v10761 = vpack.c.b16 %v10630, %v10629
  %v10762 = vpack.c.b16 %v10632, %v10631
  %v10763 = vpack.c.b16 %v10634, %v10633
  %v10764 = vpack.c.b16 %v10636, %v10635
  %10893 = vmatprep.subr.bf16.mxu0 0
  %10894 = vmatpush1.bf16.msra.mxu0 %v10637
  %10895 = vmatprep.subr.bf16.mxu0 0
  %10896 = vmatpush1.bf16.msra.mxu0 %v10638
  %10897 = vmatprep.subr.bf16.mxu0 0
  %10898 = vmatpush1.bf16.msra.mxu0 %v10639
  %10899 = vmatprep.subr.bf16.mxu0 0
  %10900 = vmatpush1.bf16.msra.mxu0 %v10640
  %10901 = vmatprep.subr.bf16.mxu0 0
  %10902 = vmatpush1.bf16.msra.mxu0 %v10641
  %10903 = vmatprep.subr.bf16.mxu0 0
  %10904 = vmatpush1.bf16.msra.mxu0 %v10642
  %10905 = vmatprep.subr.bf16.mxu0 0
  %10906 = vmatpush1.bf16.msra.mxu0 %v10643
  %10907 = vmatprep.subr.bf16.mxu0 0
  %10908 = vmatpush1.bf16.msra.mxu0 %v10644
  %10909 = vmatprep.subr.bf16.mxu0 0
  %10910 = vmatpush1.bf16.msra.mxu0 %v10645
  %10911 = vmatprep.subr.bf16.mxu0 0
  %10912 = vmatpush1.bf16.msra.mxu0 %v10646
  %10913 = vmatprep.subr.bf16.mxu0 0
  %10914 = vmatpush1.bf16.msra.mxu0 %v10647
  %10915 = vmatprep.subr.bf16.mxu0 0
  %10916 = vmatpush1.bf16.msra.mxu0 %v10648
  %10917 = vmatprep.subr.bf16.mxu0 0
  %10918 = vmatpush1.bf16.msra.mxu0 %v10649
  %10919 = vmatprep.subr.bf16.mxu0 0
  %10920 = vmatpush1.bf16.msra.mxu0 %v10650
  %10921 = vmatprep.subr.bf16.mxu0 0
  %10922 = vmatpush1.bf16.msra.mxu0 %v10651
  %10923 = vmatprep.subr.bf16.mxu0 0
  %10924 = vmatpush1.bf16.msra.mxu0 %v10652
  %10925 = vmatprep.mubr.bf16.mxu0 %v9524
  %10926 = vmatmul.mubr.bf16.gmra.mrb[0].mxu0 %v9508
  %v10927 = vpop.f32.mrb[0].mxu0
  %v10928 = vadd.f32 %v10123, %v10927
  %v10929 = vpop.f32.mrb[0].mxu0
  %v10930 = vpop.f32.mrb[0].mxu0
  %v10931 = vpop.f32.mrb[0].mxu0
  %10932 = vdwg.mxu0
  %10933 = vmatprep.subr.bf16.mxu0 0
  %10934 = vmatpush1.bf16.msra.mxu0 %v10653
  %10935 = vmatprep.subr.bf16.mxu0 0
  %10936 = vmatpush1.bf16.msra.mxu0 %v10654
  %10937 = vmatprep.subr.bf16.mxu0 0
  %10938 = vmatpush1.bf16.msra.mxu0 %v10655
  %10939 = vmatprep.subr.bf16.mxu0 0
  %10940 = vmatpush1.bf16.msra.mxu0 %v10656
  %10941 = vmatprep.subr.bf16.mxu0 0
  %10942 = vmatpush1.bf16.msra.mxu0 %v10657
  %10943 = vmatprep.subr.bf16.mxu0 0
  %10944 = vmatpush1.bf16.msra.mxu0 %v10658
  %10945 = vmatprep.subr.bf16.mxu0 0
  %10946 = vmatpush1.bf16.msra.mxu0 %v10659
  %10947 = vmatprep.subr.bf16.mxu0 0
  %10948 = vmatpush1.bf16.msra.mxu0 %v10660
  %10949 = vmatprep.subr.bf16.mxu0 0
  %10950 = vmatpush1.bf16.msra.mxu0 %v10661
  %10951 = vmatprep.subr.bf16.mxu0 0
  %10952 = vmatpush1.bf16.msra.mxu0 %v10662
  %10953 = vmatprep.subr.bf16.mxu0 0
  %10954 = vmatpush1.bf16.msra.mxu0 %v10663
  %10955 = vmatprep.subr.bf16.mxu0 0
  %10956 = vmatpush1.bf16.msra.mxu0 %v10664
  %10957 = vmatprep.subr.bf16.mxu0 0
  %10958 = vmatpush1.bf16.msra.mxu0 %v10665
  %10959 = vmatprep.subr.bf16.mxu0 0
  %10960 = vmatpush1.bf16.msra.mxu0 %v10666
  %10961 = vmatprep.subr.bf16.mxu0 0
  %10962 = vmatpush1.bf16.msra.mxu0 %v10667
  %10963 = vmatprep.subr.bf16.mxu0 0
  %10964 = vmatpush1.bf16.msra.mxu0 %v10668
  %10965 = vmatprep.mubr.bf16.mxu0 %v9572
  %10966 = vmatmul.mubr.bf16.gmra.mrb[0].mxu0 %v9556
  %v10967 = vpop.f32.mrb[0].mxu0
  %v10968 = vadd.f32 %v10928, %v10967
  %v10969 = vpop.f32.mrb[0].mxu0
  %v10970 = vpop.f32.mrb[0].mxu0
  %v10971 = vpop.f32.mrb[0].mxu0
  %10972 = vdwg.mxu0
  %10973 = vmatprep.subr.bf16.mxu0 0
  %10974 = vmatpush1.bf16.msra.mxu0 %v10669
  %10975 = vmatprep.subr.bf16.mxu0 0
  %10976 = vmatpush1.bf16.msra.mxu0 %v10670
  %10977 = vmatprep.subr.bf16.mxu0 0
  %10978 = vmatpush1.bf16.msra.mxu0 %v10671
  %10979 = vmatprep.subr.bf16.mxu0 0
  %10980 = vmatpush1.bf16.msra.mxu0 %v10672
  %10981 = vmatprep.subr.bf16.mxu0 0
  %10982 = vmatpush1.bf16.msra.mxu0 %v10673
  %10983 = vmatprep.subr.bf16.mxu0 0
  %10984 = vmatpush1.bf16.msra.mxu0 %v10674
  %10985 = vmatprep.subr.bf16.mxu0 0
  %10986 = vmatpush1.bf16.msra.mxu0 %v10675
  %10987 = vmatprep.subr.bf16.mxu0 0
  %10988 = vmatpush1.bf16.msra.mxu0 %v10676
  %10989 = vmatprep.subr.bf16.mxu0 0
  %10990 = vmatpush1.bf16.msra.mxu0 %v10677
  %10991 = vmatprep.subr.bf16.mxu0 0
  %10992 = vmatpush1.bf16.msra.mxu0 %v10678
  %10993 = vmatprep.subr.bf16.mxu0 0
  %10994 = vmatpush1.bf16.msra.mxu0 %v10679
  %10995 = vmatprep.subr.bf16.mxu0 0
  %10996 = vmatpush1.bf16.msra.mxu0 %v10680
  %10997 = vmatprep.subr.bf16.mxu0 0
  %10998 = vmatpush1.bf16.msra.mxu0 %v10681
  %10999 = vmatprep.subr.bf16.mxu0 0
  %11000 = vmatpush1.bf16.msra.mxu0 %v10682
  %11001 = vmatprep.subr.bf16.mxu0 0
  %11002 = vmatpush1.bf16.msra.mxu0 %v10683
  %11003 = vmatprep.subr.bf16.mxu0 0
  %11004 = vmatpush1.bf16.msra.mxu0 %v10684
  %11005 = vmatprep.mubr.bf16.mxu0 %v9620
  %11006 = vmatmul.mubr.bf16.gmra.mrb[0].mxu0 %v9604
  %v11007 = vpop.f32.mrb[0].mxu0
  %v11008 = vadd.f32 %v10968, %v11007
  %v11009 = vpop.f32.mrb[0].mxu0
  %v11010 = vpop.f32.mrb[0].mxu0
  %v11011 = vpop.f32.mrb[0].mxu0
  %11012 = vdwg.mxu0
  %11013 = vmatprep.subr.bf16.mxu0 0
  %11014 = vmatpush1.bf16.msra.mxu0 %v10685
  %11015 = vmatprep.subr.bf16.mxu0 0
  %11016 = vmatpush1.bf16.msra.mxu0 %v10686
  %11017 = vmatprep.subr.bf16.mxu0 0
  %11018 = vmatpush1.bf16.msra.mxu0 %v10687
  %11019 = vmatprep.subr.bf16.mxu0 0
  %11020 = vmatpush1.bf16.msra.mxu0 %v10688
  %11021 = vmatprep.subr.bf16.mxu0 0
  %11022 = vmatpush1.bf16.msra.mxu0 %v10689
  %11023 = vmatprep.subr.bf16.mxu0 0
  %11024 = vmatpush1.bf16.msra.mxu0 %v10690
  %11025 = vmatprep.subr.bf16.mxu0 0
  %11026 = vmatpush1.bf16.msra.mxu0 %v10691
  %11027 = vmatprep.subr.bf16.mxu0 0
  %11028 = vmatpush1.bf16.msra.mxu0 %v10692
  %11029 = vmatprep.subr.bf16.mxu0 0
  %11030 = vmatpush1.bf16.msra.mxu0 %v10693
  %11031 = vmatprep.subr.bf16.mxu0 0
  %11032 = vmatpush1.bf16.msra.mxu0 %v10694
  %11033 = vmatprep.subr.bf16.mxu0 0
  %11034 = vmatpush1.bf16.msra.mxu0 %v10695
  %11035 = vmatprep.subr.bf16.mxu0 0
  %11036 = vmatpush1.bf16.msra.mxu0 %v10696
  %11037 = vmatprep.subr.bf16.mxu0 0
  %11038 = vmatpush1.bf16.msra.mxu0 %v10697
  %11039 = vmatprep.subr.bf16.mxu0 0
  %11040 = vmatpush1.bf16.msra.mxu0 %v10698
  %11041 = vmatprep.subr.bf16.mxu0 0
  %11042 = vmatpush1.bf16.msra.mxu0 %v10699
  %11043 = vmatprep.subr.bf16.mxu0 0
  %11044 = vmatpush1.bf16.msra.mxu0 %v10700
  %11045 = vmatprep.mubr.bf16.mxu0 %v9668
  %11046 = vmatmul.mubr.bf16.gmra.mrb[0].mxu0 %v9652
  %v11047 = vpop.f32.mrb[0].mxu0
  %v11048 = vadd.f32 %v11008, %v11047
  %v11049 = vpop.f32.mrb[0].mxu0
  %v11050 = vpop.f32.mrb[0].mxu0
  %v11051 = vpop.f32.mrb[0].mxu0
  %11052 = vdwg.mxu0
  %11053 = vmatprep.subr.bf16.mxu0 0
  %11054 = vmatpush1.bf16.msra.mxu0 %v10701
  %11055 = vmatprep.subr.bf16.mxu0 0
  %11056 = vmatpush1.bf16.msra.mxu0 %v10702
  %11057 = vmatprep.subr.bf16.mxu0 0
  %11058 = vmatpush1.bf16.msra.mxu0 %v10703
  %11059 = vmatprep.subr.bf16.mxu0 0
  %11060 = vmatpush1.bf16.msra.mxu0 %v10704
  %11061 = vmatprep.subr.bf16.mxu0 0
  %11062 = vmatpush1.bf16.msra.mxu0 %v10705
  %11063 = vmatprep.subr.bf16.mxu0 0
  %11064 = vmatpush1.bf16.msra.mxu0 %v10706
  %11065 = vmatprep.subr.bf16.mxu0 0
  %11066 = vmatpush1.bf16.msra.mxu0 %v10707
  %11067 = vmatprep.subr.bf16.mxu0 0
  %11068 = vmatpush1.bf16.msra.mxu0 %v10708
  %11069 = vmatprep.subr.bf16.mxu0 0
  %11070 = vmatpush1.bf16.msra.mxu0 %v10709
  %11071 = vmatprep.subr.bf16.mxu0 0
  %11072 = vmatpush1.bf16.msra.mxu0 %v10710
  %11073 = vmatprep.subr.bf16.mxu0 0
  %11074 = vmatpush1.bf16.msra.mxu0 %v10711
  %11075 = vmatprep.subr.bf16.mxu0 0
  %11076 = vmatpush1.bf16.msra.mxu0 %v10712
  %11077 = vmatprep.subr.bf16.mxu0 0
  %11078 = vmatpush1.bf16.msra.mxu0 %v10713
  %11079 = vmatprep.subr.bf16.mxu0 0
  %11080 = vmatpush1.bf16.msra.mxu0 %v10714
  %11081 = vmatprep.subr.bf16.mxu0 0
  %11082 = vmatpush1.bf16.msra.mxu0 %v10715
  %11083 = vmatprep.subr.bf16.mxu0 0
  %11084 = vmatpush1.bf16.msra.mxu0 %v10716
  %11085 = vmatprep.mubr.bf16.mxu0 %v9716
  %11086 = vmatmul.mubr.bf16.gmra.mrb[0].mxu0 %v9700
  %v11087 = vpop.f32.mrb[0].mxu0
  %v11088 = vadd.f32 %v11048, %v11087
  %v11089 = vpop.f32.mrb[0].mxu0
  %v11090 = vpop.f32.mrb[0].mxu0
  %v11091 = vpop.f32.mrb[0].mxu0
  %11092 = vdwg.mxu0
  %11093 = vmatprep.subr.bf16.mxu0 0
  %11094 = vmatpush1.bf16.msra.mxu0 %v10717
  %11095 = vmatprep.subr.bf16.mxu0 0
  %11096 = vmatpush1.bf16.msra.mxu0 %v10718
  %11097 = vmatprep.subr.bf16.mxu0 0
  %11098 = vmatpush1.bf16.msra.mxu0 %v10719
  %11099 = vmatprep.subr.bf16.mxu0 0
  %11100 = vmatpush1.bf16.msra.mxu0 %v10720
  %11101 = vmatprep.subr.bf16.mxu0 0
  %11102 = vmatpush1.bf16.msra.mxu0 %v10721
  %11103 = vmatprep.subr.bf16.mxu0 0
  %11104 = vmatpush1.bf16.msra.mxu0 %v10722
  %11105 = vmatprep.subr.bf16.mxu0 0
  %11106 = vmatpush1.bf16.msra.mxu0 %v10723
  %11107 = vmatprep.subr.bf16.mxu0 0
  %11108 = vmatpush1.bf16.msra.mxu0 %v10724
  %11109 = vmatprep.subr.bf16.mxu0 0
  %11110 = vmatpush1.bf16.msra.mxu0 %v10725
  %11111 = vmatprep.subr.bf16.mxu0 0
  %11112 = vmatpush1.bf16.msra.mxu0 %v10726
  %11113 = vmatprep.subr.bf16.mxu0 0
  %11114 = vmatpush1.bf16.msra.mxu0 %v10727
  %11115 = vmatprep.subr.bf16.mxu0 0
  %11116 = vmatpush1.bf16.msra.mxu0 %v10728
  %11117 = vmatprep.subr.bf16.mxu0 0
  %11118 = vmatpush1.bf16.msra.mxu0 %v10729
  %11119 = vmatprep.subr.bf16.mxu0 0
  %11120 = vmatpush1.bf16.msra.mxu0 %v10730
  %11121 = vmatprep.subr.bf16.mxu0 0
  %11122 = vmatpush1.bf16.msra.mxu0 %v10731
  %11123 = vmatprep.subr.bf16.mxu0 0
  %11124 = vmatpush1.bf16.msra.mxu0 %v10732
  %11125 = vmatprep.mubr.bf16.mxu0 %v9764
  %11126 = vmatmul.mubr.bf16.gmra.mrb[0].mxu0 %v9748
  %v11127 = vpop.f32.mrb[0].mxu0
  %v11128 = vadd.f32 %v11088, %v11127
  %v11129 = vpop.f32.mrb[0].mxu0
  %v11130 = vpop.f32.mrb[0].mxu0
  %v11131 = vpop.f32.mrb[0].mxu0
  %11132 = vdwg.mxu0
  %11133 = vmatprep.subr.bf16.mxu0 0
  %11134 = vmatpush1.bf16.msra.mxu0 %v10733
  %11135 = vmatprep.subr.bf16.mxu0 0
  %11136 = vmatpush1.bf16.msra.mxu0 %v10734
  %11137 = vmatprep.subr.bf16.mxu0 0
  %11138 = vmatpush1.bf16.msra.mxu0 %v10735
  %11139 = vmatprep.subr.bf16.mxu0 0
  %11140 = vmatpush1.bf16.msra.mxu0 %v10736
  %11141 = vmatprep.subr.bf16.mxu0 0
  %11142 = vmatpush1.bf16.msra.mxu0 %v10737
  %11143 = vmatprep.subr.bf16.mxu0 0
  %11144 = vmatpush1.bf16.msra.mxu0 %v10738
  %11145 = vmatprep.subr.bf16.mxu0 0
  %11146 = vmatpush1.bf16.msra.mxu0 %v10739
  %11147 = vmatprep.subr.bf16.mxu0 0
  %11148 = vmatpush1.bf16.msra.mxu0 %v10740
  %11149 = vmatprep.subr.bf16.mxu0 0
  %11150 = vmatpush1.bf16.msra.mxu0 %v10741
  %11151 = vmatprep.subr.bf16.mxu0 0
  %11152 = vmatpush1.bf16.msra.mxu0 %v10742
  %11153 = vmatprep.subr.bf16.mxu0 0
  %11154 = vmatpush1.bf16.msra.mxu0 %v10743
  %11155 = vmatprep.subr.bf16.mxu0 0
  %11156 = vmatpush1.bf16.msra.mxu0 %v10744
  %11157 = vmatprep.subr.bf16.mxu0 0
  %11158 = vmatpush1.bf16.msra.mxu0 %v10745
  %11159 = vmatprep.subr.bf16.mxu0 0
  %11160 = vmatpush1.bf16.msra.mxu0 %v10746
  %11161 = vmatprep.subr.bf16.mxu0 0
  %11162 = vmatpush1.bf16.msra.mxu0 %v10747
  %11163 = vmatprep.subr.bf16.mxu0 0
  %11164 = vmatpush1.bf16.msra.mxu0 %v10748
  %11165 = vmatprep.mubr.bf16.mxu0 %v9812
  %11166 = vmatmul.mubr.bf16.gmra.mrb[0].mxu0 %v9796
  %v11167 = vpop.f32.mrb[0].mxu0
  %v11168 = vadd.f32 %v11128, %v11167
  %v11169 = vpop.f32.mrb[0].mxu0
  %v11170 = vpop.f32.mrb[0].mxu0
  %v11171 = vpop.f32.mrb[0].mxu0
  %11172 = vdwg.mxu0
  %11173 = vmatprep.subr.bf16.mxu0 0
  %11174 = vmatpush1.bf16.msra.mxu0 %v10749
  %11175 = vmatprep.subr.bf16.mxu0 0
  %11176 = vmatpush1.bf16.msra.mxu0 %v10750
  %11177 = vmatprep.subr.bf16.mxu0 0
  %11178 = vmatpush1.bf16.msra.mxu0 %v10751
  %11179 = vmatprep.subr.bf16.mxu0 0
  %11180 = vmatpush1.bf16.msra.mxu0 %v10752
  %11181 = vmatprep.subr.bf16.mxu0 0
  %11182 = vmatpush1.bf16.msra.mxu0 %v10753
  %11183 = vmatprep.subr.bf16.mxu0 0
  %11184 = vmatpush1.bf16.msra.mxu0 %v10754
  %11185 = vmatprep.subr.bf16.mxu0 0
  %11186 = vmatpush1.bf16.msra.mxu0 %v10755
  %11187 = vmatprep.subr.bf16.mxu0 0
  %11188 = vmatpush1.bf16.msra.mxu0 %v10756
  %11189 = vmatprep.subr.bf16.mxu0 0
  %11190 = vmatpush1.bf16.msra.mxu0 %v10757
  %11191 = vmatprep.subr.bf16.mxu0 0
  %11192 = vmatpush1.bf16.msra.mxu0 %v10758
  %11193 = vmatprep.subr.bf16.mxu0 0
  %11194 = vmatpush1.bf16.msra.mxu0 %v10759
  %11195 = vmatprep.subr.bf16.mxu0 0
  %11196 = vmatpush1.bf16.msra.mxu0 %v10760
  %11197 = vmatprep.subr.bf16.mxu0 0
  %11198 = vmatpush1.bf16.msra.mxu0 %v10761
  %11199 = vmatprep.subr.bf16.mxu0 0
  %11200 = vmatpush1.bf16.msra.mxu0 %v10762
  %11201 = vmatprep.subr.bf16.mxu0 0
  %11202 = vmatpush1.bf16.msra.mxu0 %v10763
  %11203 = vmatprep.subr.bf16.mxu0 0
  %11204 = vmatpush1.bf16.msra.mxu0 %v10764
  %11205 = vmatprep.mubr.bf16.mxu0 %v9860
  %11206 = vmatmul.mubr.bf16.gmra.mrb[0].mxu0 %v9844
  %v11207 = vpop.f32.mrb[0].mxu0
  %v11208 = vadd.f32 %v11168, %v11207
  %v11209 = vpop.f32.mrb[0].mxu0
  %v11210 = vpop.f32.mrb[0].mxu0
  %v11211 = vpop.f32.mrb[0].mxu0
  %11212 = vdwg.mxu0
  %11213 = vst [vmem:[%s7] sm:$0xff] %v11208
  // Predicated region
  $region30: #{mnist_net_forward.1} parent=0 // pred_check
    _
  $region31: #{mnist_net_forward.1} parent=0 // pred_check_branch
    %11215 = sbr.rel (0) target = $region33
  $region32: #{mnist_net_forward.1} parent=0 // pred_region
    _
  $region33: #{mnist_net_forward.1} parent=0 // pred_fallthru
    _
  // Predicated region
  $region34: #{mnist_net_forward.1} parent=0 // pred_check
    _
  $region35: #{mnist_net_forward.1} parent=0 // pred_check_branch
    %11217 = sbr.rel (0) target = $region37
  $region36: #{mnist_net_forward.1} parent=0 // pred_region
    _
  $region37: #{mnist_net_forward.1} parent=0 // pred_fallthru
    _

</llo_original>
